<compile_context>
chip_gen: v5e
topology: v5e:2x2
jax: 0.10.0
libtpu: 0.0.40
codegen_flags: <defaults>
</compile_context>

<pallas_src>
import functools
import math

import jax
import jax.numpy as jnp
from jax.experimental import pallas as pl
from jax.experimental.pallas import tpu as pltpu

F32 = jnp.float32


def _full_spec(shape):
    """Single-block BlockSpec covering the whole array (grid=())."""
    nd = len(shape)
    return pl.BlockSpec(shape, lambda: (0,) * nd)


# ----------------------------- fused kernel -----------------------------

def _topo_fused_kernel(x_ref, adj_ref, w1_ref, w2_ref, w3_ref, w4_ref,
                       h1_ref, h2_ref, h3_ref, h4_ref, *, mm_dtype):
    """4x (GCN -> leaky_relu -> ELU -> batch-stat BN), all VMEM resident.

    Inputs arrive already in `mm_dtype` (cast at the pallas_call boundary), so
    there is no in-kernel f32->bf16 duplicate of the N^2 adjacency.  adj_ref /
    x_ref are read at their point of use (not hoisted across the 4 unrolled
    layers) to keep N^2-sized live ranges short.
    """
    w_refs = (w1_ref, w2_ref, w3_ref, w4_ref)
    o_refs = (h1_ref, h2_ref, h3_ref, h4_ref)

    h = None  # previous layer output (cast to mm_dtype); None => read x_ref
    for layer, (w_ref, o_ref) in enumerate(zip(w_refs, o_refs)):  # unrolled
        feats = x_ref[...] if layer == 0 else h

        # support = features @ W ; out = adj @ support   (MXU, f32 accumulate)
        support = jnp.dot(feats, w_ref[...], preferred_element_type=jnp.float32)
        out = jnp.dot(adj_ref[...], support.astype(mm_dtype),
                      preferred_element_type=jnp.float32)

        # Fused leaky_relu(0.2) + ELU(alpha=1):
        #   out >= 0 -> out ; out < 0 -> exp(0.2*out) - 1
        # TODO(synk): jnp.expm1 would be marginally closer to PyTorch's ELU
        # near 0; exp-1 kept for guaranteed Mosaic lowering.
        neg = jnp.exp(0.2 * jnp.minimum(out, 0.0)) - 1.0
        out = jnp.where(out >= 0.0, out, neg)

        # BatchNorm1d(affine=False, track_running_stats=False): per-batch
        # biased statistics, eps=1e-5, f32.  One pass: sum + sum-of-squares.
        inv_n = 1.0 / out.shape[0]
        s = jnp.sum(out, axis=0, keepdims=True)
        s2 = jnp.sum(out * out, axis=0, keepdims=True)
        mean = s * inv_n
        var = jnp.maximum(s2 * inv_n - mean * mean, 0.0)
        out = (out - mean) * jax.lax.rsqrt(var + 1e-5)

        o_ref[...] = out                    # f32, lane-dense (dout % 128 == 0)
        h = out.astype(mm_dtype)            # feed next layer (stays in VMEM)


def topo_forward(x, adj, weights, *, use_bf16=False):
    """Pallas forward of `topo`: returns (fea_h1, fea_h2, fea_h3, fea_h4)."""
    n = x.shape[0]
    mm_dtype = jnp.bfloat16 if use_bf16 else jnp.float32

    # Cast MXU operands at the call boundary: when bf16, halves the HBM->VMEM
    # DMA and the VMEM residency of the dominant N^2 adjacency.
    xc = x.astype(mm_dtype)
    adjc = adj.astype(mm_dtype)
    wc = tuple(w.astype(mm_dtype) for w in weights)
    ins = (xc, adjc) + wc

    out_dims = tuple(w.shape[1] for w in weights)
    out_shape = tuple(jax.ShapeDtypeStruct((n, d), F32) for d in out_dims)
    out_specs = tuple(_full_spec((n, d)) for d in out_dims)
    in_specs = [_full_spec(a.shape) for a in ins]

    # Advisory cost estimate so XLA can schedule surrounding ops around the
    # custom call (the small-N case is launch/overlap bound).
    itemsize = jnp.dtype(mm_dtype).itemsize
    flops = sum(2 * n * w.shape[0] * w.shape[1] + 2 * n * n * w.shape[1]
                for w in weights)
    transcendentals = sum(n * d for d in out_dims)        # one exp per element
    bytes_accessed = (sum(a.size for a in ins) * itemsize
                      + sum(n * d for d in out_dims) * 4)

    # Everything is VMEM resident in this single-block kernel; budget VMEM
    # explicitly (v5e default scoped limit is only 16 MiB) while staying under
    # v7x's 64 MiB physical VMEM.
    resident = (sum(a.size for a in ins) * itemsize        # inputs
                + sum(n * d for d in out_dims) * 4         # f32 outputs
                + 3 * n * max(out_dims) * 4)               # support/out temps
    vmem_limit = int(min(max(2 * resident, 32 * 1024 * 1024),
                         64 * 1024 * 1024))

    # TODO(synk): for N in the thousands (adj no longer VMEM resident, which
    # hits much earlier under v7x's 64 MiB VMEM), switch to a K-streamed grid:
    # tile the contraction dim of adj@support with an f32 VMEM accumulator and
    # pl.when init/finalize ("arbitrary" axis), keep the resident adj block at
    # pipeline_mode=pl.Buffered(1) (or memory_space=pl.ANY + one manual copy),
    # and add a row-parallel grid axis with a two-phase cross-core BatchNorm
    # reduction so both v7x TensorCores are used.
    return pl.pallas_call(
        functools.partial(_topo_fused_kernel, mm_dtype=mm_dtype),
        out_shape=out_shape,
        in_specs=in_specs,
        out_specs=out_specs,
        compiler_params=pltpu.CompilerParams(vmem_limit_bytes=vmem_limit),
        cost_estimate=pl.CostEstimate(flops=int(flops),
                                      transcendentals=int(transcendentals),
                                      bytes_accessed=int(bytes_accessed)),
    )(*ins)


# ----------------------------- pure-JAX reference -----------------------------

def topo_reference(x, adj, weights, mm_dtype=jnp.float32):
    """Pure-JAX reference mirroring the kernel's matmul-operand dtype."""
    hs = []
    hi = jax.lax.Precision.HIGHEST
    h = x.astype(mm_dtype)
    adj_m = adj.astype(mm_dtype)
    for w in weights:
        support = jnp.dot(h, w.astype(mm_dtype),
                          preferred_element_type=jnp.float32, precision=hi)
        out = jnp.dot(adj_m, support.astype(mm_dtype),
                      preferred_element_type=jnp.float32, precision=hi)
        out = jnp.where(out >= 0.0, out,
                        jnp.exp(0.2 * jnp.minimum(out, 0.0)) - 1.0)
        m = jnp.mean(out, axis=0, keepdims=True)
        v = jnp.mean((out - m) ** 2, axis=0, keepdims=True)
        out = (out - m) * jax.lax.rsqrt(v + 1e-5)
        hs.append(out)
        h = out.astype(mm_dtype)
    return tuple(hs)


# ----------------------------- main -----------------------------

if __name__ == "__main__":
    import numpy as np

    # Small but MXU-friendly shapes: 256-wide features are lane dense and fill
    # the 256-wide MXU on v6e / v7x (128 was already optimal on v5e).
    N = 256
    x_input, x_enc1, x_enc2, x_enc3, z_input = 256, 256, 256, 256, 256

    key = jax.random.PRNGKey(0)
    kx, ka, k1, k2, k3, k4 = jax.random.split(key, 6)

    x = jax.random.normal(kx, (N, x_input), dtype=F32)

    # Symmetric-normalized random adjacency (as produced upstream of `topo`).
    a = (jax.random.uniform(ka, (N, N)) > 0.9).astype(F32)
    a = jnp.maximum(a, a.T)
    a = a.at[jnp.arange(N), jnp.arange(N)].set(1.0)
    dinv = 1.0 / jnp.sqrt(a.sum(1))
    fadj = a * dinv[:, None] * dinv[None, :]

    # Xavier-uniform GNNLayer weights.
    dims = [x_input, x_enc1, x_enc2, x_enc3, z_input]
    weights = []
    for k, (din, dout) in zip((k1, k2, k3, k4), zip(dims[:-1], dims[1:])):
        bound = math.sqrt(6.0 / (din + dout))
        weights.append(jax.random.uniform(k, (din, dout), F32, -bound, bound))
    weights = tuple(weights)

    # f32 path vs. pure-JAX reference.
    fwd = jax.jit(functools.partial(topo_forward, use_bf16=False))
    outs = fwd(x, fadj, weights)
    jax.block_until_ready(outs)
    ref = topo_reference(x, fadj, weights)
    for o, r in zip(outs, ref):
        np.testing.assert_allclose(np.asarray(o), np.asarray(r),
                                   rtol=1e-2, atol=1e-2)

    # bf16-operand MXU path: tight check vs. a reference that quantizes the
    # same operands to bf16, plus a loose sanity check vs. the f32 reference.
    fwd_bf16 = jax.jit(functools.partial(topo_forward, use_bf16=True))
    outs_bf16 = fwd_bf16(x, fadj, weights)
    jax.block_until_ready(outs_bf16)
    ref_bf16 = topo_reference(x, fadj, weights, mm_dtype=jnp.bfloat16)
    for o, r_q, r_f32 in zip(outs_bf16, ref_bf16, ref):
        np.testing.assert_allclose(np.asarray(o), np.asarray(r_q),
                                   rtol=2e-2, atol=2e-2)
        np.testing.assert_allclose(np.asarray(o), np.asarray(r_f32),
                                   rtol=0.3, atol=0.3)
        assert bool(jnp.all(jnp.isfinite(o)))

    # TODO(synk): nonzero training-mode dropout (GNNLayer.dropout != 0) would
    # need pltpu.prng_seed / prng_random_bits; the module is used with
    # dropout=0 here.
    print("KERNEL_OK")
</pallas_src>

<mosaic_0001>
module attributes {stable_mosaic.version = 11 : i64} {
  func.func @_topo_fused_kernel(%arg0: memref<256x256xf32, #tpu.memory_space<vmem>>, %arg1: memref<256x256xf32, #tpu.memory_space<vmem>>, %arg2: memref<256x256xf32, #tpu.memory_space<vmem>>, %arg3: memref<256x256xf32, #tpu.memory_space<vmem>>, %arg4: memref<256x256xf32, #tpu.memory_space<vmem>>, %arg5: memref<256x256xf32, #tpu.memory_space<vmem>>, %arg6: memref<256x256xf32, #tpu.memory_space<vmem>>, %arg7: memref<256x256xf32, #tpu.memory_space<vmem>>, %arg8: memref<256x256xf32, #tpu.memory_space<vmem>>, %arg9: memref<256x256xf32, #tpu.memory_space<vmem>>) attributes {dimension_semantics = [], scalar_prefetch = 0 : i64, scratch_operands = 0 : i64, tpu.core_type = #tpu.core_type<tc>} {
    %c0 = arith.constant 0 : index
    %c0_0 = arith.constant 0 : index
    %0 = vector.load %arg0[%c0, %c0_0] : memref<256x256xf32, #tpu.memory_space<vmem>>, vector<256x256xf32>
    %c0_1 = arith.constant 0 : index
    %c0_2 = arith.constant 0 : index
    %1 = vector.load %arg2[%c0_1, %c0_2] : memref<256x256xf32, #tpu.memory_space<vmem>>, vector<256x256xf32>
    %cst = arith.constant dense<0.000000e+00> : vector<256x256xf32>
    %2 = tpu.matmul %0, %1, %cst {dimension_numbers = #tpu.dot_dimension_numbers<[1], [0], [0], [1], [0, 0, 1, 1], [], []>} : vector<256x256xf32>, vector<256x256xf32>, vector<256x256xf32> -> vector<256x256xf32>
    %c0_3 = arith.constant 0 : index
    %c0_4 = arith.constant 0 : index
    %3 = vector.load %arg1[%c0_3, %c0_4] : memref<256x256xf32, #tpu.memory_space<vmem>>, vector<256x256xf32>
    %cst_5 = arith.constant dense<0.000000e+00> : vector<256x256xf32>
    %4 = tpu.matmul %3, %2, %cst_5 {dimension_numbers = #tpu.dot_dimension_numbers<[1], [0], [0], [1], [0, 0, 1, 1], [], []>} : vector<256x256xf32>, vector<256x256xf32>, vector<256x256xf32> -> vector<256x256xf32>
    %cst_6 = arith.constant 0.000000e+00 : f32
    %5 = vector.broadcast %cst_6 : f32 to vector<256x256xf32>
    %6 = arith.minimumf %4, %5 : vector<256x256xf32>
    %cst_7 = arith.constant 2.000000e-01 : f32
    %7 = vector.broadcast %cst_7 : f32 to vector<256x256xf32>
    %8 = arith.mulf %7, %6 : vector<256x256xf32>
    %9 = math.exp %8 : vector<256x256xf32>
    %cst_8 = arith.constant 1.000000e+00 : f32
    %10 = vector.broadcast %cst_8 : f32 to vector<256x256xf32>
    %11 = arith.subf %9, %10 : vector<256x256xf32>
    %cst_9 = arith.constant 0.000000e+00 : f32
    %12 = vector.broadcast %cst_9 : f32 to vector<256x256xf32>
    %13 = arith.cmpf oge, %4, %12 : vector<256x256xf32>
    %14 = arith.select %13, %4, %11 : vector<256x256xi1>, vector<256x256xf32>
    %cst_10 = arith.constant dense<0.000000e+00> : vector<256xf32>
    %15 = vector.multi_reduction <add>, %14, %cst_10 [0] : vector<256x256xf32> to vector<256xf32>
    %16 = vector.shape_cast %15 : vector<256xf32> to vector<1x256xf32>
    %17 = arith.mulf %14, %14 : vector<256x256xf32>
    %cst_11 = arith.constant dense<0.000000e+00> : vector<256xf32>
    %18 = vector.multi_reduction <add>, %17, %cst_11 [0] : vector<256x256xf32> to vector<256xf32>
    %19 = vector.shape_cast %18 : vector<256xf32> to vector<1x256xf32>
    %cst_12 = arith.constant 3.906250e-03 : f32
    %20 = vector.broadcast %cst_12 : f32 to vector<1x256xf32>
    %21 = arith.mulf %16, %20 : vector<1x256xf32>
    %cst_13 = arith.constant 3.906250e-03 : f32
    %22 = vector.broadcast %cst_13 : f32 to vector<1x256xf32>
    %23 = arith.mulf %19, %22 : vector<1x256xf32>
    %24 = arith.mulf %21, %21 : vector<1x256xf32>
    %25 = arith.subf %23, %24 : vector<1x256xf32>
    %cst_14 = arith.constant 0.000000e+00 : f32
    %26 = vector.broadcast %cst_14 : f32 to vector<1x256xf32>
    %27 = arith.maximumf %25, %26 : vector<1x256xf32>
    %28 = vector.broadcast %21 : vector<1x256xf32> to vector<256x256xf32>
    %29 = arith.subf %14, %28 : vector<256x256xf32>
    %cst_15 = arith.constant 9.99999974E-6 : f32
    %30 = vector.broadcast %cst_15 : f32 to vector<1x256xf32>
    %31 = arith.addf %27, %30 : vector<1x256xf32>
    %32 = math.rsqrt %31 : vector<1x256xf32>
    %33 = vector.broadcast %32 : vector<1x256xf32> to vector<256x256xf32>
    %34 = arith.mulf %29, %33 : vector<256x256xf32>
    %c0_16 = arith.constant 0 : index
    %c0_17 = arith.constant 0 : index
    %35 = vector.load %arg6[%c0_16, %c0_17] : memref<256x256xf32, #tpu.memory_space<vmem>>, vector<256x256xf32>
    tpu.vector_store %arg6[%c0_16, %c0_17], %34 {strides = array<i32>} : memref<256x256xf32, #tpu.memory_space<vmem>>, vector<256x256xf32>,
    %c0_18 = arith.constant 0 : index
    %c0_19 = arith.constant 0 : index
    %36 = vector.load %arg3[%c0_18, %c0_19] : memref<256x256xf32, #tpu.memory_space<vmem>>, vector<256x256xf32>
    %cst_20 = arith.constant dense<0.000000e+00> : vector<256x256xf32>
    %37 = tpu.matmul %34, %36, %cst_20 {dimension_numbers = #tpu.dot_dimension_numbers<[1], [0], [0], [1], [0, 0, 1, 1], [], []>} : vector<256x256xf32>, vector<256x256xf32>, vector<256x256xf32> -> vector<256x256xf32>
    %c0_21 = arith.constant 0 : index
    %c0_22 = arith.constant 0 : index
    %38 = vector.load %arg1[%c0_21, %c0_22] : memref<256x256xf32, #tpu.memory_space<vmem>>, vector<256x256xf32>
    %cst_23 = arith.constant dense<0.000000e+00> : vector<256x256xf32>
    %39 = tpu.matmul %38, %37, %cst_23 {dimension_numbers = #tpu.dot_dimension_numbers<[1], [0], [0], [1], [0, 0, 1, 1], [], []>} : vector<256x256xf32>, vector<256x256xf32>, vector<256x256xf32> -> vector<256x256xf32>
    %cst_24 = arith.constant 0.000000e+00 : f32
    %40 = vector.broadcast %cst_24 : f32 to vector<256x256xf32>
    %41 = arith.minimumf %39, %40 : vector<256x256xf32>
    %cst_25 = arith.constant 2.000000e-01 : f32
    %42 = vector.broadcast %cst_25 : f32 to vector<256x256xf32>
    %43 = arith.mulf %42, %41 : vector<256x256xf32>
    %44 = math.exp %43 : vector<256x256xf32>
    %cst_26 = arith.constant 1.000000e+00 : f32
    %45 = vector.broadcast %cst_26 : f32 to vector<256x256xf32>
    %46 = arith.subf %44, %45 : vector<256x256xf32>
    %cst_27 = arith.constant 0.000000e+00 : f32
    %47 = vector.broadcast %cst_27 : f32 to vector<256x256xf32>
    %48 = arith.cmpf oge, %39, %47 : vector<256x256xf32>
    %49 = arith.select %48, %39, %46 : vector<256x256xi1>, vector<256x256xf32>
    %cst_28 = arith.constant dense<0.000000e+00> : vector<256xf32>
    %50 = vector.multi_reduction <add>, %49, %cst_28 [0] : vector<256x256xf32> to vector<256xf32>
    %51 = vector.shape_cast %50 : vector<256xf32> to vector<1x256xf32>
    %52 = arith.mulf %49, %49 : vector<256x256xf32>
    %cst_29 = arith.constant dense<0.000000e+00> : vector<256xf32>
    %53 = vector.multi_reduction <add>, %52, %cst_29 [0] : vector<256x256xf32> to vector<256xf32>
    %54 = vector.shape_cast %53 : vector<256xf32> to vector<1x256xf32>
    %cst_30 = arith.constant 3.906250e-03 : f32
    %55 = vector.broadcast %cst_30 : f32 to vector<1x256xf32>
    %56 = arith.mulf %51, %55 : vector<1x256xf32>
    %cst_31 = arith.constant 3.906250e-03 : f32
    %57 = vector.broadcast %cst_31 : f32 to vector<1x256xf32>
    %58 = arith.mulf %54, %57 : vector<1x256xf32>
    %59 = arith.mulf %56, %56 : vector<1x256xf32>
    %60 = arith.subf %58, %59 : vector<1x256xf32>
    %cst_32 = arith.constant 0.000000e+00 : f32
    %61 = vector.broadcast %cst_32 : f32 to vector<1x256xf32>
    %62 = arith.maximumf %60, %61 : vector<1x256xf32>
    %63 = vector.broadcast %56 : vector<1x256xf32> to vector<256x256xf32>
    %64 = arith.subf %49, %63 : vector<256x256xf32>
    %cst_33 = arith.constant 9.99999974E-6 : f32
    %65 = vector.broadcast %cst_33 : f32 to vector<1x256xf32>
    %66 = arith.addf %62, %65 : vector<1x256xf32>
    %67 = math.rsqrt %66 : vector<1x256xf32>
    %68 = vector.broadcast %67 : vector<1x256xf32> to vector<256x256xf32>
    %69 = arith.mulf %64, %68 : vector<256x256xf32>
    %c0_34 = arith.constant 0 : index
    %c0_35 = arith.constant 0 : index
    %70 = vector.load %arg7[%c0_34, %c0_35] : memref<256x256xf32, #tpu.memory_space<vmem>>, vector<256x256xf32>
    tpu.vector_store %arg7[%c0_34, %c0_35], %69 {strides = array<i32>} : memref<256x256xf32, #tpu.memory_space<vmem>>, vector<256x256xf32>,
    %c0_36 = arith.constant 0 : index
    %c0_37 = arith.constant 0 : index
    %71 = vector.load %arg4[%c0_36, %c0_37] : memref<256x256xf32, #tpu.memory_space<vmem>>, vector<256x256xf32>
    %cst_38 = arith.constant dense<0.000000e+00> : vector<256x256xf32>
    %72 = tpu.matmul %69, %71, %cst_38 {dimension_numbers = #tpu.dot_dimension_numbers<[1], [0], [0], [1], [0, 0, 1, 1], [], []>} : vector<256x256xf32>, vector<256x256xf32>, vector<256x256xf32> -> vector<256x256xf32>
    %c0_39 = arith.constant 0 : index
    %c0_40 = arith.constant 0 : index
    %73 = vector.load %arg1[%c0_39, %c0_40] : memref<256x256xf32, #tpu.memory_space<vmem>>, vector<256x256xf32>
    %cst_41 = arith.constant dense<0.000000e+00> : vector<256x256xf32>
    %74 = tpu.matmul %73, %72, %cst_41 {dimension_numbers = #tpu.dot_dimension_numbers<[1], [0], [0], [1], [0, 0, 1, 1], [], []>} : vector<256x256xf32>, vector<256x256xf32>, vector<256x256xf32> -> vector<256x256xf32>
    %cst_42 = arith.constant 0.000000e+00 : f32
    %75 = vector.broadcast %cst_42 : f32 to vector<256x256xf32>
    %76 = arith.minimumf %74, %75 : vector<256x256xf32>
    %cst_43 = arith.constant 2.000000e-01 : f32
    %77 = vector.broadcast %cst_43 : f32 to vector<256x256xf32>
    %78 = arith.mulf %77, %76 : vector<256x256xf32>
    %79 = math.exp %78 : vector<256x256xf32>
    %cst_44 = arith.constant 1.000000e+00 : f32
    %80 = vector.broadcast %cst_44 : f32 to vector<256x256xf32>
    %81 = arith.subf %79, %80 : vector<256x256xf32>
    %cst_45 = arith.constant 0.000000e+00 : f32
    %82 = vector.broadcast %cst_45 : f32 to vector<256x256xf32>
    %83 = arith.cmpf oge, %74, %82 : vector<256x256xf32>
    %84 = arith.select %83, %74, %81 : vector<256x256xi1>, vector<256x256xf32>
    %cst_46 = arith.constant dense<0.000000e+00> : vector<256xf32>
    %85 = vector.multi_reduction <add>, %84, %cst_46 [0] : vector<256x256xf32> to vector<256xf32>
    %86 = vector.shape_cast %85 : vector<256xf32> to vector<1x256xf32>
    %87 = arith.mulf %84, %84 : vector<256x256xf32>
    %cst_47 = arith.constant dense<0.000000e+00> : vector<256xf32>
    %88 = vector.multi_reduction <add>, %87, %cst_47 [0] : vector<256x256xf32> to vector<256xf32>
    %89 = vector.shape_cast %88 : vector<256xf32> to vector<1x256xf32>
    %cst_48 = arith.constant 3.906250e-03 : f32
    %90 = vector.broadcast %cst_48 : f32 to vector<1x256xf32>
    %91 = arith.mulf %86, %90 : vector<1x256xf32>
    %cst_49 = arith.constant 3.906250e-03 : f32
    %92 = vector.broadcast %cst_49 : f32 to vector<1x256xf32>
    %93 = arith.mulf %89, %92 : vector<1x256xf32>
    %94 = arith.mulf %91, %91 : vector<1x256xf32>
    %95 = arith.subf %93, %94 : vector<1x256xf32>
    %cst_50 = arith.constant 0.000000e+00 : f32
    %96 = vector.broadcast %cst_50 : f32 to vector<1x256xf32>
    %97 = arith.maximumf %95, %96 : vector<1x256xf32>
    %98 = vector.broadcast %91 : vector<1x256xf32> to vector<256x256xf32>
    %99 = arith.subf %84, %98 : vector<256x256xf32>
    %cst_51 = arith.constant 9.99999974E-6 : f32
    %100 = vector.broadcast %cst_51 : f32 to vector<1x256xf32>
    %101 = arith.addf %97, %100 : vector<1x256xf32>
    %102 = math.rsqrt %101 : vector<1x256xf32>
    %103 = vector.broadcast %102 : vector<1x256xf32> to vector<256x256xf32>
    %104 = arith.mulf %99, %103 : vector<256x256xf32>
    %c0_52 = arith.constant 0 : index
    %c0_53 = arith.constant 0 : index
    %105 = vector.load %arg8[%c0_52, %c0_53] : memref<256x256xf32, #tpu.memory_space<vmem>>, vector<256x256xf32>
    tpu.vector_store %arg8[%c0_52, %c0_53], %104 {strides = array<i32>} : memref<256x256xf32, #tpu.memory_space<vmem>>, vector<256x256xf32>,
    %c0_54 = arith.constant 0 : index
    %c0_55 = arith.constant 0 : index
    %106 = vector.load %arg5[%c0_54, %c0_55] : memref<256x256xf32, #tpu.memory_space<vmem>>, vector<256x256xf32>
    %cst_56 = arith.constant dense<0.000000e+00> : vector<256x256xf32>
    %107 = tpu.matmul %104, %106, %cst_56 {dimension_numbers = #tpu.dot_dimension_numbers<[1], [0], [0], [1], [0, 0, 1, 1], [], []>} : vector<256x256xf32>, vector<256x256xf32>, vector<256x256xf32> -> vector<256x256xf32>
    %c0_57 = arith.constant 0 : index
    %c0_58 = arith.constant 0 : index
    %108 = vector.load %arg1[%c0_57, %c0_58] : memref<256x256xf32, #tpu.memory_space<vmem>>, vector<256x256xf32>
    %cst_59 = arith.constant dense<0.000000e+00> : vector<256x256xf32>
    %109 = tpu.matmul %108, %107, %cst_59 {dimension_numbers = #tpu.dot_dimension_numbers<[1], [0], [0], [1], [0, 0, 1, 1], [], []>} : vector<256x256xf32>, vector<256x256xf32>, vector<256x256xf32> -> vector<256x256xf32>
    %cst_60 = arith.constant 0.000000e+00 : f32
    %110 = vector.broadcast %cst_60 : f32 to vector<256x256xf32>
    %111 = arith.minimumf %109, %110 : vector<256x256xf32>
    %cst_61 = arith.constant 2.000000e-01 : f32
    %112 = vector.broadcast %cst_61 : f32 to vector<256x256xf32>
    %113 = arith.mulf %112, %111 : vector<256x256xf32>
    %114 = math.exp %113 : vector<256x256xf32>
    %cst_62 = arith.constant 1.000000e+00 : f32
    %115 = vector.broadcast %cst_62 : f32 to vector<256x256xf32>
    %116 = arith.subf %114, %115 : vector<256x256xf32>
    %cst_63 = arith.constant 0.000000e+00 : f32
    %117 = vector.broadcast %cst_63 : f32 to vector<256x256xf32>
    %118 = arith.cmpf oge, %109, %117 : vector<256x256xf32>
    %119 = arith.select %118, %109, %116 : vector<256x256xi1>, vector<256x256xf32>
    %cst_64 = arith.constant dense<0.000000e+00> : vector<256xf32>
    %120 = vector.multi_reduction <add>, %119, %cst_64 [0] : vector<256x256xf32> to vector<256xf32>
    %121 = vector.shape_cast %120 : vector<256xf32> to vector<1x256xf32>
    %122 = arith.mulf %119, %119 : vector<256x256xf32>
    %cst_65 = arith.constant dense<0.000000e+00> : vector<256xf32>
    %123 = vector.multi_reduction <add>, %122, %cst_65 [0] : vector<256x256xf32> to vector<256xf32>
    %124 = vector.shape_cast %123 : vector<256xf32> to vector<1x256xf32>
    %cst_66 = arith.constant 3.906250e-03 : f32
    %125 = vector.broadcast %cst_66 : f32 to vector<1x256xf32>
    %126 = arith.mulf %121, %125 : vector<1x256xf32>
    %cst_67 = arith.constant 3.906250e-03 : f32
    %127 = vector.broadcast %cst_67 : f32 to vector<1x256xf32>
    %128 = arith.mulf %124, %127 : vector<1x256xf32>
    %129 = arith.mulf %126, %126 : vector<1x256xf32>
    %130 = arith.subf %128, %129 : vector<1x256xf32>
    %cst_68 = arith.constant 0.000000e+00 : f32
    %131 = vector.broadcast %cst_68 : f32 to vector<1x256xf32>
    %132 = arith.maximumf %130, %131 : vector<1x256xf32>
    %133 = vector.broadcast %126 : vector<1x256xf32> to vector<256x256xf32>
    %134 = arith.subf %119, %133 : vector<256x256xf32>
    %cst_69 = arith.constant 9.99999974E-6 : f32
    %135 = vector.broadcast %cst_69 : f32 to vector<1x256xf32>
    %136 = arith.addf %132, %135 : vector<1x256xf32>
    %137 = math.rsqrt %136 : vector<1x256xf32>
    %138 = vector.broadcast %137 : vector<1x256xf32> to vector<256x256xf32>
    %139 = arith.mulf %134, %138 : vector<256x256xf32>
    %c0_70 = arith.constant 0 : index
    %c0_71 = arith.constant 0 : index
    %140 = vector.load %arg9[%c0_70, %c0_71] : memref<256x256xf32, #tpu.memory_space<vmem>>, vector<256x256xf32>
    tpu.vector_store %arg9[%c0_70, %c0_71], %139 {strides = array<i32>} : memref<256x256xf32, #tpu.memory_space<vmem>>, vector<256x256xf32>,
    return
  }
}

</mosaic_0001>

<llo_original>
// kernel: topo_forward.1
$region0: #{topo_forward.1}
  #allocation0 [shape = 'u32[]', space=smem, size = 0x4, offset = 0x4, fixed_abs, tag = 'smem constant byte address 0x4 - core index']
  #allocation1 [shape = 'u32[72,128]{1,0:T(1,128)}', space=vmem, size = 0x9000, scoped, tag = 'internal scratch']
  %s0 = inlined_call_operand.hbm [shape: f32[256,256], index: 0, kind: input, shape index: {}]
  %s1 = inlined_call_operand.hbm [shape: f32[256,256], index: 1, kind: input, shape index: {}]
  %s2 = inlined_call_operand.hbm [shape: f32[256,256], index: 2, kind: input, shape index: {}]
  %s3 = inlined_call_operand.hbm [shape: f32[256,256], index: 3, kind: input, shape index: {}]
  %s4 = inlined_call_operand.hbm [shape: f32[256,256], index: 4, kind: input, shape index: {}]
  %s5 = inlined_call_operand.hbm [shape: f32[256,256], index: 5, kind: input, shape index: {}]
  %s6 = inlined_call_operand.hbm [shape: f32[256,256], index: 6, kind: output, shape index: {0}]
  %s7 = inlined_call_operand.hbm [shape: f32[256,256], index: 7, kind: output, shape index: {1}]
  %s8 = inlined_call_operand.hbm [shape: f32[256,256], index: 8, kind: output, shape index: {2}]
  %s9 = inlined_call_operand.hbm [shape: f32[256,256], index: 9, kind: output, shape index: {3}]
  %10 = xla_tuple %s6, %s7, %s8, %s9
  %s11 = sld [smem:[#allocation0]]
  $region82: #{topo_forward.1} parent=0
    _
  %s13 = ssub.s32 1, %s11
  %s14 = scalar_select 0, %s13, %s11
  $region1: #{topo_forward.1} parent=0
    #allocation2 [shape = 'u8[262144]{0}', space=vmem, size = 0x40000, scoped, tag = 'input window, operand 0, single buffered']
    #allocation3 [shape = 's32[1]{0}', space=sflag, size = 0x4, scoped, tag = 'scoped memory for topo_forward.1']
    #allocation4 [shape = 's32[1]{0}', space=sflag, size = 0x4, scoped, tag = 'scoped memory for topo_forward.1']
    #allocation5 [shape = 'u8[262144]{0}', space=vmem, size = 0x40000, scoped, tag = 'input window, operand 1, single buffered']
    #allocation6 [shape = 's32[1]{0}', space=sflag, size = 0x4, scoped, tag = 'scoped memory for topo_forward.1']
    #allocation7 [shape = 'u8[262144]{0}', space=vmem, size = 0x40000, scoped, tag = 'input window, operand 2, single buffered']
    #allocation8 [shape = 'u8[262144]{0}', space=vmem, size = 0x40000, scoped, tag = 'input window, operand 3, single buffered']
    #allocation9 [shape = 's32[1]{0}', space=sflag, size = 0x4, scoped, tag = 'scoped memory for topo_forward.1']
    #allocation10 [shape = 'u8[262144]{0}', space=vmem, size = 0x40000, scoped, tag = 'input window, operand 4, single buffered']
    #allocation11 [shape = 'u8[262144]{0}', space=vmem, size = 0x40000, scoped, tag = 'input window, operand 5, single buffered']
    #allocation12 [shape = 's32[1]{0}', space=sflag, size = 0x4, scoped, tag = 'scoped memory for topo_forward.1']
    #allocation13 [shape = 'u8[262144]{0}', space=vmem, size = 0x40000, scoped, tag = 'output window, operand 0, single buffered']
    #allocation14 [shape = 'u8[262144]{0}', space=vmem, size = 0x40000, scoped, tag = 'output window, operand 1, single buffered']
    #allocation15 [shape = 's32[1]{0}', space=sflag, size = 0x4, scoped, tag = 'scoped memory for topo_forward.1']
    #allocation16 [shape = 'u8[262144]{0}', space=vmem, size = 0x40000, scoped, tag = 'output window, operand 2, single buffered']
    #allocation17 [shape = 'u8[262144]{0}', space=vmem, size = 0x40000, scoped, tag = 'output window, operand 3, single buffered']
    #allocation18 [shape = 's32[1]{0}', space=sflag, size = 0x4, scoped, tag = 'scoped memory for topo_forward.1']
    %15 = vsyncpa [#allocation3], 0
    %16 = vsyncpa [#allocation6], 0
    %17 = vsyncpa [#allocation9], 0
    %18 = vsyncpa [#allocation12], 0
    %19 = vsyncpa [#allocation4], 0
    %20 = vsyncpa [#allocation15], 0
    %21 = vsyncpa [#allocation18], 0
    // Predicated region
    $region2: #{topo_forward.1} parent=1 // pred_check
      _
    $region3: #{topo_forward.1} parent=1 // pred_check_branch
      %23 = sbr.rel (0) target = $region5
    $region4: #{topo_forward.1} parent=1 // pred_region
      %25 = vsyncadd [#allocation3], 0
      %s26 = sshll.u32 %s0, 4
      %s27 = int_to_ptr.hbm [resolvable:$true] %s26
      %s28 = sshll.u32 [#allocation2], 4
      %s29 = int_to_ptr.vmem [resolvable:$true] %s28
      %34 = dma.hbm_to_vmem [thread:$0]  %s27, 8192, %s29, [#allocation3], 256, 256, 16
    $region5: #{topo_forward.1} parent=1 // pred_fallthru
      _
    // Predicated region
    $region6: #{topo_forward.1} parent=1 // pred_check
      _
    $region7: #{topo_forward.1} parent=1 // pred_check_branch
      %36 = sbr.rel (0) target = $region9
    $region8: #{topo_forward.1} parent=1 // pred_region
      %38 = vsyncadd [#allocation6], 0
      %s39 = sshll.u32 %s1, 4
      %s40 = int_to_ptr.hbm [resolvable:$true] %s39
      %s41 = sshll.u32 [#allocation5], 4
      %s42 = int_to_ptr.vmem [resolvable:$true] %s41
      %47 = dma.hbm_to_vmem [thread:$0]  %s40, 8192, %s42, [#allocation6], 256, 256, 16
    $region9: #{topo_forward.1} parent=1 // pred_fallthru
      _
    // Predicated region
    $region10: #{topo_forward.1} parent=1 // pred_check
      _
    $region11: #{topo_forward.1} parent=1 // pred_check_branch
      %49 = sbr.rel (0) target = $region13
    $region12: #{topo_forward.1} parent=1 // pred_region
      %51 = vsyncadd [#allocation6], 0
      %s52 = sshll.u32 %s2, 4
      %s53 = int_to_ptr.hbm [resolvable:$true] %s52
      %s54 = sshll.u32 [#allocation7], 4
      %s55 = int_to_ptr.vmem [resolvable:$true] %s54
      %60 = dma.hbm_to_vmem [thread:$0]  %s53, 8192, %s55, [#allocation6], 256, 256, 16
    $region13: #{topo_forward.1} parent=1 // pred_fallthru
      _
    // Predicated region
    $region14: #{topo_forward.1} parent=1 // pred_check
      _
    $region15: #{topo_forward.1} parent=1 // pred_check_branch
      %62 = sbr.rel (0) target = $region17
    $region16: #{topo_forward.1} parent=1 // pred_region
      %64 = vsyncadd [#allocation9], 0
      %s65 = sshll.u32 %s3, 4
      %s66 = int_to_ptr.hbm [resolvable:$true] %s65
      %s67 = sshll.u32 [#allocation8], 4
      %s68 = int_to_ptr.vmem [resolvable:$true] %s67
      %73 = dma.hbm_to_vmem [thread:$0]  %s66, 8192, %s68, [#allocation9], 256, 256, 16
    $region17: #{topo_forward.1} parent=1 // pred_fallthru
      _
    // Predicated region
    $region18: #{topo_forward.1} parent=1 // pred_check
      _
    $region19: #{topo_forward.1} parent=1 // pred_check_branch
      %75 = sbr.rel (0) target = $region21
    $region20: #{topo_forward.1} parent=1 // pred_region
      %77 = vsyncadd [#allocation9], 0
      %s78 = sshll.u32 %s4, 4
      %s79 = int_to_ptr.hbm [resolvable:$true] %s78
      %s80 = sshll.u32 [#allocation10], 4
      %s81 = int_to_ptr.vmem [resolvable:$true] %s80
      %86 = dma.hbm_to_vmem [thread:$0]  %s79, 8192, %s81, [#allocation9], 256, 256, 16
    $region21: #{topo_forward.1} parent=1 // pred_fallthru
      _
    // Predicated region
    $region22: #{topo_forward.1} parent=1 // pred_check
      _
    $region23: #{topo_forward.1} parent=1 // pred_check_branch
      %88 = sbr.rel (0) target = $region25
    $region24: #{topo_forward.1} parent=1 // pred_region
      %90 = vsyncadd [#allocation12], 0
      %s91 = sshll.u32 %s5, 4
      %s92 = int_to_ptr.hbm [resolvable:$true] %s91
      %s93 = sshll.u32 [#allocation11], 4
      %s94 = int_to_ptr.vmem [resolvable:$true] %s93
      %99 = dma.hbm_to_vmem [thread:$0]  %s92, 8192, %s94, [#allocation12], 256, 256, 16
    $region25: #{topo_forward.1} parent=1 // pred_fallthru
      _
    // Predicated region
    $region26: #{topo_forward.1} parent=1 // pred_check
      _
    $region27: #{topo_forward.1} parent=1 // pred_check_branch
      %101 = sbr.rel (0) target = $region29
    $region28: #{topo_forward.1} parent=1 // pred_region
      %103 = dma.done [#allocation3], 8192
    $region29: #{topo_forward.1} parent=1 // pred_fallthru
      _
    // Predicated region
    $region30: #{topo_forward.1} parent=1 // pred_check
      _
    $region31: #{topo_forward.1} parent=1 // pred_check_branch
      %105 = sbr.rel (0) target = $region33
    $region32: #{topo_forward.1} parent=1 // pred_region
      %107 = dma.done [#allocation6], 8192
    $region33: #{topo_forward.1} parent=1 // pred_fallthru
      _
    // Predicated region
    $region34: #{topo_forward.1} parent=1 // pred_check
      _
    $region35: #{topo_forward.1} parent=1 // pred_check_branch
      %109 = sbr.rel (0) target = $region37
    $region36: #{topo_forward.1} parent=1 // pred_region
      %111 = dma.done [#allocation6], 8192
    $region37: #{topo_forward.1} parent=1 // pred_fallthru
      _
    // Predicated region
    $region38: #{topo_forward.1} parent=1 // pred_check
      _
    $region39: #{topo_forward.1} parent=1 // pred_check_branch
      %113 = sbr.rel (0) target = $region41
    $region40: #{topo_forward.1} parent=1 // pred_region
      %115 = dma.done [#allocation9], 8192
    $region41: #{topo_forward.1} parent=1 // pred_fallthru
      _
    // Predicated region
    $region42: #{topo_forward.1} parent=1 // pred_check
      _
    $region43: #{topo_forward.1} parent=1 // pred_check_branch
      %117 = sbr.rel (0) target = $region45
    $region44: #{topo_forward.1} parent=1 // pred_region
      %119 = dma.done [#allocation9], 8192
    $region45: #{topo_forward.1} parent=1 // pred_fallthru
      _
    // Predicated region
    $region46: #{topo_forward.1} parent=1 // pred_check
      _
    $region47: #{topo_forward.1} parent=1 // pred_check_branch
      %121 = sbr.rel (0) target = $region49
    $region48: #{topo_forward.1} parent=1 // pred_region
      %123 = dma.done [#allocation12], 8192
    $region49: #{topo_forward.1} parent=1 // pred_fallthru
      _
    %v124 = vld [vmem:[#allocation2] sm:$0xff]
    %v125 = vld [vmem:[#allocation2 + $0x8] sm:$0xff]
    %v126 = vld [vmem:[#allocation2 + $0x10] sm:$0xff]
    %v127 = vld [vmem:[#allocation2 + $0x18] sm:$0xff]
    %v128 = vld [vmem:[#allocation2 + $0x20] sm:$0xff]
    %v129 = vld [vmem:[#allocation2 + $0x28] sm:$0xff]
    %v130 = vld [vmem:[#allocation2 + $0x30] sm:$0xff]
    %v131 = vld [vmem:[#allocation2 + $0x38] sm:$0xff]
    %v132 = vld [vmem:[#allocation2 + $0x40] sm:$0xff]
    %v133 = vld [vmem:[#allocation2 + $0x48] sm:$0xff]
    %v134 = vld [vmem:[#allocation2 + $0x50] sm:$0xff]
    %v135 = vld [vmem:[#allocation2 + $0x58] sm:$0xff]
    %v136 = vld [vmem:[#allocation2 + $0x60] sm:$0xff]
    %v137 = vld [vmem:[#allocation2 + $0x68] sm:$0xff]
    %v138 = vld [vmem:[#allocation2 + $0x70] sm:$0xff]
    %v139 = vld [vmem:[#allocation2 + $0x78] sm:$0xff]
    %v140 = vld [vmem:[#allocation2 + $0x80] sm:$0xff]
    %v141 = vld [vmem:[#allocation2 + $0x88] sm:$0xff]
    %v142 = vld [vmem:[#allocation2 + $0x90] sm:$0xff]
    %v143 = vld [vmem:[#allocation2 + $0x98] sm:$0xff]
    %v144 = vld [vmem:[#allocation2 + $0xa0] sm:$0xff]
    %v145 = vld [vmem:[#allocation2 + $0xa8] sm:$0xff]
    %v146 = vld [vmem:[#allocation2 + $0xb0] sm:$0xff]
    %v147 = vld [vmem:[#allocation2 + $0xb8] sm:$0xff]
    %v148 = vld [vmem:[#allocation2 + $0xc0] sm:$0xff]
    %v149 = vld [vmem:[#allocation2 + $0xc8] sm:$0xff]
    %v150 = vld [vmem:[#allocation2 + $0xd0] sm:$0xff]
    %v151 = vld [vmem:[#allocation2 + $0xd8] sm:$0xff]
    %v152 = vld [vmem:[#allocation2 + $0xe0] sm:$0xff]
    %v153 = vld [vmem:[#allocation2 + $0xe8] sm:$0xff]
    %v154 = vld [vmem:[#allocation2 + $0xf0] sm:$0xff]
    %v155 = vld [vmem:[#allocation2 + $0xf8] sm:$0xff]
    %v156 = vld [vmem:[#allocation2 + $0x100] sm:$0xff]
    %v157 = vld [vmem:[#allocation2 + $0x108] sm:$0xff]
    %v158 = vld [vmem:[#allocation2 + $0x110] sm:$0xff]
    %v159 = vld [vmem:[#allocation2 + $0x118] sm:$0xff]
    %v160 = vld [vmem:[#allocation2 + $0x120] sm:$0xff]
    %v161 = vld [vmem:[#allocation2 + $0x128] sm:$0xff]
    %v162 = vld [vmem:[#allocation2 + $0x130] sm:$0xff]
    %v163 = vld [vmem:[#allocation2 + $0x138] sm:$0xff]
    %v164 = vld [vmem:[#allocation2 + $0x140] sm:$0xff]
    %v165 = vld [vmem:[#allocation2 + $0x148] sm:$0xff]
    %v166 = vld [vmem:[#allocation2 + $0x150] sm:$0xff]
    %v167 = vld [vmem:[#allocation2 + $0x158] sm:$0xff]
    %v168 = vld [vmem:[#allocation2 + $0x160] sm:$0xff]
    %v169 = vld [vmem:[#allocation2 + $0x168] sm:$0xff]
    %v170 = vld [vmem:[#allocation2 + $0x170] sm:$0xff]
    %v171 = vld [vmem:[#allocation2 + $0x178] sm:$0xff]
    %v172 = vld [vmem:[#allocation2 + $0x180] sm:$0xff]
    %v173 = vld [vmem:[#allocation2 + $0x188] sm:$0xff]
    %v174 = vld [vmem:[#allocation2 + $0x190] sm:$0xff]
    %v175 = vld [vmem:[#allocation2 + $0x198] sm:$0xff]
    %v176 = vld [vmem:[#allocation2 + $0x1a0] sm:$0xff]
    %v177 = vld [vmem:[#allocation2 + $0x1a8] sm:$0xff]
    %v178 = vld [vmem:[#allocation2 + $0x1b0] sm:$0xff]
    %v179 = vld [vmem:[#allocation2 + $0x1b8] sm:$0xff]
    %v180 = vld [vmem:[#allocation2 + $0x1c0] sm:$0xff]
    %v181 = vld [vmem:[#allocation2 + $0x1c8] sm:$0xff]
    %v182 = vld [vmem:[#allocation2 + $0x1d0] sm:$0xff]
    %v183 = vld [vmem:[#allocation2 + $0x1d8] sm:$0xff]
    %v184 = vld [vmem:[#allocation2 + $0x1e0] sm:$0xff]
    %v185 = vld [vmem:[#allocation2 + $0x1e8] sm:$0xff]
    %v186 = vld [vmem:[#allocation2 + $0x1f0] sm:$0xff]
    %v187 = vld [vmem:[#allocation2 + $0x1f8] sm:$0xff]
    %v188 = vld [vmem:[#allocation7] sm:$0xff]
    %v189 = vld [vmem:[#allocation7 + $0x8] sm:$0xff]
    %v190 = vld [vmem:[#allocation7 + $0x10] sm:$0xff]
    %v191 = vld [vmem:[#allocation7 + $0x18] sm:$0xff]
    %v192 = vld [vmem:[#allocation7 + $0x20] sm:$0xff]
    %v193 = vld [vmem:[#allocation7 + $0x28] sm:$0xff]
    %v194 = vld [vmem:[#allocation7 + $0x30] sm:$0xff]
    %v195 = vld [vmem:[#allocation7 + $0x38] sm:$0xff]
    %v196 = vld [vmem:[#allocation7 + $0x40] sm:$0xff]
    %v197 = vld [vmem:[#allocation7 + $0x48] sm:$0xff]
    %v198 = vld [vmem:[#allocation7 + $0x50] sm:$0xff]
    %v199 = vld [vmem:[#allocation7 + $0x58] sm:$0xff]
    %v200 = vld [vmem:[#allocation7 + $0x60] sm:$0xff]
    %v201 = vld [vmem:[#allocation7 + $0x68] sm:$0xff]
    %v202 = vld [vmem:[#allocation7 + $0x70] sm:$0xff]
    %v203 = vld [vmem:[#allocation7 + $0x78] sm:$0xff]
    %v204 = vld [vmem:[#allocation7 + $0x80] sm:$0xff]
    %v205 = vld [vmem:[#allocation7 + $0x88] sm:$0xff]
    %v206 = vld [vmem:[#allocation7 + $0x90] sm:$0xff]
    %v207 = vld [vmem:[#allocation7 + $0x98] sm:$0xff]
    %v208 = vld [vmem:[#allocation7 + $0xa0] sm:$0xff]
    %v209 = vld [vmem:[#allocation7 + $0xa8] sm:$0xff]
    %v210 = vld [vmem:[#allocation7 + $0xb0] sm:$0xff]
    %v211 = vld [vmem:[#allocation7 + $0xb8] sm:$0xff]
    %v212 = vld [vmem:[#allocation7 + $0xc0] sm:$0xff]
    %v213 = vld [vmem:[#allocation7 + $0xc8] sm:$0xff]
    %v214 = vld [vmem:[#allocation7 + $0xd0] sm:$0xff]
    %v215 = vld [vmem:[#allocation7 + $0xd8] sm:$0xff]
    %v216 = vld [vmem:[#allocation7 + $0xe0] sm:$0xff]
    %v217 = vld [vmem:[#allocation7 + $0xe8] sm:$0xff]
    %v218 = vld [vmem:[#allocation7 + $0xf0] sm:$0xff]
    %v219 = vld [vmem:[#allocation7 + $0xf8] sm:$0xff]
    %v220 = vld [vmem:[#allocation7 + $0x100] sm:$0xff]
    %v221 = vld [vmem:[#allocation7 + $0x108] sm:$0xff]
    %v222 = vld [vmem:[#allocation7 + $0x110] sm:$0xff]
    %v223 = vld [vmem:[#allocation7 + $0x118] sm:$0xff]
    %v224 = vld [vmem:[#allocation7 + $0x120] sm:$0xff]
    %v225 = vld [vmem:[#allocation7 + $0x128] sm:$0xff]
    %v226 = vld [vmem:[#allocation7 + $0x130] sm:$0xff]
    %v227 = vld [vmem:[#allocation7 + $0x138] sm:$0xff]
    %v228 = vld [vmem:[#allocation7 + $0x140] sm:$0xff]
    %v229 = vld [vmem:[#allocation7 + $0x148] sm:$0xff]
    %v230 = vld [vmem:[#allocation7 + $0x150] sm:$0xff]
    %v231 = vld [vmem:[#allocation7 + $0x158] sm:$0xff]
    %v232 = vld [vmem:[#allocation7 + $0x160] sm:$0xff]
    %v233 = vld [vmem:[#allocation7 + $0x168] sm:$0xff]
    %v234 = vld [vmem:[#allocation7 + $0x170] sm:$0xff]
    %v235 = vld [vmem:[#allocation7 + $0x178] sm:$0xff]
    %v236 = vld [vmem:[#allocation7 + $0x180] sm:$0xff]
    %v237 = vld [vmem:[#allocation7 + $0x188] sm:$0xff]
    %v238 = vld [vmem:[#allocation7 + $0x190] sm:$0xff]
    %v239 = vld [vmem:[#allocation7 + $0x198] sm:$0xff]
    %v240 = vld [vmem:[#allocation7 + $0x1a0] sm:$0xff]
    %v241 = vld [vmem:[#allocation7 + $0x1a8] sm:$0xff]
    %v242 = vld [vmem:[#allocation7 + $0x1b0] sm:$0xff]
    %v243 = vld [vmem:[#allocation7 + $0x1b8] sm:$0xff]
    %v244 = vld [vmem:[#allocation7 + $0x1c0] sm:$0xff]
    %v245 = vld [vmem:[#allocation7 + $0x1c8] sm:$0xff]
    %v246 = vld [vmem:[#allocation7 + $0x1d0] sm:$0xff]
    %v247 = vld [vmem:[#allocation7 + $0x1d8] sm:$0xff]
    %v248 = vld [vmem:[#allocation7 + $0x1e0] sm:$0xff]
    %v249 = vld [vmem:[#allocation7 + $0x1e8] sm:$0xff]
    %v250 = vld [vmem:[#allocation7 + $0x1f0] sm:$0xff]
    %v251 = vld [vmem:[#allocation7 + $0x1f8] sm:$0xff]
    %252 = vmatpush.msra.mxu0 %v218
    %253 = vmatpush.msra.mxu0 %v216
    %254 = vmatpush.msra.mxu0 %v214
    %255 = vmatpush.msra.mxu0 %v212
    %256 = vmatpush.msra.mxu0 %v210
    %257 = vmatpush.msra.mxu0 %v208
    %258 = vmatpush.msra.mxu0 %v206
    %259 = vmatpush.msra.mxu0 %v204
    %260 = vmatpush.msra.mxu0 %v202
    %261 = vmatpush.msra.mxu0 %v200
    %262 = vmatpush.msra.mxu0 %v198
    %263 = vmatpush.msra.mxu0 %v196
    %264 = vmatpush.msra.mxu0 %v194
    %265 = vmatpush.msra.mxu0 %v192
    %266 = vmatpush.msra.mxu0 %v190
    %267 = vmatpush.msra.mxu0 %v188
    %268 = vmatmul.f32.gmra.mxu0 %v124
    %v269 = vpop.f32.mrf.mxu0
    %v270 = vadd.f32 0.0, %v269
    %271 = vmatmul.f32.gmra.mxu0 %v126
    %v272 = vpop.f32.mrf.mxu0
    %v273 = vadd.f32 0.0, %v272
    %274 = vmatmul.f32.gmra.mxu0 %v128
    %v275 = vpop.f32.mrf.mxu0
    %v276 = vadd.f32 0.0, %v275
    %277 = vmatmul.f32.gmra.mxu0 %v130
    %v278 = vpop.f32.mrf.mxu0
    %v279 = vadd.f32 0.0, %v278
    %280 = vmatmul.f32.gmra.mxu0 %v132
    %v281 = vpop.f32.mrf.mxu0
    %v282 = vadd.f32 0.0, %v281
    %283 = vmatmul.f32.gmra.mxu0 %v134
    %v284 = vpop.f32.mrf.mxu0
    %v285 = vadd.f32 0.0, %v284
    %286 = vmatmul.f32.gmra.mxu0 %v136
    %v287 = vpop.f32.mrf.mxu0
    %v288 = vadd.f32 0.0, %v287
    %289 = vmatmul.f32.gmra.mxu0 %v138
    %v290 = vpop.f32.mrf.mxu0
    %v291 = vadd.f32 0.0, %v290
    %292 = vmatmul.f32.gmra.mxu0 %v140
    %v293 = vpop.f32.mrf.mxu0
    %v294 = vadd.f32 0.0, %v293
    %295 = vmatmul.f32.gmra.mxu0 %v142
    %v296 = vpop.f32.mrf.mxu0
    %v297 = vadd.f32 0.0, %v296
    %298 = vmatmul.f32.gmra.mxu0 %v144
    %v299 = vpop.f32.mrf.mxu0
    %v300 = vadd.f32 0.0, %v299
    %301 = vmatmul.f32.gmra.mxu0 %v146
    %v302 = vpop.f32.mrf.mxu0
    %v303 = vadd.f32 0.0, %v302
    %304 = vmatmul.f32.gmra.mxu0 %v148
    %v305 = vpop.f32.mrf.mxu0
    %v306 = vadd.f32 0.0, %v305
    %307 = vmatmul.f32.gmra.mxu0 %v150
    %v308 = vpop.f32.mrf.mxu0
    %v309 = vadd.f32 0.0, %v308
    %310 = vmatmul.f32.gmra.mxu0 %v152
    %v311 = vpop.f32.mrf.mxu0
    %v312 = vadd.f32 0.0, %v311
    %313 = vmatmul.f32.gmra.mxu0 %v154
    %v314 = vpop.f32.mrf.mxu0
    %v315 = vadd.f32 0.0, %v314
    %316 = vmatmul.f32.gmra.mxu0 %v156
    %v317 = vpop.f32.mrf.mxu0
    %v318 = vadd.f32 0.0, %v317
    %319 = vmatmul.f32.gmra.mxu0 %v158
    %v320 = vpop.f32.mrf.mxu0
    %v321 = vadd.f32 0.0, %v320
    %322 = vmatmul.f32.gmra.mxu0 %v160
    %v323 = vpop.f32.mrf.mxu0
    %v324 = vadd.f32 0.0, %v323
    %325 = vmatmul.f32.gmra.mxu0 %v162
    %v326 = vpop.f32.mrf.mxu0
    %v327 = vadd.f32 0.0, %v326
    %328 = vmatmul.f32.gmra.mxu0 %v164
    %v329 = vpop.f32.mrf.mxu0
    %v330 = vadd.f32 0.0, %v329
    %331 = vmatmul.f32.gmra.mxu0 %v166
    %v332 = vpop.f32.mrf.mxu0
    %v333 = vadd.f32 0.0, %v332
    %334 = vmatmul.f32.gmra.mxu0 %v168
    %v335 = vpop.f32.mrf.mxu0
    %v336 = vadd.f32 0.0, %v335
    %337 = vmatmul.f32.gmra.mxu0 %v170
    %v338 = vpop.f32.mrf.mxu0
    %v339 = vadd.f32 0.0, %v338
    %340 = vmatmul.f32.gmra.mxu0 %v172
    %v341 = vpop.f32.mrf.mxu0
    %v342 = vadd.f32 0.0, %v341
    %343 = vmatmul.f32.gmra.mxu0 %v174
    %v344 = vpop.f32.mrf.mxu0
    %v345 = vadd.f32 0.0, %v344
    %346 = vmatmul.f32.gmra.mxu0 %v176
    %v347 = vpop.f32.mrf.mxu0
    %v348 = vadd.f32 0.0, %v347
    %349 = vmatmul.f32.gmra.mxu0 %v178
    %v350 = vpop.f32.mrf.mxu0
    %v351 = vadd.f32 0.0, %v350
    %352 = vmatmul.f32.gmra.mxu0 %v180
    %v353 = vpop.f32.mrf.mxu0
    %v354 = vadd.f32 0.0, %v353
    %355 = vmatmul.f32.gmra.mxu0 %v182
    %v356 = vpop.f32.mrf.mxu0
    %v357 = vadd.f32 0.0, %v356
    %358 = vmatmul.f32.gmra.mxu0 %v184
    %v359 = vpop.f32.mrf.mxu0
    %v360 = vadd.f32 0.0, %v359
    %361 = vmatmul.f32.gmra.mxu0 %v186
    %v362 = vpop.f32.mrf.mxu0
    %v363 = vadd.f32 0.0, %v362
    %364 = vdwg.mxu0
    %365 = vmatpush.msra.mxu0 %v250
    %366 = vmatpush.msra.mxu0 %v248
    %367 = vmatpush.msra.mxu0 %v246
    %368 = vmatpush.msra.mxu0 %v244
    %369 = vmatpush.msra.mxu0 %v242
    %370 = vmatpush.msra.mxu0 %v240
    %371 = vmatpush.msra.mxu0 %v238
    %372 = vmatpush.msra.mxu0 %v236
    %373 = vmatpush.msra.mxu0 %v234
    %374 = vmatpush.msra.mxu0 %v232
    %375 = vmatpush.msra.mxu0 %v230
    %376 = vmatpush.msra.mxu0 %v228
    %377 = vmatpush.msra.mxu0 %v226
    %378 = vmatpush.msra.mxu0 %v224
    %379 = vmatpush.msra.mxu0 %v222
    %380 = vmatpush.msra.mxu0 %v220
    %381 = vmatmul.f32.gmra.mxu0 %v125
    %v382 = vpop.f32.mrf.mxu0
    %v383 = vadd.f32 %v270, %v382
    %384 = vmatmul.f32.gmra.mxu0 %v127
    %v385 = vpop.f32.mrf.mxu0
    %v386 = vadd.f32 %v273, %v385
    %387 = vmatmul.f32.gmra.mxu0 %v129
    %v388 = vpop.f32.mrf.mxu0
    %v389 = vadd.f32 %v276, %v388
    %390 = vmatmul.f32.gmra.mxu0 %v131
    %v391 = vpop.f32.mrf.mxu0
    %v392 = vadd.f32 %v279, %v391
    %393 = vmatmul.f32.gmra.mxu0 %v133
    %v394 = vpop.f32.mrf.mxu0
    %v395 = vadd.f32 %v282, %v394
    %396 = vmatmul.f32.gmra.mxu0 %v135
    %v397 = vpop.f32.mrf.mxu0
    %v398 = vadd.f32 %v285, %v397
    %399 = vmatmul.f32.gmra.mxu0 %v137
    %v400 = vpop.f32.mrf.mxu0
    %v401 = vadd.f32 %v288, %v400
    %402 = vmatmul.f32.gmra.mxu0 %v139
    %v403 = vpop.f32.mrf.mxu0
    %v404 = vadd.f32 %v291, %v403
    %405 = vmatmul.f32.gmra.mxu0 %v141
    %v406 = vpop.f32.mrf.mxu0
    %v407 = vadd.f32 %v294, %v406
    %408 = vmatmul.f32.gmra.mxu0 %v143
    %v409 = vpop.f32.mrf.mxu0
    %v410 = vadd.f32 %v297, %v409
    %411 = vmatmul.f32.gmra.mxu0 %v145
    %v412 = vpop.f32.mrf.mxu0
    %v413 = vadd.f32 %v300, %v412
    %414 = vmatmul.f32.gmra.mxu0 %v147
    %v415 = vpop.f32.mrf.mxu0
    %v416 = vadd.f32 %v303, %v415
    %417 = vmatmul.f32.gmra.mxu0 %v149
    %v418 = vpop.f32.mrf.mxu0
    %v419 = vadd.f32 %v306, %v418
    %420 = vmatmul.f32.gmra.mxu0 %v151
    %v421 = vpop.f32.mrf.mxu0
    %v422 = vadd.f32 %v309, %v421
    %423 = vmatmul.f32.gmra.mxu0 %v153
    %v424 = vpop.f32.mrf.mxu0
    %v425 = vadd.f32 %v312, %v424
    %426 = vmatmul.f32.gmra.mxu0 %v155
    %v427 = vpop.f32.mrf.mxu0
    %v428 = vadd.f32 %v315, %v427
    %429 = vmatmul.f32.gmra.mxu0 %v157
    %v430 = vpop.f32.mrf.mxu0
    %v431 = vadd.f32 %v318, %v430
    %432 = vmatmul.f32.gmra.mxu0 %v159
    %v433 = vpop.f32.mrf.mxu0
    %v434 = vadd.f32 %v321, %v433
    %435 = vmatmul.f32.gmra.mxu0 %v161
    %v436 = vpop.f32.mrf.mxu0
    %v437 = vadd.f32 %v324, %v436
    %438 = vmatmul.f32.gmra.mxu0 %v163
    %v439 = vpop.f32.mrf.mxu0
    %v440 = vadd.f32 %v327, %v439
    %441 = vmatmul.f32.gmra.mxu0 %v165
    %v442 = vpop.f32.mrf.mxu0
    %v443 = vadd.f32 %v330, %v442
    %444 = vmatmul.f32.gmra.mxu0 %v167
    %v445 = vpop.f32.mrf.mxu0
    %v446 = vadd.f32 %v333, %v445
    %447 = vmatmul.f32.gmra.mxu0 %v169
    %v448 = vpop.f32.mrf.mxu0
    %v449 = vadd.f32 %v336, %v448
    %450 = vmatmul.f32.gmra.mxu0 %v171
    %v451 = vpop.f32.mrf.mxu0
    %v452 = vadd.f32 %v339, %v451
    %453 = vmatmul.f32.gmra.mxu0 %v173
    %v454 = vpop.f32.mrf.mxu0
    %v455 = vadd.f32 %v342, %v454
    %456 = vmatmul.f32.gmra.mxu0 %v175
    %v457 = vpop.f32.mrf.mxu0
    %v458 = vadd.f32 %v345, %v457
    %459 = vmatmul.f32.gmra.mxu0 %v177
    %v460 = vpop.f32.mrf.mxu0
    %v461 = vadd.f32 %v348, %v460
    %462 = vmatmul.f32.gmra.mxu0 %v179
    %v463 = vpop.f32.mrf.mxu0
    %v464 = vadd.f32 %v351, %v463
    %465 = vmatmul.f32.gmra.mxu0 %v181
    %v466 = vpop.f32.mrf.mxu0
    %v467 = vadd.f32 %v354, %v466
    %468 = vmatmul.f32.gmra.mxu0 %v183
    %v469 = vpop.f32.mrf.mxu0
    %v470 = vadd.f32 %v357, %v469
    %471 = vmatmul.f32.gmra.mxu0 %v185
    %v472 = vpop.f32.mrf.mxu0
    %v473 = vadd.f32 %v360, %v472
    %474 = vmatmul.f32.gmra.mxu0 %v187
    %v475 = vpop.f32.mrf.mxu0
    %v476 = vadd.f32 %v363, %v475
    %477 = vdwg.mxu0
    %478 = vmatpush.msra.mxu0 %v219
    %479 = vmatpush.msra.mxu0 %v217
    %480 = vmatpush.msra.mxu0 %v215
    %481 = vmatpush.msra.mxu0 %v213
    %482 = vmatpush.msra.mxu0 %v211
    %483 = vmatpush.msra.mxu0 %v209
    %484 = vmatpush.msra.mxu0 %v207
    %485 = vmatpush.msra.mxu0 %v205
    %486 = vmatpush.msra.mxu0 %v203
    %487 = vmatpush.msra.mxu0 %v201
    %488 = vmatpush.msra.mxu0 %v199
    %489 = vmatpush.msra.mxu0 %v197
    %490 = vmatpush.msra.mxu0 %v195
    %491 = vmatpush.msra.mxu0 %v193
    %492 = vmatpush.msra.mxu0 %v191
    %493 = vmatpush.msra.mxu0 %v189
    %494 = vmatmul.f32.gmra.mxu0 %v124
    %v495 = vpop.f32.mrf.mxu0
    %v496 = vadd.f32 0.0, %v495
    %497 = vmatmul.f32.gmra.mxu0 %v126
    %v498 = vpop.f32.mrf.mxu0
    %v499 = vadd.f32 0.0, %v498
    %500 = vmatmul.f32.gmra.mxu0 %v128
    %v501 = vpop.f32.mrf.mxu0
    %v502 = vadd.f32 0.0, %v501
    %503 = vmatmul.f32.gmra.mxu0 %v130
    %v504 = vpop.f32.mrf.mxu0
    %v505 = vadd.f32 0.0, %v504
    %506 = vmatmul.f32.gmra.mxu0 %v132
    %v507 = vpop.f32.mrf.mxu0
    %v508 = vadd.f32 0.0, %v507
    %509 = vmatmul.f32.gmra.mxu0 %v134
    %v510 = vpop.f32.mrf.mxu0
    %v511 = vadd.f32 0.0, %v510
    %512 = vmatmul.f32.gmra.mxu0 %v136
    %v513 = vpop.f32.mrf.mxu0
    %v514 = vadd.f32 0.0, %v513
    %515 = vmatmul.f32.gmra.mxu0 %v138
    %v516 = vpop.f32.mrf.mxu0
    %v517 = vadd.f32 0.0, %v516
    %518 = vmatmul.f32.gmra.mxu0 %v140
    %v519 = vpop.f32.mrf.mxu0
    %v520 = vadd.f32 0.0, %v519
    %521 = vmatmul.f32.gmra.mxu0 %v142
    %v522 = vpop.f32.mrf.mxu0
    %v523 = vadd.f32 0.0, %v522
    %524 = vmatmul.f32.gmra.mxu0 %v144
    %v525 = vpop.f32.mrf.mxu0
    %v526 = vadd.f32 0.0, %v525
    %527 = vmatmul.f32.gmra.mxu0 %v146
    %v528 = vpop.f32.mrf.mxu0
    %v529 = vadd.f32 0.0, %v528
    %530 = vmatmul.f32.gmra.mxu0 %v148
    %v531 = vpop.f32.mrf.mxu0
    %v532 = vadd.f32 0.0, %v531
    %533 = vmatmul.f32.gmra.mxu0 %v150
    %v534 = vpop.f32.mrf.mxu0
    %v535 = vadd.f32 0.0, %v534
    %536 = vmatmul.f32.gmra.mxu0 %v152
    %v537 = vpop.f32.mrf.mxu0
    %v538 = vadd.f32 0.0, %v537
    %539 = vmatmul.f32.gmra.mxu0 %v154
    %v540 = vpop.f32.mrf.mxu0
    %v541 = vadd.f32 0.0, %v540
    %542 = vmatmul.f32.gmra.mxu0 %v156
    %v543 = vpop.f32.mrf.mxu0
    %v544 = vadd.f32 0.0, %v543
    %545 = vmatmul.f32.gmra.mxu0 %v158
    %v546 = vpop.f32.mrf.mxu0
    %v547 = vadd.f32 0.0, %v546
    %548 = vmatmul.f32.gmra.mxu0 %v160
    %v549 = vpop.f32.mrf.mxu0
    %v550 = vadd.f32 0.0, %v549
    %551 = vmatmul.f32.gmra.mxu0 %v162
    %v552 = vpop.f32.mrf.mxu0
    %v553 = vadd.f32 0.0, %v552
    %554 = vmatmul.f32.gmra.mxu0 %v164
    %v555 = vpop.f32.mrf.mxu0
    %v556 = vadd.f32 0.0, %v555
    %557 = vmatmul.f32.gmra.mxu0 %v166
    %v558 = vpop.f32.mrf.mxu0
    %v559 = vadd.f32 0.0, %v558
    %560 = vmatmul.f32.gmra.mxu0 %v168
    %v561 = vpop.f32.mrf.mxu0
    %v562 = vadd.f32 0.0, %v561
    %563 = vmatmul.f32.gmra.mxu0 %v170
    %v564 = vpop.f32.mrf.mxu0
    %v565 = vadd.f32 0.0, %v564
    %566 = vmatmul.f32.gmra.mxu0 %v172
    %v567 = vpop.f32.mrf.mxu0
    %v568 = vadd.f32 0.0, %v567
    %569 = vmatmul.f32.gmra.mxu0 %v174
    %v570 = vpop.f32.mrf.mxu0
    %v571 = vadd.f32 0.0, %v570
    %572 = vmatmul.f32.gmra.mxu0 %v176
    %v573 = vpop.f32.mrf.mxu0
    %v574 = vadd.f32 0.0, %v573
    %575 = vmatmul.f32.gmra.mxu0 %v178
    %v576 = vpop.f32.mrf.mxu0
    %v577 = vadd.f32 0.0, %v576
    %578 = vmatmul.f32.gmra.mxu0 %v180
    %v579 = vpop.f32.mrf.mxu0
    %v580 = vadd.f32 0.0, %v579
    %581 = vmatmul.f32.gmra.mxu0 %v182
    %v582 = vpop.f32.mrf.mxu0
    %v583 = vadd.f32 0.0, %v582
    %584 = vmatmul.f32.gmra.mxu0 %v184
    %v585 = vpop.f32.mrf.mxu0
    %v586 = vadd.f32 0.0, %v585
    %587 = vmatmul.f32.gmra.mxu0 %v186
    %v588 = vpop.f32.mrf.mxu0
    %v589 = vadd.f32 0.0, %v588
    %590 = vdwg.mxu0
    %591 = vmatpush.msra.mxu0 %v251
    %592 = vmatpush.msra.mxu0 %v249
    %593 = vmatpush.msra.mxu0 %v247
    %594 = vmatpush.msra.mxu0 %v245
    %595 = vmatpush.msra.mxu0 %v243
    %596 = vmatpush.msra.mxu0 %v241
    %597 = vmatpush.msra.mxu0 %v239
    %598 = vmatpush.msra.mxu0 %v237
    %599 = vmatpush.msra.mxu0 %v235
    %600 = vmatpush.msra.mxu0 %v233
    %601 = vmatpush.msra.mxu0 %v231
    %602 = vmatpush.msra.mxu0 %v229
    %603 = vmatpush.msra.mxu0 %v227
    %604 = vmatpush.msra.mxu0 %v225
    %605 = vmatpush.msra.mxu0 %v223
    %606 = vmatpush.msra.mxu0 %v221
    %607 = vmatmul.f32.gmra.mxu0 %v125
    %v608 = vpop.f32.mrf.mxu0
    %v609 = vadd.f32 %v496, %v608
    %610 = vmatmul.f32.gmra.mxu0 %v127
    %v611 = vpop.f32.mrf.mxu0
    %v612 = vadd.f32 %v499, %v611
    %613 = vmatmul.f32.gmra.mxu0 %v129
    %v614 = vpop.f32.mrf.mxu0
    %v615 = vadd.f32 %v502, %v614
    %616 = vmatmul.f32.gmra.mxu0 %v131
    %v617 = vpop.f32.mrf.mxu0
    %v618 = vadd.f32 %v505, %v617
    %619 = vmatmul.f32.gmra.mxu0 %v133
    %v620 = vpop.f32.mrf.mxu0
    %v621 = vadd.f32 %v508, %v620
    %622 = vmatmul.f32.gmra.mxu0 %v135
    %v623 = vpop.f32.mrf.mxu0
    %v624 = vadd.f32 %v511, %v623
    %625 = vmatmul.f32.gmra.mxu0 %v137
    %v626 = vpop.f32.mrf.mxu0
    %v627 = vadd.f32 %v514, %v626
    %628 = vmatmul.f32.gmra.mxu0 %v139
    %v629 = vpop.f32.mrf.mxu0
    %v630 = vadd.f32 %v517, %v629
    %631 = vmatmul.f32.gmra.mxu0 %v141
    %v632 = vpop.f32.mrf.mxu0
    %v633 = vadd.f32 %v520, %v632
    %634 = vmatmul.f32.gmra.mxu0 %v143
    %v635 = vpop.f32.mrf.mxu0
    %v636 = vadd.f32 %v523, %v635
    %637 = vmatmul.f32.gmra.mxu0 %v145
    %v638 = vpop.f32.mrf.mxu0
    %v639 = vadd.f32 %v526, %v638
    %640 = vmatmul.f32.gmra.mxu0 %v147
    %v641 = vpop.f32.mrf.mxu0
    %v642 = vadd.f32 %v529, %v641
    %643 = vmatmul.f32.gmra.mxu0 %v149
    %v644 = vpop.f32.mrf.mxu0
    %v645 = vadd.f32 %v532, %v644
    %646 = vmatmul.f32.gmra.mxu0 %v151
    %v647 = vpop.f32.mrf.mxu0
    %v648 = vadd.f32 %v535, %v647
    %649 = vmatmul.f32.gmra.mxu0 %v153
    %v650 = vpop.f32.mrf.mxu0
    %v651 = vadd.f32 %v538, %v650
    %652 = vmatmul.f32.gmra.mxu0 %v155
    %v653 = vpop.f32.mrf.mxu0
    %v654 = vadd.f32 %v541, %v653
    %655 = vmatmul.f32.gmra.mxu0 %v157
    %v656 = vpop.f32.mrf.mxu0
    %v657 = vadd.f32 %v544, %v656
    %658 = vmatmul.f32.gmra.mxu0 %v159
    %v659 = vpop.f32.mrf.mxu0
    %v660 = vadd.f32 %v547, %v659
    %661 = vmatmul.f32.gmra.mxu0 %v161
    %v662 = vpop.f32.mrf.mxu0
    %v663 = vadd.f32 %v550, %v662
    %664 = vmatmul.f32.gmra.mxu0 %v163
    %v665 = vpop.f32.mrf.mxu0
    %v666 = vadd.f32 %v553, %v665
    %667 = vmatmul.f32.gmra.mxu0 %v165
    %v668 = vpop.f32.mrf.mxu0
    %v669 = vadd.f32 %v556, %v668
    %670 = vmatmul.f32.gmra.mxu0 %v167
    %v671 = vpop.f32.mrf.mxu0
    %v672 = vadd.f32 %v559, %v671
    %673 = vmatmul.f32.gmra.mxu0 %v169
    %v674 = vpop.f32.mrf.mxu0
    %v675 = vadd.f32 %v562, %v674
    %676 = vmatmul.f32.gmra.mxu0 %v171
    %v677 = vpop.f32.mrf.mxu0
    %v678 = vadd.f32 %v565, %v677
    %679 = vmatmul.f32.gmra.mxu0 %v173
    %v680 = vpop.f32.mrf.mxu0
    %v681 = vadd.f32 %v568, %v680
    %682 = vmatmul.f32.gmra.mxu0 %v175
    %v683 = vpop.f32.mrf.mxu0
    %v684 = vadd.f32 %v571, %v683
    %685 = vmatmul.f32.gmra.mxu0 %v177
    %v686 = vpop.f32.mrf.mxu0
    %v687 = vadd.f32 %v574, %v686
    %688 = vmatmul.f32.gmra.mxu0 %v179
    %v689 = vpop.f32.mrf.mxu0
    %v690 = vadd.f32 %v577, %v689
    %691 = vmatmul.f32.gmra.mxu0 %v181
    %v692 = vpop.f32.mrf.mxu0
    %v693 = vadd.f32 %v580, %v692
    %694 = vmatmul.f32.gmra.mxu0 %v183
    %v695 = vpop.f32.mrf.mxu0
    %v696 = vadd.f32 %v583, %v695
    %697 = vmatmul.f32.gmra.mxu0 %v185
    %v698 = vpop.f32.mrf.mxu0
    %v699 = vadd.f32 %v586, %v698
    %700 = vmatmul.f32.gmra.mxu0 %v187
    %v701 = vpop.f32.mrf.mxu0
    %v702 = vadd.f32 %v589, %v701
    %703 = vdwg.mxu0
    %v704 = vld [vmem:[#allocation5] sm:$0xff]
    %v705 = vld [vmem:[#allocation5 + $0x8] sm:$0xff]
    %v706 = vld [vmem:[#allocation5 + $0x10] sm:$0xff]
    %v707 = vld [vmem:[#allocation5 + $0x18] sm:$0xff]
    %v708 = vld [vmem:[#allocation5 + $0x20] sm:$0xff]
    %v709 = vld [vmem:[#allocation5 + $0x28] sm:$0xff]
    %v710 = vld [vmem:[#allocation5 + $0x30] sm:$0xff]
    %v711 = vld [vmem:[#allocation5 + $0x38] sm:$0xff]
    %v712 = vld [vmem:[#allocation5 + $0x40] sm:$0xff]
    %v713 = vld [vmem:[#allocation5 + $0x48] sm:$0xff]
    %v714 = vld [vmem:[#allocation5 + $0x50] sm:$0xff]
    %v715 = vld [vmem:[#allocation5 + $0x58] sm:$0xff]
    %v716 = vld [vmem:[#allocation5 + $0x60] sm:$0xff]
    %v717 = vld [vmem:[#allocation5 + $0x68] sm:$0xff]
    %v718 = vld [vmem:[#allocation5 + $0x70] sm:$0xff]
    %v719 = vld [vmem:[#allocation5 + $0x78] sm:$0xff]
    %v720 = vld [vmem:[#allocation5 + $0x80] sm:$0xff]
    %v721 = vld [vmem:[#allocation5 + $0x88] sm:$0xff]
    %v722 = vld [vmem:[#allocation5 + $0x90] sm:$0xff]
    %v723 = vld [vmem:[#allocation5 + $0x98] sm:$0xff]
    %v724 = vld [vmem:[#allocation5 + $0xa0] sm:$0xff]
    %v725 = vld [vmem:[#allocation5 + $0xa8] sm:$0xff]
    %v726 = vld [vmem:[#allocation5 + $0xb0] sm:$0xff]
    %v727 = vld [vmem:[#allocation5 + $0xb8] sm:$0xff]
    %v728 = vld [vmem:[#allocation5 + $0xc0] sm:$0xff]
    %v729 = vld [vmem:[#allocation5 + $0xc8] sm:$0xff]
    %v730 = vld [vmem:[#allocation5 + $0xd0] sm:$0xff]
    %v731 = vld [vmem:[#allocation5 + $0xd8] sm:$0xff]
    %v732 = vld [vmem:[#allocation5 + $0xe0] sm:$0xff]
    %v733 = vld [vmem:[#allocation5 + $0xe8] sm:$0xff]
    %v734 = vld [vmem:[#allocation5 + $0xf0] sm:$0xff]
    %v735 = vld [vmem:[#allocation5 + $0xf8] sm:$0xff]
    %v736 = vld [vmem:[#allocation5 + $0x100] sm:$0xff]
    %v737 = vld [vmem:[#allocation5 + $0x108] sm:$0xff]
    %v738 = vld [vmem:[#allocation5 + $0x110] sm:$0xff]
    %v739 = vld [vmem:[#allocation5 + $0x118] sm:$0xff]
    %v740 = vld [vmem:[#allocation5 + $0x120] sm:$0xff]
    %v741 = vld [vmem:[#allocation5 + $0x128] sm:$0xff]
    %v742 = vld [vmem:[#allocation5 + $0x130] sm:$0xff]
    %v743 = vld [vmem:[#allocation5 + $0x138] sm:$0xff]
    %v744 = vld [vmem:[#allocation5 + $0x140] sm:$0xff]
    %v745 = vld [vmem:[#allocation5 + $0x148] sm:$0xff]
    %v746 = vld [vmem:[#allocation5 + $0x150] sm:$0xff]
    %v747 = vld [vmem:[#allocation5 + $0x158] sm:$0xff]
    %v748 = vld [vmem:[#allocation5 + $0x160] sm:$0xff]
    %v749 = vld [vmem:[#allocation5 + $0x168] sm:$0xff]
    %v750 = vld [vmem:[#allocation5 + $0x170] sm:$0xff]
    %v751 = vld [vmem:[#allocation5 + $0x178] sm:$0xff]
    %v752 = vld [vmem:[#allocation5 + $0x180] sm:$0xff]
    %v753 = vld [vmem:[#allocation5 + $0x188] sm:$0xff]
    %v754 = vld [vmem:[#allocation5 + $0x190] sm:$0xff]
    %v755 = vld [vmem:[#allocation5 + $0x198] sm:$0xff]
    %v756 = vld [vmem:[#allocation5 + $0x1a0] sm:$0xff]
    %v757 = vld [vmem:[#allocation5 + $0x1a8] sm:$0xff]
    %v758 = vld [vmem:[#allocation5 + $0x1b0] sm:$0xff]
    %v759 = vld [vmem:[#allocation5 + $0x1b8] sm:$0xff]
    %v760 = vld [vmem:[#allocation5 + $0x1c0] sm:$0xff]
    %v761 = vld [vmem:[#allocation5 + $0x1c8] sm:$0xff]
    %v762 = vld [vmem:[#allocation5 + $0x1d0] sm:$0xff]
    %v763 = vld [vmem:[#allocation5 + $0x1d8] sm:$0xff]
    %v764 = vld [vmem:[#allocation5 + $0x1e0] sm:$0xff]
    %v765 = vld [vmem:[#allocation5 + $0x1e8] sm:$0xff]
    %v766 = vld [vmem:[#allocation5 + $0x1f0] sm:$0xff]
    %v767 = vld [vmem:[#allocation5 + $0x1f8] sm:$0xff]
    %768 = vmatpush.msra.mxu0 %v428
    %769 = vmatpush.msra.mxu0 %v425
    %770 = vmatpush.msra.mxu0 %v422
    %771 = vmatpush.msra.mxu0 %v419
    %772 = vmatpush.msra.mxu0 %v416
    %773 = vmatpush.msra.mxu0 %v413
    %774 = vmatpush.msra.mxu0 %v410
    %775 = vmatpush.msra.mxu0 %v407
    %776 = vmatpush.msra.mxu0 %v404
    %777 = vmatpush.msra.mxu0 %v401
    %778 = vmatpush.msra.mxu0 %v398
    %779 = vmatpush.msra.mxu0 %v395
    %780 = vmatpush.msra.mxu0 %v392
    %781 = vmatpush.msra.mxu0 %v389
    %782 = vmatpush.msra.mxu0 %v386
    %783 = vmatpush.msra.mxu0 %v383
    %784 = vmatmul.f32.gmra.mxu0 %v704
    %v785 = vpop.f32.mrf.mxu0
    %v786 = vadd.f32 0.0, %v785
    %787 = vmatmul.f32.gmra.mxu0 %v706
    %v788 = vpop.f32.mrf.mxu0
    %v789 = vadd.f32 0.0, %v788
    %790 = vmatmul.f32.gmra.mxu0 %v708
    %v791 = vpop.f32.mrf.mxu0
    %v792 = vadd.f32 0.0, %v791
    %793 = vmatmul.f32.gmra.mxu0 %v710
    %v794 = vpop.f32.mrf.mxu0
    %v795 = vadd.f32 0.0, %v794
    %796 = vmatmul.f32.gmra.mxu0 %v712
    %v797 = vpop.f32.mrf.mxu0
    %v798 = vadd.f32 0.0, %v797
    %799 = vmatmul.f32.gmra.mxu0 %v714
    %v800 = vpop.f32.mrf.mxu0
    %v801 = vadd.f32 0.0, %v800
    %802 = vmatmul.f32.gmra.mxu0 %v716
    %v803 = vpop.f32.mrf.mxu0
    %v804 = vadd.f32 0.0, %v803
    %805 = vmatmul.f32.gmra.mxu0 %v718
    %v806 = vpop.f32.mrf.mxu0
    %v807 = vadd.f32 0.0, %v806
    %808 = vmatmul.f32.gmra.mxu0 %v720
    %v809 = vpop.f32.mrf.mxu0
    %v810 = vadd.f32 0.0, %v809
    %811 = vmatmul.f32.gmra.mxu0 %v722
    %v812 = vpop.f32.mrf.mxu0
    %v813 = vadd.f32 0.0, %v812
    %814 = vmatmul.f32.gmra.mxu0 %v724
    %v815 = vpop.f32.mrf.mxu0
    %v816 = vadd.f32 0.0, %v815
    %817 = vmatmul.f32.gmra.mxu0 %v726
    %v818 = vpop.f32.mrf.mxu0
    %v819 = vadd.f32 0.0, %v818
    %820 = vmatmul.f32.gmra.mxu0 %v728
    %v821 = vpop.f32.mrf.mxu0
    %v822 = vadd.f32 0.0, %v821
    %823 = vmatmul.f32.gmra.mxu0 %v730
    %v824 = vpop.f32.mrf.mxu0
    %v825 = vadd.f32 0.0, %v824
    %826 = vmatmul.f32.gmra.mxu0 %v732
    %v827 = vpop.f32.mrf.mxu0
    %v828 = vadd.f32 0.0, %v827
    %829 = vmatmul.f32.gmra.mxu0 %v734
    %v830 = vpop.f32.mrf.mxu0
    %v831 = vadd.f32 0.0, %v830
    %832 = vmatmul.f32.gmra.mxu0 %v736
    %v833 = vpop.f32.mrf.mxu0
    %v834 = vadd.f32 0.0, %v833
    %835 = vmatmul.f32.gmra.mxu0 %v738
    %v836 = vpop.f32.mrf.mxu0
    %v837 = vadd.f32 0.0, %v836
    %838 = vmatmul.f32.gmra.mxu0 %v740
    %v839 = vpop.f32.mrf.mxu0
    %v840 = vadd.f32 0.0, %v839
    %841 = vmatmul.f32.gmra.mxu0 %v742
    %v842 = vpop.f32.mrf.mxu0
    %v843 = vadd.f32 0.0, %v842
    %844 = vmatmul.f32.gmra.mxu0 %v744
    %v845 = vpop.f32.mrf.mxu0
    %v846 = vadd.f32 0.0, %v845
    %847 = vmatmul.f32.gmra.mxu0 %v746
    %v848 = vpop.f32.mrf.mxu0
    %v849 = vadd.f32 0.0, %v848
    %850 = vmatmul.f32.gmra.mxu0 %v748
    %v851 = vpop.f32.mrf.mxu0
    %v852 = vadd.f32 0.0, %v851
    %853 = vmatmul.f32.gmra.mxu0 %v750
    %v854 = vpop.f32.mrf.mxu0
    %v855 = vadd.f32 0.0, %v854
    %856 = vmatmul.f32.gmra.mxu0 %v752
    %v857 = vpop.f32.mrf.mxu0
    %v858 = vadd.f32 0.0, %v857
    %859 = vmatmul.f32.gmra.mxu0 %v754
    %v860 = vpop.f32.mrf.mxu0
    %v861 = vadd.f32 0.0, %v860
    %862 = vmatmul.f32.gmra.mxu0 %v756
    %v863 = vpop.f32.mrf.mxu0
    %v864 = vadd.f32 0.0, %v863
    %865 = vmatmul.f32.gmra.mxu0 %v758
    %v866 = vpop.f32.mrf.mxu0
    %v867 = vadd.f32 0.0, %v866
    %868 = vmatmul.f32.gmra.mxu0 %v760
    %v869 = vpop.f32.mrf.mxu0
    %v870 = vadd.f32 0.0, %v869
    %871 = vmatmul.f32.gmra.mxu0 %v762
    %v872 = vpop.f32.mrf.mxu0
    %v873 = vadd.f32 0.0, %v872
    %874 = vmatmul.f32.gmra.mxu0 %v764
    %v875 = vpop.f32.mrf.mxu0
    %v876 = vadd.f32 0.0, %v875
    %877 = vmatmul.f32.gmra.mxu0 %v766
    %v878 = vpop.f32.mrf.mxu0
    %v879 = vadd.f32 0.0, %v878
    %880 = vdwg.mxu0
    %881 = vmatpush.msra.mxu0 %v476
    %882 = vmatpush.msra.mxu0 %v473
    %883 = vmatpush.msra.mxu0 %v470
    %884 = vmatpush.msra.mxu0 %v467
    %885 = vmatpush.msra.mxu0 %v464
    %886 = vmatpush.msra.mxu0 %v461
    %887 = vmatpush.msra.mxu0 %v458
    %888 = vmatpush.msra.mxu0 %v455
    %889 = vmatpush.msra.mxu0 %v452
    %890 = vmatpush.msra.mxu0 %v449
    %891 = vmatpush.msra.mxu0 %v446
    %892 = vmatpush.msra.mxu0 %v443
    %893 = vmatpush.msra.mxu0 %v440
    %894 = vmatpush.msra.mxu0 %v437
    %895 = vmatpush.msra.mxu0 %v434
    %896 = vmatpush.msra.mxu0 %v431
    %897 = vmatmul.f32.gmra.mxu0 %v705
    %v898 = vpop.f32.mrf.mxu0
    %v899 = vadd.f32 %v786, %v898
    %900 = vmatmul.f32.gmra.mxu0 %v707
    %v901 = vpop.f32.mrf.mxu0
    %v902 = vadd.f32 %v789, %v901
    %903 = vmatmul.f32.gmra.mxu0 %v709
    %v904 = vpop.f32.mrf.mxu0
    %v905 = vadd.f32 %v792, %v904
    %906 = vmatmul.f32.gmra.mxu0 %v711
    %v907 = vpop.f32.mrf.mxu0
    %v908 = vadd.f32 %v795, %v907
    %909 = vmatmul.f32.gmra.mxu0 %v713
    %v910 = vpop.f32.mrf.mxu0
    %v911 = vadd.f32 %v798, %v910
    %912 = vmatmul.f32.gmra.mxu0 %v715
    %v913 = vpop.f32.mrf.mxu0
    %v914 = vadd.f32 %v801, %v913
    %915 = vmatmul.f32.gmra.mxu0 %v717
    %v916 = vpop.f32.mrf.mxu0
    %v917 = vadd.f32 %v804, %v916
    %918 = vmatmul.f32.gmra.mxu0 %v719
    %v919 = vpop.f32.mrf.mxu0
    %v920 = vadd.f32 %v807, %v919
    %921 = vmatmul.f32.gmra.mxu0 %v721
    %v922 = vpop.f32.mrf.mxu0
    %v923 = vadd.f32 %v810, %v922
    %924 = vmatmul.f32.gmra.mxu0 %v723
    %v925 = vpop.f32.mrf.mxu0
    %v926 = vadd.f32 %v813, %v925
    %927 = vmatmul.f32.gmra.mxu0 %v725
    %v928 = vpop.f32.mrf.mxu0
    %v929 = vadd.f32 %v816, %v928
    %930 = vmatmul.f32.gmra.mxu0 %v727
    %v931 = vpop.f32.mrf.mxu0
    %v932 = vadd.f32 %v819, %v931
    %933 = vmatmul.f32.gmra.mxu0 %v729
    %v934 = vpop.f32.mrf.mxu0
    %v935 = vadd.f32 %v822, %v934
    %936 = vmatmul.f32.gmra.mxu0 %v731
    %v937 = vpop.f32.mrf.mxu0
    %v938 = vadd.f32 %v825, %v937
    %939 = vmatmul.f32.gmra.mxu0 %v733
    %v940 = vpop.f32.mrf.mxu0
    %v941 = vadd.f32 %v828, %v940
    %942 = vmatmul.f32.gmra.mxu0 %v735
    %v943 = vpop.f32.mrf.mxu0
    %v944 = vadd.f32 %v831, %v943
    %945 = vmatmul.f32.gmra.mxu0 %v737
    %v946 = vpop.f32.mrf.mxu0
    %v947 = vadd.f32 %v834, %v946
    %948 = vmatmul.f32.gmra.mxu0 %v739
    %v949 = vpop.f32.mrf.mxu0
    %v950 = vadd.f32 %v837, %v949
    %951 = vmatmul.f32.gmra.mxu0 %v741
    %v952 = vpop.f32.mrf.mxu0
    %v953 = vadd.f32 %v840, %v952
    %954 = vmatmul.f32.gmra.mxu0 %v743
    %v955 = vpop.f32.mrf.mxu0
    %v956 = vadd.f32 %v843, %v955
    %957 = vmatmul.f32.gmra.mxu0 %v745
    %v958 = vpop.f32.mrf.mxu0
    %v959 = vadd.f32 %v846, %v958
    %960 = vmatmul.f32.gmra.mxu0 %v747
    %v961 = vpop.f32.mrf.mxu0
    %v962 = vadd.f32 %v849, %v961
    %963 = vmatmul.f32.gmra.mxu0 %v749
    %v964 = vpop.f32.mrf.mxu0
    %v965 = vadd.f32 %v852, %v964
    %966 = vmatmul.f32.gmra.mxu0 %v751
    %v967 = vpop.f32.mrf.mxu0
    %v968 = vadd.f32 %v855, %v967
    %969 = vmatmul.f32.gmra.mxu0 %v753
    %v970 = vpop.f32.mrf.mxu0
    %v971 = vadd.f32 %v858, %v970
    %972 = vmatmul.f32.gmra.mxu0 %v755
    %v973 = vpop.f32.mrf.mxu0
    %v974 = vadd.f32 %v861, %v973
    %975 = vmatmul.f32.gmra.mxu0 %v757
    %v976 = vpop.f32.mrf.mxu0
    %v977 = vadd.f32 %v864, %v976
    %978 = vmatmul.f32.gmra.mxu0 %v759
    %v979 = vpop.f32.mrf.mxu0
    %v980 = vadd.f32 %v867, %v979
    %981 = vmatmul.f32.gmra.mxu0 %v761
    %v982 = vpop.f32.mrf.mxu0
    %v983 = vadd.f32 %v870, %v982
    %984 = vmatmul.f32.gmra.mxu0 %v763
    %v985 = vpop.f32.mrf.mxu0
    %v986 = vadd.f32 %v873, %v985
    %987 = vmatmul.f32.gmra.mxu0 %v765
    %v988 = vpop.f32.mrf.mxu0
    %v989 = vadd.f32 %v876, %v988
    %990 = vmatmul.f32.gmra.mxu0 %v767
    %v991 = vpop.f32.mrf.mxu0
    %v992 = vadd.f32 %v879, %v991
    %993 = vdwg.mxu0
    %994 = vmatpush.msra.mxu0 %v654
    %995 = vmatpush.msra.mxu0 %v651
    %996 = vmatpush.msra.mxu0 %v648
    %997 = vmatpush.msra.mxu0 %v645
    %998 = vmatpush.msra.mxu0 %v642
    %999 = vmatpush.msra.mxu0 %v639
    %1000 = vmatpush.msra.mxu0 %v636
    %1001 = vmatpush.msra.mxu0 %v633
    %1002 = vmatpush.msra.mxu0 %v630
    %1003 = vmatpush.msra.mxu0 %v627
    %1004 = vmatpush.msra.mxu0 %v624
    %1005 = vmatpush.msra.mxu0 %v621
    %1006 = vmatpush.msra.mxu0 %v618
    %1007 = vmatpush.msra.mxu0 %v615
    %1008 = vmatpush.msra.mxu0 %v612
    %1009 = vmatpush.msra.mxu0 %v609
    %1010 = vmatmul.f32.gmra.mxu0 %v704
    %v1011 = vpop.f32.mrf.mxu0
    %v1012 = vadd.f32 0.0, %v1011
    %1013 = vmatmul.f32.gmra.mxu0 %v706
    %v1014 = vpop.f32.mrf.mxu0
    %v1015 = vadd.f32 0.0, %v1014
    %1016 = vmatmul.f32.gmra.mxu0 %v708
    %v1017 = vpop.f32.mrf.mxu0
    %v1018 = vadd.f32 0.0, %v1017
    %1019 = vmatmul.f32.gmra.mxu0 %v710
    %v1020 = vpop.f32.mrf.mxu0
    %v1021 = vadd.f32 0.0, %v1020
    %1022 = vmatmul.f32.gmra.mxu0 %v712
    %v1023 = vpop.f32.mrf.mxu0
    %v1024 = vadd.f32 0.0, %v1023
    %1025 = vmatmul.f32.gmra.mxu0 %v714
    %v1026 = vpop.f32.mrf.mxu0
    %v1027 = vadd.f32 0.0, %v1026
    %1028 = vmatmul.f32.gmra.mxu0 %v716
    %v1029 = vpop.f32.mrf.mxu0
    %v1030 = vadd.f32 0.0, %v1029
    %1031 = vmatmul.f32.gmra.mxu0 %v718
    %v1032 = vpop.f32.mrf.mxu0
    %v1033 = vadd.f32 0.0, %v1032
    %1034 = vmatmul.f32.gmra.mxu0 %v720
    %v1035 = vpop.f32.mrf.mxu0
    %v1036 = vadd.f32 0.0, %v1035
    %1037 = vmatmul.f32.gmra.mxu0 %v722
    %v1038 = vpop.f32.mrf.mxu0
    %v1039 = vadd.f32 0.0, %v1038
    %1040 = vmatmul.f32.gmra.mxu0 %v724
    %v1041 = vpop.f32.mrf.mxu0
    %v1042 = vadd.f32 0.0, %v1041
    %1043 = vmatmul.f32.gmra.mxu0 %v726
    %v1044 = vpop.f32.mrf.mxu0
    %v1045 = vadd.f32 0.0, %v1044
    %1046 = vmatmul.f32.gmra.mxu0 %v728
    %v1047 = vpop.f32.mrf.mxu0
    %v1048 = vadd.f32 0.0, %v1047
    %1049 = vmatmul.f32.gmra.mxu0 %v730
    %v1050 = vpop.f32.mrf.mxu0
    %v1051 = vadd.f32 0.0, %v1050
    %1052 = vmatmul.f32.gmra.mxu0 %v732
    %v1053 = vpop.f32.mrf.mxu0
    %v1054 = vadd.f32 0.0, %v1053
    %1055 = vmatmul.f32.gmra.mxu0 %v734
    %v1056 = vpop.f32.mrf.mxu0
    %v1057 = vadd.f32 0.0, %v1056
    %1058 = vmatmul.f32.gmra.mxu0 %v736
    %v1059 = vpop.f32.mrf.mxu0
    %v1060 = vadd.f32 0.0, %v1059
    %1061 = vmatmul.f32.gmra.mxu0 %v738
    %v1062 = vpop.f32.mrf.mxu0
    %v1063 = vadd.f32 0.0, %v1062
    %1064 = vmatmul.f32.gmra.mxu0 %v740
    %v1065 = vpop.f32.mrf.mxu0
    %v1066 = vadd.f32 0.0, %v1065
    %1067 = vmatmul.f32.gmra.mxu0 %v742
    %v1068 = vpop.f32.mrf.mxu0
    %v1069 = vadd.f32 0.0, %v1068
    %1070 = vmatmul.f32.gmra.mxu0 %v744
    %v1071 = vpop.f32.mrf.mxu0
    %v1072 = vadd.f32 0.0, %v1071
    %1073 = vmatmul.f32.gmra.mxu0 %v746
    %v1074 = vpop.f32.mrf.mxu0
    %v1075 = vadd.f32 0.0, %v1074
    %1076 = vmatmul.f32.gmra.mxu0 %v748
    %v1077 = vpop.f32.mrf.mxu0
    %v1078 = vadd.f32 0.0, %v1077
    %1079 = vmatmul.f32.gmra.mxu0 %v750
    %v1080 = vpop.f32.mrf.mxu0
    %v1081 = vadd.f32 0.0, %v1080
    %1082 = vmatmul.f32.gmra.mxu0 %v752
    %v1083 = vpop.f32.mrf.mxu0
    %v1084 = vadd.f32 0.0, %v1083
    %1085 = vmatmul.f32.gmra.mxu0 %v754
    %v1086 = vpop.f32.mrf.mxu0
    %v1087 = vadd.f32 0.0, %v1086
    %1088 = vmatmul.f32.gmra.mxu0 %v756
    %v1089 = vpop.f32.mrf.mxu0
    %v1090 = vadd.f32 0.0, %v1089
    %1091 = vmatmul.f32.gmra.mxu0 %v758
    %v1092 = vpop.f32.mrf.mxu0
    %v1093 = vadd.f32 0.0, %v1092
    %1094 = vmatmul.f32.gmra.mxu0 %v760
    %v1095 = vpop.f32.mrf.mxu0
    %v1096 = vadd.f32 0.0, %v1095
    %1097 = vmatmul.f32.gmra.mxu0 %v762
    %v1098 = vpop.f32.mrf.mxu0
    %v1099 = vadd.f32 0.0, %v1098
    %1100 = vmatmul.f32.gmra.mxu0 %v764
    %v1101 = vpop.f32.mrf.mxu0
    %v1102 = vadd.f32 0.0, %v1101
    %1103 = vmatmul.f32.gmra.mxu0 %v766
    %v1104 = vpop.f32.mrf.mxu0
    %v1105 = vadd.f32 0.0, %v1104
    %1106 = vdwg.mxu0
    %1107 = vmatpush.msra.mxu0 %v702
    %1108 = vmatpush.msra.mxu0 %v699
    %1109 = vmatpush.msra.mxu0 %v696
    %1110 = vmatpush.msra.mxu0 %v693
    %1111 = vmatpush.msra.mxu0 %v690
    %1112 = vmatpush.msra.mxu0 %v687
    %1113 = vmatpush.msra.mxu0 %v684
    %1114 = vmatpush.msra.mxu0 %v681
    %1115 = vmatpush.msra.mxu0 %v678
    %1116 = vmatpush.msra.mxu0 %v675
    %1117 = vmatpush.msra.mxu0 %v672
    %1118 = vmatpush.msra.mxu0 %v669
    %1119 = vmatpush.msra.mxu0 %v666
    %1120 = vmatpush.msra.mxu0 %v663
    %1121 = vmatpush.msra.mxu0 %v660
    %1122 = vmatpush.msra.mxu0 %v657
    %1123 = vmatmul.f32.gmra.mxu0 %v705
    %v1124 = vpop.f32.mrf.mxu0
    %v1125 = vadd.f32 %v1012, %v1124
    %1126 = vmatmul.f32.gmra.mxu0 %v707
    %v1127 = vpop.f32.mrf.mxu0
    %v1128 = vadd.f32 %v1015, %v1127
    %1129 = vmatmul.f32.gmra.mxu0 %v709
    %v1130 = vpop.f32.mrf.mxu0
    %v1131 = vadd.f32 %v1018, %v1130
    %1132 = vmatmul.f32.gmra.mxu0 %v711
    %v1133 = vpop.f32.mrf.mxu0
    %v1134 = vadd.f32 %v1021, %v1133
    %1135 = vmatmul.f32.gmra.mxu0 %v713
    %v1136 = vpop.f32.mrf.mxu0
    %v1137 = vadd.f32 %v1024, %v1136
    %1138 = vmatmul.f32.gmra.mxu0 %v715
    %v1139 = vpop.f32.mrf.mxu0
    %v1140 = vadd.f32 %v1027, %v1139
    %1141 = vmatmul.f32.gmra.mxu0 %v717
    %v1142 = vpop.f32.mrf.mxu0
    %v1143 = vadd.f32 %v1030, %v1142
    %1144 = vmatmul.f32.gmra.mxu0 %v719
    %v1145 = vpop.f32.mrf.mxu0
    %v1146 = vadd.f32 %v1033, %v1145
    %1147 = vmatmul.f32.gmra.mxu0 %v721
    %v1148 = vpop.f32.mrf.mxu0
    %v1149 = vadd.f32 %v1036, %v1148
    %1150 = vmatmul.f32.gmra.mxu0 %v723
    %v1151 = vpop.f32.mrf.mxu0
    %v1152 = vadd.f32 %v1039, %v1151
    %1153 = vmatmul.f32.gmra.mxu0 %v725
    %v1154 = vpop.f32.mrf.mxu0
    %v1155 = vadd.f32 %v1042, %v1154
    %1156 = vmatmul.f32.gmra.mxu0 %v727
    %v1157 = vpop.f32.mrf.mxu0
    %v1158 = vadd.f32 %v1045, %v1157
    %1159 = vmatmul.f32.gmra.mxu0 %v729
    %v1160 = vpop.f32.mrf.mxu0
    %v1161 = vadd.f32 %v1048, %v1160
    %1162 = vmatmul.f32.gmra.mxu0 %v731
    %v1163 = vpop.f32.mrf.mxu0
    %v1164 = vadd.f32 %v1051, %v1163
    %1165 = vmatmul.f32.gmra.mxu0 %v733
    %v1166 = vpop.f32.mrf.mxu0
    %v1167 = vadd.f32 %v1054, %v1166
    %1168 = vmatmul.f32.gmra.mxu0 %v735
    %v1169 = vpop.f32.mrf.mxu0
    %v1170 = vadd.f32 %v1057, %v1169
    %1171 = vmatmul.f32.gmra.mxu0 %v737
    %v1172 = vpop.f32.mrf.mxu0
    %v1173 = vadd.f32 %v1060, %v1172
    %1174 = vmatmul.f32.gmra.mxu0 %v739
    %v1175 = vpop.f32.mrf.mxu0
    %v1176 = vadd.f32 %v1063, %v1175
    %1177 = vmatmul.f32.gmra.mxu0 %v741
    %v1178 = vpop.f32.mrf.mxu0
    %v1179 = vadd.f32 %v1066, %v1178
    %1180 = vmatmul.f32.gmra.mxu0 %v743
    %v1181 = vpop.f32.mrf.mxu0
    %v1182 = vadd.f32 %v1069, %v1181
    %1183 = vmatmul.f32.gmra.mxu0 %v745
    %v1184 = vpop.f32.mrf.mxu0
    %v1185 = vadd.f32 %v1072, %v1184
    %1186 = vmatmul.f32.gmra.mxu0 %v747
    %v1187 = vpop.f32.mrf.mxu0
    %v1188 = vadd.f32 %v1075, %v1187
    %1189 = vmatmul.f32.gmra.mxu0 %v749
    %v1190 = vpop.f32.mrf.mxu0
    %v1191 = vadd.f32 %v1078, %v1190
    %1192 = vmatmul.f32.gmra.mxu0 %v751
    %v1193 = vpop.f32.mrf.mxu0
    %v1194 = vadd.f32 %v1081, %v1193
    %1195 = vmatmul.f32.gmra.mxu0 %v753
    %v1196 = vpop.f32.mrf.mxu0
    %v1197 = vadd.f32 %v1084, %v1196
    %1198 = vmatmul.f32.gmra.mxu0 %v755
    %v1199 = vpop.f32.mrf.mxu0
    %v1200 = vadd.f32 %v1087, %v1199
    %1201 = vmatmul.f32.gmra.mxu0 %v757
    %v1202 = vpop.f32.mrf.mxu0
    %v1203 = vadd.f32 %v1090, %v1202
    %1204 = vmatmul.f32.gmra.mxu0 %v759
    %v1205 = vpop.f32.mrf.mxu0
    %v1206 = vadd.f32 %v1093, %v1205
    %1207 = vmatmul.f32.gmra.mxu0 %v761
    %v1208 = vpop.f32.mrf.mxu0
    %v1209 = vadd.f32 %v1096, %v1208
    %1210 = vmatmul.f32.gmra.mxu0 %v763
    %v1211 = vpop.f32.mrf.mxu0
    %v1212 = vadd.f32 %v1099, %v1211
    %1213 = vmatmul.f32.gmra.mxu0 %v765
    %v1214 = vpop.f32.mrf.mxu0
    %v1215 = vadd.f32 %v1102, %v1214
    %1216 = vmatmul.f32.gmra.mxu0 %v767
    %v1217 = vpop.f32.mrf.mxu0
    %v1218 = vadd.f32 %v1105, %v1217
    %1219 = vdwg.mxu0
    %v1220 = vmin.f32 %v899, 0.0
    %v1221 = vmin.f32 %v1125, 0.0
    %v1222 = vmin.f32 %v902, 0.0
    %v1223 = vmin.f32 %v1128, 0.0
    %v1224 = vmin.f32 %v905, 0.0
    %v1225 = vmin.f32 %v1131, 0.0
    %v1226 = vmin.f32 %v908, 0.0
    %v1227 = vmin.f32 %v1134, 0.0
    %v1228 = vmin.f32 %v911, 0.0
    %v1229 = vmin.f32 %v1137, 0.0
    %v1230 = vmin.f32 %v914, 0.0
    %v1231 = vmin.f32 %v1140, 0.0
    %v1232 = vmin.f32 %v917, 0.0
    %v1233 = vmin.f32 %v1143, 0.0
    %v1234 = vmin.f32 %v920, 0.0
    %v1235 = vmin.f32 %v1146, 0.0
    %v1236 = vmin.f32 %v923, 0.0
    %v1237 = vmin.f32 %v1149, 0.0
    %v1238 = vmin.f32 %v926, 0.0
    %v1239 = vmin.f32 %v1152, 0.0
    %v1240 = vmin.f32 %v929, 0.0
    %v1241 = vmin.f32 %v1155, 0.0
    %v1242 = vmin.f32 %v932, 0.0
    %v1243 = vmin.f32 %v1158, 0.0
    %v1244 = vmin.f32 %v935, 0.0
    %v1245 = vmin.f32 %v1161, 0.0
    %v1246 = vmin.f32 %v938, 0.0
    %v1247 = vmin.f32 %v1164, 0.0
    %v1248 = vmin.f32 %v941, 0.0
    %v1249 = vmin.f32 %v1167, 0.0
    %v1250 = vmin.f32 %v944, 0.0
    %v1251 = vmin.f32 %v1170, 0.0
    %v1252 = vmin.f32 %v947, 0.0
    %v1253 = vmin.f32 %v1173, 0.0
    %v1254 = vmin.f32 %v950, 0.0
    %v1255 = vmin.f32 %v1176, 0.0
    %v1256 = vmin.f32 %v953, 0.0
    %v1257 = vmin.f32 %v1179, 0.0
    %v1258 = vmin.f32 %v956, 0.0
    %v1259 = vmin.f32 %v1182, 0.0
    %v1260 = vmin.f32 %v959, 0.0
    %v1261 = vmin.f32 %v1185, 0.0
    %v1262 = vmin.f32 %v962, 0.0
    %v1263 = vmin.f32 %v1188, 0.0
    %v1264 = vmin.f32 %v965, 0.0
    %v1265 = vmin.f32 %v1191, 0.0
    %v1266 = vmin.f32 %v968, 0.0
    %v1267 = vmin.f32 %v1194, 0.0
    %v1268 = vmin.f32 %v971, 0.0
    %v1269 = vmin.f32 %v1197, 0.0
    %v1270 = vmin.f32 %v974, 0.0
    %v1271 = vmin.f32 %v1200, 0.0
    %v1272 = vmin.f32 %v977, 0.0
    %v1273 = vmin.f32 %v1203, 0.0
    %v1274 = vmin.f32 %v980, 0.0
    %v1275 = vmin.f32 %v1206, 0.0
    %v1276 = vmin.f32 %v983, 0.0
    %v1277 = vmin.f32 %v1209, 0.0
    %v1278 = vmin.f32 %v986, 0.0
    %v1279 = vmin.f32 %v1212, 0.0
    %v1280 = vmin.f32 %v989, 0.0
    %v1281 = vmin.f32 %v1215, 0.0
    %v1282 = vmin.f32 %v992, 0.0
    %v1283 = vmin.f32 %v1218, 0.0
    %v1284 = vmul.f32 %v1220, 0.2
    %v1285 = vmul.f32 %v1221, 0.2
    %v1286 = vmul.f32 %v1222, 0.2
    %v1287 = vmul.f32 %v1223, 0.2
    %v1288 = vmul.f32 %v1224, 0.2
    %v1289 = vmul.f32 %v1225, 0.2
    %v1290 = vmul.f32 %v1226, 0.2
    %v1291 = vmul.f32 %v1227, 0.2
    %v1292 = vmul.f32 %v1228, 0.2
    %v1293 = vmul.f32 %v1229, 0.2
    %v1294 = vmul.f32 %v1230, 0.2
    %v1295 = vmul.f32 %v1231, 0.2
    %v1296 = vmul.f32 %v1232, 0.2
    %v1297 = vmul.f32 %v1233, 0.2
    %v1298 = vmul.f32 %v1234, 0.2
    %v1299 = vmul.f32 %v1235, 0.2
    %v1300 = vmul.f32 %v1236, 0.2
    %v1301 = vmul.f32 %v1237, 0.2
    %v1302 = vmul.f32 %v1238, 0.2
    %v1303 = vmul.f32 %v1239, 0.2
    %v1304 = vmul.f32 %v1240, 0.2
    %v1305 = vmul.f32 %v1241, 0.2
    %v1306 = vmul.f32 %v1242, 0.2
    %v1307 = vmul.f32 %v1243, 0.2
    %v1308 = vmul.f32 %v1244, 0.2
    %v1309 = vmul.f32 %v1245, 0.2
    %v1310 = vmul.f32 %v1246, 0.2
    %v1311 = vmul.f32 %v1247, 0.2
    %v1312 = vmul.f32 %v1248, 0.2
    %v1313 = vmul.f32 %v1249, 0.2
    %v1314 = vmul.f32 %v1250, 0.2
    %v1315 = vmul.f32 %v1251, 0.2
    %v1316 = vmul.f32 %v1252, 0.2
    %v1317 = vmul.f32 %v1253, 0.2
    %v1318 = vmul.f32 %v1254, 0.2
    %v1319 = vmul.f32 %v1255, 0.2
    %v1320 = vmul.f32 %v1256, 0.2
    %v1321 = vmul.f32 %v1257, 0.2
    %v1322 = vmul.f32 %v1258, 0.2
    %v1323 = vmul.f32 %v1259, 0.2
    %v1324 = vmul.f32 %v1260, 0.2
    %v1325 = vmul.f32 %v1261, 0.2
    %v1326 = vmul.f32 %v1262, 0.2
    %v1327 = vmul.f32 %v1263, 0.2
    %v1328 = vmul.f32 %v1264, 0.2
    %v1329 = vmul.f32 %v1265, 0.2
    %v1330 = vmul.f32 %v1266, 0.2
    %v1331 = vmul.f32 %v1267, 0.2
    %v1332 = vmul.f32 %v1268, 0.2
    %v1333 = vmul.f32 %v1269, 0.2
    %v1334 = vmul.f32 %v1270, 0.2
    %v1335 = vmul.f32 %v1271, 0.2
    %v1336 = vmul.f32 %v1272, 0.2
    %v1337 = vmul.f32 %v1273, 0.2
    %v1338 = vmul.f32 %v1274, 0.2
    %v1339 = vmul.f32 %v1275, 0.2
    %v1340 = vmul.f32 %v1276, 0.2
    %v1341 = vmul.f32 %v1277, 0.2
    %v1342 = vmul.f32 %v1278, 0.2
    %v1343 = vmul.f32 %v1279, 0.2
    %v1344 = vmul.f32 %v1280, 0.2
    %v1345 = vmul.f32 %v1281, 0.2
    %v1346 = vmul.f32 %v1282, 0.2
    %v1347 = vmul.f32 %v1283, 0.2
    %v1348 = vmul.f32 %v1284, 1.442695
    %v1349 = vpow.pop %v1348
    %v1350 = vmul.f32 %v1285, 1.442695
    %v1351 = vpow.pop %v1350
    %v1352 = vmul.f32 %v1286, 1.442695
    %v1353 = vpow.pop %v1352
    %v1354 = vmul.f32 %v1287, 1.442695
    %v1355 = vpow.pop %v1354
    %v1356 = vmul.f32 %v1288, 1.442695
    %v1357 = vpow.pop %v1356
    %v1358 = vmul.f32 %v1289, 1.442695
    %v1359 = vpow.pop %v1358
    %v1360 = vmul.f32 %v1290, 1.442695
    %v1361 = vpow.pop %v1360
    %v1362 = vmul.f32 %v1291, 1.442695
    %v1363 = vpow.pop %v1362
    %v1364 = vmul.f32 %v1292, 1.442695
    %v1365 = vpow.pop %v1364
    %v1366 = vmul.f32 %v1293, 1.442695
    %v1367 = vpow.pop %v1366
    %v1368 = vmul.f32 %v1294, 1.442695
    %v1369 = vpow.pop %v1368
    %v1370 = vmul.f32 %v1295, 1.442695
    %v1371 = vpow.pop %v1370
    %v1372 = vmul.f32 %v1296, 1.442695
    %v1373 = vpow.pop %v1372
    %v1374 = vmul.f32 %v1297, 1.442695
    %v1375 = vpow.pop %v1374
    %v1376 = vmul.f32 %v1298, 1.442695
    %v1377 = vpow.pop %v1376
    %v1378 = vmul.f32 %v1299, 1.442695
    %v1379 = vpow.pop %v1378
    %v1380 = vmul.f32 %v1300, 1.442695
    %v1381 = vpow.pop %v1380
    %v1382 = vmul.f32 %v1301, 1.442695
    %v1383 = vpow.pop %v1382
    %v1384 = vmul.f32 %v1302, 1.442695
    %v1385 = vpow.pop %v1384
    %v1386 = vmul.f32 %v1303, 1.442695
    %v1387 = vpow.pop %v1386
    %v1388 = vmul.f32 %v1304, 1.442695
    %v1389 = vpow.pop %v1388
    %v1390 = vmul.f32 %v1305, 1.442695
    %v1391 = vpow.pop %v1390
    %v1392 = vmul.f32 %v1306, 1.442695
    %v1393 = vpow.pop %v1392
    %v1394 = vmul.f32 %v1307, 1.442695
    %v1395 = vpow.pop %v1394
    %v1396 = vmul.f32 %v1308, 1.442695
    %v1397 = vpow.pop %v1396
    %v1398 = vmul.f32 %v1309, 1.442695
    %v1399 = vpow.pop %v1398
    %v1400 = vmul.f32 %v1310, 1.442695
    %v1401 = vpow.pop %v1400
    %v1402 = vmul.f32 %v1311, 1.442695
    %v1403 = vpow.pop %v1402
    %v1404 = vmul.f32 %v1312, 1.442695
    %v1405 = vpow.pop %v1404
    %v1406 = vmul.f32 %v1313, 1.442695
    %v1407 = vpow.pop %v1406
    %v1408 = vmul.f32 %v1314, 1.442695
    %v1409 = vpow.pop %v1408
    %v1410 = vmul.f32 %v1315, 1.442695
    %v1411 = vpow.pop %v1410
    %v1412 = vmul.f32 %v1316, 1.442695
    %v1413 = vpow.pop %v1412
    %v1414 = vmul.f32 %v1317, 1.442695
    %v1415 = vpow.pop %v1414
    %v1416 = vmul.f32 %v1318, 1.442695
    %v1417 = vpow.pop %v1416
    %v1418 = vmul.f32 %v1319, 1.442695
    %v1419 = vpow.pop %v1418
    %v1420 = vmul.f32 %v1320, 1.442695
    %v1421 = vpow.pop %v1420
    %v1422 = vmul.f32 %v1321, 1.442695
    %v1423 = vpow.pop %v1422
    %v1424 = vmul.f32 %v1322, 1.442695
    %v1425 = vpow.pop %v1424
    %v1426 = vmul.f32 %v1323, 1.442695
    %v1427 = vpow.pop %v1426
    %v1428 = vmul.f32 %v1324, 1.442695
    %v1429 = vpow.pop %v1428
    %v1430 = vmul.f32 %v1325, 1.442695
    %v1431 = vpow.pop %v1430
    %v1432 = vmul.f32 %v1326, 1.442695
    %v1433 = vpow.pop %v1432
    %v1434 = vmul.f32 %v1327, 1.442695
    %v1435 = vpow.pop %v1434
    %v1436 = vmul.f32 %v1328, 1.442695
    %v1437 = vpow.pop %v1436
    %v1438 = vmul.f32 %v1329, 1.442695
    %v1439 = vpow.pop %v1438
    %v1440 = vmul.f32 %v1330, 1.442695
    %v1441 = vpow.pop %v1440
    %v1442 = vmul.f32 %v1331, 1.442695
    %v1443 = vpow.pop %v1442
    %v1444 = vmul.f32 %v1332, 1.442695
    %v1445 = vpow.pop %v1444
    %v1446 = vmul.f32 %v1333, 1.442695
    %v1447 = vpow.pop %v1446
    %v1448 = vmul.f32 %v1334, 1.442695
    %v1449 = vpow.pop %v1448
    %v1450 = vmul.f32 %v1335, 1.442695
    %v1451 = vpow.pop %v1450
    %v1452 = vmul.f32 %v1336, 1.442695
    %v1453 = vpow.pop %v1452
    %v1454 = vmul.f32 %v1337, 1.442695
    %v1455 = vpow.pop %v1454
    %v1456 = vmul.f32 %v1338, 1.442695
    %v1457 = vpow.pop %v1456
    %v1458 = vmul.f32 %v1339, 1.442695
    %v1459 = vpow.pop %v1458
    %v1460 = vmul.f32 %v1340, 1.442695
    %v1461 = vpow.pop %v1460
    %v1462 = vmul.f32 %v1341, 1.442695
    %v1463 = vpow.pop %v1462
    %v1464 = vmul.f32 %v1342, 1.442695
    %v1465 = vpow.pop %v1464
    %v1466 = vmul.f32 %v1343, 1.442695
    %v1467 = vpow.pop %v1466
    %v1468 = vmul.f32 %v1344, 1.442695
    %v1469 = vpow.pop %v1468
    %v1470 = vmul.f32 %v1345, 1.442695
    %v1471 = vpow.pop %v1470
    %v1472 = vmul.f32 %v1346, 1.442695
    %v1473 = vpow.pop %v1472
    %v1474 = vmul.f32 %v1347, 1.442695
    %v1475 = vpow.pop %v1474
    %v1476 = vsub.f32 %v1349, 1.0
    %v1477 = vsub.f32 %v1351, 1.0
    %v1478 = vsub.f32 %v1353, 1.0
    %v1479 = vsub.f32 %v1355, 1.0
    %v1480 = vsub.f32 %v1357, 1.0
    %v1481 = vsub.f32 %v1359, 1.0
    %v1482 = vsub.f32 %v1361, 1.0
    %v1483 = vsub.f32 %v1363, 1.0
    %v1484 = vsub.f32 %v1365, 1.0
    %v1485 = vsub.f32 %v1367, 1.0
    %v1486 = vsub.f32 %v1369, 1.0
    %v1487 = vsub.f32 %v1371, 1.0
    %v1488 = vsub.f32 %v1373, 1.0
    %v1489 = vsub.f32 %v1375, 1.0
    %v1490 = vsub.f32 %v1377, 1.0
    %v1491 = vsub.f32 %v1379, 1.0
    %v1492 = vsub.f32 %v1381, 1.0
    %v1493 = vsub.f32 %v1383, 1.0
    %v1494 = vsub.f32 %v1385, 1.0
    %v1495 = vsub.f32 %v1387, 1.0
    %v1496 = vsub.f32 %v1389, 1.0
    %v1497 = vsub.f32 %v1391, 1.0
    %v1498 = vsub.f32 %v1393, 1.0
    %v1499 = vsub.f32 %v1395, 1.0
    %v1500 = vsub.f32 %v1397, 1.0
    %v1501 = vsub.f32 %v1399, 1.0
    %v1502 = vsub.f32 %v1401, 1.0
    %v1503 = vsub.f32 %v1403, 1.0
    %v1504 = vsub.f32 %v1405, 1.0
    %v1505 = vsub.f32 %v1407, 1.0
    %v1506 = vsub.f32 %v1409, 1.0
    %v1507 = vsub.f32 %v1411, 1.0
    %v1508 = vsub.f32 %v1413, 1.0
    %v1509 = vsub.f32 %v1415, 1.0
    %v1510 = vsub.f32 %v1417, 1.0
    %v1511 = vsub.f32 %v1419, 1.0
    %v1512 = vsub.f32 %v1421, 1.0
    %v1513 = vsub.f32 %v1423, 1.0
    %v1514 = vsub.f32 %v1425, 1.0
    %v1515 = vsub.f32 %v1427, 1.0
    %v1516 = vsub.f32 %v1429, 1.0
    %v1517 = vsub.f32 %v1431, 1.0
    %v1518 = vsub.f32 %v1433, 1.0
    %v1519 = vsub.f32 %v1435, 1.0
    %v1520 = vsub.f32 %v1437, 1.0
    %v1521 = vsub.f32 %v1439, 1.0
    %v1522 = vsub.f32 %v1441, 1.0
    %v1523 = vsub.f32 %v1443, 1.0
    %v1524 = vsub.f32 %v1445, 1.0
    %v1525 = vsub.f32 %v1447, 1.0
    %v1526 = vsub.f32 %v1449, 1.0
    %v1527 = vsub.f32 %v1451, 1.0
    %v1528 = vsub.f32 %v1453, 1.0
    %v1529 = vsub.f32 %v1455, 1.0
    %v1530 = vsub.f32 %v1457, 1.0
    %v1531 = vsub.f32 %v1459, 1.0
    %v1532 = vsub.f32 %v1461, 1.0
    %v1533 = vsub.f32 %v1463, 1.0
    %v1534 = vsub.f32 %v1465, 1.0
    %v1535 = vsub.f32 %v1467, 1.0
    %v1536 = vsub.f32 %v1469, 1.0
    %v1537 = vsub.f32 %v1471, 1.0
    %v1538 = vsub.f32 %v1473, 1.0
    %v1539 = vsub.f32 %v1475, 1.0
    %vm1540 = vcmp.ge.f32.partialorder %v899, 0.0
    %vm1541 = vcmp.ge.f32.partialorder %v1125, 0.0
    %vm1542 = vcmp.ge.f32.partialorder %v902, 0.0
    %vm1543 = vcmp.ge.f32.partialorder %v1128, 0.0
    %vm1544 = vcmp.ge.f32.partialorder %v905, 0.0
    %vm1545 = vcmp.ge.f32.partialorder %v1131, 0.0
    %vm1546 = vcmp.ge.f32.partialorder %v908, 0.0
    %vm1547 = vcmp.ge.f32.partialorder %v1134, 0.0
    %vm1548 = vcmp.ge.f32.partialorder %v911, 0.0
    %vm1549 = vcmp.ge.f32.partialorder %v1137, 0.0
    %vm1550 = vcmp.ge.f32.partialorder %v914, 0.0
    %vm1551 = vcmp.ge.f32.partialorder %v1140, 0.0
    %vm1552 = vcmp.ge.f32.partialorder %v917, 0.0
    %vm1553 = vcmp.ge.f32.partialorder %v1143, 0.0
    %vm1554 = vcmp.ge.f32.partialorder %v920, 0.0
    %vm1555 = vcmp.ge.f32.partialorder %v1146, 0.0
    %vm1556 = vcmp.ge.f32.partialorder %v923, 0.0
    %vm1557 = vcmp.ge.f32.partialorder %v1149, 0.0
    %vm1558 = vcmp.ge.f32.partialorder %v926, 0.0
    %vm1559 = vcmp.ge.f32.partialorder %v1152, 0.0
    %vm1560 = vcmp.ge.f32.partialorder %v929, 0.0
    %vm1561 = vcmp.ge.f32.partialorder %v1155, 0.0
    %vm1562 = vcmp.ge.f32.partialorder %v932, 0.0
    %vm1563 = vcmp.ge.f32.partialorder %v1158, 0.0
    %vm1564 = vcmp.ge.f32.partialorder %v935, 0.0
    %vm1565 = vcmp.ge.f32.partialorder %v1161, 0.0
    %vm1566 = vcmp.ge.f32.partialorder %v938, 0.0
    %vm1567 = vcmp.ge.f32.partialorder %v1164, 0.0
    %vm1568 = vcmp.ge.f32.partialorder %v941, 0.0
    %vm1569 = vcmp.ge.f32.partialorder %v1167, 0.0
    %vm1570 = vcmp.ge.f32.partialorder %v944, 0.0
    %vm1571 = vcmp.ge.f32.partialorder %v1170, 0.0
    %vm1572 = vcmp.ge.f32.partialorder %v947, 0.0
    %vm1573 = vcmp.ge.f32.partialorder %v1173, 0.0
    %vm1574 = vcmp.ge.f32.partialorder %v950, 0.0
    %vm1575 = vcmp.ge.f32.partialorder %v1176, 0.0
    %vm1576 = vcmp.ge.f32.partialorder %v953, 0.0
    %vm1577 = vcmp.ge.f32.partialorder %v1179, 0.0
    %vm1578 = vcmp.ge.f32.partialorder %v956, 0.0
    %vm1579 = vcmp.ge.f32.partialorder %v1182, 0.0
    %vm1580 = vcmp.ge.f32.partialorder %v959, 0.0
    %vm1581 = vcmp.ge.f32.partialorder %v1185, 0.0
    %vm1582 = vcmp.ge.f32.partialorder %v962, 0.0
    %vm1583 = vcmp.ge.f32.partialorder %v1188, 0.0
    %vm1584 = vcmp.ge.f32.partialorder %v965, 0.0
    %vm1585 = vcmp.ge.f32.partialorder %v1191, 0.0
    %vm1586 = vcmp.ge.f32.partialorder %v968, 0.0
    %vm1587 = vcmp.ge.f32.partialorder %v1194, 0.0
    %vm1588 = vcmp.ge.f32.partialorder %v971, 0.0
    %vm1589 = vcmp.ge.f32.partialorder %v1197, 0.0
    %vm1590 = vcmp.ge.f32.partialorder %v974, 0.0
    %vm1591 = vcmp.ge.f32.partialorder %v1200, 0.0
    %vm1592 = vcmp.ge.f32.partialorder %v977, 0.0
    %vm1593 = vcmp.ge.f32.partialorder %v1203, 0.0
    %vm1594 = vcmp.ge.f32.partialorder %v980, 0.0
    %vm1595 = vcmp.ge.f32.partialorder %v1206, 0.0
    %vm1596 = vcmp.ge.f32.partialorder %v983, 0.0
    %vm1597 = vcmp.ge.f32.partialorder %v1209, 0.0
    %vm1598 = vcmp.ge.f32.partialorder %v986, 0.0
    %vm1599 = vcmp.ge.f32.partialorder %v1212, 0.0
    %vm1600 = vcmp.ge.f32.partialorder %v989, 0.0
    %vm1601 = vcmp.ge.f32.partialorder %v1215, 0.0
    %vm1602 = vcmp.ge.f32.partialorder %v992, 0.0
    %vm1603 = vcmp.ge.f32.partialorder %v1218, 0.0
    %v1604 = vsel %vm1540, %v899, %v1476
    %v1605 = vsel %vm1541, %v1125, %v1477
    %v1606 = vsel %vm1542, %v902, %v1478
    %v1607 = vsel %vm1543, %v1128, %v1479
    %v1608 = vsel %vm1544, %v905, %v1480
    %v1609 = vsel %vm1545, %v1131, %v1481
    %v1610 = vsel %vm1546, %v908, %v1482
    %v1611 = vsel %vm1547, %v1134, %v1483
    %v1612 = vsel %vm1548, %v911, %v1484
    %v1613 = vsel %vm1549, %v1137, %v1485
    %v1614 = vsel %vm1550, %v914, %v1486
    %v1615 = vsel %vm1551, %v1140, %v1487
    %v1616 = vsel %vm1552, %v917, %v1488
    %v1617 = vsel %vm1553, %v1143, %v1489
    %v1618 = vsel %vm1554, %v920, %v1490
    %v1619 = vsel %vm1555, %v1146, %v1491
    %v1620 = vsel %vm1556, %v923, %v1492
    %v1621 = vsel %vm1557, %v1149, %v1493
    %v1622 = vsel %vm1558, %v926, %v1494
    %v1623 = vsel %vm1559, %v1152, %v1495
    %v1624 = vsel %vm1560, %v929, %v1496
    %v1625 = vsel %vm1561, %v1155, %v1497
    %v1626 = vsel %vm1562, %v932, %v1498
    %v1627 = vsel %vm1563, %v1158, %v1499
    %v1628 = vsel %vm1564, %v935, %v1500
    %v1629 = vsel %vm1565, %v1161, %v1501
    %v1630 = vsel %vm1566, %v938, %v1502
    %v1631 = vsel %vm1567, %v1164, %v1503
    %v1632 = vsel %vm1568, %v941, %v1504
    %v1633 = vsel %vm1569, %v1167, %v1505
    %v1634 = vsel %vm1570, %v944, %v1506
    %v1635 = vsel %vm1571, %v1170, %v1507
    %v1636 = vsel %vm1572, %v947, %v1508
    %v1637 = vsel %vm1573, %v1173, %v1509
    %v1638 = vsel %vm1574, %v950, %v1510
    %v1639 = vsel %vm1575, %v1176, %v1511
    %v1640 = vsel %vm1576, %v953, %v1512
    %v1641 = vsel %vm1577, %v1179, %v1513
    %v1642 = vsel %vm1578, %v956, %v1514
    %v1643 = vsel %vm1579, %v1182, %v1515
    %v1644 = vsel %vm1580, %v959, %v1516
    %v1645 = vsel %vm1581, %v1185, %v1517
    %v1646 = vsel %vm1582, %v962, %v1518
    %v1647 = vsel %vm1583, %v1188, %v1519
    %v1648 = vsel %vm1584, %v965, %v1520
    %v1649 = vsel %vm1585, %v1191, %v1521
    %v1650 = vsel %vm1586, %v968, %v1522
    %v1651 = vsel %vm1587, %v1194, %v1523
    %v1652 = vsel %vm1588, %v971, %v1524
    %v1653 = vsel %vm1589, %v1197, %v1525
    %v1654 = vsel %vm1590, %v974, %v1526
    %v1655 = vsel %vm1591, %v1200, %v1527
    %v1656 = vsel %vm1592, %v977, %v1528
    %v1657 = vsel %vm1593, %v1203, %v1529
    %v1658 = vsel %vm1594, %v980, %v1530
    %v1659 = vsel %vm1595, %v1206, %v1531
    %v1660 = vsel %vm1596, %v983, %v1532
    %v1661 = vsel %vm1597, %v1209, %v1533
    %v1662 = vsel %vm1598, %v986, %v1534
    %v1663 = vsel %vm1599, %v1212, %v1535
    %v1664 = vsel %vm1600, %v989, %v1536
    %v1665 = vsel %vm1601, %v1215, %v1537
    %v1666 = vsel %vm1602, %v992, %v1538
    %v1667 = vsel %vm1603, %v1218, %v1539
    %v1668 = vadd.f32 %v1604, %v1606
    %v1669 = vadd.f32 %v1668, %v1608
    %v1670 = vadd.f32 %v1669, %v1610
    %v1671 = vadd.f32 %v1670, %v1612
    %v1672 = vadd.f32 %v1671, %v1614
    %v1673 = vadd.f32 %v1672, %v1616
    %v1674 = vadd.f32 %v1673, %v1618
    %v1675 = vadd.f32 %v1674, %v1620
    %v1676 = vadd.f32 %v1675, %v1622
    %v1677 = vadd.f32 %v1676, %v1624
    %v1678 = vadd.f32 %v1677, %v1626
    %v1679 = vadd.f32 %v1678, %v1628
    %v1680 = vadd.f32 %v1679, %v1630
    %v1681 = vadd.f32 %v1680, %v1632
    %v1682 = vadd.f32 %v1681, %v1634
    %v1683 = vadd.f32 %v1682, %v1636
    %v1684 = vadd.f32 %v1683, %v1638
    %v1685 = vadd.f32 %v1684, %v1640
    %v1686 = vadd.f32 %v1685, %v1642
    %v1687 = vadd.f32 %v1686, %v1644
    %v1688 = vadd.f32 %v1687, %v1646
    %v1689 = vadd.f32 %v1688, %v1648
    %v1690 = vadd.f32 %v1689, %v1650
    %v1691 = vadd.f32 %v1690, %v1652
    %v1692 = vadd.f32 %v1691, %v1654
    %v1693 = vadd.f32 %v1692, %v1656
    %v1694 = vadd.f32 %v1693, %v1658
    %v1695 = vadd.f32 %v1694, %v1660
    %v1696 = vadd.f32 %v1695, %v1662
    %v1697 = vadd.f32 %v1696, %v1664
    %v1698 = vadd.f32 %v1697, %v1666
    %v1699 = vrot.slane %v1698, 4
    %v1700 = vadd.f32 %v1698, %v1699
    %v1701 = vrot.slane %v1700, 2
    %v1702 = vadd.f32 %v1700, %v1701
    %v1703 = vrot.slane %v1702, 1
    %v1704 = vadd.f32 %v1702, %v1703
    %v1705 = vadd.f32 %v1605, %v1607
    %v1706 = vadd.f32 %v1705, %v1609
    %v1707 = vadd.f32 %v1706, %v1611
    %v1708 = vadd.f32 %v1707, %v1613
    %v1709 = vadd.f32 %v1708, %v1615
    %v1710 = vadd.f32 %v1709, %v1617
    %v1711 = vadd.f32 %v1710, %v1619
    %v1712 = vadd.f32 %v1711, %v1621
    %v1713 = vadd.f32 %v1712, %v1623
    %v1714 = vadd.f32 %v1713, %v1625
    %v1715 = vadd.f32 %v1714, %v1627
    %v1716 = vadd.f32 %v1715, %v1629
    %v1717 = vadd.f32 %v1716, %v1631
    %v1718 = vadd.f32 %v1717, %v1633
    %v1719 = vadd.f32 %v1718, %v1635
    %v1720 = vadd.f32 %v1719, %v1637
    %v1721 = vadd.f32 %v1720, %v1639
    %v1722 = vadd.f32 %v1721, %v1641
    %v1723 = vadd.f32 %v1722, %v1643
    %v1724 = vadd.f32 %v1723, %v1645
    %v1725 = vadd.f32 %v1724, %v1647
    %v1726 = vadd.f32 %v1725, %v1649
    %v1727 = vadd.f32 %v1726, %v1651
    %v1728 = vadd.f32 %v1727, %v1653
    %v1729 = vadd.f32 %v1728, %v1655
    %v1730 = vadd.f32 %v1729, %v1657
    %v1731 = vadd.f32 %v1730, %v1659
    %v1732 = vadd.f32 %v1731, %v1661
    %v1733 = vadd.f32 %v1732, %v1663
    %v1734 = vadd.f32 %v1733, %v1665
    %v1735 = vadd.f32 %v1734, %v1667
    %v1736 = vrot.slane %v1735, 4
    %v1737 = vadd.f32 %v1735, %v1736
    %v1738 = vrot.slane %v1737, 2
    %v1739 = vadd.f32 %v1737, %v1738
    %v1740 = vrot.slane %v1739, 1
    %v1741 = vadd.f32 %v1739, %v1740
    %v1742 = vmul.f32 %v1604, %v1604
    %v1743 = vmul.f32 %v1605, %v1605
    %v1744 = vmul.f32 %v1606, %v1606
    %v1745 = vmul.f32 %v1607, %v1607
    %v1746 = vmul.f32 %v1608, %v1608
    %v1747 = vmul.f32 %v1609, %v1609
    %v1748 = vmul.f32 %v1610, %v1610
    %v1749 = vmul.f32 %v1611, %v1611
    %v1750 = vmul.f32 %v1612, %v1612
    %v1751 = vmul.f32 %v1613, %v1613
    %v1752 = vmul.f32 %v1614, %v1614
    %v1753 = vmul.f32 %v1615, %v1615
    %v1754 = vmul.f32 %v1616, %v1616
    %v1755 = vmul.f32 %v1617, %v1617
    %v1756 = vmul.f32 %v1618, %v1618
    %v1757 = vmul.f32 %v1619, %v1619
    %v1758 = vmul.f32 %v1620, %v1620
    %v1759 = vmul.f32 %v1621, %v1621
    %v1760 = vmul.f32 %v1622, %v1622
    %v1761 = vmul.f32 %v1623, %v1623
    %v1762 = vmul.f32 %v1624, %v1624
    %v1763 = vmul.f32 %v1625, %v1625
    %v1764 = vmul.f32 %v1626, %v1626
    %v1765 = vmul.f32 %v1627, %v1627
    %v1766 = vmul.f32 %v1628, %v1628
    %v1767 = vmul.f32 %v1629, %v1629
    %v1768 = vmul.f32 %v1630, %v1630
    %v1769 = vmul.f32 %v1631, %v1631
    %v1770 = vmul.f32 %v1632, %v1632
    %v1771 = vmul.f32 %v1633, %v1633
    %v1772 = vmul.f32 %v1634, %v1634
    %v1773 = vmul.f32 %v1635, %v1635
    %v1774 = vmul.f32 %v1636, %v1636
    %v1775 = vmul.f32 %v1637, %v1637
    %v1776 = vmul.f32 %v1638, %v1638
    %v1777 = vmul.f32 %v1639, %v1639
    %v1778 = vmul.f32 %v1640, %v1640
    %v1779 = vmul.f32 %v1641, %v1641
    %v1780 = vmul.f32 %v1642, %v1642
    %v1781 = vmul.f32 %v1643, %v1643
    %v1782 = vmul.f32 %v1644, %v1644
    %v1783 = vmul.f32 %v1645, %v1645
    %v1784 = vmul.f32 %v1646, %v1646
    %v1785 = vmul.f32 %v1647, %v1647
    %v1786 = vmul.f32 %v1648, %v1648
    %v1787 = vmul.f32 %v1649, %v1649
    %v1788 = vmul.f32 %v1650, %v1650
    %v1789 = vmul.f32 %v1651, %v1651
    %v1790 = vmul.f32 %v1652, %v1652
    %v1791 = vmul.f32 %v1653, %v1653
    %v1792 = vmul.f32 %v1654, %v1654
    %v1793 = vmul.f32 %v1655, %v1655
    %v1794 = vmul.f32 %v1656, %v1656
    %v1795 = vmul.f32 %v1657, %v1657
    %v1796 = vmul.f32 %v1658, %v1658
    %v1797 = vmul.f32 %v1659, %v1659
    %v1798 = vmul.f32 %v1660, %v1660
    %v1799 = vmul.f32 %v1661, %v1661
    %v1800 = vmul.f32 %v1662, %v1662
    %v1801 = vmul.f32 %v1663, %v1663
    %v1802 = vmul.f32 %v1664, %v1664
    %v1803 = vmul.f32 %v1665, %v1665
    %v1804 = vmul.f32 %v1666, %v1666
    %v1805 = vmul.f32 %v1667, %v1667
    %v1806 = vadd.f32 %v1742, %v1744
    %v1807 = vadd.f32 %v1806, %v1746
    %v1808 = vadd.f32 %v1807, %v1748
    %v1809 = vadd.f32 %v1808, %v1750
    %v1810 = vadd.f32 %v1809, %v1752
    %v1811 = vadd.f32 %v1810, %v1754
    %v1812 = vadd.f32 %v1811, %v1756
    %v1813 = vadd.f32 %v1812, %v1758
    %v1814 = vadd.f32 %v1813, %v1760
    %v1815 = vadd.f32 %v1814, %v1762
    %v1816 = vadd.f32 %v1815, %v1764
    %v1817 = vadd.f32 %v1816, %v1766
    %v1818 = vadd.f32 %v1817, %v1768
    %v1819 = vadd.f32 %v1818, %v1770
    %v1820 = vadd.f32 %v1819, %v1772
    %v1821 = vadd.f32 %v1820, %v1774
    %v1822 = vadd.f32 %v1821, %v1776
    %v1823 = vadd.f32 %v1822, %v1778
    %v1824 = vadd.f32 %v1823, %v1780
    %v1825 = vadd.f32 %v1824, %v1782
    %v1826 = vadd.f32 %v1825, %v1784
    %v1827 = vadd.f32 %v1826, %v1786
    %v1828 = vadd.f32 %v1827, %v1788
    %v1829 = vadd.f32 %v1828, %v1790
    %v1830 = vadd.f32 %v1829, %v1792
    %v1831 = vadd.f32 %v1830, %v1794
    %v1832 = vadd.f32 %v1831, %v1796
    %v1833 = vadd.f32 %v1832, %v1798
    %v1834 = vadd.f32 %v1833, %v1800
    %v1835 = vadd.f32 %v1834, %v1802
    %v1836 = vadd.f32 %v1835, %v1804
    %v1837 = vrot.slane %v1836, 4
    %v1838 = vadd.f32 %v1836, %v1837
    %v1839 = vrot.slane %v1838, 2
    %v1840 = vadd.f32 %v1838, %v1839
    %v1841 = vrot.slane %v1840, 1
    %v1842 = vadd.f32 %v1840, %v1841
    %v1843 = vadd.f32 %v1743, %v1745
    %v1844 = vadd.f32 %v1843, %v1747
    %v1845 = vadd.f32 %v1844, %v1749
    %v1846 = vadd.f32 %v1845, %v1751
    %v1847 = vadd.f32 %v1846, %v1753
    %v1848 = vadd.f32 %v1847, %v1755
    %v1849 = vadd.f32 %v1848, %v1757
    %v1850 = vadd.f32 %v1849, %v1759
    %v1851 = vadd.f32 %v1850, %v1761
    %v1852 = vadd.f32 %v1851, %v1763
    %v1853 = vadd.f32 %v1852, %v1765
    %v1854 = vadd.f32 %v1853, %v1767
    %v1855 = vadd.f32 %v1854, %v1769
    %v1856 = vadd.f32 %v1855, %v1771
    %v1857 = vadd.f32 %v1856, %v1773
    %v1858 = vadd.f32 %v1857, %v1775
    %v1859 = vadd.f32 %v1858, %v1777
    %v1860 = vadd.f32 %v1859, %v1779
    %v1861 = vadd.f32 %v1860, %v1781
    %v1862 = vadd.f32 %v1861, %v1783
    %v1863 = vadd.f32 %v1862, %v1785
    %v1864 = vadd.f32 %v1863, %v1787
    %v1865 = vadd.f32 %v1864, %v1789
    %v1866 = vadd.f32 %v1865, %v1791
    %v1867 = vadd.f32 %v1866, %v1793
    %v1868 = vadd.f32 %v1867, %v1795
    %v1869 = vadd.f32 %v1868, %v1797
    %v1870 = vadd.f32 %v1869, %v1799
    %v1871 = vadd.f32 %v1870, %v1801
    %v1872 = vadd.f32 %v1871, %v1803
    %v1873 = vadd.f32 %v1872, %v1805
    %v1874 = vrot.slane %v1873, 4
    %v1875 = vadd.f32 %v1873, %v1874
    %v1876 = vrot.slane %v1875, 2
    %v1877 = vadd.f32 %v1875, %v1876
    %v1878 = vrot.slane %v1877, 1
    %v1879 = vadd.f32 %v1877, %v1878
    %v1880 = vmul.f32 %v1704, 0.00390625
    %v1881 = vmul.f32 %v1741, 0.00390625
    %v1882 = vmul.f32 %v1842, 0.00390625
    %v1883 = vmul.f32 %v1879, 0.00390625
    %v1884 = vmul.f32 %v1880, %v1880
    %v1885 = vmul.f32 %v1881, %v1881
    %v1886 = vsub.f32 %v1882, %v1884
    %v1887 = vsub.f32 %v1883, %v1885
    %v1888 = vmax.f32 %v1886, 0.0
    %v1889 = vmax.f32 %v1887, 0.0
    %v1890 = vsub.f32 %v1604, %v1880
    %v1891 = vsub.f32 %v1605, %v1881
    %v1892 = vsub.f32 %v1606, %v1880
    %v1893 = vsub.f32 %v1607, %v1881
    %v1894 = vsub.f32 %v1608, %v1880
    %v1895 = vsub.f32 %v1609, %v1881
    %v1896 = vsub.f32 %v1610, %v1880
    %v1897 = vsub.f32 %v1611, %v1881
    %v1898 = vsub.f32 %v1612, %v1880
    %v1899 = vsub.f32 %v1613, %v1881
    %v1900 = vsub.f32 %v1614, %v1880
    %v1901 = vsub.f32 %v1615, %v1881
    %v1902 = vsub.f32 %v1616, %v1880
    %v1903 = vsub.f32 %v1617, %v1881
    %v1904 = vsub.f32 %v1618, %v1880
    %v1905 = vsub.f32 %v1619, %v1881
    %v1906 = vsub.f32 %v1620, %v1880
    %v1907 = vsub.f32 %v1621, %v1881
    %v1908 = vsub.f32 %v1622, %v1880
    %v1909 = vsub.f32 %v1623, %v1881
    %v1910 = vsub.f32 %v1624, %v1880
    %v1911 = vsub.f32 %v1625, %v1881
    %v1912 = vsub.f32 %v1626, %v1880
    %v1913 = vsub.f32 %v1627, %v1881
    %v1914 = vsub.f32 %v1628, %v1880
    %v1915 = vsub.f32 %v1629, %v1881
    %v1916 = vsub.f32 %v1630, %v1880
    %v1917 = vsub.f32 %v1631, %v1881
    %v1918 = vsub.f32 %v1632, %v1880
    %v1919 = vsub.f32 %v1633, %v1881
    %v1920 = vsub.f32 %v1634, %v1880
    %v1921 = vsub.f32 %v1635, %v1881
    %v1922 = vsub.f32 %v1636, %v1880
    %v1923 = vsub.f32 %v1637, %v1881
    %v1924 = vsub.f32 %v1638, %v1880
    %v1925 = vsub.f32 %v1639, %v1881
    %v1926 = vsub.f32 %v1640, %v1880
    %v1927 = vsub.f32 %v1641, %v1881
    %v1928 = vsub.f32 %v1642, %v1880
    %v1929 = vsub.f32 %v1643, %v1881
    %v1930 = vsub.f32 %v1644, %v1880
    %v1931 = vsub.f32 %v1645, %v1881
    %v1932 = vsub.f32 %v1646, %v1880
    %v1933 = vsub.f32 %v1647, %v1881
    %v1934 = vsub.f32 %v1648, %v1880
    %v1935 = vsub.f32 %v1649, %v1881
    %v1936 = vsub.f32 %v1650, %v1880
    %v1937 = vsub.f32 %v1651, %v1881
    %v1938 = vsub.f32 %v1652, %v1880
    %v1939 = vsub.f32 %v1653, %v1881
    %v1940 = vsub.f32 %v1654, %v1880
    %v1941 = vsub.f32 %v1655, %v1881
    %v1942 = vsub.f32 %v1656, %v1880
    %v1943 = vsub.f32 %v1657, %v1881
    %v1944 = vsub.f32 %v1658, %v1880
    %v1945 = vsub.f32 %v1659, %v1881
    %v1946 = vsub.f32 %v1660, %v1880
    %v1947 = vsub.f32 %v1661, %v1881
    %v1948 = vsub.f32 %v1662, %v1880
    %v1949 = vsub.f32 %v1663, %v1881
    %v1950 = vsub.f32 %v1664, %v1880
    %v1951 = vsub.f32 %v1665, %v1881
    %v1952 = vsub.f32 %v1666, %v1880
    %v1953 = vsub.f32 %v1667, %v1881
    %v1954 = vadd.f32 %v1888, 1e-05
    %v1955 = vadd.f32 %v1889, 1e-05
    %v1956 = vrsqrt.pop %v1954
    %v1957 = vmul.f32 %v1956, %v1954
    %v1958 = vmul.f32 %v1957, %v1956
    %v1959 = vmul.f32 0.5, %v1958
    %v1960 = vsub.f32 1.5, %v1959
    %v1961 = vmul.f32 %v1956, %v1960
    %vm1962 = vweird.f32 %v1954
    %vm1963 = vweird.f32 %v1956
    %vm1964 = vmor %vm1962, %vm1963
    %v1965 = vsel %vm1964, %v1956, %v1961
    %v1966 = vrsqrt.pop %v1955
    %v1967 = vmul.f32 %v1966, %v1955
    %v1968 = vmul.f32 %v1967, %v1966
    %v1969 = vmul.f32 0.5, %v1968
    %v1970 = vsub.f32 1.5, %v1969
    %v1971 = vmul.f32 %v1966, %v1970
    %vm1972 = vweird.f32 %v1955
    %vm1973 = vweird.f32 %v1966
    %vm1974 = vmor %vm1972, %vm1973
    %v1975 = vsel %vm1974, %v1966, %v1971
    %v1976 = vmul.f32 %v1890, %v1965
    %v1977 = vmul.f32 %v1891, %v1975
    %v1978 = vmul.f32 %v1892, %v1965
    %v1979 = vmul.f32 %v1893, %v1975
    %v1980 = vmul.f32 %v1894, %v1965
    %v1981 = vmul.f32 %v1895, %v1975
    %v1982 = vmul.f32 %v1896, %v1965
    %v1983 = vmul.f32 %v1897, %v1975
    %v1984 = vmul.f32 %v1898, %v1965
    %v1985 = vmul.f32 %v1899, %v1975
    %v1986 = vmul.f32 %v1900, %v1965
    %v1987 = vmul.f32 %v1901, %v1975
    %v1988 = vmul.f32 %v1902, %v1965
    %v1989 = vmul.f32 %v1903, %v1975
    %v1990 = vmul.f32 %v1904, %v1965
    %v1991 = vmul.f32 %v1905, %v1975
    %v1992 = vmul.f32 %v1906, %v1965
    %v1993 = vmul.f32 %v1907, %v1975
    %v1994 = vmul.f32 %v1908, %v1965
    %v1995 = vmul.f32 %v1909, %v1975
    %v1996 = vmul.f32 %v1910, %v1965
    %v1997 = vmul.f32 %v1911, %v1975
    %v1998 = vmul.f32 %v1912, %v1965
    %v1999 = vmul.f32 %v1913, %v1975
    %v2000 = vmul.f32 %v1914, %v1965
    %v2001 = vmul.f32 %v1915, %v1975
    %v2002 = vmul.f32 %v1916, %v1965
    %v2003 = vmul.f32 %v1917, %v1975
    %v2004 = vmul.f32 %v1918, %v1965
    %v2005 = vmul.f32 %v1919, %v1975
    %v2006 = vmul.f32 %v1920, %v1965
    %v2007 = vmul.f32 %v1921, %v1975
    %v2008 = vmul.f32 %v1922, %v1965
    %v2009 = vmul.f32 %v1923, %v1975
    %v2010 = vmul.f32 %v1924, %v1965
    %v2011 = vmul.f32 %v1925, %v1975
    %v2012 = vmul.f32 %v1926, %v1965
    %v2013 = vmul.f32 %v1927, %v1975
    %v2014 = vmul.f32 %v1928, %v1965
    %v2015 = vmul.f32 %v1929, %v1975
    %v2016 = vmul.f32 %v1930, %v1965
    %v2017 = vmul.f32 %v1931, %v1975
    %v2018 = vmul.f32 %v1932, %v1965
    %v2019 = vmul.f32 %v1933, %v1975
    %v2020 = vmul.f32 %v1934, %v1965
    %v2021 = vmul.f32 %v1935, %v1975
    %v2022 = vmul.f32 %v1936, %v1965
    %v2023 = vmul.f32 %v1937, %v1975
    %v2024 = vmul.f32 %v1938, %v1965
    %v2025 = vmul.f32 %v1939, %v1975
    %v2026 = vmul.f32 %v1940, %v1965
    %v2027 = vmul.f32 %v1941, %v1975
    %v2028 = vmul.f32 %v1942, %v1965
    %v2029 = vmul.f32 %v1943, %v1975
    %v2030 = vmul.f32 %v1944, %v1965
    %v2031 = vmul.f32 %v1945, %v1975
    %v2032 = vmul.f32 %v1946, %v1965
    %v2033 = vmul.f32 %v1947, %v1975
    %v2034 = vmul.f32 %v1948, %v1965
    %v2035 = vmul.f32 %v1949, %v1975
    %v2036 = vmul.f32 %v1950, %v1965
    %v2037 = vmul.f32 %v1951, %v1975
    %v2038 = vmul.f32 %v1952, %v1965
    %v2039 = vmul.f32 %v1953, %v1975
    %2040 = vst [vmem:[#allocation13] sm:$0xff] %v1976
    %2041 = vst [vmem:[#allocation13 + $0x8] sm:$0xff] %v1977
    %2042 = vst [vmem:[#allocation13 + $0x10] sm:$0xff] %v1978
    %2043 = vst [vmem:[#allocation13 + $0x18] sm:$0xff] %v1979
    %2044 = vst [vmem:[#allocation13 + $0x20] sm:$0xff] %v1980
    %2045 = vst [vmem:[#allocation13 + $0x28] sm:$0xff] %v1981
    %2046 = vst [vmem:[#allocation13 + $0x30] sm:$0xff] %v1982
    %2047 = vst [vmem:[#allocation13 + $0x38] sm:$0xff] %v1983
    %2048 = vst [vmem:[#allocation13 + $0x40] sm:$0xff] %v1984
    %2049 = vst [vmem:[#allocation13 + $0x48] sm:$0xff] %v1985
    %2050 = vst [vmem:[#allocation13 + $0x50] sm:$0xff] %v1986
    %2051 = vst [vmem:[#allocation13 + $0x58] sm:$0xff] %v1987
    %2052 = vst [vmem:[#allocation13 + $0x60] sm:$0xff] %v1988
    %2053 = vst [vmem:[#allocation13 + $0x68] sm:$0xff] %v1989
    %2054 = vst [vmem:[#allocation13 + $0x70] sm:$0xff] %v1990
    %2055 = vst [vmem:[#allocation13 + $0x78] sm:$0xff] %v1991
    %2056 = vst [vmem:[#allocation13 + $0x80] sm:$0xff] %v1992
    %2057 = vst [vmem:[#allocation13 + $0x88] sm:$0xff] %v1993
    %2058 = vst [vmem:[#allocation13 + $0x90] sm:$0xff] %v1994
    %2059 = vst [vmem:[#allocation13 + $0x98] sm:$0xff] %v1995
    %2060 = vst [vmem:[#allocation13 + $0xa0] sm:$0xff] %v1996
    %2061 = vst [vmem:[#allocation13 + $0xa8] sm:$0xff] %v1997
    %2062 = vst [vmem:[#allocation13 + $0xb0] sm:$0xff] %v1998
    %2063 = vst [vmem:[#allocation13 + $0xb8] sm:$0xff] %v1999
    %2064 = vst [vmem:[#allocation13 + $0xc0] sm:$0xff] %v2000
    %2065 = vst [vmem:[#allocation13 + $0xc8] sm:$0xff] %v2001
    %2066 = vst [vmem:[#allocation13 + $0xd0] sm:$0xff] %v2002
    %2067 = vst [vmem:[#allocation13 + $0xd8] sm:$0xff] %v2003
    %2068 = vst [vmem:[#allocation13 + $0xe0] sm:$0xff] %v2004
    %2069 = vst [vmem:[#allocation13 + $0xe8] sm:$0xff] %v2005
    %2070 = vst [vmem:[#allocation13 + $0xf0] sm:$0xff] %v2006
    %2071 = vst [vmem:[#allocation13 + $0xf8] sm:$0xff] %v2007
    %2072 = vst [vmem:[#allocation13 + $0x100] sm:$0xff] %v2008
    %2073 = vst [vmem:[#allocation13 + $0x108] sm:$0xff] %v2009
    %2074 = vst [vmem:[#allocation13 + $0x110] sm:$0xff] %v2010
    %2075 = vst [vmem:[#allocation13 + $0x118] sm:$0xff] %v2011
    %2076 = vst [vmem:[#allocation13 + $0x120] sm:$0xff] %v2012
    %2077 = vst [vmem:[#allocation13 + $0x128] sm:$0xff] %v2013
    %2078 = vst [vmem:[#allocation13 + $0x130] sm:$0xff] %v2014
    %2079 = vst [vmem:[#allocation13 + $0x138] sm:$0xff] %v2015
    %2080 = vst [vmem:[#allocation13 + $0x140] sm:$0xff] %v2016
    %2081 = vst [vmem:[#allocation13 + $0x148] sm:$0xff] %v2017
    %2082 = vst [vmem:[#allocation13 + $0x150] sm:$0xff] %v2018
    %2083 = vst [vmem:[#allocation13 + $0x158] sm:$0xff] %v2019
    %2084 = vst [vmem:[#allocation13 + $0x160] sm:$0xff] %v2020
    %2085 = vst [vmem:[#allocation13 + $0x168] sm:$0xff] %v2021
    %2086 = vst [vmem:[#allocation13 + $0x170] sm:$0xff] %v2022
    %2087 = vst [vmem:[#allocation13 + $0x178] sm:$0xff] %v2023
    %2088 = vst [vmem:[#allocation13 + $0x180] sm:$0xff] %v2024
    %2089 = vst [vmem:[#allocation13 + $0x188] sm:$0xff] %v2025
    %2090 = vst [vmem:[#allocation13 + $0x190] sm:$0xff] %v2026
    %2091 = vst [vmem:[#allocation13 + $0x198] sm:$0xff] %v2027
    %2092 = vst [vmem:[#allocation13 + $0x1a0] sm:$0xff] %v2028
    %2093 = vst [vmem:[#allocation13 + $0x1a8] sm:$0xff] %v2029
    %2094 = vst [vmem:[#allocation13 + $0x1b0] sm:$0xff] %v2030
    %2095 = vst [vmem:[#allocation13 + $0x1b8] sm:$0xff] %v2031
    %2096 = vst [vmem:[#allocation13 + $0x1c0] sm:$0xff] %v2032
    %2097 = vst [vmem:[#allocation13 + $0x1c8] sm:$0xff] %v2033
    %2098 = vst [vmem:[#allocation13 + $0x1d0] sm:$0xff] %v2034
    %2099 = vst [vmem:[#allocation13 + $0x1d8] sm:$0xff] %v2035
    %2100 = vst [vmem:[#allocation13 + $0x1e0] sm:$0xff] %v2036
    %2101 = vst [vmem:[#allocation13 + $0x1e8] sm:$0xff] %v2037
    %2102 = vst [vmem:[#allocation13 + $0x1f0] sm:$0xff] %v2038
    %2103 = vst [vmem:[#allocation13 + $0x1f8] sm:$0xff] %v2039
    %v2104 = vld [vmem:[#allocation8] sm:$0xff]
    %v2105 = vld [vmem:[#allocation8 + $0x8] sm:$0xff]
    %v2106 = vld [vmem:[#allocation8 + $0x10] sm:$0xff]
    %v2107 = vld [vmem:[#allocation8 + $0x18] sm:$0xff]
    %v2108 = vld [vmem:[#allocation8 + $0x20] sm:$0xff]
    %v2109 = vld [vmem:[#allocation8 + $0x28] sm:$0xff]
    %v2110 = vld [vmem:[#allocation8 + $0x30] sm:$0xff]
    %v2111 = vld [vmem:[#allocation8 + $0x38] sm:$0xff]
    %v2112 = vld [vmem:[#allocation8 + $0x40] sm:$0xff]
    %v2113 = vld [vmem:[#allocation8 + $0x48] sm:$0xff]
    %v2114 = vld [vmem:[#allocation8 + $0x50] sm:$0xff]
    %v2115 = vld [vmem:[#allocation8 + $0x58] sm:$0xff]
    %v2116 = vld [vmem:[#allocation8 + $0x60] sm:$0xff]
    %v2117 = vld [vmem:[#allocation8 + $0x68] sm:$0xff]
    %v2118 = vld [vmem:[#allocation8 + $0x70] sm:$0xff]
    %v2119 = vld [vmem:[#allocation8 + $0x78] sm:$0xff]
    %v2120 = vld [vmem:[#allocation8 + $0x80] sm:$0xff]
    %v2121 = vld [vmem:[#allocation8 + $0x88] sm:$0xff]
    %v2122 = vld [vmem:[#allocation8 + $0x90] sm:$0xff]
    %v2123 = vld [vmem:[#allocation8 + $0x98] sm:$0xff]
    %v2124 = vld [vmem:[#allocation8 + $0xa0] sm:$0xff]
    %v2125 = vld [vmem:[#allocation8 + $0xa8] sm:$0xff]
    %v2126 = vld [vmem:[#allocation8 + $0xb0] sm:$0xff]
    %v2127 = vld [vmem:[#allocation8 + $0xb8] sm:$0xff]
    %v2128 = vld [vmem:[#allocation8 + $0xc0] sm:$0xff]
    %v2129 = vld [vmem:[#allocation8 + $0xc8] sm:$0xff]
    %v2130 = vld [vmem:[#allocation8 + $0xd0] sm:$0xff]
    %v2131 = vld [vmem:[#allocation8 + $0xd8] sm:$0xff]
    %v2132 = vld [vmem:[#allocation8 + $0xe0] sm:$0xff]
    %v2133 = vld [vmem:[#allocation8 + $0xe8] sm:$0xff]
    %v2134 = vld [vmem:[#allocation8 + $0xf0] sm:$0xff]
    %v2135 = vld [vmem:[#allocation8 + $0xf8] sm:$0xff]
    %v2136 = vld [vmem:[#allocation8 + $0x100] sm:$0xff]
    %v2137 = vld [vmem:[#allocation8 + $0x108] sm:$0xff]
    %v2138 = vld [vmem:[#allocation8 + $0x110] sm:$0xff]
    %v2139 = vld [vmem:[#allocation8 + $0x118] sm:$0xff]
    %v2140 = vld [vmem:[#allocation8 + $0x120] sm:$0xff]
    %v2141 = vld [vmem:[#allocation8 + $0x128] sm:$0xff]
    %v2142 = vld [vmem:[#allocation8 + $0x130] sm:$0xff]
    %v2143 = vld [vmem:[#allocation8 + $0x138] sm:$0xff]
    %v2144 = vld [vmem:[#allocation8 + $0x140] sm:$0xff]
    %v2145 = vld [vmem:[#allocation8 + $0x148] sm:$0xff]
    %v2146 = vld [vmem:[#allocation8 + $0x150] sm:$0xff]
    %v2147 = vld [vmem:[#allocation8 + $0x158] sm:$0xff]
    %v2148 = vld [vmem:[#allocation8 + $0x160] sm:$0xff]
    %v2149 = vld [vmem:[#allocation8 + $0x168] sm:$0xff]
    %v2150 = vld [vmem:[#allocation8 + $0x170] sm:$0xff]
    %v2151 = vld [vmem:[#allocation8 + $0x178] sm:$0xff]
    %v2152 = vld [vmem:[#allocation8 + $0x180] sm:$0xff]
    %v2153 = vld [vmem:[#allocation8 + $0x188] sm:$0xff]
    %v2154 = vld [vmem:[#allocation8 + $0x190] sm:$0xff]
    %v2155 = vld [vmem:[#allocation8 + $0x198] sm:$0xff]
    %v2156 = vld [vmem:[#allocation8 + $0x1a0] sm:$0xff]
    %v2157 = vld [vmem:[#allocation8 + $0x1a8] sm:$0xff]
    %v2158 = vld [vmem:[#allocation8 + $0x1b0] sm:$0xff]
    %v2159 = vld [vmem:[#allocation8 + $0x1b8] sm:$0xff]
    %v2160 = vld [vmem:[#allocation8 + $0x1c0] sm:$0xff]
    %v2161 = vld [vmem:[#allocation8 + $0x1c8] sm:$0xff]
    %v2162 = vld [vmem:[#allocation8 + $0x1d0] sm:$0xff]
    %v2163 = vld [vmem:[#allocation8 + $0x1d8] sm:$0xff]
    %v2164 = vld [vmem:[#allocation8 + $0x1e0] sm:$0xff]
    %v2165 = vld [vmem:[#allocation8 + $0x1e8] sm:$0xff]
    %v2166 = vld [vmem:[#allocation8 + $0x1f0] sm:$0xff]
    %v2167 = vld [vmem:[#allocation8 + $0x1f8] sm:$0xff]
    %2168 = vmatpush.msra.mxu0 %v2134
    %2169 = vmatpush.msra.mxu0 %v2132
    %2170 = vmatpush.msra.mxu0 %v2130
    %2171 = vmatpush.msra.mxu0 %v2128
    %2172 = vmatpush.msra.mxu0 %v2126
    %2173 = vmatpush.msra.mxu0 %v2124
    %2174 = vmatpush.msra.mxu0 %v2122
    %2175 = vmatpush.msra.mxu0 %v2120
    %2176 = vmatpush.msra.mxu0 %v2118
    %2177 = vmatpush.msra.mxu0 %v2116
    %2178 = vmatpush.msra.mxu0 %v2114
    %2179 = vmatpush.msra.mxu0 %v2112
    %2180 = vmatpush.msra.mxu0 %v2110
    %2181 = vmatpush.msra.mxu0 %v2108
    %2182 = vmatpush.msra.mxu0 %v2106
    %2183 = vmatpush.msra.mxu0 %v2104
    %2184 = vmatmul.f32.gmra.mxu0 %v1976
    %v2185 = vpop.f32.mrf.mxu0
    %v2186 = vadd.f32 0.0, %v2185
    %2187 = vmatmul.f32.gmra.mxu0 %v1978
    %v2188 = vpop.f32.mrf.mxu0
    %v2189 = vadd.f32 0.0, %v2188
    %2190 = vmatmul.f32.gmra.mxu0 %v1980
    %v2191 = vpop.f32.mrf.mxu0
    %v2192 = vadd.f32 0.0, %v2191
    %2193 = vmatmul.f32.gmra.mxu0 %v1982
    %v2194 = vpop.f32.mrf.mxu0
    %v2195 = vadd.f32 0.0, %v2194
    %2196 = vmatmul.f32.gmra.mxu0 %v1984
    %v2197 = vpop.f32.mrf.mxu0
    %v2198 = vadd.f32 0.0, %v2197
    %2199 = vmatmul.f32.gmra.mxu0 %v1986
    %v2200 = vpop.f32.mrf.mxu0
    %v2201 = vadd.f32 0.0, %v2200
    %2202 = vmatmul.f32.gmra.mxu0 %v1988
    %v2203 = vpop.f32.mrf.mxu0
    %v2204 = vadd.f32 0.0, %v2203
    %2205 = vmatmul.f32.gmra.mxu0 %v1990
    %v2206 = vpop.f32.mrf.mxu0
    %v2207 = vadd.f32 0.0, %v2206
    %2208 = vmatmul.f32.gmra.mxu0 %v1992
    %v2209 = vpop.f32.mrf.mxu0
    %v2210 = vadd.f32 0.0, %v2209
    %2211 = vmatmul.f32.gmra.mxu0 %v1994
    %v2212 = vpop.f32.mrf.mxu0
    %v2213 = vadd.f32 0.0, %v2212
    %2214 = vmatmul.f32.gmra.mxu0 %v1996
    %v2215 = vpop.f32.mrf.mxu0
    %v2216 = vadd.f32 0.0, %v2215
    %2217 = vmatmul.f32.gmra.mxu0 %v1998
    %v2218 = vpop.f32.mrf.mxu0
    %v2219 = vadd.f32 0.0, %v2218
    %2220 = vmatmul.f32.gmra.mxu0 %v2000
    %v2221 = vpop.f32.mrf.mxu0
    %v2222 = vadd.f32 0.0, %v2221
    %2223 = vmatmul.f32.gmra.mxu0 %v2002
    %v2224 = vpop.f32.mrf.mxu0
    %v2225 = vadd.f32 0.0, %v2224
    %2226 = vmatmul.f32.gmra.mxu0 %v2004
    %v2227 = vpop.f32.mrf.mxu0
    %v2228 = vadd.f32 0.0, %v2227
    %2229 = vmatmul.f32.gmra.mxu0 %v2006
    %v2230 = vpop.f32.mrf.mxu0
    %v2231 = vadd.f32 0.0, %v2230
    %2232 = vmatmul.f32.gmra.mxu0 %v2008
    %v2233 = vpop.f32.mrf.mxu0
    %v2234 = vadd.f32 0.0, %v2233
    %2235 = vmatmul.f32.gmra.mxu0 %v2010
    %v2236 = vpop.f32.mrf.mxu0
    %v2237 = vadd.f32 0.0, %v2236
    %2238 = vmatmul.f32.gmra.mxu0 %v2012
    %v2239 = vpop.f32.mrf.mxu0
    %v2240 = vadd.f32 0.0, %v2239
    %2241 = vmatmul.f32.gmra.mxu0 %v2014
    %v2242 = vpop.f32.mrf.mxu0
    %v2243 = vadd.f32 0.0, %v2242
    %2244 = vmatmul.f32.gmra.mxu0 %v2016
    %v2245 = vpop.f32.mrf.mxu0
    %v2246 = vadd.f32 0.0, %v2245
    %2247 = vmatmul.f32.gmra.mxu0 %v2018
    %v2248 = vpop.f32.mrf.mxu0
    %v2249 = vadd.f32 0.0, %v2248
    %2250 = vmatmul.f32.gmra.mxu0 %v2020
    %v2251 = vpop.f32.mrf.mxu0
    %v2252 = vadd.f32 0.0, %v2251
    %2253 = vmatmul.f32.gmra.mxu0 %v2022
    %v2254 = vpop.f32.mrf.mxu0
    %v2255 = vadd.f32 0.0, %v2254
    %2256 = vmatmul.f32.gmra.mxu0 %v2024
    %v2257 = vpop.f32.mrf.mxu0
    %v2258 = vadd.f32 0.0, %v2257
    %2259 = vmatmul.f32.gmra.mxu0 %v2026
    %v2260 = vpop.f32.mrf.mxu0
    %v2261 = vadd.f32 0.0, %v2260
    %2262 = vmatmul.f32.gmra.mxu0 %v2028
    %v2263 = vpop.f32.mrf.mxu0
    %v2264 = vadd.f32 0.0, %v2263
    %2265 = vmatmul.f32.gmra.mxu0 %v2030
    %v2266 = vpop.f32.mrf.mxu0
    %v2267 = vadd.f32 0.0, %v2266
    %2268 = vmatmul.f32.gmra.mxu0 %v2032
    %v2269 = vpop.f32.mrf.mxu0
    %v2270 = vadd.f32 0.0, %v2269
    %2271 = vmatmul.f32.gmra.mxu0 %v2034
    %v2272 = vpop.f32.mrf.mxu0
    %v2273 = vadd.f32 0.0, %v2272
    %2274 = vmatmul.f32.gmra.mxu0 %v2036
    %v2275 = vpop.f32.mrf.mxu0
    %v2276 = vadd.f32 0.0, %v2275
    %2277 = vmatmul.f32.gmra.mxu0 %v2038
    %v2278 = vpop.f32.mrf.mxu0
    %v2279 = vadd.f32 0.0, %v2278
    %2280 = vdwg.mxu0
    %2281 = vmatpush.msra.mxu0 %v2166
    %2282 = vmatpush.msra.mxu0 %v2164
    %2283 = vmatpush.msra.mxu0 %v2162
    %2284 = vmatpush.msra.mxu0 %v2160
    %2285 = vmatpush.msra.mxu0 %v2158
    %2286 = vmatpush.msra.mxu0 %v2156
    %2287 = vmatpush.msra.mxu0 %v2154
    %2288 = vmatpush.msra.mxu0 %v2152
    %2289 = vmatpush.msra.mxu0 %v2150
    %2290 = vmatpush.msra.mxu0 %v2148
    %2291 = vmatpush.msra.mxu0 %v2146
    %2292 = vmatpush.msra.mxu0 %v2144
    %2293 = vmatpush.msra.mxu0 %v2142
    %2294 = vmatpush.msra.mxu0 %v2140
    %2295 = vmatpush.msra.mxu0 %v2138
    %2296 = vmatpush.msra.mxu0 %v2136
    %2297 = vmatmul.f32.gmra.mxu0 %v1977
    %v2298 = vpop.f32.mrf.mxu0
    %v2299 = vadd.f32 %v2186, %v2298
    %2300 = vmatmul.f32.gmra.mxu0 %v1979
    %v2301 = vpop.f32.mrf.mxu0
    %v2302 = vadd.f32 %v2189, %v2301
    %2303 = vmatmul.f32.gmra.mxu0 %v1981
    %v2304 = vpop.f32.mrf.mxu0
    %v2305 = vadd.f32 %v2192, %v2304
    %2306 = vmatmul.f32.gmra.mxu0 %v1983
    %v2307 = vpop.f32.mrf.mxu0
    %v2308 = vadd.f32 %v2195, %v2307
    %2309 = vmatmul.f32.gmra.mxu0 %v1985
    %v2310 = vpop.f32.mrf.mxu0
    %v2311 = vadd.f32 %v2198, %v2310
    %2312 = vmatmul.f32.gmra.mxu0 %v1987
    %v2313 = vpop.f32.mrf.mxu0
    %v2314 = vadd.f32 %v2201, %v2313
    %2315 = vmatmul.f32.gmra.mxu0 %v1989
    %v2316 = vpop.f32.mrf.mxu0
    %v2317 = vadd.f32 %v2204, %v2316
    %2318 = vmatmul.f32.gmra.mxu0 %v1991
    %v2319 = vpop.f32.mrf.mxu0
    %v2320 = vadd.f32 %v2207, %v2319
    %2321 = vmatmul.f32.gmra.mxu0 %v1993
    %v2322 = vpop.f32.mrf.mxu0
    %v2323 = vadd.f32 %v2210, %v2322
    %2324 = vmatmul.f32.gmra.mxu0 %v1995
    %v2325 = vpop.f32.mrf.mxu0
    %v2326 = vadd.f32 %v2213, %v2325
    %2327 = vmatmul.f32.gmra.mxu0 %v1997
    %v2328 = vpop.f32.mrf.mxu0
    %v2329 = vadd.f32 %v2216, %v2328
    %2330 = vmatmul.f32.gmra.mxu0 %v1999
    %v2331 = vpop.f32.mrf.mxu0
    %v2332 = vadd.f32 %v2219, %v2331
    %2333 = vmatmul.f32.gmra.mxu0 %v2001
    %v2334 = vpop.f32.mrf.mxu0
    %v2335 = vadd.f32 %v2222, %v2334
    %2336 = vmatmul.f32.gmra.mxu0 %v2003
    %v2337 = vpop.f32.mrf.mxu0
    %v2338 = vadd.f32 %v2225, %v2337
    %2339 = vmatmul.f32.gmra.mxu0 %v2005
    %v2340 = vpop.f32.mrf.mxu0
    %v2341 = vadd.f32 %v2228, %v2340
    %2342 = vmatmul.f32.gmra.mxu0 %v2007
    %v2343 = vpop.f32.mrf.mxu0
    %v2344 = vadd.f32 %v2231, %v2343
    %2345 = vmatmul.f32.gmra.mxu0 %v2009
    %v2346 = vpop.f32.mrf.mxu0
    %v2347 = vadd.f32 %v2234, %v2346
    %2348 = vmatmul.f32.gmra.mxu0 %v2011
    %v2349 = vpop.f32.mrf.mxu0
    %v2350 = vadd.f32 %v2237, %v2349
    %2351 = vmatmul.f32.gmra.mxu0 %v2013
    %v2352 = vpop.f32.mrf.mxu0
    %v2353 = vadd.f32 %v2240, %v2352
    %2354 = vmatmul.f32.gmra.mxu0 %v2015
    %v2355 = vpop.f32.mrf.mxu0
    %v2356 = vadd.f32 %v2243, %v2355
    %2357 = vmatmul.f32.gmra.mxu0 %v2017
    %v2358 = vpop.f32.mrf.mxu0
    %v2359 = vadd.f32 %v2246, %v2358
    %2360 = vmatmul.f32.gmra.mxu0 %v2019
    %v2361 = vpop.f32.mrf.mxu0
    %v2362 = vadd.f32 %v2249, %v2361
    %2363 = vmatmul.f32.gmra.mxu0 %v2021
    %v2364 = vpop.f32.mrf.mxu0
    %v2365 = vadd.f32 %v2252, %v2364
    %2366 = vmatmul.f32.gmra.mxu0 %v2023
    %v2367 = vpop.f32.mrf.mxu0
    %v2368 = vadd.f32 %v2255, %v2367
    %2369 = vmatmul.f32.gmra.mxu0 %v2025
    %v2370 = vpop.f32.mrf.mxu0
    %v2371 = vadd.f32 %v2258, %v2370
    %2372 = vmatmul.f32.gmra.mxu0 %v2027
    %v2373 = vpop.f32.mrf.mxu0
    %v2374 = vadd.f32 %v2261, %v2373
    %2375 = vmatmul.f32.gmra.mxu0 %v2029
    %v2376 = vpop.f32.mrf.mxu0
    %v2377 = vadd.f32 %v2264, %v2376
    %2378 = vmatmul.f32.gmra.mxu0 %v2031
    %v2379 = vpop.f32.mrf.mxu0
    %v2380 = vadd.f32 %v2267, %v2379
    %2381 = vmatmul.f32.gmra.mxu0 %v2033
    %v2382 = vpop.f32.mrf.mxu0
    %v2383 = vadd.f32 %v2270, %v2382
    %2384 = vmatmul.f32.gmra.mxu0 %v2035
    %v2385 = vpop.f32.mrf.mxu0
    %v2386 = vadd.f32 %v2273, %v2385
    %2387 = vmatmul.f32.gmra.mxu0 %v2037
    %v2388 = vpop.f32.mrf.mxu0
    %v2389 = vadd.f32 %v2276, %v2388
    %2390 = vmatmul.f32.gmra.mxu0 %v2039
    %v2391 = vpop.f32.mrf.mxu0
    %v2392 = vadd.f32 %v2279, %v2391
    %2393 = vdwg.mxu0
    %2394 = vmatpush.msra.mxu0 %v2135
    %2395 = vmatpush.msra.mxu0 %v2133
    %2396 = vmatpush.msra.mxu0 %v2131
    %2397 = vmatpush.msra.mxu0 %v2129
    %2398 = vmatpush.msra.mxu0 %v2127
    %2399 = vmatpush.msra.mxu0 %v2125
    %2400 = vmatpush.msra.mxu0 %v2123
    %2401 = vmatpush.msra.mxu0 %v2121
    %2402 = vmatpush.msra.mxu0 %v2119
    %2403 = vmatpush.msra.mxu0 %v2117
    %2404 = vmatpush.msra.mxu0 %v2115
    %2405 = vmatpush.msra.mxu0 %v2113
    %2406 = vmatpush.msra.mxu0 %v2111
    %2407 = vmatpush.msra.mxu0 %v2109
    %2408 = vmatpush.msra.mxu0 %v2107
    %2409 = vmatpush.msra.mxu0 %v2105
    %2410 = vmatmul.f32.gmra.mxu0 %v1976
    %v2411 = vpop.f32.mrf.mxu0
    %v2412 = vadd.f32 0.0, %v2411
    %2413 = vmatmul.f32.gmra.mxu0 %v1978
    %v2414 = vpop.f32.mrf.mxu0
    %v2415 = vadd.f32 0.0, %v2414
    %2416 = vmatmul.f32.gmra.mxu0 %v1980
    %v2417 = vpop.f32.mrf.mxu0
    %v2418 = vadd.f32 0.0, %v2417
    %2419 = vmatmul.f32.gmra.mxu0 %v1982
    %v2420 = vpop.f32.mrf.mxu0
    %v2421 = vadd.f32 0.0, %v2420
    %2422 = vmatmul.f32.gmra.mxu0 %v1984
    %v2423 = vpop.f32.mrf.mxu0
    %v2424 = vadd.f32 0.0, %v2423
    %2425 = vmatmul.f32.gmra.mxu0 %v1986
    %v2426 = vpop.f32.mrf.mxu0
    %v2427 = vadd.f32 0.0, %v2426
    %2428 = vmatmul.f32.gmra.mxu0 %v1988
    %v2429 = vpop.f32.mrf.mxu0
    %v2430 = vadd.f32 0.0, %v2429
    %2431 = vmatmul.f32.gmra.mxu0 %v1990
    %v2432 = vpop.f32.mrf.mxu0
    %v2433 = vadd.f32 0.0, %v2432
    %2434 = vmatmul.f32.gmra.mxu0 %v1992
    %v2435 = vpop.f32.mrf.mxu0
    %v2436 = vadd.f32 0.0, %v2435
    %2437 = vmatmul.f32.gmra.mxu0 %v1994
    %v2438 = vpop.f32.mrf.mxu0
    %v2439 = vadd.f32 0.0, %v2438
    %2440 = vmatmul.f32.gmra.mxu0 %v1996
    %v2441 = vpop.f32.mrf.mxu0
    %v2442 = vadd.f32 0.0, %v2441
    %2443 = vmatmul.f32.gmra.mxu0 %v1998
    %v2444 = vpop.f32.mrf.mxu0
    %v2445 = vadd.f32 0.0, %v2444
    %2446 = vmatmul.f32.gmra.mxu0 %v2000
    %v2447 = vpop.f32.mrf.mxu0
    %v2448 = vadd.f32 0.0, %v2447
    %2449 = vmatmul.f32.gmra.mxu0 %v2002
    %v2450 = vpop.f32.mrf.mxu0
    %v2451 = vadd.f32 0.0, %v2450
    %2452 = vmatmul.f32.gmra.mxu0 %v2004
    %v2453 = vpop.f32.mrf.mxu0
    %v2454 = vadd.f32 0.0, %v2453
    %2455 = vmatmul.f32.gmra.mxu0 %v2006
    %v2456 = vpop.f32.mrf.mxu0
    %v2457 = vadd.f32 0.0, %v2456
    %2458 = vmatmul.f32.gmra.mxu0 %v2008
    %v2459 = vpop.f32.mrf.mxu0
    %v2460 = vadd.f32 0.0, %v2459
    %2461 = vmatmul.f32.gmra.mxu0 %v2010
    %v2462 = vpop.f32.mrf.mxu0
    %v2463 = vadd.f32 0.0, %v2462
    %2464 = vmatmul.f32.gmra.mxu0 %v2012
    %v2465 = vpop.f32.mrf.mxu0
    %v2466 = vadd.f32 0.0, %v2465
    %2467 = vmatmul.f32.gmra.mxu0 %v2014
    %v2468 = vpop.f32.mrf.mxu0
    %v2469 = vadd.f32 0.0, %v2468
    %2470 = vmatmul.f32.gmra.mxu0 %v2016
    %v2471 = vpop.f32.mrf.mxu0
    %v2472 = vadd.f32 0.0, %v2471
    %2473 = vmatmul.f32.gmra.mxu0 %v2018
    %v2474 = vpop.f32.mrf.mxu0
    %v2475 = vadd.f32 0.0, %v2474
    %2476 = vmatmul.f32.gmra.mxu0 %v2020
    %v2477 = vpop.f32.mrf.mxu0
    %v2478 = vadd.f32 0.0, %v2477
    %2479 = vmatmul.f32.gmra.mxu0 %v2022
    %v2480 = vpop.f32.mrf.mxu0
    %v2481 = vadd.f32 0.0, %v2480
    %2482 = vmatmul.f32.gmra.mxu0 %v2024
    %v2483 = vpop.f32.mrf.mxu0
    %v2484 = vadd.f32 0.0, %v2483
    %2485 = vmatmul.f32.gmra.mxu0 %v2026
    %v2486 = vpop.f32.mrf.mxu0
    %v2487 = vadd.f32 0.0, %v2486
    %2488 = vmatmul.f32.gmra.mxu0 %v2028
    %v2489 = vpop.f32.mrf.mxu0
    %v2490 = vadd.f32 0.0, %v2489
    %2491 = vmatmul.f32.gmra.mxu0 %v2030
    %v2492 = vpop.f32.mrf.mxu0
    %v2493 = vadd.f32 0.0, %v2492
    %2494 = vmatmul.f32.gmra.mxu0 %v2032
    %v2495 = vpop.f32.mrf.mxu0
    %v2496 = vadd.f32 0.0, %v2495
    %2497 = vmatmul.f32.gmra.mxu0 %v2034
    %v2498 = vpop.f32.mrf.mxu0
    %v2499 = vadd.f32 0.0, %v2498
    %2500 = vmatmul.f32.gmra.mxu0 %v2036
    %v2501 = vpop.f32.mrf.mxu0
    %v2502 = vadd.f32 0.0, %v2501
    %2503 = vmatmul.f32.gmra.mxu0 %v2038
    %v2504 = vpop.f32.mrf.mxu0
    %v2505 = vadd.f32 0.0, %v2504
    %2506 = vdwg.mxu0
    %2507 = vmatpush.msra.mxu0 %v2167
    %2508 = vmatpush.msra.mxu0 %v2165
    %2509 = vmatpush.msra.mxu0 %v2163
    %2510 = vmatpush.msra.mxu0 %v2161
    %2511 = vmatpush.msra.mxu0 %v2159
    %2512 = vmatpush.msra.mxu0 %v2157
    %2513 = vmatpush.msra.mxu0 %v2155
    %2514 = vmatpush.msra.mxu0 %v2153
    %2515 = vmatpush.msra.mxu0 %v2151
    %2516 = vmatpush.msra.mxu0 %v2149
    %2517 = vmatpush.msra.mxu0 %v2147
    %2518 = vmatpush.msra.mxu0 %v2145
    %2519 = vmatpush.msra.mxu0 %v2143
    %2520 = vmatpush.msra.mxu0 %v2141
    %2521 = vmatpush.msra.mxu0 %v2139
    %2522 = vmatpush.msra.mxu0 %v2137
    %2523 = vmatmul.f32.gmra.mxu0 %v1977
    %v2524 = vpop.f32.mrf.mxu0
    %v2525 = vadd.f32 %v2412, %v2524
    %2526 = vmatmul.f32.gmra.mxu0 %v1979
    %v2527 = vpop.f32.mrf.mxu0
    %v2528 = vadd.f32 %v2415, %v2527
    %2529 = vmatmul.f32.gmra.mxu0 %v1981
    %v2530 = vpop.f32.mrf.mxu0
    %v2531 = vadd.f32 %v2418, %v2530
    %2532 = vmatmul.f32.gmra.mxu0 %v1983
    %v2533 = vpop.f32.mrf.mxu0
    %v2534 = vadd.f32 %v2421, %v2533
    %2535 = vmatmul.f32.gmra.mxu0 %v1985
    %v2536 = vpop.f32.mrf.mxu0
    %v2537 = vadd.f32 %v2424, %v2536
    %2538 = vmatmul.f32.gmra.mxu0 %v1987
    %v2539 = vpop.f32.mrf.mxu0
    %v2540 = vadd.f32 %v2427, %v2539
    %2541 = vmatmul.f32.gmra.mxu0 %v1989
    %v2542 = vpop.f32.mrf.mxu0
    %v2543 = vadd.f32 %v2430, %v2542
    %2544 = vmatmul.f32.gmra.mxu0 %v1991
    %v2545 = vpop.f32.mrf.mxu0
    %v2546 = vadd.f32 %v2433, %v2545
    %2547 = vmatmul.f32.gmra.mxu0 %v1993
    %v2548 = vpop.f32.mrf.mxu0
    %v2549 = vadd.f32 %v2436, %v2548
    %2550 = vmatmul.f32.gmra.mxu0 %v1995
    %v2551 = vpop.f32.mrf.mxu0
    %v2552 = vadd.f32 %v2439, %v2551
    %2553 = vmatmul.f32.gmra.mxu0 %v1997
    %v2554 = vpop.f32.mrf.mxu0
    %v2555 = vadd.f32 %v2442, %v2554
    %2556 = vmatmul.f32.gmra.mxu0 %v1999
    %v2557 = vpop.f32.mrf.mxu0
    %v2558 = vadd.f32 %v2445, %v2557
    %2559 = vmatmul.f32.gmra.mxu0 %v2001
    %v2560 = vpop.f32.mrf.mxu0
    %v2561 = vadd.f32 %v2448, %v2560
    %2562 = vmatmul.f32.gmra.mxu0 %v2003
    %v2563 = vpop.f32.mrf.mxu0
    %v2564 = vadd.f32 %v2451, %v2563
    %2565 = vmatmul.f32.gmra.mxu0 %v2005
    %v2566 = vpop.f32.mrf.mxu0
    %v2567 = vadd.f32 %v2454, %v2566
    %2568 = vmatmul.f32.gmra.mxu0 %v2007
    %v2569 = vpop.f32.mrf.mxu0
    %v2570 = vadd.f32 %v2457, %v2569
    %2571 = vmatmul.f32.gmra.mxu0 %v2009
    %v2572 = vpop.f32.mrf.mxu0
    %v2573 = vadd.f32 %v2460, %v2572
    %2574 = vmatmul.f32.gmra.mxu0 %v2011
    %v2575 = vpop.f32.mrf.mxu0
    %v2576 = vadd.f32 %v2463, %v2575
    %2577 = vmatmul.f32.gmra.mxu0 %v2013
    %v2578 = vpop.f32.mrf.mxu0
    %v2579 = vadd.f32 %v2466, %v2578
    %2580 = vmatmul.f32.gmra.mxu0 %v2015
    %v2581 = vpop.f32.mrf.mxu0
    %v2582 = vadd.f32 %v2469, %v2581
    %2583 = vmatmul.f32.gmra.mxu0 %v2017
    %v2584 = vpop.f32.mrf.mxu0
    %v2585 = vadd.f32 %v2472, %v2584
    %2586 = vmatmul.f32.gmra.mxu0 %v2019
    %v2587 = vpop.f32.mrf.mxu0
    %v2588 = vadd.f32 %v2475, %v2587
    %2589 = vmatmul.f32.gmra.mxu0 %v2021
    %v2590 = vpop.f32.mrf.mxu0
    %v2591 = vadd.f32 %v2478, %v2590
    %2592 = vmatmul.f32.gmra.mxu0 %v2023
    %v2593 = vpop.f32.mrf.mxu0
    %v2594 = vadd.f32 %v2481, %v2593
    %2595 = vmatmul.f32.gmra.mxu0 %v2025
    %v2596 = vpop.f32.mrf.mxu0
    %v2597 = vadd.f32 %v2484, %v2596
    %2598 = vmatmul.f32.gmra.mxu0 %v2027
    %v2599 = vpop.f32.mrf.mxu0
    %v2600 = vadd.f32 %v2487, %v2599
    %2601 = vmatmul.f32.gmra.mxu0 %v2029
    %v2602 = vpop.f32.mrf.mxu0
    %v2603 = vadd.f32 %v2490, %v2602
    %2604 = vmatmul.f32.gmra.mxu0 %v2031
    %v2605 = vpop.f32.mrf.mxu0
    %v2606 = vadd.f32 %v2493, %v2605
    %2607 = vmatmul.f32.gmra.mxu0 %v2033
    %v2608 = vpop.f32.mrf.mxu0
    %v2609 = vadd.f32 %v2496, %v2608
    %2610 = vmatmul.f32.gmra.mxu0 %v2035
    %v2611 = vpop.f32.mrf.mxu0
    %v2612 = vadd.f32 %v2499, %v2611
    %2613 = vmatmul.f32.gmra.mxu0 %v2037
    %v2614 = vpop.f32.mrf.mxu0
    %v2615 = vadd.f32 %v2502, %v2614
    %2616 = vmatmul.f32.gmra.mxu0 %v2039
    %v2617 = vpop.f32.mrf.mxu0
    %v2618 = vadd.f32 %v2505, %v2617
    %2619 = vdwg.mxu0
    %v2620 = vld [vmem:[#allocation5] sm:$0xff]
    %v2621 = vld [vmem:[#allocation5 + $0x8] sm:$0xff]
    %v2622 = vld [vmem:[#allocation5 + $0x10] sm:$0xff]
    %v2623 = vld [vmem:[#allocation5 + $0x18] sm:$0xff]
    %v2624 = vld [vmem:[#allocation5 + $0x20] sm:$0xff]
    %v2625 = vld [vmem:[#allocation5 + $0x28] sm:$0xff]
    %v2626 = vld [vmem:[#allocation5 + $0x30] sm:$0xff]
    %v2627 = vld [vmem:[#allocation5 + $0x38] sm:$0xff]
    %v2628 = vld [vmem:[#allocation5 + $0x40] sm:$0xff]
    %v2629 = vld [vmem:[#allocation5 + $0x48] sm:$0xff]
    %v2630 = vld [vmem:[#allocation5 + $0x50] sm:$0xff]
    %v2631 = vld [vmem:[#allocation5 + $0x58] sm:$0xff]
    %v2632 = vld [vmem:[#allocation5 + $0x60] sm:$0xff]
    %v2633 = vld [vmem:[#allocation5 + $0x68] sm:$0xff]
    %v2634 = vld [vmem:[#allocation5 + $0x70] sm:$0xff]
    %v2635 = vld [vmem:[#allocation5 + $0x78] sm:$0xff]
    %v2636 = vld [vmem:[#allocation5 + $0x80] sm:$0xff]
    %v2637 = vld [vmem:[#allocation5 + $0x88] sm:$0xff]
    %v2638 = vld [vmem:[#allocation5 + $0x90] sm:$0xff]
    %v2639 = vld [vmem:[#allocation5 + $0x98] sm:$0xff]
    %v2640 = vld [vmem:[#allocation5 + $0xa0] sm:$0xff]
    %v2641 = vld [vmem:[#allocation5 + $0xa8] sm:$0xff]
    %v2642 = vld [vmem:[#allocation5 + $0xb0] sm:$0xff]
    %v2643 = vld [vmem:[#allocation5 + $0xb8] sm:$0xff]
    %v2644 = vld [vmem:[#allocation5 + $0xc0] sm:$0xff]
    %v2645 = vld [vmem:[#allocation5 + $0xc8] sm:$0xff]
    %v2646 = vld [vmem:[#allocation5 + $0xd0] sm:$0xff]
    %v2647 = vld [vmem:[#allocation5 + $0xd8] sm:$0xff]
    %v2648 = vld [vmem:[#allocation5 + $0xe0] sm:$0xff]
    %v2649 = vld [vmem:[#allocation5 + $0xe8] sm:$0xff]
    %v2650 = vld [vmem:[#allocation5 + $0xf0] sm:$0xff]
    %v2651 = vld [vmem:[#allocation5 + $0xf8] sm:$0xff]
    %v2652 = vld [vmem:[#allocation5 + $0x100] sm:$0xff]
    %v2653 = vld [vmem:[#allocation5 + $0x108] sm:$0xff]
    %v2654 = vld [vmem:[#allocation5 + $0x110] sm:$0xff]
    %v2655 = vld [vmem:[#allocation5 + $0x118] sm:$0xff]
    %v2656 = vld [vmem:[#allocation5 + $0x120] sm:$0xff]
    %v2657 = vld [vmem:[#allocation5 + $0x128] sm:$0xff]
    %v2658 = vld [vmem:[#allocation5 + $0x130] sm:$0xff]
    %v2659 = vld [vmem:[#allocation5 + $0x138] sm:$0xff]
    %v2660 = vld [vmem:[#allocation5 + $0x140] sm:$0xff]
    %v2661 = vld [vmem:[#allocation5 + $0x148] sm:$0xff]
    %v2662 = vld [vmem:[#allocation5 + $0x150] sm:$0xff]
    %v2663 = vld [vmem:[#allocation5 + $0x158] sm:$0xff]
    %v2664 = vld [vmem:[#allocation5 + $0x160] sm:$0xff]
    %v2665 = vld [vmem:[#allocation5 + $0x168] sm:$0xff]
    %v2666 = vld [vmem:[#allocation5 + $0x170] sm:$0xff]
    %v2667 = vld [vmem:[#allocation5 + $0x178] sm:$0xff]
    %v2668 = vld [vmem:[#allocation5 + $0x180] sm:$0xff]
    %v2669 = vld [vmem:[#allocation5 + $0x188] sm:$0xff]
    %v2670 = vld [vmem:[#allocation5 + $0x190] sm:$0xff]
    %v2671 = vld [vmem:[#allocation5 + $0x198] sm:$0xff]
    %v2672 = vld [vmem:[#allocation5 + $0x1a0] sm:$0xff]
    %v2673 = vld [vmem:[#allocation5 + $0x1a8] sm:$0xff]
    %v2674 = vld [vmem:[#allocation5 + $0x1b0] sm:$0xff]
    %v2675 = vld [vmem:[#allocation5 + $0x1b8] sm:$0xff]
    %v2676 = vld [vmem:[#allocation5 + $0x1c0] sm:$0xff]
    %v2677 = vld [vmem:[#allocation5 + $0x1c8] sm:$0xff]
    %v2678 = vld [vmem:[#allocation5 + $0x1d0] sm:$0xff]
    %v2679 = vld [vmem:[#allocation5 + $0x1d8] sm:$0xff]
    %v2680 = vld [vmem:[#allocation5 + $0x1e0] sm:$0xff]
    %v2681 = vld [vmem:[#allocation5 + $0x1e8] sm:$0xff]
    %v2682 = vld [vmem:[#allocation5 + $0x1f0] sm:$0xff]
    %v2683 = vld [vmem:[#allocation5 + $0x1f8] sm:$0xff]
    %2684 = vmatpush.msra.mxu0 %v2344
    %2685 = vmatpush.msra.mxu0 %v2341
    %2686 = vmatpush.msra.mxu0 %v2338
    %2687 = vmatpush.msra.mxu0 %v2335
    %2688 = vmatpush.msra.mxu0 %v2332
    %2689 = vmatpush.msra.mxu0 %v2329
    %2690 = vmatpush.msra.mxu0 %v2326
    %2691 = vmatpush.msra.mxu0 %v2323
    %2692 = vmatpush.msra.mxu0 %v2320
    %2693 = vmatpush.msra.mxu0 %v2317
    %2694 = vmatpush.msra.mxu0 %v2314
    %2695 = vmatpush.msra.mxu0 %v2311
    %2696 = vmatpush.msra.mxu0 %v2308
    %2697 = vmatpush.msra.mxu0 %v2305
    %2698 = vmatpush.msra.mxu0 %v2302
    %2699 = vmatpush.msra.mxu0 %v2299
    %2700 = vmatmul.f32.gmra.mxu0 %v2620
    %v2701 = vpop.f32.mrf.mxu0
    %v2702 = vadd.f32 0.0, %v2701
    %2703 = vmatmul.f32.gmra.mxu0 %v2622
    %v2704 = vpop.f32.mrf.mxu0
    %v2705 = vadd.f32 0.0, %v2704
    %2706 = vmatmul.f32.gmra.mxu0 %v2624
    %v2707 = vpop.f32.mrf.mxu0
    %v2708 = vadd.f32 0.0, %v2707
    %2709 = vmatmul.f32.gmra.mxu0 %v2626
    %v2710 = vpop.f32.mrf.mxu0
    %v2711 = vadd.f32 0.0, %v2710
    %2712 = vmatmul.f32.gmra.mxu0 %v2628
    %v2713 = vpop.f32.mrf.mxu0
    %v2714 = vadd.f32 0.0, %v2713
    %2715 = vmatmul.f32.gmra.mxu0 %v2630
    %v2716 = vpop.f32.mrf.mxu0
    %v2717 = vadd.f32 0.0, %v2716
    %2718 = vmatmul.f32.gmra.mxu0 %v2632
    %v2719 = vpop.f32.mrf.mxu0
    %v2720 = vadd.f32 0.0, %v2719
    %2721 = vmatmul.f32.gmra.mxu0 %v2634
    %v2722 = vpop.f32.mrf.mxu0
    %v2723 = vadd.f32 0.0, %v2722
    %2724 = vmatmul.f32.gmra.mxu0 %v2636
    %v2725 = vpop.f32.mrf.mxu0
    %v2726 = vadd.f32 0.0, %v2725
    %2727 = vmatmul.f32.gmra.mxu0 %v2638
    %v2728 = vpop.f32.mrf.mxu0
    %v2729 = vadd.f32 0.0, %v2728
    %2730 = vmatmul.f32.gmra.mxu0 %v2640
    %v2731 = vpop.f32.mrf.mxu0
    %v2732 = vadd.f32 0.0, %v2731
    %2733 = vmatmul.f32.gmra.mxu0 %v2642
    %v2734 = vpop.f32.mrf.mxu0
    %v2735 = vadd.f32 0.0, %v2734
    %2736 = vmatmul.f32.gmra.mxu0 %v2644
    %v2737 = vpop.f32.mrf.mxu0
    %v2738 = vadd.f32 0.0, %v2737
    %2739 = vmatmul.f32.gmra.mxu0 %v2646
    %v2740 = vpop.f32.mrf.mxu0
    %v2741 = vadd.f32 0.0, %v2740
    %2742 = vmatmul.f32.gmra.mxu0 %v2648
    %v2743 = vpop.f32.mrf.mxu0
    %v2744 = vadd.f32 0.0, %v2743
    %2745 = vmatmul.f32.gmra.mxu0 %v2650
    %v2746 = vpop.f32.mrf.mxu0
    %v2747 = vadd.f32 0.0, %v2746
    %2748 = vmatmul.f32.gmra.mxu0 %v2652
    %v2749 = vpop.f32.mrf.mxu0
    %v2750 = vadd.f32 0.0, %v2749
    %2751 = vmatmul.f32.gmra.mxu0 %v2654
    %v2752 = vpop.f32.mrf.mxu0
    %v2753 = vadd.f32 0.0, %v2752
    %2754 = vmatmul.f32.gmra.mxu0 %v2656
    %v2755 = vpop.f32.mrf.mxu0
    %v2756 = vadd.f32 0.0, %v2755
    %2757 = vmatmul.f32.gmra.mxu0 %v2658
    %v2758 = vpop.f32.mrf.mxu0
    %v2759 = vadd.f32 0.0, %v2758
    %2760 = vmatmul.f32.gmra.mxu0 %v2660
    %v2761 = vpop.f32.mrf.mxu0
    %v2762 = vadd.f32 0.0, %v2761
    %2763 = vmatmul.f32.gmra.mxu0 %v2662
    %v2764 = vpop.f32.mrf.mxu0
    %v2765 = vadd.f32 0.0, %v2764
    %2766 = vmatmul.f32.gmra.mxu0 %v2664
    %v2767 = vpop.f32.mrf.mxu0
    %v2768 = vadd.f32 0.0, %v2767
    %2769 = vmatmul.f32.gmra.mxu0 %v2666
    %v2770 = vpop.f32.mrf.mxu0
    %v2771 = vadd.f32 0.0, %v2770
    %2772 = vmatmul.f32.gmra.mxu0 %v2668
    %v2773 = vpop.f32.mrf.mxu0
    %v2774 = vadd.f32 0.0, %v2773
    %2775 = vmatmul.f32.gmra.mxu0 %v2670
    %v2776 = vpop.f32.mrf.mxu0
    %v2777 = vadd.f32 0.0, %v2776
    %2778 = vmatmul.f32.gmra.mxu0 %v2672
    %v2779 = vpop.f32.mrf.mxu0
    %v2780 = vadd.f32 0.0, %v2779
    %2781 = vmatmul.f32.gmra.mxu0 %v2674
    %v2782 = vpop.f32.mrf.mxu0
    %v2783 = vadd.f32 0.0, %v2782
    %2784 = vmatmul.f32.gmra.mxu0 %v2676
    %v2785 = vpop.f32.mrf.mxu0
    %v2786 = vadd.f32 0.0, %v2785
    %2787 = vmatmul.f32.gmra.mxu0 %v2678
    %v2788 = vpop.f32.mrf.mxu0
    %v2789 = vadd.f32 0.0, %v2788
    %2790 = vmatmul.f32.gmra.mxu0 %v2680
    %v2791 = vpop.f32.mrf.mxu0
    %v2792 = vadd.f32 0.0, %v2791
    %2793 = vmatmul.f32.gmra.mxu0 %v2682
    %v2794 = vpop.f32.mrf.mxu0
    %v2795 = vadd.f32 0.0, %v2794
    %2796 = vdwg.mxu0
    %2797 = vmatpush.msra.mxu0 %v2392
    %2798 = vmatpush.msra.mxu0 %v2389
    %2799 = vmatpush.msra.mxu0 %v2386
    %2800 = vmatpush.msra.mxu0 %v2383
    %2801 = vmatpush.msra.mxu0 %v2380
    %2802 = vmatpush.msra.mxu0 %v2377
    %2803 = vmatpush.msra.mxu0 %v2374
    %2804 = vmatpush.msra.mxu0 %v2371
    %2805 = vmatpush.msra.mxu0 %v2368
    %2806 = vmatpush.msra.mxu0 %v2365
    %2807 = vmatpush.msra.mxu0 %v2362
    %2808 = vmatpush.msra.mxu0 %v2359
    %2809 = vmatpush.msra.mxu0 %v2356
    %2810 = vmatpush.msra.mxu0 %v2353
    %2811 = vmatpush.msra.mxu0 %v2350
    %2812 = vmatpush.msra.mxu0 %v2347
    %2813 = vmatmul.f32.gmra.mxu0 %v2621
    %v2814 = vpop.f32.mrf.mxu0
    %v2815 = vadd.f32 %v2702, %v2814
    %2816 = vmatmul.f32.gmra.mxu0 %v2623
    %v2817 = vpop.f32.mrf.mxu0
    %v2818 = vadd.f32 %v2705, %v2817
    %2819 = vmatmul.f32.gmra.mxu0 %v2625
    %v2820 = vpop.f32.mrf.mxu0
    %v2821 = vadd.f32 %v2708, %v2820
    %2822 = vmatmul.f32.gmra.mxu0 %v2627
    %v2823 = vpop.f32.mrf.mxu0
    %v2824 = vadd.f32 %v2711, %v2823
    %2825 = vmatmul.f32.gmra.mxu0 %v2629
    %v2826 = vpop.f32.mrf.mxu0
    %v2827 = vadd.f32 %v2714, %v2826
    %2828 = vmatmul.f32.gmra.mxu0 %v2631
    %v2829 = vpop.f32.mrf.mxu0
    %v2830 = vadd.f32 %v2717, %v2829
    %2831 = vmatmul.f32.gmra.mxu0 %v2633
    %v2832 = vpop.f32.mrf.mxu0
    %v2833 = vadd.f32 %v2720, %v2832
    %2834 = vmatmul.f32.gmra.mxu0 %v2635
    %v2835 = vpop.f32.mrf.mxu0
    %v2836 = vadd.f32 %v2723, %v2835
    %2837 = vmatmul.f32.gmra.mxu0 %v2637
    %v2838 = vpop.f32.mrf.mxu0
    %v2839 = vadd.f32 %v2726, %v2838
    %2840 = vmatmul.f32.gmra.mxu0 %v2639
    %v2841 = vpop.f32.mrf.mxu0
    %v2842 = vadd.f32 %v2729, %v2841
    %2843 = vmatmul.f32.gmra.mxu0 %v2641
    %v2844 = vpop.f32.mrf.mxu0
    %v2845 = vadd.f32 %v2732, %v2844
    %2846 = vmatmul.f32.gmra.mxu0 %v2643
    %v2847 = vpop.f32.mrf.mxu0
    %v2848 = vadd.f32 %v2735, %v2847
    %2849 = vmatmul.f32.gmra.mxu0 %v2645
    %v2850 = vpop.f32.mrf.mxu0
    %v2851 = vadd.f32 %v2738, %v2850
    %2852 = vmatmul.f32.gmra.mxu0 %v2647
    %v2853 = vpop.f32.mrf.mxu0
    %v2854 = vadd.f32 %v2741, %v2853
    %2855 = vmatmul.f32.gmra.mxu0 %v2649
    %v2856 = vpop.f32.mrf.mxu0
    %v2857 = vadd.f32 %v2744, %v2856
    %2858 = vmatmul.f32.gmra.mxu0 %v2651
    %v2859 = vpop.f32.mrf.mxu0
    %v2860 = vadd.f32 %v2747, %v2859
    %2861 = vmatmul.f32.gmra.mxu0 %v2653
    %v2862 = vpop.f32.mrf.mxu0
    %v2863 = vadd.f32 %v2750, %v2862
    %2864 = vmatmul.f32.gmra.mxu0 %v2655
    %v2865 = vpop.f32.mrf.mxu0
    %v2866 = vadd.f32 %v2753, %v2865
    %2867 = vmatmul.f32.gmra.mxu0 %v2657
    %v2868 = vpop.f32.mrf.mxu0
    %v2869 = vadd.f32 %v2756, %v2868
    %2870 = vmatmul.f32.gmra.mxu0 %v2659
    %v2871 = vpop.f32.mrf.mxu0
    %v2872 = vadd.f32 %v2759, %v2871
    %2873 = vmatmul.f32.gmra.mxu0 %v2661
    %v2874 = vpop.f32.mrf.mxu0
    %v2875 = vadd.f32 %v2762, %v2874
    %2876 = vmatmul.f32.gmra.mxu0 %v2663
    %v2877 = vpop.f32.mrf.mxu0
    %v2878 = vadd.f32 %v2765, %v2877
    %2879 = vmatmul.f32.gmra.mxu0 %v2665
    %v2880 = vpop.f32.mrf.mxu0
    %v2881 = vadd.f32 %v2768, %v2880
    %2882 = vmatmul.f32.gmra.mxu0 %v2667
    %v2883 = vpop.f32.mrf.mxu0
    %v2884 = vadd.f32 %v2771, %v2883
    %2885 = vmatmul.f32.gmra.mxu0 %v2669
    %v2886 = vpop.f32.mrf.mxu0
    %v2887 = vadd.f32 %v2774, %v2886
    %2888 = vmatmul.f32.gmra.mxu0 %v2671
    %v2889 = vpop.f32.mrf.mxu0
    %v2890 = vadd.f32 %v2777, %v2889
    %2891 = vmatmul.f32.gmra.mxu0 %v2673
    %v2892 = vpop.f32.mrf.mxu0
    %v2893 = vadd.f32 %v2780, %v2892
    %2894 = vmatmul.f32.gmra.mxu0 %v2675
    %v2895 = vpop.f32.mrf.mxu0
    %v2896 = vadd.f32 %v2783, %v2895
    %2897 = vmatmul.f32.gmra.mxu0 %v2677
    %v2898 = vpop.f32.mrf.mxu0
    %v2899 = vadd.f32 %v2786, %v2898
    %2900 = vmatmul.f32.gmra.mxu0 %v2679
    %v2901 = vpop.f32.mrf.mxu0
    %v2902 = vadd.f32 %v2789, %v2901
    %2903 = vmatmul.f32.gmra.mxu0 %v2681
    %v2904 = vpop.f32.mrf.mxu0
    %v2905 = vadd.f32 %v2792, %v2904
    %2906 = vmatmul.f32.gmra.mxu0 %v2683
    %v2907 = vpop.f32.mrf.mxu0
    %v2908 = vadd.f32 %v2795, %v2907
    %2909 = vdwg.mxu0
    %2910 = vmatpush.msra.mxu0 %v2570
    %2911 = vmatpush.msra.mxu0 %v2567
    %2912 = vmatpush.msra.mxu0 %v2564
    %2913 = vmatpush.msra.mxu0 %v2561
    %2914 = vmatpush.msra.mxu0 %v2558
    %2915 = vmatpush.msra.mxu0 %v2555
    %2916 = vmatpush.msra.mxu0 %v2552
    %2917 = vmatpush.msra.mxu0 %v2549
    %2918 = vmatpush.msra.mxu0 %v2546
    %2919 = vmatpush.msra.mxu0 %v2543
    %2920 = vmatpush.msra.mxu0 %v2540
    %2921 = vmatpush.msra.mxu0 %v2537
    %2922 = vmatpush.msra.mxu0 %v2534
    %2923 = vmatpush.msra.mxu0 %v2531
    %2924 = vmatpush.msra.mxu0 %v2528
    %2925 = vmatpush.msra.mxu0 %v2525
    %2926 = vmatmul.f32.gmra.mxu0 %v2620
    %v2927 = vpop.f32.mrf.mxu0
    %v2928 = vadd.f32 0.0, %v2927
    %2929 = vmatmul.f32.gmra.mxu0 %v2622
    %v2930 = vpop.f32.mrf.mxu0
    %v2931 = vadd.f32 0.0, %v2930
    %2932 = vmatmul.f32.gmra.mxu0 %v2624
    %v2933 = vpop.f32.mrf.mxu0
    %v2934 = vadd.f32 0.0, %v2933
    %2935 = vmatmul.f32.gmra.mxu0 %v2626
    %v2936 = vpop.f32.mrf.mxu0
    %v2937 = vadd.f32 0.0, %v2936
    %2938 = vmatmul.f32.gmra.mxu0 %v2628
    %v2939 = vpop.f32.mrf.mxu0
    %v2940 = vadd.f32 0.0, %v2939
    %2941 = vmatmul.f32.gmra.mxu0 %v2630
    %v2942 = vpop.f32.mrf.mxu0
    %v2943 = vadd.f32 0.0, %v2942
    %2944 = vmatmul.f32.gmra.mxu0 %v2632
    %v2945 = vpop.f32.mrf.mxu0
    %v2946 = vadd.f32 0.0, %v2945
    %2947 = vmatmul.f32.gmra.mxu0 %v2634
    %v2948 = vpop.f32.mrf.mxu0
    %v2949 = vadd.f32 0.0, %v2948
    %2950 = vmatmul.f32.gmra.mxu0 %v2636
    %v2951 = vpop.f32.mrf.mxu0
    %v2952 = vadd.f32 0.0, %v2951
    %2953 = vmatmul.f32.gmra.mxu0 %v2638
    %v2954 = vpop.f32.mrf.mxu0
    %v2955 = vadd.f32 0.0, %v2954
    %2956 = vmatmul.f32.gmra.mxu0 %v2640
    %v2957 = vpop.f32.mrf.mxu0
    %v2958 = vadd.f32 0.0, %v2957
    %2959 = vmatmul.f32.gmra.mxu0 %v2642
    %v2960 = vpop.f32.mrf.mxu0
    %v2961 = vadd.f32 0.0, %v2960
    %2962 = vmatmul.f32.gmra.mxu0 %v2644
    %v2963 = vpop.f32.mrf.mxu0
    %v2964 = vadd.f32 0.0, %v2963
    %2965 = vmatmul.f32.gmra.mxu0 %v2646
    %v2966 = vpop.f32.mrf.mxu0
    %v2967 = vadd.f32 0.0, %v2966
    %2968 = vmatmul.f32.gmra.mxu0 %v2648
    %v2969 = vpop.f32.mrf.mxu0
    %v2970 = vadd.f32 0.0, %v2969
    %2971 = vmatmul.f32.gmra.mxu0 %v2650
    %v2972 = vpop.f32.mrf.mxu0
    %v2973 = vadd.f32 0.0, %v2972
    %2974 = vmatmul.f32.gmra.mxu0 %v2652
    %v2975 = vpop.f32.mrf.mxu0
    %v2976 = vadd.f32 0.0, %v2975
    %2977 = vmatmul.f32.gmra.mxu0 %v2654
    %v2978 = vpop.f32.mrf.mxu0
    %v2979 = vadd.f32 0.0, %v2978
    %2980 = vmatmul.f32.gmra.mxu0 %v2656
    %v2981 = vpop.f32.mrf.mxu0
    %v2982 = vadd.f32 0.0, %v2981
    %2983 = vmatmul.f32.gmra.mxu0 %v2658
    %v2984 = vpop.f32.mrf.mxu0
    %v2985 = vadd.f32 0.0, %v2984
    %2986 = vmatmul.f32.gmra.mxu0 %v2660
    %v2987 = vpop.f32.mrf.mxu0
    %v2988 = vadd.f32 0.0, %v2987
    %2989 = vmatmul.f32.gmra.mxu0 %v2662
    %v2990 = vpop.f32.mrf.mxu0
    %v2991 = vadd.f32 0.0, %v2990
    %2992 = vmatmul.f32.gmra.mxu0 %v2664
    %v2993 = vpop.f32.mrf.mxu0
    %v2994 = vadd.f32 0.0, %v2993
    %2995 = vmatmul.f32.gmra.mxu0 %v2666
    %v2996 = vpop.f32.mrf.mxu0
    %v2997 = vadd.f32 0.0, %v2996
    %2998 = vmatmul.f32.gmra.mxu0 %v2668
    %v2999 = vpop.f32.mrf.mxu0
    %v3000 = vadd.f32 0.0, %v2999
    %3001 = vmatmul.f32.gmra.mxu0 %v2670
    %v3002 = vpop.f32.mrf.mxu0
    %v3003 = vadd.f32 0.0, %v3002
    %3004 = vmatmul.f32.gmra.mxu0 %v2672
    %v3005 = vpop.f32.mrf.mxu0
    %v3006 = vadd.f32 0.0, %v3005
    %3007 = vmatmul.f32.gmra.mxu0 %v2674
    %v3008 = vpop.f32.mrf.mxu0
    %v3009 = vadd.f32 0.0, %v3008
    %3010 = vmatmul.f32.gmra.mxu0 %v2676
    %v3011 = vpop.f32.mrf.mxu0
    %v3012 = vadd.f32 0.0, %v3011
    %3013 = vmatmul.f32.gmra.mxu0 %v2678
    %v3014 = vpop.f32.mrf.mxu0
    %v3015 = vadd.f32 0.0, %v3014
    %3016 = vmatmul.f32.gmra.mxu0 %v2680
    %v3017 = vpop.f32.mrf.mxu0
    %v3018 = vadd.f32 0.0, %v3017
    %3019 = vmatmul.f32.gmra.mxu0 %v2682
    %v3020 = vpop.f32.mrf.mxu0
    %v3021 = vadd.f32 0.0, %v3020
    %3022 = vdwg.mxu0
    %3023 = vmatpush.msra.mxu0 %v2618
    %3024 = vmatpush.msra.mxu0 %v2615
    %3025 = vmatpush.msra.mxu0 %v2612
    %3026 = vmatpush.msra.mxu0 %v2609
    %3027 = vmatpush.msra.mxu0 %v2606
    %3028 = vmatpush.msra.mxu0 %v2603
    %3029 = vmatpush.msra.mxu0 %v2600
    %3030 = vmatpush.msra.mxu0 %v2597
    %3031 = vmatpush.msra.mxu0 %v2594
    %3032 = vmatpush.msra.mxu0 %v2591
    %3033 = vmatpush.msra.mxu0 %v2588
    %3034 = vmatpush.msra.mxu0 %v2585
    %3035 = vmatpush.msra.mxu0 %v2582
    %3036 = vmatpush.msra.mxu0 %v2579
    %3037 = vmatpush.msra.mxu0 %v2576
    %3038 = vmatpush.msra.mxu0 %v2573
    %3039 = vmatmul.f32.gmra.mxu0 %v2621
    %v3040 = vpop.f32.mrf.mxu0
    %v3041 = vadd.f32 %v2928, %v3040
    %3042 = vmatmul.f32.gmra.mxu0 %v2623
    %v3043 = vpop.f32.mrf.mxu0
    %v3044 = vadd.f32 %v2931, %v3043
    %3045 = vmatmul.f32.gmra.mxu0 %v2625
    %v3046 = vpop.f32.mrf.mxu0
    %v3047 = vadd.f32 %v2934, %v3046
    %3048 = vmatmul.f32.gmra.mxu0 %v2627
    %v3049 = vpop.f32.mrf.mxu0
    %v3050 = vadd.f32 %v2937, %v3049
    %3051 = vmatmul.f32.gmra.mxu0 %v2629
    %v3052 = vpop.f32.mrf.mxu0
    %v3053 = vadd.f32 %v2940, %v3052
    %3054 = vmatmul.f32.gmra.mxu0 %v2631
    %v3055 = vpop.f32.mrf.mxu0
    %v3056 = vadd.f32 %v2943, %v3055
    %3057 = vmatmul.f32.gmra.mxu0 %v2633
    %v3058 = vpop.f32.mrf.mxu0
    %v3059 = vadd.f32 %v2946, %v3058
    %3060 = vmatmul.f32.gmra.mxu0 %v2635
    %v3061 = vpop.f32.mrf.mxu0
    %v3062 = vadd.f32 %v2949, %v3061
    %3063 = vmatmul.f32.gmra.mxu0 %v2637
    %v3064 = vpop.f32.mrf.mxu0
    %v3065 = vadd.f32 %v2952, %v3064
    %3066 = vmatmul.f32.gmra.mxu0 %v2639
    %v3067 = vpop.f32.mrf.mxu0
    %v3068 = vadd.f32 %v2955, %v3067
    %3069 = vmatmul.f32.gmra.mxu0 %v2641
    %v3070 = vpop.f32.mrf.mxu0
    %v3071 = vadd.f32 %v2958, %v3070
    %3072 = vmatmul.f32.gmra.mxu0 %v2643
    %v3073 = vpop.f32.mrf.mxu0
    %v3074 = vadd.f32 %v2961, %v3073
    %3075 = vmatmul.f32.gmra.mxu0 %v2645
    %v3076 = vpop.f32.mrf.mxu0
    %v3077 = vadd.f32 %v2964, %v3076
    %3078 = vmatmul.f32.gmra.mxu0 %v2647
    %v3079 = vpop.f32.mrf.mxu0
    %v3080 = vadd.f32 %v2967, %v3079
    %3081 = vmatmul.f32.gmra.mxu0 %v2649
    %v3082 = vpop.f32.mrf.mxu0
    %v3083 = vadd.f32 %v2970, %v3082
    %3084 = vmatmul.f32.gmra.mxu0 %v2651
    %v3085 = vpop.f32.mrf.mxu0
    %v3086 = vadd.f32 %v2973, %v3085
    %3087 = vmatmul.f32.gmra.mxu0 %v2653
    %v3088 = vpop.f32.mrf.mxu0
    %v3089 = vadd.f32 %v2976, %v3088
    %3090 = vmatmul.f32.gmra.mxu0 %v2655
    %v3091 = vpop.f32.mrf.mxu0
    %v3092 = vadd.f32 %v2979, %v3091
    %3093 = vmatmul.f32.gmra.mxu0 %v2657
    %v3094 = vpop.f32.mrf.mxu0
    %v3095 = vadd.f32 %v2982, %v3094
    %3096 = vmatmul.f32.gmra.mxu0 %v2659
    %v3097 = vpop.f32.mrf.mxu0
    %v3098 = vadd.f32 %v2985, %v3097
    %3099 = vmatmul.f32.gmra.mxu0 %v2661
    %v3100 = vpop.f32.mrf.mxu0
    %v3101 = vadd.f32 %v2988, %v3100
    %3102 = vmatmul.f32.gmra.mxu0 %v2663
    %v3103 = vpop.f32.mrf.mxu0
    %v3104 = vadd.f32 %v2991, %v3103
    %3105 = vmatmul.f32.gmra.mxu0 %v2665
    %v3106 = vpop.f32.mrf.mxu0
    %v3107 = vadd.f32 %v2994, %v3106
    %3108 = vmatmul.f32.gmra.mxu0 %v2667
    %v3109 = vpop.f32.mrf.mxu0
    %v3110 = vadd.f32 %v2997, %v3109
    %3111 = vmatmul.f32.gmra.mxu0 %v2669
    %v3112 = vpop.f32.mrf.mxu0
    %v3113 = vadd.f32 %v3000, %v3112
    %3114 = vmatmul.f32.gmra.mxu0 %v2671
    %v3115 = vpop.f32.mrf.mxu0
    %v3116 = vadd.f32 %v3003, %v3115
    %3117 = vmatmul.f32.gmra.mxu0 %v2673
    %v3118 = vpop.f32.mrf.mxu0
    %v3119 = vadd.f32 %v3006, %v3118
    %3120 = vmatmul.f32.gmra.mxu0 %v2675
    %v3121 = vpop.f32.mrf.mxu0
    %v3122 = vadd.f32 %v3009, %v3121
    %3123 = vmatmul.f32.gmra.mxu0 %v2677
    %v3124 = vpop.f32.mrf.mxu0
    %v3125 = vadd.f32 %v3012, %v3124
    %3126 = vmatmul.f32.gmra.mxu0 %v2679
    %v3127 = vpop.f32.mrf.mxu0
    %v3128 = vadd.f32 %v3015, %v3127
    %3129 = vmatmul.f32.gmra.mxu0 %v2681
    %v3130 = vpop.f32.mrf.mxu0
    %v3131 = vadd.f32 %v3018, %v3130
    %3132 = vmatmul.f32.gmra.mxu0 %v2683
    %v3133 = vpop.f32.mrf.mxu0
    %v3134 = vadd.f32 %v3021, %v3133
    %3135 = vdwg.mxu0
    %v3136 = vmin.f32 %v2815, 0.0
    %v3137 = vmin.f32 %v3041, 0.0
    %v3138 = vmin.f32 %v2818, 0.0
    %v3139 = vmin.f32 %v3044, 0.0
    %v3140 = vmin.f32 %v2821, 0.0
    %v3141 = vmin.f32 %v3047, 0.0
    %v3142 = vmin.f32 %v2824, 0.0
    %v3143 = vmin.f32 %v3050, 0.0
    %v3144 = vmin.f32 %v2827, 0.0
    %v3145 = vmin.f32 %v3053, 0.0
    %v3146 = vmin.f32 %v2830, 0.0
    %v3147 = vmin.f32 %v3056, 0.0
    %v3148 = vmin.f32 %v2833, 0.0
    %v3149 = vmin.f32 %v3059, 0.0
    %v3150 = vmin.f32 %v2836, 0.0
    %v3151 = vmin.f32 %v3062, 0.0
    %v3152 = vmin.f32 %v2839, 0.0
    %v3153 = vmin.f32 %v3065, 0.0
    %v3154 = vmin.f32 %v2842, 0.0
    %v3155 = vmin.f32 %v3068, 0.0
    %v3156 = vmin.f32 %v2845, 0.0
    %v3157 = vmin.f32 %v3071, 0.0
    %v3158 = vmin.f32 %v2848, 0.0
    %v3159 = vmin.f32 %v3074, 0.0
    %v3160 = vmin.f32 %v2851, 0.0
    %v3161 = vmin.f32 %v3077, 0.0
    %v3162 = vmin.f32 %v2854, 0.0
    %v3163 = vmin.f32 %v3080, 0.0
    %v3164 = vmin.f32 %v2857, 0.0
    %v3165 = vmin.f32 %v3083, 0.0
    %v3166 = vmin.f32 %v2860, 0.0
    %v3167 = vmin.f32 %v3086, 0.0
    %v3168 = vmin.f32 %v2863, 0.0
    %v3169 = vmin.f32 %v3089, 0.0
    %v3170 = vmin.f32 %v2866, 0.0
    %v3171 = vmin.f32 %v3092, 0.0
    %v3172 = vmin.f32 %v2869, 0.0
    %v3173 = vmin.f32 %v3095, 0.0
    %v3174 = vmin.f32 %v2872, 0.0
    %v3175 = vmin.f32 %v3098, 0.0
    %v3176 = vmin.f32 %v2875, 0.0
    %v3177 = vmin.f32 %v3101, 0.0
    %v3178 = vmin.f32 %v2878, 0.0
    %v3179 = vmin.f32 %v3104, 0.0
    %v3180 = vmin.f32 %v2881, 0.0
    %v3181 = vmin.f32 %v3107, 0.0
    %v3182 = vmin.f32 %v2884, 0.0
    %v3183 = vmin.f32 %v3110, 0.0
    %v3184 = vmin.f32 %v2887, 0.0
    %v3185 = vmin.f32 %v3113, 0.0
    %v3186 = vmin.f32 %v2890, 0.0
    %v3187 = vmin.f32 %v3116, 0.0
    %v3188 = vmin.f32 %v2893, 0.0
    %v3189 = vmin.f32 %v3119, 0.0
    %v3190 = vmin.f32 %v2896, 0.0
    %v3191 = vmin.f32 %v3122, 0.0
    %v3192 = vmin.f32 %v2899, 0.0
    %v3193 = vmin.f32 %v3125, 0.0
    %v3194 = vmin.f32 %v2902, 0.0
    %v3195 = vmin.f32 %v3128, 0.0
    %v3196 = vmin.f32 %v2905, 0.0
    %v3197 = vmin.f32 %v3131, 0.0
    %v3198 = vmin.f32 %v2908, 0.0
    %v3199 = vmin.f32 %v3134, 0.0
    %v3200 = vmul.f32 %v3136, 0.2
    %v3201 = vmul.f32 %v3137, 0.2
    %v3202 = vmul.f32 %v3138, 0.2
    %v3203 = vmul.f32 %v3139, 0.2
    %v3204 = vmul.f32 %v3140, 0.2
    %v3205 = vmul.f32 %v3141, 0.2
    %v3206 = vmul.f32 %v3142, 0.2
    %v3207 = vmul.f32 %v3143, 0.2
    %v3208 = vmul.f32 %v3144, 0.2
    %v3209 = vmul.f32 %v3145, 0.2
    %v3210 = vmul.f32 %v3146, 0.2
    %v3211 = vmul.f32 %v3147, 0.2
    %v3212 = vmul.f32 %v3148, 0.2
    %v3213 = vmul.f32 %v3149, 0.2
    %v3214 = vmul.f32 %v3150, 0.2
    %v3215 = vmul.f32 %v3151, 0.2
    %v3216 = vmul.f32 %v3152, 0.2
    %v3217 = vmul.f32 %v3153, 0.2
    %v3218 = vmul.f32 %v3154, 0.2
    %v3219 = vmul.f32 %v3155, 0.2
    %v3220 = vmul.f32 %v3156, 0.2
    %v3221 = vmul.f32 %v3157, 0.2
    %v3222 = vmul.f32 %v3158, 0.2
    %v3223 = vmul.f32 %v3159, 0.2
    %v3224 = vmul.f32 %v3160, 0.2
    %v3225 = vmul.f32 %v3161, 0.2
    %v3226 = vmul.f32 %v3162, 0.2
    %v3227 = vmul.f32 %v3163, 0.2
    %v3228 = vmul.f32 %v3164, 0.2
    %v3229 = vmul.f32 %v3165, 0.2
    %v3230 = vmul.f32 %v3166, 0.2
    %v3231 = vmul.f32 %v3167, 0.2
    %v3232 = vmul.f32 %v3168, 0.2
    %v3233 = vmul.f32 %v3169, 0.2
    %v3234 = vmul.f32 %v3170, 0.2
    %v3235 = vmul.f32 %v3171, 0.2
    %v3236 = vmul.f32 %v3172, 0.2
    %v3237 = vmul.f32 %v3173, 0.2
    %v3238 = vmul.f32 %v3174, 0.2
    %v3239 = vmul.f32 %v3175, 0.2
    %v3240 = vmul.f32 %v3176, 0.2
    %v3241 = vmul.f32 %v3177, 0.2
    %v3242 = vmul.f32 %v3178, 0.2
    %v3243 = vmul.f32 %v3179, 0.2
    %v3244 = vmul.f32 %v3180, 0.2
    %v3245 = vmul.f32 %v3181, 0.2
    %v3246 = vmul.f32 %v3182, 0.2
    %v3247 = vmul.f32 %v3183, 0.2
    %v3248 = vmul.f32 %v3184, 0.2
    %v3249 = vmul.f32 %v3185, 0.2
    %v3250 = vmul.f32 %v3186, 0.2
    %v3251 = vmul.f32 %v3187, 0.2
    %v3252 = vmul.f32 %v3188, 0.2
    %v3253 = vmul.f32 %v3189, 0.2
    %v3254 = vmul.f32 %v3190, 0.2
    %v3255 = vmul.f32 %v3191, 0.2
    %v3256 = vmul.f32 %v3192, 0.2
    %v3257 = vmul.f32 %v3193, 0.2
    %v3258 = vmul.f32 %v3194, 0.2
    %v3259 = vmul.f32 %v3195, 0.2
    %v3260 = vmul.f32 %v3196, 0.2
    %v3261 = vmul.f32 %v3197, 0.2
    %v3262 = vmul.f32 %v3198, 0.2
    %v3263 = vmul.f32 %v3199, 0.2
    %v3264 = vmul.f32 %v3200, 1.442695
    %v3265 = vpow.pop %v3264
    %v3266 = vmul.f32 %v3201, 1.442695
    %v3267 = vpow.pop %v3266
    %v3268 = vmul.f32 %v3202, 1.442695
    %v3269 = vpow.pop %v3268
    %v3270 = vmul.f32 %v3203, 1.442695
    %v3271 = vpow.pop %v3270
    %v3272 = vmul.f32 %v3204, 1.442695
    %v3273 = vpow.pop %v3272
    %v3274 = vmul.f32 %v3205, 1.442695
    %v3275 = vpow.pop %v3274
    %v3276 = vmul.f32 %v3206, 1.442695
    %v3277 = vpow.pop %v3276
    %v3278 = vmul.f32 %v3207, 1.442695
    %v3279 = vpow.pop %v3278
    %v3280 = vmul.f32 %v3208, 1.442695
    %v3281 = vpow.pop %v3280
    %v3282 = vmul.f32 %v3209, 1.442695
    %v3283 = vpow.pop %v3282
    %v3284 = vmul.f32 %v3210, 1.442695
    %v3285 = vpow.pop %v3284
    %v3286 = vmul.f32 %v3211, 1.442695
    %v3287 = vpow.pop %v3286
    %v3288 = vmul.f32 %v3212, 1.442695
    %v3289 = vpow.pop %v3288
    %v3290 = vmul.f32 %v3213, 1.442695
    %v3291 = vpow.pop %v3290
    %v3292 = vmul.f32 %v3214, 1.442695
    %v3293 = vpow.pop %v3292
    %v3294 = vmul.f32 %v3215, 1.442695
    %v3295 = vpow.pop %v3294
    %v3296 = vmul.f32 %v3216, 1.442695
    %v3297 = vpow.pop %v3296
    %v3298 = vmul.f32 %v3217, 1.442695
    %v3299 = vpow.pop %v3298
    %v3300 = vmul.f32 %v3218, 1.442695
    %v3301 = vpow.pop %v3300
    %v3302 = vmul.f32 %v3219, 1.442695
    %v3303 = vpow.pop %v3302
    %v3304 = vmul.f32 %v3220, 1.442695
    %v3305 = vpow.pop %v3304
    %v3306 = vmul.f32 %v3221, 1.442695
    %v3307 = vpow.pop %v3306
    %v3308 = vmul.f32 %v3222, 1.442695
    %v3309 = vpow.pop %v3308
    %v3310 = vmul.f32 %v3223, 1.442695
    %v3311 = vpow.pop %v3310
    %v3312 = vmul.f32 %v3224, 1.442695
    %v3313 = vpow.pop %v3312
    %v3314 = vmul.f32 %v3225, 1.442695
    %v3315 = vpow.pop %v3314
    %v3316 = vmul.f32 %v3226, 1.442695
    %v3317 = vpow.pop %v3316
    %v3318 = vmul.f32 %v3227, 1.442695
    %v3319 = vpow.pop %v3318
    %v3320 = vmul.f32 %v3228, 1.442695
    %v3321 = vpow.pop %v3320
    %v3322 = vmul.f32 %v3229, 1.442695
    %v3323 = vpow.pop %v3322
    %v3324 = vmul.f32 %v3230, 1.442695
    %v3325 = vpow.pop %v3324
    %v3326 = vmul.f32 %v3231, 1.442695
    %v3327 = vpow.pop %v3326
    %v3328 = vmul.f32 %v3232, 1.442695
    %v3329 = vpow.pop %v3328
    %v3330 = vmul.f32 %v3233, 1.442695
    %v3331 = vpow.pop %v3330
    %v3332 = vmul.f32 %v3234, 1.442695
    %v3333 = vpow.pop %v3332
    %v3334 = vmul.f32 %v3235, 1.442695
    %v3335 = vpow.pop %v3334
    %v3336 = vmul.f32 %v3236, 1.442695
    %v3337 = vpow.pop %v3336
    %v3338 = vmul.f32 %v3237, 1.442695
    %v3339 = vpow.pop %v3338
    %v3340 = vmul.f32 %v3238, 1.442695
    %v3341 = vpow.pop %v3340
    %v3342 = vmul.f32 %v3239, 1.442695
    %v3343 = vpow.pop %v3342
    %v3344 = vmul.f32 %v3240, 1.442695
    %v3345 = vpow.pop %v3344
    %v3346 = vmul.f32 %v3241, 1.442695
    %v3347 = vpow.pop %v3346
    %v3348 = vmul.f32 %v3242, 1.442695
    %v3349 = vpow.pop %v3348
    %v3350 = vmul.f32 %v3243, 1.442695
    %v3351 = vpow.pop %v3350
    %v3352 = vmul.f32 %v3244, 1.442695
    %v3353 = vpow.pop %v3352
    %v3354 = vmul.f32 %v3245, 1.442695
    %v3355 = vpow.pop %v3354
    %v3356 = vmul.f32 %v3246, 1.442695
    %v3357 = vpow.pop %v3356
    %v3358 = vmul.f32 %v3247, 1.442695
    %v3359 = vpow.pop %v3358
    %v3360 = vmul.f32 %v3248, 1.442695
    %v3361 = vpow.pop %v3360
    %v3362 = vmul.f32 %v3249, 1.442695
    %v3363 = vpow.pop %v3362
    %v3364 = vmul.f32 %v3250, 1.442695
    %v3365 = vpow.pop %v3364
    %v3366 = vmul.f32 %v3251, 1.442695
    %v3367 = vpow.pop %v3366
    %v3368 = vmul.f32 %v3252, 1.442695
    %v3369 = vpow.pop %v3368
    %v3370 = vmul.f32 %v3253, 1.442695
    %v3371 = vpow.pop %v3370
    %v3372 = vmul.f32 %v3254, 1.442695
    %v3373 = vpow.pop %v3372
    %v3374 = vmul.f32 %v3255, 1.442695
    %v3375 = vpow.pop %v3374
    %v3376 = vmul.f32 %v3256, 1.442695
    %v3377 = vpow.pop %v3376
    %v3378 = vmul.f32 %v3257, 1.442695
    %v3379 = vpow.pop %v3378
    %v3380 = vmul.f32 %v3258, 1.442695
    %v3381 = vpow.pop %v3380
    %v3382 = vmul.f32 %v3259, 1.442695
    %v3383 = vpow.pop %v3382
    %v3384 = vmul.f32 %v3260, 1.442695
    %v3385 = vpow.pop %v3384
    %v3386 = vmul.f32 %v3261, 1.442695
    %v3387 = vpow.pop %v3386
    %v3388 = vmul.f32 %v3262, 1.442695
    %v3389 = vpow.pop %v3388
    %v3390 = vmul.f32 %v3263, 1.442695
    %v3391 = vpow.pop %v3390
    %v3392 = vsub.f32 %v3265, 1.0
    %v3393 = vsub.f32 %v3267, 1.0
    %v3394 = vsub.f32 %v3269, 1.0
    %v3395 = vsub.f32 %v3271, 1.0
    %v3396 = vsub.f32 %v3273, 1.0
    %v3397 = vsub.f32 %v3275, 1.0
    %v3398 = vsub.f32 %v3277, 1.0
    %v3399 = vsub.f32 %v3279, 1.0
    %v3400 = vsub.f32 %v3281, 1.0
    %v3401 = vsub.f32 %v3283, 1.0
    %v3402 = vsub.f32 %v3285, 1.0
    %v3403 = vsub.f32 %v3287, 1.0
    %v3404 = vsub.f32 %v3289, 1.0
    %v3405 = vsub.f32 %v3291, 1.0
    %v3406 = vsub.f32 %v3293, 1.0
    %v3407 = vsub.f32 %v3295, 1.0
    %v3408 = vsub.f32 %v3297, 1.0
    %v3409 = vsub.f32 %v3299, 1.0
    %v3410 = vsub.f32 %v3301, 1.0
    %v3411 = vsub.f32 %v3303, 1.0
    %v3412 = vsub.f32 %v3305, 1.0
    %v3413 = vsub.f32 %v3307, 1.0
    %v3414 = vsub.f32 %v3309, 1.0
    %v3415 = vsub.f32 %v3311, 1.0
    %v3416 = vsub.f32 %v3313, 1.0
    %v3417 = vsub.f32 %v3315, 1.0
    %v3418 = vsub.f32 %v3317, 1.0
    %v3419 = vsub.f32 %v3319, 1.0
    %v3420 = vsub.f32 %v3321, 1.0
    %v3421 = vsub.f32 %v3323, 1.0
    %v3422 = vsub.f32 %v3325, 1.0
    %v3423 = vsub.f32 %v3327, 1.0
    %v3424 = vsub.f32 %v3329, 1.0
    %v3425 = vsub.f32 %v3331, 1.0
    %v3426 = vsub.f32 %v3333, 1.0
    %v3427 = vsub.f32 %v3335, 1.0
    %v3428 = vsub.f32 %v3337, 1.0
    %v3429 = vsub.f32 %v3339, 1.0
    %v3430 = vsub.f32 %v3341, 1.0
    %v3431 = vsub.f32 %v3343, 1.0
    %v3432 = vsub.f32 %v3345, 1.0
    %v3433 = vsub.f32 %v3347, 1.0
    %v3434 = vsub.f32 %v3349, 1.0
    %v3435 = vsub.f32 %v3351, 1.0
    %v3436 = vsub.f32 %v3353, 1.0
    %v3437 = vsub.f32 %v3355, 1.0
    %v3438 = vsub.f32 %v3357, 1.0
    %v3439 = vsub.f32 %v3359, 1.0
    %v3440 = vsub.f32 %v3361, 1.0
    %v3441 = vsub.f32 %v3363, 1.0
    %v3442 = vsub.f32 %v3365, 1.0
    %v3443 = vsub.f32 %v3367, 1.0
    %v3444 = vsub.f32 %v3369, 1.0
    %v3445 = vsub.f32 %v3371, 1.0
    %v3446 = vsub.f32 %v3373, 1.0
    %v3447 = vsub.f32 %v3375, 1.0
    %v3448 = vsub.f32 %v3377, 1.0
    %v3449 = vsub.f32 %v3379, 1.0
    %v3450 = vsub.f32 %v3381, 1.0
    %v3451 = vsub.f32 %v3383, 1.0
    %v3452 = vsub.f32 %v3385, 1.0
    %v3453 = vsub.f32 %v3387, 1.0
    %v3454 = vsub.f32 %v3389, 1.0
    %v3455 = vsub.f32 %v3391, 1.0
    %vm3456 = vcmp.ge.f32.partialorder %v2815, 0.0
    %vm3457 = vcmp.ge.f32.partialorder %v3041, 0.0
    %vm3458 = vcmp.ge.f32.partialorder %v2818, 0.0
    %vm3459 = vcmp.ge.f32.partialorder %v3044, 0.0
    %vm3460 = vcmp.ge.f32.partialorder %v2821, 0.0
    %vm3461 = vcmp.ge.f32.partialorder %v3047, 0.0
    %vm3462 = vcmp.ge.f32.partialorder %v2824, 0.0
    %vm3463 = vcmp.ge.f32.partialorder %v3050, 0.0
    %vm3464 = vcmp.ge.f32.partialorder %v2827, 0.0
    %vm3465 = vcmp.ge.f32.partialorder %v3053, 0.0
    %vm3466 = vcmp.ge.f32.partialorder %v2830, 0.0
    %vm3467 = vcmp.ge.f32.partialorder %v3056, 0.0
    %vm3468 = vcmp.ge.f32.partialorder %v2833, 0.0
    %vm3469 = vcmp.ge.f32.partialorder %v3059, 0.0
    %vm3470 = vcmp.ge.f32.partialorder %v2836, 0.0
    %vm3471 = vcmp.ge.f32.partialorder %v3062, 0.0
    %vm3472 = vcmp.ge.f32.partialorder %v2839, 0.0
    %vm3473 = vcmp.ge.f32.partialorder %v3065, 0.0
    %vm3474 = vcmp.ge.f32.partialorder %v2842, 0.0
    %vm3475 = vcmp.ge.f32.partialorder %v3068, 0.0
    %vm3476 = vcmp.ge.f32.partialorder %v2845, 0.0
    %vm3477 = vcmp.ge.f32.partialorder %v3071, 0.0
    %vm3478 = vcmp.ge.f32.partialorder %v2848, 0.0
    %vm3479 = vcmp.ge.f32.partialorder %v3074, 0.0
    %vm3480 = vcmp.ge.f32.partialorder %v2851, 0.0
    %vm3481 = vcmp.ge.f32.partialorder %v3077, 0.0
    %vm3482 = vcmp.ge.f32.partialorder %v2854, 0.0
    %vm3483 = vcmp.ge.f32.partialorder %v3080, 0.0
    %vm3484 = vcmp.ge.f32.partialorder %v2857, 0.0
    %vm3485 = vcmp.ge.f32.partialorder %v3083, 0.0
    %vm3486 = vcmp.ge.f32.partialorder %v2860, 0.0
    %vm3487 = vcmp.ge.f32.partialorder %v3086, 0.0
    %vm3488 = vcmp.ge.f32.partialorder %v2863, 0.0
    %vm3489 = vcmp.ge.f32.partialorder %v3089, 0.0
    %vm3490 = vcmp.ge.f32.partialorder %v2866, 0.0
    %vm3491 = vcmp.ge.f32.partialorder %v3092, 0.0
    %vm3492 = vcmp.ge.f32.partialorder %v2869, 0.0
    %vm3493 = vcmp.ge.f32.partialorder %v3095, 0.0
    %vm3494 = vcmp.ge.f32.partialorder %v2872, 0.0
    %vm3495 = vcmp.ge.f32.partialorder %v3098, 0.0
    %vm3496 = vcmp.ge.f32.partialorder %v2875, 0.0
    %vm3497 = vcmp.ge.f32.partialorder %v3101, 0.0
    %vm3498 = vcmp.ge.f32.partialorder %v2878, 0.0
    %vm3499 = vcmp.ge.f32.partialorder %v3104, 0.0
    %vm3500 = vcmp.ge.f32.partialorder %v2881, 0.0
    %vm3501 = vcmp.ge.f32.partialorder %v3107, 0.0
    %vm3502 = vcmp.ge.f32.partialorder %v2884, 0.0
    %vm3503 = vcmp.ge.f32.partialorder %v3110, 0.0
    %vm3504 = vcmp.ge.f32.partialorder %v2887, 0.0
    %vm3505 = vcmp.ge.f32.partialorder %v3113, 0.0
    %vm3506 = vcmp.ge.f32.partialorder %v2890, 0.0
    %vm3507 = vcmp.ge.f32.partialorder %v3116, 0.0
    %vm3508 = vcmp.ge.f32.partialorder %v2893, 0.0
    %vm3509 = vcmp.ge.f32.partialorder %v3119, 0.0
    %vm3510 = vcmp.ge.f32.partialorder %v2896, 0.0
    %vm3511 = vcmp.ge.f32.partialorder %v3122, 0.0
    %vm3512 = vcmp.ge.f32.partialorder %v2899, 0.0
    %vm3513 = vcmp.ge.f32.partialorder %v3125, 0.0
    %vm3514 = vcmp.ge.f32.partialorder %v2902, 0.0
    %vm3515 = vcmp.ge.f32.partialorder %v3128, 0.0
    %vm3516 = vcmp.ge.f32.partialorder %v2905, 0.0
    %vm3517 = vcmp.ge.f32.partialorder %v3131, 0.0
    %vm3518 = vcmp.ge.f32.partialorder %v2908, 0.0
    %vm3519 = vcmp.ge.f32.partialorder %v3134, 0.0
    %v3520 = vsel %vm3456, %v2815, %v3392
    %v3521 = vsel %vm3457, %v3041, %v3393
    %v3522 = vsel %vm3458, %v2818, %v3394
    %v3523 = vsel %vm3459, %v3044, %v3395
    %v3524 = vsel %vm3460, %v2821, %v3396
    %v3525 = vsel %vm3461, %v3047, %v3397
    %v3526 = vsel %vm3462, %v2824, %v3398
    %v3527 = vsel %vm3463, %v3050, %v3399
    %v3528 = vsel %vm3464, %v2827, %v3400
    %v3529 = vsel %vm3465, %v3053, %v3401
    %v3530 = vsel %vm3466, %v2830, %v3402
    %v3531 = vsel %vm3467, %v3056, %v3403
    %v3532 = vsel %vm3468, %v2833, %v3404
    %v3533 = vsel %vm3469, %v3059, %v3405
    %v3534 = vsel %vm3470, %v2836, %v3406
    %v3535 = vsel %vm3471, %v3062, %v3407
    %v3536 = vsel %vm3472, %v2839, %v3408
    %v3537 = vsel %vm3473, %v3065, %v3409
    %v3538 = vsel %vm3474, %v2842, %v3410
    %v3539 = vsel %vm3475, %v3068, %v3411
    %v3540 = vsel %vm3476, %v2845, %v3412
    %v3541 = vsel %vm3477, %v3071, %v3413
    %v3542 = vsel %vm3478, %v2848, %v3414
    %v3543 = vsel %vm3479, %v3074, %v3415
    %v3544 = vsel %vm3480, %v2851, %v3416
    %v3545 = vsel %vm3481, %v3077, %v3417
    %v3546 = vsel %vm3482, %v2854, %v3418
    %v3547 = vsel %vm3483, %v3080, %v3419
    %v3548 = vsel %vm3484, %v2857, %v3420
    %v3549 = vsel %vm3485, %v3083, %v3421
    %v3550 = vsel %vm3486, %v2860, %v3422
    %v3551 = vsel %vm3487, %v3086, %v3423
    %v3552 = vsel %vm3488, %v2863, %v3424
    %v3553 = vsel %vm3489, %v3089, %v3425
    %v3554 = vsel %vm3490, %v2866, %v3426
    %v3555 = vsel %vm3491, %v3092, %v3427
    %v3556 = vsel %vm3492, %v2869, %v3428
    %v3557 = vsel %vm3493, %v3095, %v3429
    %v3558 = vsel %vm3494, %v2872, %v3430
    %v3559 = vsel %vm3495, %v3098, %v3431
    %v3560 = vsel %vm3496, %v2875, %v3432
    %v3561 = vsel %vm3497, %v3101, %v3433
    %v3562 = vsel %vm3498, %v2878, %v3434
    %v3563 = vsel %vm3499, %v3104, %v3435
    %v3564 = vsel %vm3500, %v2881, %v3436
    %v3565 = vsel %vm3501, %v3107, %v3437
    %v3566 = vsel %vm3502, %v2884, %v3438
    %v3567 = vsel %vm3503, %v3110, %v3439
    %v3568 = vsel %vm3504, %v2887, %v3440
    %v3569 = vsel %vm3505, %v3113, %v3441
    %v3570 = vsel %vm3506, %v2890, %v3442
    %v3571 = vsel %vm3507, %v3116, %v3443
    %v3572 = vsel %vm3508, %v2893, %v3444
    %v3573 = vsel %vm3509, %v3119, %v3445
    %v3574 = vsel %vm3510, %v2896, %v3446
    %v3575 = vsel %vm3511, %v3122, %v3447
    %v3576 = vsel %vm3512, %v2899, %v3448
    %v3577 = vsel %vm3513, %v3125, %v3449
    %v3578 = vsel %vm3514, %v2902, %v3450
    %v3579 = vsel %vm3515, %v3128, %v3451
    %v3580 = vsel %vm3516, %v2905, %v3452
    %v3581 = vsel %vm3517, %v3131, %v3453
    %v3582 = vsel %vm3518, %v2908, %v3454
    %v3583 = vsel %vm3519, %v3134, %v3455
    %v3584 = vadd.f32 %v3520, %v3522
    %v3585 = vadd.f32 %v3584, %v3524
    %v3586 = vadd.f32 %v3585, %v3526
    %v3587 = vadd.f32 %v3586, %v3528
    %v3588 = vadd.f32 %v3587, %v3530
    %v3589 = vadd.f32 %v3588, %v3532
    %v3590 = vadd.f32 %v3589, %v3534
    %v3591 = vadd.f32 %v3590, %v3536
    %v3592 = vadd.f32 %v3591, %v3538
    %v3593 = vadd.f32 %v3592, %v3540
    %v3594 = vadd.f32 %v3593, %v3542
    %v3595 = vadd.f32 %v3594, %v3544
    %v3596 = vadd.f32 %v3595, %v3546
    %v3597 = vadd.f32 %v3596, %v3548
    %v3598 = vadd.f32 %v3597, %v3550
    %v3599 = vadd.f32 %v3598, %v3552
    %v3600 = vadd.f32 %v3599, %v3554
    %v3601 = vadd.f32 %v3600, %v3556
    %v3602 = vadd.f32 %v3601, %v3558
    %v3603 = vadd.f32 %v3602, %v3560
    %v3604 = vadd.f32 %v3603, %v3562
    %v3605 = vadd.f32 %v3604, %v3564
    %v3606 = vadd.f32 %v3605, %v3566
    %v3607 = vadd.f32 %v3606, %v3568
    %v3608 = vadd.f32 %v3607, %v3570
    %v3609 = vadd.f32 %v3608, %v3572
    %v3610 = vadd.f32 %v3609, %v3574
    %v3611 = vadd.f32 %v3610, %v3576
    %v3612 = vadd.f32 %v3611, %v3578
    %v3613 = vadd.f32 %v3612, %v3580
    %v3614 = vadd.f32 %v3613, %v3582
    %v3615 = vrot.slane %v3614, 4
    %v3616 = vadd.f32 %v3614, %v3615
    %v3617 = vrot.slane %v3616, 2
    %v3618 = vadd.f32 %v3616, %v3617
    %v3619 = vrot.slane %v3618, 1
    %v3620 = vadd.f32 %v3618, %v3619
    %v3621 = vadd.f32 %v3521, %v3523
    %v3622 = vadd.f32 %v3621, %v3525
    %v3623 = vadd.f32 %v3622, %v3527
    %v3624 = vadd.f32 %v3623, %v3529
    %v3625 = vadd.f32 %v3624, %v3531
    %v3626 = vadd.f32 %v3625, %v3533
    %v3627 = vadd.f32 %v3626, %v3535
    %v3628 = vadd.f32 %v3627, %v3537
    %v3629 = vadd.f32 %v3628, %v3539
    %v3630 = vadd.f32 %v3629, %v3541
    %v3631 = vadd.f32 %v3630, %v3543
    %v3632 = vadd.f32 %v3631, %v3545
    %v3633 = vadd.f32 %v3632, %v3547
    %v3634 = vadd.f32 %v3633, %v3549
    %v3635 = vadd.f32 %v3634, %v3551
    %v3636 = vadd.f32 %v3635, %v3553
    %v3637 = vadd.f32 %v3636, %v3555
    %v3638 = vadd.f32 %v3637, %v3557
    %v3639 = vadd.f32 %v3638, %v3559
    %v3640 = vadd.f32 %v3639, %v3561
    %v3641 = vadd.f32 %v3640, %v3563
    %v3642 = vadd.f32 %v3641, %v3565
    %v3643 = vadd.f32 %v3642, %v3567
    %v3644 = vadd.f32 %v3643, %v3569
    %v3645 = vadd.f32 %v3644, %v3571
    %v3646 = vadd.f32 %v3645, %v3573
    %v3647 = vadd.f32 %v3646, %v3575
    %v3648 = vadd.f32 %v3647, %v3577
    %v3649 = vadd.f32 %v3648, %v3579
    %v3650 = vadd.f32 %v3649, %v3581
    %v3651 = vadd.f32 %v3650, %v3583
    %v3652 = vrot.slane %v3651, 4
    %v3653 = vadd.f32 %v3651, %v3652
    %v3654 = vrot.slane %v3653, 2
    %v3655 = vadd.f32 %v3653, %v3654
    %v3656 = vrot.slane %v3655, 1
    %v3657 = vadd.f32 %v3655, %v3656
    %v3658 = vmul.f32 %v3520, %v3520
    %v3659 = vmul.f32 %v3521, %v3521
    %v3660 = vmul.f32 %v3522, %v3522
    %v3661 = vmul.f32 %v3523, %v3523
    %v3662 = vmul.f32 %v3524, %v3524
    %v3663 = vmul.f32 %v3525, %v3525
    %v3664 = vmul.f32 %v3526, %v3526
    %v3665 = vmul.f32 %v3527, %v3527
    %v3666 = vmul.f32 %v3528, %v3528
    %v3667 = vmul.f32 %v3529, %v3529
    %v3668 = vmul.f32 %v3530, %v3530
    %v3669 = vmul.f32 %v3531, %v3531
    %v3670 = vmul.f32 %v3532, %v3532
    %v3671 = vmul.f32 %v3533, %v3533
    %v3672 = vmul.f32 %v3534, %v3534
    %v3673 = vmul.f32 %v3535, %v3535
    %v3674 = vmul.f32 %v3536, %v3536
    %v3675 = vmul.f32 %v3537, %v3537
    %v3676 = vmul.f32 %v3538, %v3538
    %v3677 = vmul.f32 %v3539, %v3539
    %v3678 = vmul.f32 %v3540, %v3540
    %v3679 = vmul.f32 %v3541, %v3541
    %v3680 = vmul.f32 %v3542, %v3542
    %v3681 = vmul.f32 %v3543, %v3543
    %v3682 = vmul.f32 %v3544, %v3544
    %v3683 = vmul.f32 %v3545, %v3545
    %v3684 = vmul.f32 %v3546, %v3546
    %v3685 = vmul.f32 %v3547, %v3547
    %v3686 = vmul.f32 %v3548, %v3548
    %v3687 = vmul.f32 %v3549, %v3549
    %v3688 = vmul.f32 %v3550, %v3550
    %v3689 = vmul.f32 %v3551, %v3551
    %v3690 = vmul.f32 %v3552, %v3552
    %v3691 = vmul.f32 %v3553, %v3553
    %v3692 = vmul.f32 %v3554, %v3554
    %v3693 = vmul.f32 %v3555, %v3555
    %v3694 = vmul.f32 %v3556, %v3556
    %v3695 = vmul.f32 %v3557, %v3557
    %v3696 = vmul.f32 %v3558, %v3558
    %v3697 = vmul.f32 %v3559, %v3559
    %v3698 = vmul.f32 %v3560, %v3560
    %v3699 = vmul.f32 %v3561, %v3561
    %v3700 = vmul.f32 %v3562, %v3562
    %v3701 = vmul.f32 %v3563, %v3563
    %v3702 = vmul.f32 %v3564, %v3564
    %v3703 = vmul.f32 %v3565, %v3565
    %v3704 = vmul.f32 %v3566, %v3566
    %v3705 = vmul.f32 %v3567, %v3567
    %v3706 = vmul.f32 %v3568, %v3568
    %v3707 = vmul.f32 %v3569, %v3569
    %v3708 = vmul.f32 %v3570, %v3570
    %v3709 = vmul.f32 %v3571, %v3571
    %v3710 = vmul.f32 %v3572, %v3572
    %v3711 = vmul.f32 %v3573, %v3573
    %v3712 = vmul.f32 %v3574, %v3574
    %v3713 = vmul.f32 %v3575, %v3575
    %v3714 = vmul.f32 %v3576, %v3576
    %v3715 = vmul.f32 %v3577, %v3577
    %v3716 = vmul.f32 %v3578, %v3578
    %v3717 = vmul.f32 %v3579, %v3579
    %v3718 = vmul.f32 %v3580, %v3580
    %v3719 = vmul.f32 %v3581, %v3581
    %v3720 = vmul.f32 %v3582, %v3582
    %v3721 = vmul.f32 %v3583, %v3583
    %v3722 = vadd.f32 %v3658, %v3660
    %v3723 = vadd.f32 %v3722, %v3662
    %v3724 = vadd.f32 %v3723, %v3664
    %v3725 = vadd.f32 %v3724, %v3666
    %v3726 = vadd.f32 %v3725, %v3668
    %v3727 = vadd.f32 %v3726, %v3670
    %v3728 = vadd.f32 %v3727, %v3672
    %v3729 = vadd.f32 %v3728, %v3674
    %v3730 = vadd.f32 %v3729, %v3676
    %v3731 = vadd.f32 %v3730, %v3678
    %v3732 = vadd.f32 %v3731, %v3680
    %v3733 = vadd.f32 %v3732, %v3682
    %v3734 = vadd.f32 %v3733, %v3684
    %v3735 = vadd.f32 %v3734, %v3686
    %v3736 = vadd.f32 %v3735, %v3688
    %v3737 = vadd.f32 %v3736, %v3690
    %v3738 = vadd.f32 %v3737, %v3692
    %v3739 = vadd.f32 %v3738, %v3694
    %v3740 = vadd.f32 %v3739, %v3696
    %v3741 = vadd.f32 %v3740, %v3698
    %v3742 = vadd.f32 %v3741, %v3700
    %v3743 = vadd.f32 %v3742, %v3702
    %v3744 = vadd.f32 %v3743, %v3704
    %v3745 = vadd.f32 %v3744, %v3706
    %v3746 = vadd.f32 %v3745, %v3708
    %v3747 = vadd.f32 %v3746, %v3710
    %v3748 = vadd.f32 %v3747, %v3712
    %v3749 = vadd.f32 %v3748, %v3714
    %v3750 = vadd.f32 %v3749, %v3716
    %v3751 = vadd.f32 %v3750, %v3718
    %v3752 = vadd.f32 %v3751, %v3720
    %v3753 = vrot.slane %v3752, 4
    %v3754 = vadd.f32 %v3752, %v3753
    %v3755 = vrot.slane %v3754, 2
    %v3756 = vadd.f32 %v3754, %v3755
    %v3757 = vrot.slane %v3756, 1
    %v3758 = vadd.f32 %v3756, %v3757
    %v3759 = vadd.f32 %v3659, %v3661
    %v3760 = vadd.f32 %v3759, %v3663
    %v3761 = vadd.f32 %v3760, %v3665
    %v3762 = vadd.f32 %v3761, %v3667
    %v3763 = vadd.f32 %v3762, %v3669
    %v3764 = vadd.f32 %v3763, %v3671
    %v3765 = vadd.f32 %v3764, %v3673
    %v3766 = vadd.f32 %v3765, %v3675
    %v3767 = vadd.f32 %v3766, %v3677
    %v3768 = vadd.f32 %v3767, %v3679
    %v3769 = vadd.f32 %v3768, %v3681
    %v3770 = vadd.f32 %v3769, %v3683
    %v3771 = vadd.f32 %v3770, %v3685
    %v3772 = vadd.f32 %v3771, %v3687
    %v3773 = vadd.f32 %v3772, %v3689
    %v3774 = vadd.f32 %v3773, %v3691
    %v3775 = vadd.f32 %v3774, %v3693
    %v3776 = vadd.f32 %v3775, %v3695
    %v3777 = vadd.f32 %v3776, %v3697
    %v3778 = vadd.f32 %v3777, %v3699
    %v3779 = vadd.f32 %v3778, %v3701
    %v3780 = vadd.f32 %v3779, %v3703
    %v3781 = vadd.f32 %v3780, %v3705
    %v3782 = vadd.f32 %v3781, %v3707
    %v3783 = vadd.f32 %v3782, %v3709
    %v3784 = vadd.f32 %v3783, %v3711
    %v3785 = vadd.f32 %v3784, %v3713
    %v3786 = vadd.f32 %v3785, %v3715
    %v3787 = vadd.f32 %v3786, %v3717
    %v3788 = vadd.f32 %v3787, %v3719
    %v3789 = vadd.f32 %v3788, %v3721
    %v3790 = vrot.slane %v3789, 4
    %v3791 = vadd.f32 %v3789, %v3790
    %v3792 = vrot.slane %v3791, 2
    %v3793 = vadd.f32 %v3791, %v3792
    %v3794 = vrot.slane %v3793, 1
    %v3795 = vadd.f32 %v3793, %v3794
    %v3796 = vmul.f32 %v3620, 0.00390625
    %v3797 = vmul.f32 %v3657, 0.00390625
    %v3798 = vmul.f32 %v3758, 0.00390625
    %v3799 = vmul.f32 %v3795, 0.00390625
    %v3800 = vmul.f32 %v3796, %v3796
    %v3801 = vmul.f32 %v3797, %v3797
    %v3802 = vsub.f32 %v3798, %v3800
    %v3803 = vsub.f32 %v3799, %v3801
    %v3804 = vmax.f32 %v3802, 0.0
    %v3805 = vmax.f32 %v3803, 0.0
    %v3806 = vsub.f32 %v3520, %v3796
    %v3807 = vsub.f32 %v3521, %v3797
    %v3808 = vsub.f32 %v3522, %v3796
    %v3809 = vsub.f32 %v3523, %v3797
    %v3810 = vsub.f32 %v3524, %v3796
    %v3811 = vsub.f32 %v3525, %v3797
    %v3812 = vsub.f32 %v3526, %v3796
    %v3813 = vsub.f32 %v3527, %v3797
    %v3814 = vsub.f32 %v3528, %v3796
    %v3815 = vsub.f32 %v3529, %v3797
    %v3816 = vsub.f32 %v3530, %v3796
    %v3817 = vsub.f32 %v3531, %v3797
    %v3818 = vsub.f32 %v3532, %v3796
    %v3819 = vsub.f32 %v3533, %v3797
    %v3820 = vsub.f32 %v3534, %v3796
    %v3821 = vsub.f32 %v3535, %v3797
    %v3822 = vsub.f32 %v3536, %v3796
    %v3823 = vsub.f32 %v3537, %v3797
    %v3824 = vsub.f32 %v3538, %v3796
    %v3825 = vsub.f32 %v3539, %v3797
    %v3826 = vsub.f32 %v3540, %v3796
    %v3827 = vsub.f32 %v3541, %v3797
    %v3828 = vsub.f32 %v3542, %v3796
    %v3829 = vsub.f32 %v3543, %v3797
    %v3830 = vsub.f32 %v3544, %v3796
    %v3831 = vsub.f32 %v3545, %v3797
    %v3832 = vsub.f32 %v3546, %v3796
    %v3833 = vsub.f32 %v3547, %v3797
    %v3834 = vsub.f32 %v3548, %v3796
    %v3835 = vsub.f32 %v3549, %v3797
    %v3836 = vsub.f32 %v3550, %v3796
    %v3837 = vsub.f32 %v3551, %v3797
    %v3838 = vsub.f32 %v3552, %v3796
    %v3839 = vsub.f32 %v3553, %v3797
    %v3840 = vsub.f32 %v3554, %v3796
    %v3841 = vsub.f32 %v3555, %v3797
    %v3842 = vsub.f32 %v3556, %v3796
    %v3843 = vsub.f32 %v3557, %v3797
    %v3844 = vsub.f32 %v3558, %v3796
    %v3845 = vsub.f32 %v3559, %v3797
    %v3846 = vsub.f32 %v3560, %v3796
    %v3847 = vsub.f32 %v3561, %v3797
    %v3848 = vsub.f32 %v3562, %v3796
    %v3849 = vsub.f32 %v3563, %v3797
    %v3850 = vsub.f32 %v3564, %v3796
    %v3851 = vsub.f32 %v3565, %v3797
    %v3852 = vsub.f32 %v3566, %v3796
    %v3853 = vsub.f32 %v3567, %v3797
    %v3854 = vsub.f32 %v3568, %v3796
    %v3855 = vsub.f32 %v3569, %v3797
    %v3856 = vsub.f32 %v3570, %v3796
    %v3857 = vsub.f32 %v3571, %v3797
    %v3858 = vsub.f32 %v3572, %v3796
    %v3859 = vsub.f32 %v3573, %v3797
    %v3860 = vsub.f32 %v3574, %v3796
    %v3861 = vsub.f32 %v3575, %v3797
    %v3862 = vsub.f32 %v3576, %v3796
    %v3863 = vsub.f32 %v3577, %v3797
    %v3864 = vsub.f32 %v3578, %v3796
    %v3865 = vsub.f32 %v3579, %v3797
    %v3866 = vsub.f32 %v3580, %v3796
    %v3867 = vsub.f32 %v3581, %v3797
    %v3868 = vsub.f32 %v3582, %v3796
    %v3869 = vsub.f32 %v3583, %v3797
    %v3870 = vadd.f32 %v3804, 1e-05
    %v3871 = vadd.f32 %v3805, 1e-05
    %v3872 = vrsqrt.pop %v3870
    %v3873 = vmul.f32 %v3872, %v3870
    %v3874 = vmul.f32 %v3873, %v3872
    %v3875 = vmul.f32 0.5, %v3874
    %v3876 = vsub.f32 1.5, %v3875
    %v3877 = vmul.f32 %v3872, %v3876
    %vm3878 = vweird.f32 %v3870
    %vm3879 = vweird.f32 %v3872
    %vm3880 = vmor %vm3878, %vm3879
    %v3881 = vsel %vm3880, %v3872, %v3877
    %v3882 = vrsqrt.pop %v3871
    %v3883 = vmul.f32 %v3882, %v3871
    %v3884 = vmul.f32 %v3883, %v3882
    %v3885 = vmul.f32 0.5, %v3884
    %v3886 = vsub.f32 1.5, %v3885
    %v3887 = vmul.f32 %v3882, %v3886
    %vm3888 = vweird.f32 %v3871
    %vm3889 = vweird.f32 %v3882
    %vm3890 = vmor %vm3888, %vm3889
    %v3891 = vsel %vm3890, %v3882, %v3887
    %v3892 = vmul.f32 %v3806, %v3881
    %v3893 = vmul.f32 %v3807, %v3891
    %v3894 = vmul.f32 %v3808, %v3881
    %v3895 = vmul.f32 %v3809, %v3891
    %v3896 = vmul.f32 %v3810, %v3881
    %v3897 = vmul.f32 %v3811, %v3891
    %v3898 = vmul.f32 %v3812, %v3881
    %v3899 = vmul.f32 %v3813, %v3891
    %v3900 = vmul.f32 %v3814, %v3881
    %v3901 = vmul.f32 %v3815, %v3891
    %v3902 = vmul.f32 %v3816, %v3881
    %v3903 = vmul.f32 %v3817, %v3891
    %v3904 = vmul.f32 %v3818, %v3881
    %v3905 = vmul.f32 %v3819, %v3891
    %v3906 = vmul.f32 %v3820, %v3881
    %v3907 = vmul.f32 %v3821, %v3891
    %v3908 = vmul.f32 %v3822, %v3881
    %v3909 = vmul.f32 %v3823, %v3891
    %v3910 = vmul.f32 %v3824, %v3881
    %v3911 = vmul.f32 %v3825, %v3891
    %v3912 = vmul.f32 %v3826, %v3881
    %v3913 = vmul.f32 %v3827, %v3891
    %v3914 = vmul.f32 %v3828, %v3881
    %v3915 = vmul.f32 %v3829, %v3891
    %v3916 = vmul.f32 %v3830, %v3881
    %v3917 = vmul.f32 %v3831, %v3891
    %v3918 = vmul.f32 %v3832, %v3881
    %v3919 = vmul.f32 %v3833, %v3891
    %v3920 = vmul.f32 %v3834, %v3881
    %v3921 = vmul.f32 %v3835, %v3891
    %v3922 = vmul.f32 %v3836, %v3881
    %v3923 = vmul.f32 %v3837, %v3891
    %v3924 = vmul.f32 %v3838, %v3881
    %v3925 = vmul.f32 %v3839, %v3891
    %v3926 = vmul.f32 %v3840, %v3881
    %v3927 = vmul.f32 %v3841, %v3891
    %v3928 = vmul.f32 %v3842, %v3881
    %v3929 = vmul.f32 %v3843, %v3891
    %v3930 = vmul.f32 %v3844, %v3881
    %v3931 = vmul.f32 %v3845, %v3891
    %v3932 = vmul.f32 %v3846, %v3881
    %v3933 = vmul.f32 %v3847, %v3891
    %v3934 = vmul.f32 %v3848, %v3881
    %v3935 = vmul.f32 %v3849, %v3891
    %v3936 = vmul.f32 %v3850, %v3881
    %v3937 = vmul.f32 %v3851, %v3891
    %v3938 = vmul.f32 %v3852, %v3881
    %v3939 = vmul.f32 %v3853, %v3891
    %v3940 = vmul.f32 %v3854, %v3881
    %v3941 = vmul.f32 %v3855, %v3891
    %v3942 = vmul.f32 %v3856, %v3881
    %v3943 = vmul.f32 %v3857, %v3891
    %v3944 = vmul.f32 %v3858, %v3881
    %v3945 = vmul.f32 %v3859, %v3891
    %v3946 = vmul.f32 %v3860, %v3881
    %v3947 = vmul.f32 %v3861, %v3891
    %v3948 = vmul.f32 %v3862, %v3881
    %v3949 = vmul.f32 %v3863, %v3891
    %v3950 = vmul.f32 %v3864, %v3881
    %v3951 = vmul.f32 %v3865, %v3891
    %v3952 = vmul.f32 %v3866, %v3881
    %v3953 = vmul.f32 %v3867, %v3891
    %v3954 = vmul.f32 %v3868, %v3881
    %v3955 = vmul.f32 %v3869, %v3891
    %3956 = vst [vmem:[#allocation14] sm:$0xff] %v3892
    %3957 = vst [vmem:[#allocation14 + $0x8] sm:$0xff] %v3893
    %3958 = vst [vmem:[#allocation14 + $0x10] sm:$0xff] %v3894
    %3959 = vst [vmem:[#allocation14 + $0x18] sm:$0xff] %v3895
    %3960 = vst [vmem:[#allocation14 + $0x20] sm:$0xff] %v3896
    %3961 = vst [vmem:[#allocation14 + $0x28] sm:$0xff] %v3897
    %3962 = vst [vmem:[#allocation14 + $0x30] sm:$0xff] %v3898
    %3963 = vst [vmem:[#allocation14 + $0x38] sm:$0xff] %v3899
    %3964 = vst [vmem:[#allocation14 + $0x40] sm:$0xff] %v3900
    %3965 = vst [vmem:[#allocation14 + $0x48] sm:$0xff] %v3901
    %3966 = vst [vmem:[#allocation14 + $0x50] sm:$0xff] %v3902
    %3967 = vst [vmem:[#allocation14 + $0x58] sm:$0xff] %v3903
    %3968 = vst [vmem:[#allocation14 + $0x60] sm:$0xff] %v3904
    %3969 = vst [vmem:[#allocation14 + $0x68] sm:$0xff] %v3905
    %3970 = vst [vmem:[#allocation14 + $0x70] sm:$0xff] %v3906
    %3971 = vst [vmem:[#allocation14 + $0x78] sm:$0xff] %v3907
    %3972 = vst [vmem:[#allocation14 + $0x80] sm:$0xff] %v3908
    %3973 = vst [vmem:[#allocation14 + $0x88] sm:$0xff] %v3909
    %3974 = vst [vmem:[#allocation14 + $0x90] sm:$0xff] %v3910
    %3975 = vst [vmem:[#allocation14 + $0x98] sm:$0xff] %v3911
    %3976 = vst [vmem:[#allocation14 + $0xa0] sm:$0xff] %v3912
    %3977 = vst [vmem:[#allocation14 + $0xa8] sm:$0xff] %v3913
    %3978 = vst [vmem:[#allocation14 + $0xb0] sm:$0xff] %v3914
    %3979 = vst [vmem:[#allocation14 + $0xb8] sm:$0xff] %v3915
    %3980 = vst [vmem:[#allocation14 + $0xc0] sm:$0xff] %v3916
    %3981 = vst [vmem:[#allocation14 + $0xc8] sm:$0xff] %v3917
    %3982 = vst [vmem:[#allocation14 + $0xd0] sm:$0xff] %v3918
    %3983 = vst [vmem:[#allocation14 + $0xd8] sm:$0xff] %v3919
    %3984 = vst [vmem:[#allocation14 + $0xe0] sm:$0xff] %v3920
    %3985 = vst [vmem:[#allocation14 + $0xe8] sm:$0xff] %v3921
    %3986 = vst [vmem:[#allocation14 + $0xf0] sm:$0xff] %v3922
    %3987 = vst [vmem:[#allocation14 + $0xf8] sm:$0xff] %v3923
    %3988 = vst [vmem:[#allocation14 + $0x100] sm:$0xff] %v3924
    %3989 = vst [vmem:[#allocation14 + $0x108] sm:$0xff] %v3925
    %3990 = vst [vmem:[#allocation14 + $0x110] sm:$0xff] %v3926
    %3991 = vst [vmem:[#allocation14 + $0x118] sm:$0xff] %v3927
    %3992 = vst [vmem:[#allocation14 + $0x120] sm:$0xff] %v3928
    %3993 = vst [vmem:[#allocation14 + $0x128] sm:$0xff] %v3929
    %3994 = vst [vmem:[#allocation14 + $0x130] sm:$0xff] %v3930
    %3995 = vst [vmem:[#allocation14 + $0x138] sm:$0xff] %v3931
    %3996 = vst [vmem:[#allocation14 + $0x140] sm:$0xff] %v3932
    %3997 = vst [vmem:[#allocation14 + $0x148] sm:$0xff] %v3933
    %3998 = vst [vmem:[#allocation14 + $0x150] sm:$0xff] %v3934
    %3999 = vst [vmem:[#allocation14 + $0x158] sm:$0xff] %v3935
    %4000 = vst [vmem:[#allocation14 + $0x160] sm:$0xff] %v3936
    %4001 = vst [vmem:[#allocation14 + $0x168] sm:$0xff] %v3937
    %4002 = vst [vmem:[#allocation14 + $0x170] sm:$0xff] %v3938
    %4003 = vst [vmem:[#allocation14 + $0x178] sm:$0xff] %v3939
    %4004 = vst [vmem:[#allocation14 + $0x180] sm:$0xff] %v3940
    %4005 = vst [vmem:[#allocation14 + $0x188] sm:$0xff] %v3941
    %4006 = vst [vmem:[#allocation14 + $0x190] sm:$0xff] %v3942
    %4007 = vst [vmem:[#allocation14 + $0x198] sm:$0xff] %v3943
    %4008 = vst [vmem:[#allocation14 + $0x1a0] sm:$0xff] %v3944
    %4009 = vst [vmem:[#allocation14 + $0x1a8] sm:$0xff] %v3945
    %4010 = vst [vmem:[#allocation14 + $0x1b0] sm:$0xff] %v3946
    %4011 = vst [vmem:[#allocation14 + $0x1b8] sm:$0xff] %v3947
    %4012 = vst [vmem:[#allocation14 + $0x1c0] sm:$0xff] %v3948
    %4013 = vst [vmem:[#allocation14 + $0x1c8] sm:$0xff] %v3949
    %4014 = vst [vmem:[#allocation14 + $0x1d0] sm:$0xff] %v3950
    %4015 = vst [vmem:[#allocation14 + $0x1d8] sm:$0xff] %v3951
    %4016 = vst [vmem:[#allocation14 + $0x1e0] sm:$0xff] %v3952
    %4017 = vst [vmem:[#allocation14 + $0x1e8] sm:$0xff] %v3953
    %4018 = vst [vmem:[#allocation14 + $0x1f0] sm:$0xff] %v3954
    %4019 = vst [vmem:[#allocation14 + $0x1f8] sm:$0xff] %v3955
    %v4020 = vld [vmem:[#allocation10] sm:$0xff]
    %v4021 = vld [vmem:[#allocation10 + $0x8] sm:$0xff]
    %v4022 = vld [vmem:[#allocation10 + $0x10] sm:$0xff]
    %v4023 = vld [vmem:[#allocation10 + $0x18] sm:$0xff]
    %v4024 = vld [vmem:[#allocation10 + $0x20] sm:$0xff]
    %v4025 = vld [vmem:[#allocation10 + $0x28] sm:$0xff]
    %v4026 = vld [vmem:[#allocation10 + $0x30] sm:$0xff]
    %v4027 = vld [vmem:[#allocation10 + $0x38] sm:$0xff]
    %v4028 = vld [vmem:[#allocation10 + $0x40] sm:$0xff]
    %v4029 = vld [vmem:[#allocation10 + $0x48] sm:$0xff]
    %v4030 = vld [vmem:[#allocation10 + $0x50] sm:$0xff]
    %v4031 = vld [vmem:[#allocation10 + $0x58] sm:$0xff]
    %v4032 = vld [vmem:[#allocation10 + $0x60] sm:$0xff]
    %v4033 = vld [vmem:[#allocation10 + $0x68] sm:$0xff]
    %v4034 = vld [vmem:[#allocation10 + $0x70] sm:$0xff]
    %v4035 = vld [vmem:[#allocation10 + $0x78] sm:$0xff]
    %v4036 = vld [vmem:[#allocation10 + $0x80] sm:$0xff]
    %v4037 = vld [vmem:[#allocation10 + $0x88] sm:$0xff]
    %v4038 = vld [vmem:[#allocation10 + $0x90] sm:$0xff]
    %v4039 = vld [vmem:[#allocation10 + $0x98] sm:$0xff]
    %v4040 = vld [vmem:[#allocation10 + $0xa0] sm:$0xff]
    %v4041 = vld [vmem:[#allocation10 + $0xa8] sm:$0xff]
    %v4042 = vld [vmem:[#allocation10 + $0xb0] sm:$0xff]
    %v4043 = vld [vmem:[#allocation10 + $0xb8] sm:$0xff]
    %v4044 = vld [vmem:[#allocation10 + $0xc0] sm:$0xff]
    %v4045 = vld [vmem:[#allocation10 + $0xc8] sm:$0xff]
    %v4046 = vld [vmem:[#allocation10 + $0xd0] sm:$0xff]
    %v4047 = vld [vmem:[#allocation10 + $0xd8] sm:$0xff]
    %v4048 = vld [vmem:[#allocation10 + $0xe0] sm:$0xff]
    %v4049 = vld [vmem:[#allocation10 + $0xe8] sm:$0xff]
    %v4050 = vld [vmem:[#allocation10 + $0xf0] sm:$0xff]
    %v4051 = vld [vmem:[#allocation10 + $0xf8] sm:$0xff]
    %v4052 = vld [vmem:[#allocation10 + $0x100] sm:$0xff]
    %v4053 = vld [vmem:[#allocation10 + $0x108] sm:$0xff]
    %v4054 = vld [vmem:[#allocation10 + $0x110] sm:$0xff]
    %v4055 = vld [vmem:[#allocation10 + $0x118] sm:$0xff]
    %v4056 = vld [vmem:[#allocation10 + $0x120] sm:$0xff]
    %v4057 = vld [vmem:[#allocation10 + $0x128] sm:$0xff]
    %v4058 = vld [vmem:[#allocation10 + $0x130] sm:$0xff]
    %v4059 = vld [vmem:[#allocation10 + $0x138] sm:$0xff]
    %v4060 = vld [vmem:[#allocation10 + $0x140] sm:$0xff]
    %v4061 = vld [vmem:[#allocation10 + $0x148] sm:$0xff]
    %v4062 = vld [vmem:[#allocation10 + $0x150] sm:$0xff]
    %v4063 = vld [vmem:[#allocation10 + $0x158] sm:$0xff]
    %v4064 = vld [vmem:[#allocation10 + $0x160] sm:$0xff]
    %v4065 = vld [vmem:[#allocation10 + $0x168] sm:$0xff]
    %v4066 = vld [vmem:[#allocation10 + $0x170] sm:$0xff]
    %v4067 = vld [vmem:[#allocation10 + $0x178] sm:$0xff]
    %v4068 = vld [vmem:[#allocation10 + $0x180] sm:$0xff]
    %v4069 = vld [vmem:[#allocation10 + $0x188] sm:$0xff]
    %v4070 = vld [vmem:[#allocation10 + $0x190] sm:$0xff]
    %v4071 = vld [vmem:[#allocation10 + $0x198] sm:$0xff]
    %v4072 = vld [vmem:[#allocation10 + $0x1a0] sm:$0xff]
    %v4073 = vld [vmem:[#allocation10 + $0x1a8] sm:$0xff]
    %v4074 = vld [vmem:[#allocation10 + $0x1b0] sm:$0xff]
    %v4075 = vld [vmem:[#allocation10 + $0x1b8] sm:$0xff]
    %v4076 = vld [vmem:[#allocation10 + $0x1c0] sm:$0xff]
    %v4077 = vld [vmem:[#allocation10 + $0x1c8] sm:$0xff]
    %v4078 = vld [vmem:[#allocation10 + $0x1d0] sm:$0xff]
    %v4079 = vld [vmem:[#allocation10 + $0x1d8] sm:$0xff]
    %v4080 = vld [vmem:[#allocation10 + $0x1e0] sm:$0xff]
    %v4081 = vld [vmem:[#allocation10 + $0x1e8] sm:$0xff]
    %v4082 = vld [vmem:[#allocation10 + $0x1f0] sm:$0xff]
    %v4083 = vld [vmem:[#allocation10 + $0x1f8] sm:$0xff]
    %4084 = vmatpush.msra.mxu0 %v4050
    %4085 = vmatpush.msra.mxu0 %v4048
    %4086 = vmatpush.msra.mxu0 %v4046
    %4087 = vmatpush.msra.mxu0 %v4044
    %4088 = vmatpush.msra.mxu0 %v4042
    %4089 = vmatpush.msra.mxu0 %v4040
    %4090 = vmatpush.msra.mxu0 %v4038
    %4091 = vmatpush.msra.mxu0 %v4036
    %4092 = vmatpush.msra.mxu0 %v4034
    %4093 = vmatpush.msra.mxu0 %v4032
    %4094 = vmatpush.msra.mxu0 %v4030
    %4095 = vmatpush.msra.mxu0 %v4028
    %4096 = vmatpush.msra.mxu0 %v4026
    %4097 = vmatpush.msra.mxu0 %v4024
    %4098 = vmatpush.msra.mxu0 %v4022
    %4099 = vmatpush.msra.mxu0 %v4020
    %4100 = vmatmul.f32.gmra.mxu0 %v3892
    %v4101 = vpop.f32.mrf.mxu0
    %v4102 = vadd.f32 0.0, %v4101
    %4103 = vmatmul.f32.gmra.mxu0 %v3894
    %v4104 = vpop.f32.mrf.mxu0
    %v4105 = vadd.f32 0.0, %v4104
    %4106 = vmatmul.f32.gmra.mxu0 %v3896
    %v4107 = vpop.f32.mrf.mxu0
    %v4108 = vadd.f32 0.0, %v4107
    %4109 = vmatmul.f32.gmra.mxu0 %v3898
    %v4110 = vpop.f32.mrf.mxu0
    %v4111 = vadd.f32 0.0, %v4110
    %4112 = vmatmul.f32.gmra.mxu0 %v3900
    %v4113 = vpop.f32.mrf.mxu0
    %v4114 = vadd.f32 0.0, %v4113
    %4115 = vmatmul.f32.gmra.mxu0 %v3902
    %v4116 = vpop.f32.mrf.mxu0
    %v4117 = vadd.f32 0.0, %v4116
    %4118 = vmatmul.f32.gmra.mxu0 %v3904
    %v4119 = vpop.f32.mrf.mxu0
    %v4120 = vadd.f32 0.0, %v4119
    %4121 = vmatmul.f32.gmra.mxu0 %v3906
    %v4122 = vpop.f32.mrf.mxu0
    %v4123 = vadd.f32 0.0, %v4122
    %4124 = vmatmul.f32.gmra.mxu0 %v3908
    %v4125 = vpop.f32.mrf.mxu0
    %v4126 = vadd.f32 0.0, %v4125
    %4127 = vmatmul.f32.gmra.mxu0 %v3910
    %v4128 = vpop.f32.mrf.mxu0
    %v4129 = vadd.f32 0.0, %v4128
    %4130 = vmatmul.f32.gmra.mxu0 %v3912
    %v4131 = vpop.f32.mrf.mxu0
    %v4132 = vadd.f32 0.0, %v4131
    %4133 = vmatmul.f32.gmra.mxu0 %v3914
    %v4134 = vpop.f32.mrf.mxu0
    %v4135 = vadd.f32 0.0, %v4134
    %4136 = vmatmul.f32.gmra.mxu0 %v3916
    %v4137 = vpop.f32.mrf.mxu0
    %v4138 = vadd.f32 0.0, %v4137
    %4139 = vmatmul.f32.gmra.mxu0 %v3918
    %v4140 = vpop.f32.mrf.mxu0
    %v4141 = vadd.f32 0.0, %v4140
    %4142 = vmatmul.f32.gmra.mxu0 %v3920
    %v4143 = vpop.f32.mrf.mxu0
    %v4144 = vadd.f32 0.0, %v4143
    %4145 = vmatmul.f32.gmra.mxu0 %v3922
    %v4146 = vpop.f32.mrf.mxu0
    %v4147 = vadd.f32 0.0, %v4146
    %4148 = vmatmul.f32.gmra.mxu0 %v3924
    %v4149 = vpop.f32.mrf.mxu0
    %v4150 = vadd.f32 0.0, %v4149
    %4151 = vmatmul.f32.gmra.mxu0 %v3926
    %v4152 = vpop.f32.mrf.mxu0
    %v4153 = vadd.f32 0.0, %v4152
    %4154 = vmatmul.f32.gmra.mxu0 %v3928
    %v4155 = vpop.f32.mrf.mxu0
    %v4156 = vadd.f32 0.0, %v4155
    %4157 = vmatmul.f32.gmra.mxu0 %v3930
    %v4158 = vpop.f32.mrf.mxu0
    %v4159 = vadd.f32 0.0, %v4158
    %4160 = vmatmul.f32.gmra.mxu0 %v3932
    %v4161 = vpop.f32.mrf.mxu0
    %v4162 = vadd.f32 0.0, %v4161
    %4163 = vmatmul.f32.gmra.mxu0 %v3934
    %v4164 = vpop.f32.mrf.mxu0
    %v4165 = vadd.f32 0.0, %v4164
    %4166 = vmatmul.f32.gmra.mxu0 %v3936
    %v4167 = vpop.f32.mrf.mxu0
    %v4168 = vadd.f32 0.0, %v4167
    %4169 = vmatmul.f32.gmra.mxu0 %v3938
    %v4170 = vpop.f32.mrf.mxu0
    %v4171 = vadd.f32 0.0, %v4170
    %4172 = vmatmul.f32.gmra.mxu0 %v3940
    %v4173 = vpop.f32.mrf.mxu0
    %v4174 = vadd.f32 0.0, %v4173
    %4175 = vmatmul.f32.gmra.mxu0 %v3942
    %v4176 = vpop.f32.mrf.mxu0
    %v4177 = vadd.f32 0.0, %v4176
    %4178 = vmatmul.f32.gmra.mxu0 %v3944
    %v4179 = vpop.f32.mrf.mxu0
    %v4180 = vadd.f32 0.0, %v4179
    %4181 = vmatmul.f32.gmra.mxu0 %v3946
    %v4182 = vpop.f32.mrf.mxu0
    %v4183 = vadd.f32 0.0, %v4182
    %4184 = vmatmul.f32.gmra.mxu0 %v3948
    %v4185 = vpop.f32.mrf.mxu0
    %v4186 = vadd.f32 0.0, %v4185
    %4187 = vmatmul.f32.gmra.mxu0 %v3950
    %v4188 = vpop.f32.mrf.mxu0
    %v4189 = vadd.f32 0.0, %v4188
    %4190 = vmatmul.f32.gmra.mxu0 %v3952
    %v4191 = vpop.f32.mrf.mxu0
    %v4192 = vadd.f32 0.0, %v4191
    %4193 = vmatmul.f32.gmra.mxu0 %v3954
    %v4194 = vpop.f32.mrf.mxu0
    %v4195 = vadd.f32 0.0, %v4194
    %4196 = vdwg.mxu0
    %4197 = vmatpush.msra.mxu0 %v4082
    %4198 = vmatpush.msra.mxu0 %v4080
    %4199 = vmatpush.msra.mxu0 %v4078
    %4200 = vmatpush.msra.mxu0 %v4076
    %4201 = vmatpush.msra.mxu0 %v4074
    %4202 = vmatpush.msra.mxu0 %v4072
    %4203 = vmatpush.msra.mxu0 %v4070
    %4204 = vmatpush.msra.mxu0 %v4068
    %4205 = vmatpush.msra.mxu0 %v4066
    %4206 = vmatpush.msra.mxu0 %v4064
    %4207 = vmatpush.msra.mxu0 %v4062
    %4208 = vmatpush.msra.mxu0 %v4060
    %4209 = vmatpush.msra.mxu0 %v4058
    %4210 = vmatpush.msra.mxu0 %v4056
    %4211 = vmatpush.msra.mxu0 %v4054
    %4212 = vmatpush.msra.mxu0 %v4052
    %4213 = vmatmul.f32.gmra.mxu0 %v3893
    %v4214 = vpop.f32.mrf.mxu0
    %v4215 = vadd.f32 %v4102, %v4214
    %4216 = vmatmul.f32.gmra.mxu0 %v3895
    %v4217 = vpop.f32.mrf.mxu0
    %v4218 = vadd.f32 %v4105, %v4217
    %4219 = vmatmul.f32.gmra.mxu0 %v3897
    %v4220 = vpop.f32.mrf.mxu0
    %v4221 = vadd.f32 %v4108, %v4220
    %4222 = vmatmul.f32.gmra.mxu0 %v3899
    %v4223 = vpop.f32.mrf.mxu0
    %v4224 = vadd.f32 %v4111, %v4223
    %4225 = vmatmul.f32.gmra.mxu0 %v3901
    %v4226 = vpop.f32.mrf.mxu0
    %v4227 = vadd.f32 %v4114, %v4226
    %4228 = vmatmul.f32.gmra.mxu0 %v3903
    %v4229 = vpop.f32.mrf.mxu0
    %v4230 = vadd.f32 %v4117, %v4229
    %4231 = vmatmul.f32.gmra.mxu0 %v3905
    %v4232 = vpop.f32.mrf.mxu0
    %v4233 = vadd.f32 %v4120, %v4232
    %4234 = vmatmul.f32.gmra.mxu0 %v3907
    %v4235 = vpop.f32.mrf.mxu0
    %v4236 = vadd.f32 %v4123, %v4235
    %4237 = vmatmul.f32.gmra.mxu0 %v3909
    %v4238 = vpop.f32.mrf.mxu0
    %v4239 = vadd.f32 %v4126, %v4238
    %4240 = vmatmul.f32.gmra.mxu0 %v3911
    %v4241 = vpop.f32.mrf.mxu0
    %v4242 = vadd.f32 %v4129, %v4241
    %4243 = vmatmul.f32.gmra.mxu0 %v3913
    %v4244 = vpop.f32.mrf.mxu0
    %v4245 = vadd.f32 %v4132, %v4244
    %4246 = vmatmul.f32.gmra.mxu0 %v3915
    %v4247 = vpop.f32.mrf.mxu0
    %v4248 = vadd.f32 %v4135, %v4247
    %4249 = vmatmul.f32.gmra.mxu0 %v3917
    %v4250 = vpop.f32.mrf.mxu0
    %v4251 = vadd.f32 %v4138, %v4250
    %4252 = vmatmul.f32.gmra.mxu0 %v3919
    %v4253 = vpop.f32.mrf.mxu0
    %v4254 = vadd.f32 %v4141, %v4253
    %4255 = vmatmul.f32.gmra.mxu0 %v3921
    %v4256 = vpop.f32.mrf.mxu0
    %v4257 = vadd.f32 %v4144, %v4256
    %4258 = vmatmul.f32.gmra.mxu0 %v3923
    %v4259 = vpop.f32.mrf.mxu0
    %v4260 = vadd.f32 %v4147, %v4259
    %4261 = vmatmul.f32.gmra.mxu0 %v3925
    %v4262 = vpop.f32.mrf.mxu0
    %v4263 = vadd.f32 %v4150, %v4262
    %4264 = vmatmul.f32.gmra.mxu0 %v3927
    %v4265 = vpop.f32.mrf.mxu0
    %v4266 = vadd.f32 %v4153, %v4265
    %4267 = vmatmul.f32.gmra.mxu0 %v3929
    %v4268 = vpop.f32.mrf.mxu0
    %v4269 = vadd.f32 %v4156, %v4268
    %4270 = vmatmul.f32.gmra.mxu0 %v3931
    %v4271 = vpop.f32.mrf.mxu0
    %v4272 = vadd.f32 %v4159, %v4271
    %4273 = vmatmul.f32.gmra.mxu0 %v3933
    %v4274 = vpop.f32.mrf.mxu0
    %v4275 = vadd.f32 %v4162, %v4274
    %4276 = vmatmul.f32.gmra.mxu0 %v3935
    %v4277 = vpop.f32.mrf.mxu0
    %v4278 = vadd.f32 %v4165, %v4277
    %4279 = vmatmul.f32.gmra.mxu0 %v3937
    %v4280 = vpop.f32.mrf.mxu0
    %v4281 = vadd.f32 %v4168, %v4280
    %4282 = vmatmul.f32.gmra.mxu0 %v3939
    %v4283 = vpop.f32.mrf.mxu0
    %v4284 = vadd.f32 %v4171, %v4283
    %4285 = vmatmul.f32.gmra.mxu0 %v3941
    %v4286 = vpop.f32.mrf.mxu0
    %v4287 = vadd.f32 %v4174, %v4286
    %4288 = vmatmul.f32.gmra.mxu0 %v3943
    %v4289 = vpop.f32.mrf.mxu0
    %v4290 = vadd.f32 %v4177, %v4289
    %4291 = vmatmul.f32.gmra.mxu0 %v3945
    %v4292 = vpop.f32.mrf.mxu0
    %v4293 = vadd.f32 %v4180, %v4292
    %4294 = vmatmul.f32.gmra.mxu0 %v3947
    %v4295 = vpop.f32.mrf.mxu0
    %v4296 = vadd.f32 %v4183, %v4295
    %4297 = vmatmul.f32.gmra.mxu0 %v3949
    %v4298 = vpop.f32.mrf.mxu0
    %v4299 = vadd.f32 %v4186, %v4298
    %4300 = vmatmul.f32.gmra.mxu0 %v3951
    %v4301 = vpop.f32.mrf.mxu0
    %v4302 = vadd.f32 %v4189, %v4301
    %4303 = vmatmul.f32.gmra.mxu0 %v3953
    %v4304 = vpop.f32.mrf.mxu0
    %v4305 = vadd.f32 %v4192, %v4304
    %4306 = vmatmul.f32.gmra.mxu0 %v3955
    %v4307 = vpop.f32.mrf.mxu0
    %v4308 = vadd.f32 %v4195, %v4307
    %4309 = vdwg.mxu0
    %4310 = vmatpush.msra.mxu0 %v4051
    %4311 = vmatpush.msra.mxu0 %v4049
    %4312 = vmatpush.msra.mxu0 %v4047
    %4313 = vmatpush.msra.mxu0 %v4045
    %4314 = vmatpush.msra.mxu0 %v4043
    %4315 = vmatpush.msra.mxu0 %v4041
    %4316 = vmatpush.msra.mxu0 %v4039
    %4317 = vmatpush.msra.mxu0 %v4037
    %4318 = vmatpush.msra.mxu0 %v4035
    %4319 = vmatpush.msra.mxu0 %v4033
    %4320 = vmatpush.msra.mxu0 %v4031
    %4321 = vmatpush.msra.mxu0 %v4029
    %4322 = vmatpush.msra.mxu0 %v4027
    %4323 = vmatpush.msra.mxu0 %v4025
    %4324 = vmatpush.msra.mxu0 %v4023
    %4325 = vmatpush.msra.mxu0 %v4021
    %4326 = vmatmul.f32.gmra.mxu0 %v3892
    %v4327 = vpop.f32.mrf.mxu0
    %v4328 = vadd.f32 0.0, %v4327
    %4329 = vmatmul.f32.gmra.mxu0 %v3894
    %v4330 = vpop.f32.mrf.mxu0
    %v4331 = vadd.f32 0.0, %v4330
    %4332 = vmatmul.f32.gmra.mxu0 %v3896
    %v4333 = vpop.f32.mrf.mxu0
    %v4334 = vadd.f32 0.0, %v4333
    %4335 = vmatmul.f32.gmra.mxu0 %v3898
    %v4336 = vpop.f32.mrf.mxu0
    %v4337 = vadd.f32 0.0, %v4336
    %4338 = vmatmul.f32.gmra.mxu0 %v3900
    %v4339 = vpop.f32.mrf.mxu0
    %v4340 = vadd.f32 0.0, %v4339
    %4341 = vmatmul.f32.gmra.mxu0 %v3902
    %v4342 = vpop.f32.mrf.mxu0
    %v4343 = vadd.f32 0.0, %v4342
    %4344 = vmatmul.f32.gmra.mxu0 %v3904
    %v4345 = vpop.f32.mrf.mxu0
    %v4346 = vadd.f32 0.0, %v4345
    %4347 = vmatmul.f32.gmra.mxu0 %v3906
    %v4348 = vpop.f32.mrf.mxu0
    %v4349 = vadd.f32 0.0, %v4348
    %4350 = vmatmul.f32.gmra.mxu0 %v3908
    %v4351 = vpop.f32.mrf.mxu0
    %v4352 = vadd.f32 0.0, %v4351
    %4353 = vmatmul.f32.gmra.mxu0 %v3910
    %v4354 = vpop.f32.mrf.mxu0
    %v4355 = vadd.f32 0.0, %v4354
    %4356 = vmatmul.f32.gmra.mxu0 %v3912
    %v4357 = vpop.f32.mrf.mxu0
    %v4358 = vadd.f32 0.0, %v4357
    %4359 = vmatmul.f32.gmra.mxu0 %v3914
    %v4360 = vpop.f32.mrf.mxu0
    %v4361 = vadd.f32 0.0, %v4360
    %4362 = vmatmul.f32.gmra.mxu0 %v3916
    %v4363 = vpop.f32.mrf.mxu0
    %v4364 = vadd.f32 0.0, %v4363
    %4365 = vmatmul.f32.gmra.mxu0 %v3918
    %v4366 = vpop.f32.mrf.mxu0
    %v4367 = vadd.f32 0.0, %v4366
    %4368 = vmatmul.f32.gmra.mxu0 %v3920
    %v4369 = vpop.f32.mrf.mxu0
    %v4370 = vadd.f32 0.0, %v4369
    %4371 = vmatmul.f32.gmra.mxu0 %v3922
    %v4372 = vpop.f32.mrf.mxu0
    %v4373 = vadd.f32 0.0, %v4372
    %4374 = vmatmul.f32.gmra.mxu0 %v3924
    %v4375 = vpop.f32.mrf.mxu0
    %v4376 = vadd.f32 0.0, %v4375
    %4377 = vmatmul.f32.gmra.mxu0 %v3926
    %v4378 = vpop.f32.mrf.mxu0
    %v4379 = vadd.f32 0.0, %v4378
    %4380 = vmatmul.f32.gmra.mxu0 %v3928
    %v4381 = vpop.f32.mrf.mxu0
    %v4382 = vadd.f32 0.0, %v4381
    %4383 = vmatmul.f32.gmra.mxu0 %v3930
    %v4384 = vpop.f32.mrf.mxu0
    %v4385 = vadd.f32 0.0, %v4384
    %4386 = vmatmul.f32.gmra.mxu0 %v3932
    %v4387 = vpop.f32.mrf.mxu0
    %v4388 = vadd.f32 0.0, %v4387
    %4389 = vmatmul.f32.gmra.mxu0 %v3934
    %v4390 = vpop.f32.mrf.mxu0
    %v4391 = vadd.f32 0.0, %v4390
    %4392 = vmatmul.f32.gmra.mxu0 %v3936
    %v4393 = vpop.f32.mrf.mxu0
    %v4394 = vadd.f32 0.0, %v4393
    %4395 = vmatmul.f32.gmra.mxu0 %v3938
    %v4396 = vpop.f32.mrf.mxu0
    %v4397 = vadd.f32 0.0, %v4396
    %4398 = vmatmul.f32.gmra.mxu0 %v3940
    %v4399 = vpop.f32.mrf.mxu0
    %v4400 = vadd.f32 0.0, %v4399
    %4401 = vmatmul.f32.gmra.mxu0 %v3942
    %v4402 = vpop.f32.mrf.mxu0
    %v4403 = vadd.f32 0.0, %v4402
    %4404 = vmatmul.f32.gmra.mxu0 %v3944
    %v4405 = vpop.f32.mrf.mxu0
    %v4406 = vadd.f32 0.0, %v4405
    %4407 = vmatmul.f32.gmra.mxu0 %v3946
    %v4408 = vpop.f32.mrf.mxu0
    %v4409 = vadd.f32 0.0, %v4408
    %4410 = vmatmul.f32.gmra.mxu0 %v3948
    %v4411 = vpop.f32.mrf.mxu0
    %v4412 = vadd.f32 0.0, %v4411
    %4413 = vmatmul.f32.gmra.mxu0 %v3950
    %v4414 = vpop.f32.mrf.mxu0
    %v4415 = vadd.f32 0.0, %v4414
    %4416 = vmatmul.f32.gmra.mxu0 %v3952
    %v4417 = vpop.f32.mrf.mxu0
    %v4418 = vadd.f32 0.0, %v4417
    %4419 = vmatmul.f32.gmra.mxu0 %v3954
    %v4420 = vpop.f32.mrf.mxu0
    %v4421 = vadd.f32 0.0, %v4420
    %4422 = vdwg.mxu0
    %4423 = vmatpush.msra.mxu0 %v4083
    %4424 = vmatpush.msra.mxu0 %v4081
    %4425 = vmatpush.msra.mxu0 %v4079
    %4426 = vmatpush.msra.mxu0 %v4077
    %4427 = vmatpush.msra.mxu0 %v4075
    %4428 = vmatpush.msra.mxu0 %v4073
    %4429 = vmatpush.msra.mxu0 %v4071
    %4430 = vmatpush.msra.mxu0 %v4069
    %4431 = vmatpush.msra.mxu0 %v4067
    %4432 = vmatpush.msra.mxu0 %v4065
    %4433 = vmatpush.msra.mxu0 %v4063
    %4434 = vmatpush.msra.mxu0 %v4061
    %4435 = vmatpush.msra.mxu0 %v4059
    %4436 = vmatpush.msra.mxu0 %v4057
    %4437 = vmatpush.msra.mxu0 %v4055
    %4438 = vmatpush.msra.mxu0 %v4053
    %4439 = vmatmul.f32.gmra.mxu0 %v3893
    %v4440 = vpop.f32.mrf.mxu0
    %v4441 = vadd.f32 %v4328, %v4440
    %4442 = vmatmul.f32.gmra.mxu0 %v3895
    %v4443 = vpop.f32.mrf.mxu0
    %v4444 = vadd.f32 %v4331, %v4443
    %4445 = vmatmul.f32.gmra.mxu0 %v3897
    %v4446 = vpop.f32.mrf.mxu0
    %v4447 = vadd.f32 %v4334, %v4446
    %4448 = vmatmul.f32.gmra.mxu0 %v3899
    %v4449 = vpop.f32.mrf.mxu0
    %v4450 = vadd.f32 %v4337, %v4449
    %4451 = vmatmul.f32.gmra.mxu0 %v3901
    %v4452 = vpop.f32.mrf.mxu0
    %v4453 = vadd.f32 %v4340, %v4452
    %4454 = vmatmul.f32.gmra.mxu0 %v3903
    %v4455 = vpop.f32.mrf.mxu0
    %v4456 = vadd.f32 %v4343, %v4455
    %4457 = vmatmul.f32.gmra.mxu0 %v3905
    %v4458 = vpop.f32.mrf.mxu0
    %v4459 = vadd.f32 %v4346, %v4458
    %4460 = vmatmul.f32.gmra.mxu0 %v3907
    %v4461 = vpop.f32.mrf.mxu0
    %v4462 = vadd.f32 %v4349, %v4461
    %4463 = vmatmul.f32.gmra.mxu0 %v3909
    %v4464 = vpop.f32.mrf.mxu0
    %v4465 = vadd.f32 %v4352, %v4464
    %4466 = vmatmul.f32.gmra.mxu0 %v3911
    %v4467 = vpop.f32.mrf.mxu0
    %v4468 = vadd.f32 %v4355, %v4467
    %4469 = vmatmul.f32.gmra.mxu0 %v3913
    %v4470 = vpop.f32.mrf.mxu0
    %v4471 = vadd.f32 %v4358, %v4470
    %4472 = vmatmul.f32.gmra.mxu0 %v3915
    %v4473 = vpop.f32.mrf.mxu0
    %v4474 = vadd.f32 %v4361, %v4473
    %4475 = vmatmul.f32.gmra.mxu0 %v3917
    %v4476 = vpop.f32.mrf.mxu0
    %v4477 = vadd.f32 %v4364, %v4476
    %4478 = vmatmul.f32.gmra.mxu0 %v3919
    %v4479 = vpop.f32.mrf.mxu0
    %v4480 = vadd.f32 %v4367, %v4479
    %4481 = vmatmul.f32.gmra.mxu0 %v3921
    %v4482 = vpop.f32.mrf.mxu0
    %v4483 = vadd.f32 %v4370, %v4482
    %4484 = vmatmul.f32.gmra.mxu0 %v3923
    %v4485 = vpop.f32.mrf.mxu0
    %v4486 = vadd.f32 %v4373, %v4485
    %4487 = vmatmul.f32.gmra.mxu0 %v3925
    %v4488 = vpop.f32.mrf.mxu0
    %v4489 = vadd.f32 %v4376, %v4488
    %4490 = vmatmul.f32.gmra.mxu0 %v3927
    %v4491 = vpop.f32.mrf.mxu0
    %v4492 = vadd.f32 %v4379, %v4491
    %4493 = vmatmul.f32.gmra.mxu0 %v3929
    %v4494 = vpop.f32.mrf.mxu0
    %v4495 = vadd.f32 %v4382, %v4494
    %4496 = vmatmul.f32.gmra.mxu0 %v3931
    %v4497 = vpop.f32.mrf.mxu0
    %v4498 = vadd.f32 %v4385, %v4497
    %4499 = vmatmul.f32.gmra.mxu0 %v3933
    %v4500 = vpop.f32.mrf.mxu0
    %v4501 = vadd.f32 %v4388, %v4500
    %4502 = vmatmul.f32.gmra.mxu0 %v3935
    %v4503 = vpop.f32.mrf.mxu0
    %v4504 = vadd.f32 %v4391, %v4503
    %4505 = vmatmul.f32.gmra.mxu0 %v3937
    %v4506 = vpop.f32.mrf.mxu0
    %v4507 = vadd.f32 %v4394, %v4506
    %4508 = vmatmul.f32.gmra.mxu0 %v3939
    %v4509 = vpop.f32.mrf.mxu0
    %v4510 = vadd.f32 %v4397, %v4509
    %4511 = vmatmul.f32.gmra.mxu0 %v3941
    %v4512 = vpop.f32.mrf.mxu0
    %v4513 = vadd.f32 %v4400, %v4512
    %4514 = vmatmul.f32.gmra.mxu0 %v3943
    %v4515 = vpop.f32.mrf.mxu0
    %v4516 = vadd.f32 %v4403, %v4515
    %4517 = vmatmul.f32.gmra.mxu0 %v3945
    %v4518 = vpop.f32.mrf.mxu0
    %v4519 = vadd.f32 %v4406, %v4518
    %4520 = vmatmul.f32.gmra.mxu0 %v3947
    %v4521 = vpop.f32.mrf.mxu0
    %v4522 = vadd.f32 %v4409, %v4521
    %4523 = vmatmul.f32.gmra.mxu0 %v3949
    %v4524 = vpop.f32.mrf.mxu0
    %v4525 = vadd.f32 %v4412, %v4524
    %4526 = vmatmul.f32.gmra.mxu0 %v3951
    %v4527 = vpop.f32.mrf.mxu0
    %v4528 = vadd.f32 %v4415, %v4527
    %4529 = vmatmul.f32.gmra.mxu0 %v3953
    %v4530 = vpop.f32.mrf.mxu0
    %v4531 = vadd.f32 %v4418, %v4530
    %4532 = vmatmul.f32.gmra.mxu0 %v3955
    %v4533 = vpop.f32.mrf.mxu0
    %v4534 = vadd.f32 %v4421, %v4533
    %4535 = vdwg.mxu0
    %v4536 = vld [vmem:[#allocation5] sm:$0xff]
    %v4537 = vld [vmem:[#allocation5 + $0x8] sm:$0xff]
    %v4538 = vld [vmem:[#allocation5 + $0x10] sm:$0xff]
    %v4539 = vld [vmem:[#allocation5 + $0x18] sm:$0xff]
    %v4540 = vld [vmem:[#allocation5 + $0x20] sm:$0xff]
    %v4541 = vld [vmem:[#allocation5 + $0x28] sm:$0xff]
    %v4542 = vld [vmem:[#allocation5 + $0x30] sm:$0xff]
    %v4543 = vld [vmem:[#allocation5 + $0x38] sm:$0xff]
    %v4544 = vld [vmem:[#allocation5 + $0x40] sm:$0xff]
    %v4545 = vld [vmem:[#allocation5 + $0x48] sm:$0xff]
    %v4546 = vld [vmem:[#allocation5 + $0x50] sm:$0xff]
    %v4547 = vld [vmem:[#allocation5 + $0x58] sm:$0xff]
    %v4548 = vld [vmem:[#allocation5 + $0x60] sm:$0xff]
    %v4549 = vld [vmem:[#allocation5 + $0x68] sm:$0xff]
    %v4550 = vld [vmem:[#allocation5 + $0x70] sm:$0xff]
    %v4551 = vld [vmem:[#allocation5 + $0x78] sm:$0xff]
    %v4552 = vld [vmem:[#allocation5 + $0x80] sm:$0xff]
    %v4553 = vld [vmem:[#allocation5 + $0x88] sm:$0xff]
    %v4554 = vld [vmem:[#allocation5 + $0x90] sm:$0xff]
    %v4555 = vld [vmem:[#allocation5 + $0x98] sm:$0xff]
    %v4556 = vld [vmem:[#allocation5 + $0xa0] sm:$0xff]
    %v4557 = vld [vmem:[#allocation5 + $0xa8] sm:$0xff]
    %v4558 = vld [vmem:[#allocation5 + $0xb0] sm:$0xff]
    %v4559 = vld [vmem:[#allocation5 + $0xb8] sm:$0xff]
    %v4560 = vld [vmem:[#allocation5 + $0xc0] sm:$0xff]
    %v4561 = vld [vmem:[#allocation5 + $0xc8] sm:$0xff]
    %v4562 = vld [vmem:[#allocation5 + $0xd0] sm:$0xff]
    %v4563 = vld [vmem:[#allocation5 + $0xd8] sm:$0xff]
    %v4564 = vld [vmem:[#allocation5 + $0xe0] sm:$0xff]
    %v4565 = vld [vmem:[#allocation5 + $0xe8] sm:$0xff]
    %v4566 = vld [vmem:[#allocation5 + $0xf0] sm:$0xff]
    %v4567 = vld [vmem:[#allocation5 + $0xf8] sm:$0xff]
    %v4568 = vld [vmem:[#allocation5 + $0x100] sm:$0xff]
    %v4569 = vld [vmem:[#allocation5 + $0x108] sm:$0xff]
    %v4570 = vld [vmem:[#allocation5 + $0x110] sm:$0xff]
    %v4571 = vld [vmem:[#allocation5 + $0x118] sm:$0xff]
    %v4572 = vld [vmem:[#allocation5 + $0x120] sm:$0xff]
    %v4573 = vld [vmem:[#allocation5 + $0x128] sm:$0xff]
    %v4574 = vld [vmem:[#allocation5 + $0x130] sm:$0xff]
    %v4575 = vld [vmem:[#allocation5 + $0x138] sm:$0xff]
    %v4576 = vld [vmem:[#allocation5 + $0x140] sm:$0xff]
    %v4577 = vld [vmem:[#allocation5 + $0x148] sm:$0xff]
    %v4578 = vld [vmem:[#allocation5 + $0x150] sm:$0xff]
    %v4579 = vld [vmem:[#allocation5 + $0x158] sm:$0xff]
    %v4580 = vld [vmem:[#allocation5 + $0x160] sm:$0xff]
    %v4581 = vld [vmem:[#allocation5 + $0x168] sm:$0xff]
    %v4582 = vld [vmem:[#allocation5 + $0x170] sm:$0xff]
    %v4583 = vld [vmem:[#allocation5 + $0x178] sm:$0xff]
    %v4584 = vld [vmem:[#allocation5 + $0x180] sm:$0xff]
    %v4585 = vld [vmem:[#allocation5 + $0x188] sm:$0xff]
    %v4586 = vld [vmem:[#allocation5 + $0x190] sm:$0xff]
    %v4587 = vld [vmem:[#allocation5 + $0x198] sm:$0xff]
    %v4588 = vld [vmem:[#allocation5 + $0x1a0] sm:$0xff]
    %v4589 = vld [vmem:[#allocation5 + $0x1a8] sm:$0xff]
    %v4590 = vld [vmem:[#allocation5 + $0x1b0] sm:$0xff]
    %v4591 = vld [vmem:[#allocation5 + $0x1b8] sm:$0xff]
    %v4592 = vld [vmem:[#allocation5 + $0x1c0] sm:$0xff]
    %v4593 = vld [vmem:[#allocation5 + $0x1c8] sm:$0xff]
    %v4594 = vld [vmem:[#allocation5 + $0x1d0] sm:$0xff]
    %v4595 = vld [vmem:[#allocation5 + $0x1d8] sm:$0xff]
    %v4596 = vld [vmem:[#allocation5 + $0x1e0] sm:$0xff]
    %v4597 = vld [vmem:[#allocation5 + $0x1e8] sm:$0xff]
    %v4598 = vld [vmem:[#allocation5 + $0x1f0] sm:$0xff]
    %v4599 = vld [vmem:[#allocation5 + $0x1f8] sm:$0xff]
    %4600 = vmatpush.msra.mxu0 %v4260
    %4601 = vmatpush.msra.mxu0 %v4257
    %4602 = vmatpush.msra.mxu0 %v4254
    %4603 = vmatpush.msra.mxu0 %v4251
    %4604 = vmatpush.msra.mxu0 %v4248
    %4605 = vmatpush.msra.mxu0 %v4245
    %4606 = vmatpush.msra.mxu0 %v4242
    %4607 = vmatpush.msra.mxu0 %v4239
    %4608 = vmatpush.msra.mxu0 %v4236
    %4609 = vmatpush.msra.mxu0 %v4233
    %4610 = vmatpush.msra.mxu0 %v4230
    %4611 = vmatpush.msra.mxu0 %v4227
    %4612 = vmatpush.msra.mxu0 %v4224
    %4613 = vmatpush.msra.mxu0 %v4221
    %4614 = vmatpush.msra.mxu0 %v4218
    %4615 = vmatpush.msra.mxu0 %v4215
    %4616 = vmatmul.f32.gmra.mxu0 %v4536
    %v4617 = vpop.f32.mrf.mxu0
    %v4618 = vadd.f32 0.0, %v4617
    %4619 = vmatmul.f32.gmra.mxu0 %v4538
    %v4620 = vpop.f32.mrf.mxu0
    %v4621 = vadd.f32 0.0, %v4620
    %4622 = vmatmul.f32.gmra.mxu0 %v4540
    %v4623 = vpop.f32.mrf.mxu0
    %v4624 = vadd.f32 0.0, %v4623
    %4625 = vmatmul.f32.gmra.mxu0 %v4542
    %v4626 = vpop.f32.mrf.mxu0
    %v4627 = vadd.f32 0.0, %v4626
    %4628 = vmatmul.f32.gmra.mxu0 %v4544
    %v4629 = vpop.f32.mrf.mxu0
    %v4630 = vadd.f32 0.0, %v4629
    %4631 = vmatmul.f32.gmra.mxu0 %v4546
    %v4632 = vpop.f32.mrf.mxu0
    %v4633 = vadd.f32 0.0, %v4632
    %4634 = vmatmul.f32.gmra.mxu0 %v4548
    %v4635 = vpop.f32.mrf.mxu0
    %v4636 = vadd.f32 0.0, %v4635
    %4637 = vmatmul.f32.gmra.mxu0 %v4550
    %v4638 = vpop.f32.mrf.mxu0
    %v4639 = vadd.f32 0.0, %v4638
    %4640 = vmatmul.f32.gmra.mxu0 %v4552
    %v4641 = vpop.f32.mrf.mxu0
    %v4642 = vadd.f32 0.0, %v4641
    %4643 = vmatmul.f32.gmra.mxu0 %v4554
    %v4644 = vpop.f32.mrf.mxu0
    %v4645 = vadd.f32 0.0, %v4644
    %4646 = vmatmul.f32.gmra.mxu0 %v4556
    %v4647 = vpop.f32.mrf.mxu0
    %v4648 = vadd.f32 0.0, %v4647
    %4649 = vmatmul.f32.gmra.mxu0 %v4558
    %v4650 = vpop.f32.mrf.mxu0
    %v4651 = vadd.f32 0.0, %v4650
    %4652 = vmatmul.f32.gmra.mxu0 %v4560
    %v4653 = vpop.f32.mrf.mxu0
    %v4654 = vadd.f32 0.0, %v4653
    %4655 = vmatmul.f32.gmra.mxu0 %v4562
    %v4656 = vpop.f32.mrf.mxu0
    %v4657 = vadd.f32 0.0, %v4656
    %4658 = vmatmul.f32.gmra.mxu0 %v4564
    %v4659 = vpop.f32.mrf.mxu0
    %v4660 = vadd.f32 0.0, %v4659
    %4661 = vmatmul.f32.gmra.mxu0 %v4566
    %v4662 = vpop.f32.mrf.mxu0
    %v4663 = vadd.f32 0.0, %v4662
    %4664 = vmatmul.f32.gmra.mxu0 %v4568
    %v4665 = vpop.f32.mrf.mxu0
    %v4666 = vadd.f32 0.0, %v4665
    %4667 = vmatmul.f32.gmra.mxu0 %v4570
    %v4668 = vpop.f32.mrf.mxu0
    %v4669 = vadd.f32 0.0, %v4668
    %4670 = vmatmul.f32.gmra.mxu0 %v4572
    %v4671 = vpop.f32.mrf.mxu0
    %v4672 = vadd.f32 0.0, %v4671
    %4673 = vmatmul.f32.gmra.mxu0 %v4574
    %v4674 = vpop.f32.mrf.mxu0
    %v4675 = vadd.f32 0.0, %v4674
    %4676 = vmatmul.f32.gmra.mxu0 %v4576
    %v4677 = vpop.f32.mrf.mxu0
    %v4678 = vadd.f32 0.0, %v4677
    %4679 = vmatmul.f32.gmra.mxu0 %v4578
    %v4680 = vpop.f32.mrf.mxu0
    %v4681 = vadd.f32 0.0, %v4680
    %4682 = vmatmul.f32.gmra.mxu0 %v4580
    %v4683 = vpop.f32.mrf.mxu0
    %v4684 = vadd.f32 0.0, %v4683
    %4685 = vmatmul.f32.gmra.mxu0 %v4582
    %v4686 = vpop.f32.mrf.mxu0
    %v4687 = vadd.f32 0.0, %v4686
    %4688 = vmatmul.f32.gmra.mxu0 %v4584
    %v4689 = vpop.f32.mrf.mxu0
    %v4690 = vadd.f32 0.0, %v4689
    %4691 = vmatmul.f32.gmra.mxu0 %v4586
    %v4692 = vpop.f32.mrf.mxu0
    %v4693 = vadd.f32 0.0, %v4692
    %4694 = vmatmul.f32.gmra.mxu0 %v4588
    %v4695 = vpop.f32.mrf.mxu0
    %v4696 = vadd.f32 0.0, %v4695
    %4697 = vmatmul.f32.gmra.mxu0 %v4590
    %v4698 = vpop.f32.mrf.mxu0
    %v4699 = vadd.f32 0.0, %v4698
    %4700 = vmatmul.f32.gmra.mxu0 %v4592
    %v4701 = vpop.f32.mrf.mxu0
    %v4702 = vadd.f32 0.0, %v4701
    %4703 = vmatmul.f32.gmra.mxu0 %v4594
    %v4704 = vpop.f32.mrf.mxu0
    %v4705 = vadd.f32 0.0, %v4704
    %4706 = vmatmul.f32.gmra.mxu0 %v4596
    %v4707 = vpop.f32.mrf.mxu0
    %v4708 = vadd.f32 0.0, %v4707
    %4709 = vmatmul.f32.gmra.mxu0 %v4598
    %v4710 = vpop.f32.mrf.mxu0
    %v4711 = vadd.f32 0.0, %v4710
    %4712 = vdwg.mxu0
    %4713 = vmatpush.msra.mxu0 %v4308
    %4714 = vmatpush.msra.mxu0 %v4305
    %4715 = vmatpush.msra.mxu0 %v4302
    %4716 = vmatpush.msra.mxu0 %v4299
    %4717 = vmatpush.msra.mxu0 %v4296
    %4718 = vmatpush.msra.mxu0 %v4293
    %4719 = vmatpush.msra.mxu0 %v4290
    %4720 = vmatpush.msra.mxu0 %v4287
    %4721 = vmatpush.msra.mxu0 %v4284
    %4722 = vmatpush.msra.mxu0 %v4281
    %4723 = vmatpush.msra.mxu0 %v4278
    %4724 = vmatpush.msra.mxu0 %v4275
    %4725 = vmatpush.msra.mxu0 %v4272
    %4726 = vmatpush.msra.mxu0 %v4269
    %4727 = vmatpush.msra.mxu0 %v4266
    %4728 = vmatpush.msra.mxu0 %v4263
    %4729 = vmatmul.f32.gmra.mxu0 %v4537
    %v4730 = vpop.f32.mrf.mxu0
    %v4731 = vadd.f32 %v4618, %v4730
    %4732 = vmatmul.f32.gmra.mxu0 %v4539
    %v4733 = vpop.f32.mrf.mxu0
    %v4734 = vadd.f32 %v4621, %v4733
    %4735 = vmatmul.f32.gmra.mxu0 %v4541
    %v4736 = vpop.f32.mrf.mxu0
    %v4737 = vadd.f32 %v4624, %v4736
    %4738 = vmatmul.f32.gmra.mxu0 %v4543
    %v4739 = vpop.f32.mrf.mxu0
    %v4740 = vadd.f32 %v4627, %v4739
    %4741 = vmatmul.f32.gmra.mxu0 %v4545
    %v4742 = vpop.f32.mrf.mxu0
    %v4743 = vadd.f32 %v4630, %v4742
    %4744 = vmatmul.f32.gmra.mxu0 %v4547
    %v4745 = vpop.f32.mrf.mxu0
    %v4746 = vadd.f32 %v4633, %v4745
    %4747 = vmatmul.f32.gmra.mxu0 %v4549
    %v4748 = vpop.f32.mrf.mxu0
    %v4749 = vadd.f32 %v4636, %v4748
    %4750 = vmatmul.f32.gmra.mxu0 %v4551
    %v4751 = vpop.f32.mrf.mxu0
    %v4752 = vadd.f32 %v4639, %v4751
    %4753 = vmatmul.f32.gmra.mxu0 %v4553
    %v4754 = vpop.f32.mrf.mxu0
    %v4755 = vadd.f32 %v4642, %v4754
    %4756 = vmatmul.f32.gmra.mxu0 %v4555
    %v4757 = vpop.f32.mrf.mxu0
    %v4758 = vadd.f32 %v4645, %v4757
    %4759 = vmatmul.f32.gmra.mxu0 %v4557
    %v4760 = vpop.f32.mrf.mxu0
    %v4761 = vadd.f32 %v4648, %v4760
    %4762 = vmatmul.f32.gmra.mxu0 %v4559
    %v4763 = vpop.f32.mrf.mxu0
    %v4764 = vadd.f32 %v4651, %v4763
    %4765 = vmatmul.f32.gmra.mxu0 %v4561
    %v4766 = vpop.f32.mrf.mxu0
    %v4767 = vadd.f32 %v4654, %v4766
    %4768 = vmatmul.f32.gmra.mxu0 %v4563
    %v4769 = vpop.f32.mrf.mxu0
    %v4770 = vadd.f32 %v4657, %v4769
    %4771 = vmatmul.f32.gmra.mxu0 %v4565
    %v4772 = vpop.f32.mrf.mxu0
    %v4773 = vadd.f32 %v4660, %v4772
    %4774 = vmatmul.f32.gmra.mxu0 %v4567
    %v4775 = vpop.f32.mrf.mxu0
    %v4776 = vadd.f32 %v4663, %v4775
    %4777 = vmatmul.f32.gmra.mxu0 %v4569
    %v4778 = vpop.f32.mrf.mxu0
    %v4779 = vadd.f32 %v4666, %v4778
    %4780 = vmatmul.f32.gmra.mxu0 %v4571
    %v4781 = vpop.f32.mrf.mxu0
    %v4782 = vadd.f32 %v4669, %v4781
    %4783 = vmatmul.f32.gmra.mxu0 %v4573
    %v4784 = vpop.f32.mrf.mxu0
    %v4785 = vadd.f32 %v4672, %v4784
    %4786 = vmatmul.f32.gmra.mxu0 %v4575
    %v4787 = vpop.f32.mrf.mxu0
    %v4788 = vadd.f32 %v4675, %v4787
    %4789 = vmatmul.f32.gmra.mxu0 %v4577
    %v4790 = vpop.f32.mrf.mxu0
    %v4791 = vadd.f32 %v4678, %v4790
    %4792 = vmatmul.f32.gmra.mxu0 %v4579
    %v4793 = vpop.f32.mrf.mxu0
    %v4794 = vadd.f32 %v4681, %v4793
    %4795 = vmatmul.f32.gmra.mxu0 %v4581
    %v4796 = vpop.f32.mrf.mxu0
    %v4797 = vadd.f32 %v4684, %v4796
    %4798 = vmatmul.f32.gmra.mxu0 %v4583
    %v4799 = vpop.f32.mrf.mxu0
    %v4800 = vadd.f32 %v4687, %v4799
    %4801 = vmatmul.f32.gmra.mxu0 %v4585
    %v4802 = vpop.f32.mrf.mxu0
    %v4803 = vadd.f32 %v4690, %v4802
    %4804 = vmatmul.f32.gmra.mxu0 %v4587
    %v4805 = vpop.f32.mrf.mxu0
    %v4806 = vadd.f32 %v4693, %v4805
    %4807 = vmatmul.f32.gmra.mxu0 %v4589
    %v4808 = vpop.f32.mrf.mxu0
    %v4809 = vadd.f32 %v4696, %v4808
    %4810 = vmatmul.f32.gmra.mxu0 %v4591
    %v4811 = vpop.f32.mrf.mxu0
    %v4812 = vadd.f32 %v4699, %v4811
    %4813 = vmatmul.f32.gmra.mxu0 %v4593
    %v4814 = vpop.f32.mrf.mxu0
    %v4815 = vadd.f32 %v4702, %v4814
    %4816 = vmatmul.f32.gmra.mxu0 %v4595
    %v4817 = vpop.f32.mrf.mxu0
    %v4818 = vadd.f32 %v4705, %v4817
    %4819 = vmatmul.f32.gmra.mxu0 %v4597
    %v4820 = vpop.f32.mrf.mxu0
    %v4821 = vadd.f32 %v4708, %v4820
    %4822 = vmatmul.f32.gmra.mxu0 %v4599
    %v4823 = vpop.f32.mrf.mxu0
    %v4824 = vadd.f32 %v4711, %v4823
    %4825 = vdwg.mxu0
    %4826 = vmatpush.msra.mxu0 %v4486
    %4827 = vmatpush.msra.mxu0 %v4483
    %4828 = vmatpush.msra.mxu0 %v4480
    %4829 = vmatpush.msra.mxu0 %v4477
    %4830 = vmatpush.msra.mxu0 %v4474
    %4831 = vmatpush.msra.mxu0 %v4471
    %4832 = vmatpush.msra.mxu0 %v4468
    %4833 = vmatpush.msra.mxu0 %v4465
    %4834 = vmatpush.msra.mxu0 %v4462
    %4835 = vmatpush.msra.mxu0 %v4459
    %4836 = vmatpush.msra.mxu0 %v4456
    %4837 = vmatpush.msra.mxu0 %v4453
    %4838 = vmatpush.msra.mxu0 %v4450
    %4839 = vmatpush.msra.mxu0 %v4447
    %4840 = vmatpush.msra.mxu0 %v4444
    %4841 = vmatpush.msra.mxu0 %v4441
    %4842 = vmatmul.f32.gmra.mxu0 %v4536
    %v4843 = vpop.f32.mrf.mxu0
    %v4844 = vadd.f32 0.0, %v4843
    %4845 = vmatmul.f32.gmra.mxu0 %v4538
    %v4846 = vpop.f32.mrf.mxu0
    %v4847 = vadd.f32 0.0, %v4846
    %4848 = vmatmul.f32.gmra.mxu0 %v4540
    %v4849 = vpop.f32.mrf.mxu0
    %v4850 = vadd.f32 0.0, %v4849
    %4851 = vmatmul.f32.gmra.mxu0 %v4542
    %v4852 = vpop.f32.mrf.mxu0
    %v4853 = vadd.f32 0.0, %v4852
    %4854 = vmatmul.f32.gmra.mxu0 %v4544
    %v4855 = vpop.f32.mrf.mxu0
    %v4856 = vadd.f32 0.0, %v4855
    %4857 = vmatmul.f32.gmra.mxu0 %v4546
    %v4858 = vpop.f32.mrf.mxu0
    %v4859 = vadd.f32 0.0, %v4858
    %4860 = vmatmul.f32.gmra.mxu0 %v4548
    %v4861 = vpop.f32.mrf.mxu0
    %v4862 = vadd.f32 0.0, %v4861
    %4863 = vmatmul.f32.gmra.mxu0 %v4550
    %v4864 = vpop.f32.mrf.mxu0
    %v4865 = vadd.f32 0.0, %v4864
    %4866 = vmatmul.f32.gmra.mxu0 %v4552
    %v4867 = vpop.f32.mrf.mxu0
    %v4868 = vadd.f32 0.0, %v4867
    %4869 = vmatmul.f32.gmra.mxu0 %v4554
    %v4870 = vpop.f32.mrf.mxu0
    %v4871 = vadd.f32 0.0, %v4870
    %4872 = vmatmul.f32.gmra.mxu0 %v4556
    %v4873 = vpop.f32.mrf.mxu0
    %v4874 = vadd.f32 0.0, %v4873
    %4875 = vmatmul.f32.gmra.mxu0 %v4558
    %v4876 = vpop.f32.mrf.mxu0
    %v4877 = vadd.f32 0.0, %v4876
    %4878 = vmatmul.f32.gmra.mxu0 %v4560
    %v4879 = vpop.f32.mrf.mxu0
    %v4880 = vadd.f32 0.0, %v4879
    %4881 = vmatmul.f32.gmra.mxu0 %v4562
    %v4882 = vpop.f32.mrf.mxu0
    %v4883 = vadd.f32 0.0, %v4882
    %4884 = vmatmul.f32.gmra.mxu0 %v4564
    %v4885 = vpop.f32.mrf.mxu0
    %v4886 = vadd.f32 0.0, %v4885
    %4887 = vmatmul.f32.gmra.mxu0 %v4566
    %v4888 = vpop.f32.mrf.mxu0
    %v4889 = vadd.f32 0.0, %v4888
    %4890 = vmatmul.f32.gmra.mxu0 %v4568
    %v4891 = vpop.f32.mrf.mxu0
    %v4892 = vadd.f32 0.0, %v4891
    %4893 = vmatmul.f32.gmra.mxu0 %v4570
    %v4894 = vpop.f32.mrf.mxu0
    %v4895 = vadd.f32 0.0, %v4894
    %4896 = vmatmul.f32.gmra.mxu0 %v4572
    %v4897 = vpop.f32.mrf.mxu0
    %v4898 = vadd.f32 0.0, %v4897
    %4899 = vmatmul.f32.gmra.mxu0 %v4574
    %v4900 = vpop.f32.mrf.mxu0
    %v4901 = vadd.f32 0.0, %v4900
    %4902 = vmatmul.f32.gmra.mxu0 %v4576
    %v4903 = vpop.f32.mrf.mxu0
    %v4904 = vadd.f32 0.0, %v4903
    %4905 = vmatmul.f32.gmra.mxu0 %v4578
    %v4906 = vpop.f32.mrf.mxu0
    %v4907 = vadd.f32 0.0, %v4906
    %4908 = vmatmul.f32.gmra.mxu0 %v4580
    %v4909 = vpop.f32.mrf.mxu0
    %v4910 = vadd.f32 0.0, %v4909
    %4911 = vmatmul.f32.gmra.mxu0 %v4582
    %v4912 = vpop.f32.mrf.mxu0
    %v4913 = vadd.f32 0.0, %v4912
    %4914 = vmatmul.f32.gmra.mxu0 %v4584
    %v4915 = vpop.f32.mrf.mxu0
    %v4916 = vadd.f32 0.0, %v4915
    %4917 = vmatmul.f32.gmra.mxu0 %v4586
    %v4918 = vpop.f32.mrf.mxu0
    %v4919 = vadd.f32 0.0, %v4918
    %4920 = vmatmul.f32.gmra.mxu0 %v4588
    %v4921 = vpop.f32.mrf.mxu0
    %v4922 = vadd.f32 0.0, %v4921
    %4923 = vmatmul.f32.gmra.mxu0 %v4590
    %v4924 = vpop.f32.mrf.mxu0
    %v4925 = vadd.f32 0.0, %v4924
    %4926 = vmatmul.f32.gmra.mxu0 %v4592
    %v4927 = vpop.f32.mrf.mxu0
    %v4928 = vadd.f32 0.0, %v4927
    %4929 = vmatmul.f32.gmra.mxu0 %v4594
    %v4930 = vpop.f32.mrf.mxu0
    %v4931 = vadd.f32 0.0, %v4930
    %4932 = vmatmul.f32.gmra.mxu0 %v4596
    %v4933 = vpop.f32.mrf.mxu0
    %v4934 = vadd.f32 0.0, %v4933
    %4935 = vmatmul.f32.gmra.mxu0 %v4598
    %v4936 = vpop.f32.mrf.mxu0
    %v4937 = vadd.f32 0.0, %v4936
    %4938 = vdwg.mxu0
    %4939 = vmatpush.msra.mxu0 %v4534
    %4940 = vmatpush.msra.mxu0 %v4531
    %4941 = vmatpush.msra.mxu0 %v4528
    %4942 = vmatpush.msra.mxu0 %v4525
    %4943 = vmatpush.msra.mxu0 %v4522
    %4944 = vmatpush.msra.mxu0 %v4519
    %4945 = vmatpush.msra.mxu0 %v4516
    %4946 = vmatpush.msra.mxu0 %v4513
    %4947 = vmatpush.msra.mxu0 %v4510
    %4948 = vmatpush.msra.mxu0 %v4507
    %4949 = vmatpush.msra.mxu0 %v4504
    %4950 = vmatpush.msra.mxu0 %v4501
    %4951 = vmatpush.msra.mxu0 %v4498
    %4952 = vmatpush.msra.mxu0 %v4495
    %4953 = vmatpush.msra.mxu0 %v4492
    %4954 = vmatpush.msra.mxu0 %v4489
    %4955 = vmatmul.f32.gmra.mxu0 %v4537
    %v4956 = vpop.f32.mrf.mxu0
    %v4957 = vadd.f32 %v4844, %v4956
    %4958 = vmatmul.f32.gmra.mxu0 %v4539
    %v4959 = vpop.f32.mrf.mxu0
    %v4960 = vadd.f32 %v4847, %v4959
    %4961 = vmatmul.f32.gmra.mxu0 %v4541
    %v4962 = vpop.f32.mrf.mxu0
    %v4963 = vadd.f32 %v4850, %v4962
    %4964 = vmatmul.f32.gmra.mxu0 %v4543
    %v4965 = vpop.f32.mrf.mxu0
    %v4966 = vadd.f32 %v4853, %v4965
    %4967 = vmatmul.f32.gmra.mxu0 %v4545
    %v4968 = vpop.f32.mrf.mxu0
    %v4969 = vadd.f32 %v4856, %v4968
    %4970 = vmatmul.f32.gmra.mxu0 %v4547
    %v4971 = vpop.f32.mrf.mxu0
    %v4972 = vadd.f32 %v4859, %v4971
    %4973 = vmatmul.f32.gmra.mxu0 %v4549
    %v4974 = vpop.f32.mrf.mxu0
    %v4975 = vadd.f32 %v4862, %v4974
    %4976 = vmatmul.f32.gmra.mxu0 %v4551
    %v4977 = vpop.f32.mrf.mxu0
    %v4978 = vadd.f32 %v4865, %v4977
    %4979 = vmatmul.f32.gmra.mxu0 %v4553
    %v4980 = vpop.f32.mrf.mxu0
    %v4981 = vadd.f32 %v4868, %v4980
    %4982 = vmatmul.f32.gmra.mxu0 %v4555
    %v4983 = vpop.f32.mrf.mxu0
    %v4984 = vadd.f32 %v4871, %v4983
    %4985 = vmatmul.f32.gmra.mxu0 %v4557
    %v4986 = vpop.f32.mrf.mxu0
    %v4987 = vadd.f32 %v4874, %v4986
    %4988 = vmatmul.f32.gmra.mxu0 %v4559
    %v4989 = vpop.f32.mrf.mxu0
    %v4990 = vadd.f32 %v4877, %v4989
    %4991 = vmatmul.f32.gmra.mxu0 %v4561
    %v4992 = vpop.f32.mrf.mxu0
    %v4993 = vadd.f32 %v4880, %v4992
    %4994 = vmatmul.f32.gmra.mxu0 %v4563
    %v4995 = vpop.f32.mrf.mxu0
    %v4996 = vadd.f32 %v4883, %v4995
    %4997 = vmatmul.f32.gmra.mxu0 %v4565
    %v4998 = vpop.f32.mrf.mxu0
    %v4999 = vadd.f32 %v4886, %v4998
    %5000 = vmatmul.f32.gmra.mxu0 %v4567
    %v5001 = vpop.f32.mrf.mxu0
    %v5002 = vadd.f32 %v4889, %v5001
    %5003 = vmatmul.f32.gmra.mxu0 %v4569
    %v5004 = vpop.f32.mrf.mxu0
    %v5005 = vadd.f32 %v4892, %v5004
    %5006 = vmatmul.f32.gmra.mxu0 %v4571
    %v5007 = vpop.f32.mrf.mxu0
    %v5008 = vadd.f32 %v4895, %v5007
    %5009 = vmatmul.f32.gmra.mxu0 %v4573
    %v5010 = vpop.f32.mrf.mxu0
    %v5011 = vadd.f32 %v4898, %v5010
    %5012 = vmatmul.f32.gmra.mxu0 %v4575
    %v5013 = vpop.f32.mrf.mxu0
    %v5014 = vadd.f32 %v4901, %v5013
    %5015 = vmatmul.f32.gmra.mxu0 %v4577
    %v5016 = vpop.f32.mrf.mxu0
    %v5017 = vadd.f32 %v4904, %v5016
    %5018 = vmatmul.f32.gmra.mxu0 %v4579
    %v5019 = vpop.f32.mrf.mxu0
    %v5020 = vadd.f32 %v4907, %v5019
    %5021 = vmatmul.f32.gmra.mxu0 %v4581
    %v5022 = vpop.f32.mrf.mxu0
    %v5023 = vadd.f32 %v4910, %v5022
    %5024 = vmatmul.f32.gmra.mxu0 %v4583
    %v5025 = vpop.f32.mrf.mxu0
    %v5026 = vadd.f32 %v4913, %v5025
    %5027 = vmatmul.f32.gmra.mxu0 %v4585
    %v5028 = vpop.f32.mrf.mxu0
    %v5029 = vadd.f32 %v4916, %v5028
    %5030 = vmatmul.f32.gmra.mxu0 %v4587
    %v5031 = vpop.f32.mrf.mxu0
    %v5032 = vadd.f32 %v4919, %v5031
    %5033 = vmatmul.f32.gmra.mxu0 %v4589
    %v5034 = vpop.f32.mrf.mxu0
    %v5035 = vadd.f32 %v4922, %v5034
    %5036 = vmatmul.f32.gmra.mxu0 %v4591
    %v5037 = vpop.f32.mrf.mxu0
    %v5038 = vadd.f32 %v4925, %v5037
    %5039 = vmatmul.f32.gmra.mxu0 %v4593
    %v5040 = vpop.f32.mrf.mxu0
    %v5041 = vadd.f32 %v4928, %v5040
    %5042 = vmatmul.f32.gmra.mxu0 %v4595
    %v5043 = vpop.f32.mrf.mxu0
    %v5044 = vadd.f32 %v4931, %v5043
    %5045 = vmatmul.f32.gmra.mxu0 %v4597
    %v5046 = vpop.f32.mrf.mxu0
    %v5047 = vadd.f32 %v4934, %v5046
    %5048 = vmatmul.f32.gmra.mxu0 %v4599
    %v5049 = vpop.f32.mrf.mxu0
    %v5050 = vadd.f32 %v4937, %v5049
    %5051 = vdwg.mxu0
    %v5052 = vmin.f32 %v4731, 0.0
    %v5053 = vmin.f32 %v4957, 0.0
    %v5054 = vmin.f32 %v4734, 0.0
    %v5055 = vmin.f32 %v4960, 0.0
    %v5056 = vmin.f32 %v4737, 0.0
    %v5057 = vmin.f32 %v4963, 0.0
    %v5058 = vmin.f32 %v4740, 0.0
    %v5059 = vmin.f32 %v4966, 0.0
    %v5060 = vmin.f32 %v4743, 0.0
    %v5061 = vmin.f32 %v4969, 0.0
    %v5062 = vmin.f32 %v4746, 0.0
    %v5063 = vmin.f32 %v4972, 0.0
    %v5064 = vmin.f32 %v4749, 0.0
    %v5065 = vmin.f32 %v4975, 0.0
    %v5066 = vmin.f32 %v4752, 0.0
    %v5067 = vmin.f32 %v4978, 0.0
    %v5068 = vmin.f32 %v4755, 0.0
    %v5069 = vmin.f32 %v4981, 0.0
    %v5070 = vmin.f32 %v4758, 0.0
    %v5071 = vmin.f32 %v4984, 0.0
    %v5072 = vmin.f32 %v4761, 0.0
    %v5073 = vmin.f32 %v4987, 0.0
    %v5074 = vmin.f32 %v4764, 0.0
    %v5075 = vmin.f32 %v4990, 0.0
    %v5076 = vmin.f32 %v4767, 0.0
    %v5077 = vmin.f32 %v4993, 0.0
    %v5078 = vmin.f32 %v4770, 0.0
    %v5079 = vmin.f32 %v4996, 0.0
    %v5080 = vmin.f32 %v4773, 0.0
    %v5081 = vmin.f32 %v4999, 0.0
    %v5082 = vmin.f32 %v4776, 0.0
    %v5083 = vmin.f32 %v5002, 0.0
    %v5084 = vmin.f32 %v4779, 0.0
    %v5085 = vmin.f32 %v5005, 0.0
    %v5086 = vmin.f32 %v4782, 0.0
    %v5087 = vmin.f32 %v5008, 0.0
    %v5088 = vmin.f32 %v4785, 0.0
    %v5089 = vmin.f32 %v5011, 0.0
    %v5090 = vmin.f32 %v4788, 0.0
    %v5091 = vmin.f32 %v5014, 0.0
    %v5092 = vmin.f32 %v4791, 0.0
    %v5093 = vmin.f32 %v5017, 0.0
    %v5094 = vmin.f32 %v4794, 0.0
    %v5095 = vmin.f32 %v5020, 0.0
    %v5096 = vmin.f32 %v4797, 0.0
    %v5097 = vmin.f32 %v5023, 0.0
    %v5098 = vmin.f32 %v4800, 0.0
    %v5099 = vmin.f32 %v5026, 0.0
    %v5100 = vmin.f32 %v4803, 0.0
    %v5101 = vmin.f32 %v5029, 0.0
    %v5102 = vmin.f32 %v4806, 0.0
    %v5103 = vmin.f32 %v5032, 0.0
    %v5104 = vmin.f32 %v4809, 0.0
    %v5105 = vmin.f32 %v5035, 0.0
    %v5106 = vmin.f32 %v4812, 0.0
    %v5107 = vmin.f32 %v5038, 0.0
    %v5108 = vmin.f32 %v4815, 0.0
    %v5109 = vmin.f32 %v5041, 0.0
    %v5110 = vmin.f32 %v4818, 0.0
    %v5111 = vmin.f32 %v5044, 0.0
    %v5112 = vmin.f32 %v4821, 0.0
    %v5113 = vmin.f32 %v5047, 0.0
    %v5114 = vmin.f32 %v4824, 0.0
    %v5115 = vmin.f32 %v5050, 0.0
    %v5116 = vmul.f32 %v5052, 0.2
    %v5117 = vmul.f32 %v5053, 0.2
    %v5118 = vmul.f32 %v5054, 0.2
    %v5119 = vmul.f32 %v5055, 0.2
    %v5120 = vmul.f32 %v5056, 0.2
    %v5121 = vmul.f32 %v5057, 0.2
    %v5122 = vmul.f32 %v5058, 0.2
    %v5123 = vmul.f32 %v5059, 0.2
    %v5124 = vmul.f32 %v5060, 0.2
    %v5125 = vmul.f32 %v5061, 0.2
    %v5126 = vmul.f32 %v5062, 0.2
    %v5127 = vmul.f32 %v5063, 0.2
    %v5128 = vmul.f32 %v5064, 0.2
    %v5129 = vmul.f32 %v5065, 0.2
    %v5130 = vmul.f32 %v5066, 0.2
    %v5131 = vmul.f32 %v5067, 0.2
    %v5132 = vmul.f32 %v5068, 0.2
    %v5133 = vmul.f32 %v5069, 0.2
    %v5134 = vmul.f32 %v5070, 0.2
    %v5135 = vmul.f32 %v5071, 0.2
    %v5136 = vmul.f32 %v5072, 0.2
    %v5137 = vmul.f32 %v5073, 0.2
    %v5138 = vmul.f32 %v5074, 0.2
    %v5139 = vmul.f32 %v5075, 0.2
    %v5140 = vmul.f32 %v5076, 0.2
    %v5141 = vmul.f32 %v5077, 0.2
    %v5142 = vmul.f32 %v5078, 0.2
    %v5143 = vmul.f32 %v5079, 0.2
    %v5144 = vmul.f32 %v5080, 0.2
    %v5145 = vmul.f32 %v5081, 0.2
    %v5146 = vmul.f32 %v5082, 0.2
    %v5147 = vmul.f32 %v5083, 0.2
    %v5148 = vmul.f32 %v5084, 0.2
    %v5149 = vmul.f32 %v5085, 0.2
    %v5150 = vmul.f32 %v5086, 0.2
    %v5151 = vmul.f32 %v5087, 0.2
    %v5152 = vmul.f32 %v5088, 0.2
    %v5153 = vmul.f32 %v5089, 0.2
    %v5154 = vmul.f32 %v5090, 0.2
    %v5155 = vmul.f32 %v5091, 0.2
    %v5156 = vmul.f32 %v5092, 0.2
    %v5157 = vmul.f32 %v5093, 0.2
    %v5158 = vmul.f32 %v5094, 0.2
    %v5159 = vmul.f32 %v5095, 0.2
    %v5160 = vmul.f32 %v5096, 0.2
    %v5161 = vmul.f32 %v5097, 0.2
    %v5162 = vmul.f32 %v5098, 0.2
    %v5163 = vmul.f32 %v5099, 0.2
    %v5164 = vmul.f32 %v5100, 0.2
    %v5165 = vmul.f32 %v5101, 0.2
    %v5166 = vmul.f32 %v5102, 0.2
    %v5167 = vmul.f32 %v5103, 0.2
    %v5168 = vmul.f32 %v5104, 0.2
    %v5169 = vmul.f32 %v5105, 0.2
    %v5170 = vmul.f32 %v5106, 0.2
    %v5171 = vmul.f32 %v5107, 0.2
    %v5172 = vmul.f32 %v5108, 0.2
    %v5173 = vmul.f32 %v5109, 0.2
    %v5174 = vmul.f32 %v5110, 0.2
    %v5175 = vmul.f32 %v5111, 0.2
    %v5176 = vmul.f32 %v5112, 0.2
    %v5177 = vmul.f32 %v5113, 0.2
    %v5178 = vmul.f32 %v5114, 0.2
    %v5179 = vmul.f32 %v5115, 0.2
    %v5180 = vmul.f32 %v5116, 1.442695
    %v5181 = vpow.pop %v5180
    %v5182 = vmul.f32 %v5117, 1.442695
    %v5183 = vpow.pop %v5182
    %v5184 = vmul.f32 %v5118, 1.442695
    %v5185 = vpow.pop %v5184
    %v5186 = vmul.f32 %v5119, 1.442695
    %v5187 = vpow.pop %v5186
    %v5188 = vmul.f32 %v5120, 1.442695
    %v5189 = vpow.pop %v5188
    %v5190 = vmul.f32 %v5121, 1.442695
    %v5191 = vpow.pop %v5190
    %v5192 = vmul.f32 %v5122, 1.442695
    %v5193 = vpow.pop %v5192
    %v5194 = vmul.f32 %v5123, 1.442695
    %v5195 = vpow.pop %v5194
    %v5196 = vmul.f32 %v5124, 1.442695
    %v5197 = vpow.pop %v5196
    %v5198 = vmul.f32 %v5125, 1.442695
    %v5199 = vpow.pop %v5198
    %v5200 = vmul.f32 %v5126, 1.442695
    %v5201 = vpow.pop %v5200
    %v5202 = vmul.f32 %v5127, 1.442695
    %v5203 = vpow.pop %v5202
    %v5204 = vmul.f32 %v5128, 1.442695
    %v5205 = vpow.pop %v5204
    %v5206 = vmul.f32 %v5129, 1.442695
    %v5207 = vpow.pop %v5206
    %v5208 = vmul.f32 %v5130, 1.442695
    %v5209 = vpow.pop %v5208
    %v5210 = vmul.f32 %v5131, 1.442695
    %v5211 = vpow.pop %v5210
    %v5212 = vmul.f32 %v5132, 1.442695
    %v5213 = vpow.pop %v5212
    %v5214 = vmul.f32 %v5133, 1.442695
    %v5215 = vpow.pop %v5214
    %v5216 = vmul.f32 %v5134, 1.442695
    %v5217 = vpow.pop %v5216
    %v5218 = vmul.f32 %v5135, 1.442695
    %v5219 = vpow.pop %v5218
    %v5220 = vmul.f32 %v5136, 1.442695
    %v5221 = vpow.pop %v5220
    %v5222 = vmul.f32 %v5137, 1.442695
    %v5223 = vpow.pop %v5222
    %v5224 = vmul.f32 %v5138, 1.442695
    %v5225 = vpow.pop %v5224
    %v5226 = vmul.f32 %v5139, 1.442695
    %v5227 = vpow.pop %v5226
    %v5228 = vmul.f32 %v5140, 1.442695
    %v5229 = vpow.pop %v5228
    %v5230 = vmul.f32 %v5141, 1.442695
    %v5231 = vpow.pop %v5230
    %v5232 = vmul.f32 %v5142, 1.442695
    %v5233 = vpow.pop %v5232
    %v5234 = vmul.f32 %v5143, 1.442695
    %v5235 = vpow.pop %v5234
    %v5236 = vmul.f32 %v5144, 1.442695
    %v5237 = vpow.pop %v5236
    %v5238 = vmul.f32 %v5145, 1.442695
    %v5239 = vpow.pop %v5238
    %v5240 = vmul.f32 %v5146, 1.442695
    %v5241 = vpow.pop %v5240
    %v5242 = vmul.f32 %v5147, 1.442695
    %v5243 = vpow.pop %v5242
    %v5244 = vmul.f32 %v5148, 1.442695
    %v5245 = vpow.pop %v5244
    %v5246 = vmul.f32 %v5149, 1.442695
    %v5247 = vpow.pop %v5246
    %v5248 = vmul.f32 %v5150, 1.442695
    %v5249 = vpow.pop %v5248
    %v5250 = vmul.f32 %v5151, 1.442695
    %v5251 = vpow.pop %v5250
    %v5252 = vmul.f32 %v5152, 1.442695
    %v5253 = vpow.pop %v5252
    %v5254 = vmul.f32 %v5153, 1.442695
    %v5255 = vpow.pop %v5254
    %v5256 = vmul.f32 %v5154, 1.442695
    %v5257 = vpow.pop %v5256
    %v5258 = vmul.f32 %v5155, 1.442695
    %v5259 = vpow.pop %v5258
    %v5260 = vmul.f32 %v5156, 1.442695
    %v5261 = vpow.pop %v5260
    %v5262 = vmul.f32 %v5157, 1.442695
    %v5263 = vpow.pop %v5262
    %v5264 = vmul.f32 %v5158, 1.442695
    %v5265 = vpow.pop %v5264
    %v5266 = vmul.f32 %v5159, 1.442695
    %v5267 = vpow.pop %v5266
    %v5268 = vmul.f32 %v5160, 1.442695
    %v5269 = vpow.pop %v5268
    %v5270 = vmul.f32 %v5161, 1.442695
    %v5271 = vpow.pop %v5270
    %v5272 = vmul.f32 %v5162, 1.442695
    %v5273 = vpow.pop %v5272
    %v5274 = vmul.f32 %v5163, 1.442695
    %v5275 = vpow.pop %v5274
    %v5276 = vmul.f32 %v5164, 1.442695
    %v5277 = vpow.pop %v5276
    %v5278 = vmul.f32 %v5165, 1.442695
    %v5279 = vpow.pop %v5278
    %v5280 = vmul.f32 %v5166, 1.442695
    %v5281 = vpow.pop %v5280
    %v5282 = vmul.f32 %v5167, 1.442695
    %v5283 = vpow.pop %v5282
    %v5284 = vmul.f32 %v5168, 1.442695
    %v5285 = vpow.pop %v5284
    %v5286 = vmul.f32 %v5169, 1.442695
    %v5287 = vpow.pop %v5286
    %v5288 = vmul.f32 %v5170, 1.442695
    %v5289 = vpow.pop %v5288
    %v5290 = vmul.f32 %v5171, 1.442695
    %v5291 = vpow.pop %v5290
    %v5292 = vmul.f32 %v5172, 1.442695
    %v5293 = vpow.pop %v5292
    %v5294 = vmul.f32 %v5173, 1.442695
    %v5295 = vpow.pop %v5294
    %v5296 = vmul.f32 %v5174, 1.442695
    %v5297 = vpow.pop %v5296
    %v5298 = vmul.f32 %v5175, 1.442695
    %v5299 = vpow.pop %v5298
    %v5300 = vmul.f32 %v5176, 1.442695
    %v5301 = vpow.pop %v5300
    %v5302 = vmul.f32 %v5177, 1.442695
    %v5303 = vpow.pop %v5302
    %v5304 = vmul.f32 %v5178, 1.442695
    %v5305 = vpow.pop %v5304
    %v5306 = vmul.f32 %v5179, 1.442695
    %v5307 = vpow.pop %v5306
    %v5308 = vsub.f32 %v5181, 1.0
    %v5309 = vsub.f32 %v5183, 1.0
    %v5310 = vsub.f32 %v5185, 1.0
    %v5311 = vsub.f32 %v5187, 1.0
    %v5312 = vsub.f32 %v5189, 1.0
    %v5313 = vsub.f32 %v5191, 1.0
    %v5314 = vsub.f32 %v5193, 1.0
    %v5315 = vsub.f32 %v5195, 1.0
    %v5316 = vsub.f32 %v5197, 1.0
    %v5317 = vsub.f32 %v5199, 1.0
    %v5318 = vsub.f32 %v5201, 1.0
    %v5319 = vsub.f32 %v5203, 1.0
    %v5320 = vsub.f32 %v5205, 1.0
    %v5321 = vsub.f32 %v5207, 1.0
    %v5322 = vsub.f32 %v5209, 1.0
    %v5323 = vsub.f32 %v5211, 1.0
    %v5324 = vsub.f32 %v5213, 1.0
    %v5325 = vsub.f32 %v5215, 1.0
    %v5326 = vsub.f32 %v5217, 1.0
    %v5327 = vsub.f32 %v5219, 1.0
    %v5328 = vsub.f32 %v5221, 1.0
    %v5329 = vsub.f32 %v5223, 1.0
    %v5330 = vsub.f32 %v5225, 1.0
    %v5331 = vsub.f32 %v5227, 1.0
    %v5332 = vsub.f32 %v5229, 1.0
    %v5333 = vsub.f32 %v5231, 1.0
    %v5334 = vsub.f32 %v5233, 1.0
    %v5335 = vsub.f32 %v5235, 1.0
    %v5336 = vsub.f32 %v5237, 1.0
    %v5337 = vsub.f32 %v5239, 1.0
    %v5338 = vsub.f32 %v5241, 1.0
    %v5339 = vsub.f32 %v5243, 1.0
    %v5340 = vsub.f32 %v5245, 1.0
    %v5341 = vsub.f32 %v5247, 1.0
    %v5342 = vsub.f32 %v5249, 1.0
    %v5343 = vsub.f32 %v5251, 1.0
    %v5344 = vsub.f32 %v5253, 1.0
    %v5345 = vsub.f32 %v5255, 1.0
    %v5346 = vsub.f32 %v5257, 1.0
    %v5347 = vsub.f32 %v5259, 1.0
    %v5348 = vsub.f32 %v5261, 1.0
    %v5349 = vsub.f32 %v5263, 1.0
    %v5350 = vsub.f32 %v5265, 1.0
    %v5351 = vsub.f32 %v5267, 1.0
    %v5352 = vsub.f32 %v5269, 1.0
    %v5353 = vsub.f32 %v5271, 1.0
    %v5354 = vsub.f32 %v5273, 1.0
    %v5355 = vsub.f32 %v5275, 1.0
    %v5356 = vsub.f32 %v5277, 1.0
    %v5357 = vsub.f32 %v5279, 1.0
    %v5358 = vsub.f32 %v5281, 1.0
    %v5359 = vsub.f32 %v5283, 1.0
    %v5360 = vsub.f32 %v5285, 1.0
    %v5361 = vsub.f32 %v5287, 1.0
    %v5362 = vsub.f32 %v5289, 1.0
    %v5363 = vsub.f32 %v5291, 1.0
    %v5364 = vsub.f32 %v5293, 1.0
    %v5365 = vsub.f32 %v5295, 1.0
    %v5366 = vsub.f32 %v5297, 1.0
    %v5367 = vsub.f32 %v5299, 1.0
    %v5368 = vsub.f32 %v5301, 1.0
    %v5369 = vsub.f32 %v5303, 1.0
    %v5370 = vsub.f32 %v5305, 1.0
    %v5371 = vsub.f32 %v5307, 1.0
    %vm5372 = vcmp.ge.f32.partialorder %v4731, 0.0
    %vm5373 = vcmp.ge.f32.partialorder %v4957, 0.0
    %vm5374 = vcmp.ge.f32.partialorder %v4734, 0.0
    %vm5375 = vcmp.ge.f32.partialorder %v4960, 0.0
    %vm5376 = vcmp.ge.f32.partialorder %v4737, 0.0
    %vm5377 = vcmp.ge.f32.partialorder %v4963, 0.0
    %vm5378 = vcmp.ge.f32.partialorder %v4740, 0.0
    %vm5379 = vcmp.ge.f32.partialorder %v4966, 0.0
    %vm5380 = vcmp.ge.f32.partialorder %v4743, 0.0
    %vm5381 = vcmp.ge.f32.partialorder %v4969, 0.0
    %vm5382 = vcmp.ge.f32.partialorder %v4746, 0.0
    %vm5383 = vcmp.ge.f32.partialorder %v4972, 0.0
    %vm5384 = vcmp.ge.f32.partialorder %v4749, 0.0
    %vm5385 = vcmp.ge.f32.partialorder %v4975, 0.0
    %vm5386 = vcmp.ge.f32.partialorder %v4752, 0.0
    %vm5387 = vcmp.ge.f32.partialorder %v4978, 0.0
    %vm5388 = vcmp.ge.f32.partialorder %v4755, 0.0
    %vm5389 = vcmp.ge.f32.partialorder %v4981, 0.0
    %vm5390 = vcmp.ge.f32.partialorder %v4758, 0.0
    %vm5391 = vcmp.ge.f32.partialorder %v4984, 0.0
    %vm5392 = vcmp.ge.f32.partialorder %v4761, 0.0
    %vm5393 = vcmp.ge.f32.partialorder %v4987, 0.0
    %vm5394 = vcmp.ge.f32.partialorder %v4764, 0.0
    %vm5395 = vcmp.ge.f32.partialorder %v4990, 0.0
    %vm5396 = vcmp.ge.f32.partialorder %v4767, 0.0
    %vm5397 = vcmp.ge.f32.partialorder %v4993, 0.0
    %vm5398 = vcmp.ge.f32.partialorder %v4770, 0.0
    %vm5399 = vcmp.ge.f32.partialorder %v4996, 0.0
    %vm5400 = vcmp.ge.f32.partialorder %v4773, 0.0
    %vm5401 = vcmp.ge.f32.partialorder %v4999, 0.0
    %vm5402 = vcmp.ge.f32.partialorder %v4776, 0.0
    %vm5403 = vcmp.ge.f32.partialorder %v5002, 0.0
    %vm5404 = vcmp.ge.f32.partialorder %v4779, 0.0
    %vm5405 = vcmp.ge.f32.partialorder %v5005, 0.0
    %vm5406 = vcmp.ge.f32.partialorder %v4782, 0.0
    %vm5407 = vcmp.ge.f32.partialorder %v5008, 0.0
    %vm5408 = vcmp.ge.f32.partialorder %v4785, 0.0
    %vm5409 = vcmp.ge.f32.partialorder %v5011, 0.0
    %vm5410 = vcmp.ge.f32.partialorder %v4788, 0.0
    %vm5411 = vcmp.ge.f32.partialorder %v5014, 0.0
    %vm5412 = vcmp.ge.f32.partialorder %v4791, 0.0
    %vm5413 = vcmp.ge.f32.partialorder %v5017, 0.0
    %vm5414 = vcmp.ge.f32.partialorder %v4794, 0.0
    %vm5415 = vcmp.ge.f32.partialorder %v5020, 0.0
    %vm5416 = vcmp.ge.f32.partialorder %v4797, 0.0
    %vm5417 = vcmp.ge.f32.partialorder %v5023, 0.0
    %vm5418 = vcmp.ge.f32.partialorder %v4800, 0.0
    %vm5419 = vcmp.ge.f32.partialorder %v5026, 0.0
    %vm5420 = vcmp.ge.f32.partialorder %v4803, 0.0
    %vm5421 = vcmp.ge.f32.partialorder %v5029, 0.0
    %vm5422 = vcmp.ge.f32.partialorder %v4806, 0.0
    %vm5423 = vcmp.ge.f32.partialorder %v5032, 0.0
    %vm5424 = vcmp.ge.f32.partialorder %v4809, 0.0
    %vm5425 = vcmp.ge.f32.partialorder %v5035, 0.0
    %vm5426 = vcmp.ge.f32.partialorder %v4812, 0.0
    %vm5427 = vcmp.ge.f32.partialorder %v5038, 0.0
    %vm5428 = vcmp.ge.f32.partialorder %v4815, 0.0
    %vm5429 = vcmp.ge.f32.partialorder %v5041, 0.0
    %vm5430 = vcmp.ge.f32.partialorder %v4818, 0.0
    %vm5431 = vcmp.ge.f32.partialorder %v5044, 0.0
    %vm5432 = vcmp.ge.f32.partialorder %v4821, 0.0
    %vm5433 = vcmp.ge.f32.partialorder %v5047, 0.0
    %vm5434 = vcmp.ge.f32.partialorder %v4824, 0.0
    %vm5435 = vcmp.ge.f32.partialorder %v5050, 0.0
    %v5436 = vsel %vm5372, %v4731, %v5308
    %v5437 = vsel %vm5373, %v4957, %v5309
    %v5438 = vsel %vm5374, %v4734, %v5310
    %v5439 = vsel %vm5375, %v4960, %v5311
    %v5440 = vsel %vm5376, %v4737, %v5312
    %v5441 = vsel %vm5377, %v4963, %v5313
    %v5442 = vsel %vm5378, %v4740, %v5314
    %v5443 = vsel %vm5379, %v4966, %v5315
    %v5444 = vsel %vm5380, %v4743, %v5316
    %v5445 = vsel %vm5381, %v4969, %v5317
    %v5446 = vsel %vm5382, %v4746, %v5318
    %v5447 = vsel %vm5383, %v4972, %v5319
    %v5448 = vsel %vm5384, %v4749, %v5320
    %v5449 = vsel %vm5385, %v4975, %v5321
    %v5450 = vsel %vm5386, %v4752, %v5322
    %v5451 = vsel %vm5387, %v4978, %v5323
    %v5452 = vsel %vm5388, %v4755, %v5324
    %v5453 = vsel %vm5389, %v4981, %v5325
    %v5454 = vsel %vm5390, %v4758, %v5326
    %v5455 = vsel %vm5391, %v4984, %v5327
    %v5456 = vsel %vm5392, %v4761, %v5328
    %v5457 = vsel %vm5393, %v4987, %v5329
    %v5458 = vsel %vm5394, %v4764, %v5330
    %v5459 = vsel %vm5395, %v4990, %v5331
    %v5460 = vsel %vm5396, %v4767, %v5332
    %v5461 = vsel %vm5397, %v4993, %v5333
    %v5462 = vsel %vm5398, %v4770, %v5334
    %v5463 = vsel %vm5399, %v4996, %v5335
    %v5464 = vsel %vm5400, %v4773, %v5336
    %v5465 = vsel %vm5401, %v4999, %v5337
    %v5466 = vsel %vm5402, %v4776, %v5338
    %v5467 = vsel %vm5403, %v5002, %v5339
    %v5468 = vsel %vm5404, %v4779, %v5340
    %v5469 = vsel %vm5405, %v5005, %v5341
    %v5470 = vsel %vm5406, %v4782, %v5342
    %v5471 = vsel %vm5407, %v5008, %v5343
    %v5472 = vsel %vm5408, %v4785, %v5344
    %v5473 = vsel %vm5409, %v5011, %v5345
    %v5474 = vsel %vm5410, %v4788, %v5346
    %v5475 = vsel %vm5411, %v5014, %v5347
    %v5476 = vsel %vm5412, %v4791, %v5348
    %v5477 = vsel %vm5413, %v5017, %v5349
    %v5478 = vsel %vm5414, %v4794, %v5350
    %v5479 = vsel %vm5415, %v5020, %v5351
    %v5480 = vsel %vm5416, %v4797, %v5352
    %v5481 = vsel %vm5417, %v5023, %v5353
    %v5482 = vsel %vm5418, %v4800, %v5354
    %v5483 = vsel %vm5419, %v5026, %v5355
    %v5484 = vsel %vm5420, %v4803, %v5356
    %v5485 = vsel %vm5421, %v5029, %v5357
    %v5486 = vsel %vm5422, %v4806, %v5358
    %v5487 = vsel %vm5423, %v5032, %v5359
    %v5488 = vsel %vm5424, %v4809, %v5360
    %v5489 = vsel %vm5425, %v5035, %v5361
    %v5490 = vsel %vm5426, %v4812, %v5362
    %v5491 = vsel %vm5427, %v5038, %v5363
    %v5492 = vsel %vm5428, %v4815, %v5364
    %v5493 = vsel %vm5429, %v5041, %v5365
    %v5494 = vsel %vm5430, %v4818, %v5366
    %v5495 = vsel %vm5431, %v5044, %v5367
    %v5496 = vsel %vm5432, %v4821, %v5368
    %v5497 = vsel %vm5433, %v5047, %v5369
    %v5498 = vsel %vm5434, %v4824, %v5370
    %v5499 = vsel %vm5435, %v5050, %v5371
    %v5500 = vadd.f32 %v5436, %v5438
    %v5501 = vadd.f32 %v5500, %v5440
    %v5502 = vadd.f32 %v5501, %v5442
    %v5503 = vadd.f32 %v5502, %v5444
    %v5504 = vadd.f32 %v5503, %v5446
    %v5505 = vadd.f32 %v5504, %v5448
    %v5506 = vadd.f32 %v5505, %v5450
    %v5507 = vadd.f32 %v5506, %v5452
    %v5508 = vadd.f32 %v5507, %v5454
    %v5509 = vadd.f32 %v5508, %v5456
    %v5510 = vadd.f32 %v5509, %v5458
    %v5511 = vadd.f32 %v5510, %v5460
    %v5512 = vadd.f32 %v5511, %v5462
    %v5513 = vadd.f32 %v5512, %v5464
    %v5514 = vadd.f32 %v5513, %v5466
    %v5515 = vadd.f32 %v5514, %v5468
    %v5516 = vadd.f32 %v5515, %v5470
    %v5517 = vadd.f32 %v5516, %v5472
    %v5518 = vadd.f32 %v5517, %v5474
    %v5519 = vadd.f32 %v5518, %v5476
    %v5520 = vadd.f32 %v5519, %v5478
    %v5521 = vadd.f32 %v5520, %v5480
    %v5522 = vadd.f32 %v5521, %v5482
    %v5523 = vadd.f32 %v5522, %v5484
    %v5524 = vadd.f32 %v5523, %v5486
    %v5525 = vadd.f32 %v5524, %v5488
    %v5526 = vadd.f32 %v5525, %v5490
    %v5527 = vadd.f32 %v5526, %v5492
    %v5528 = vadd.f32 %v5527, %v5494
    %v5529 = vadd.f32 %v5528, %v5496
    %v5530 = vadd.f32 %v5529, %v5498
    %v5531 = vrot.slane %v5530, 4
    %v5532 = vadd.f32 %v5530, %v5531
    %v5533 = vrot.slane %v5532, 2
    %v5534 = vadd.f32 %v5532, %v5533
    %v5535 = vrot.slane %v5534, 1
    %v5536 = vadd.f32 %v5534, %v5535
    %v5537 = vadd.f32 %v5437, %v5439
    %v5538 = vadd.f32 %v5537, %v5441
    %v5539 = vadd.f32 %v5538, %v5443
    %v5540 = vadd.f32 %v5539, %v5445
    %v5541 = vadd.f32 %v5540, %v5447
    %v5542 = vadd.f32 %v5541, %v5449
    %v5543 = vadd.f32 %v5542, %v5451
    %v5544 = vadd.f32 %v5543, %v5453
    %v5545 = vadd.f32 %v5544, %v5455
    %v5546 = vadd.f32 %v5545, %v5457
    %v5547 = vadd.f32 %v5546, %v5459
    %v5548 = vadd.f32 %v5547, %v5461
    %v5549 = vadd.f32 %v5548, %v5463
    %v5550 = vadd.f32 %v5549, %v5465
    %v5551 = vadd.f32 %v5550, %v5467
    %v5552 = vadd.f32 %v5551, %v5469
    %v5553 = vadd.f32 %v5552, %v5471
    %v5554 = vadd.f32 %v5553, %v5473
    %v5555 = vadd.f32 %v5554, %v5475
    %v5556 = vadd.f32 %v5555, %v5477
    %v5557 = vadd.f32 %v5556, %v5479
    %v5558 = vadd.f32 %v5557, %v5481
    %v5559 = vadd.f32 %v5558, %v5483
    %v5560 = vadd.f32 %v5559, %v5485
    %v5561 = vadd.f32 %v5560, %v5487
    %v5562 = vadd.f32 %v5561, %v5489
    %v5563 = vadd.f32 %v5562, %v5491
    %v5564 = vadd.f32 %v5563, %v5493
    %v5565 = vadd.f32 %v5564, %v5495
    %v5566 = vadd.f32 %v5565, %v5497
    %v5567 = vadd.f32 %v5566, %v5499
    %v5568 = vrot.slane %v5567, 4
    %v5569 = vadd.f32 %v5567, %v5568
    %v5570 = vrot.slane %v5569, 2
    %v5571 = vadd.f32 %v5569, %v5570
    %v5572 = vrot.slane %v5571, 1
    %v5573 = vadd.f32 %v5571, %v5572
    %v5574 = vmul.f32 %v5436, %v5436
    %v5575 = vmul.f32 %v5437, %v5437
    %v5576 = vmul.f32 %v5438, %v5438
    %v5577 = vmul.f32 %v5439, %v5439
    %v5578 = vmul.f32 %v5440, %v5440
    %v5579 = vmul.f32 %v5441, %v5441
    %v5580 = vmul.f32 %v5442, %v5442
    %v5581 = vmul.f32 %v5443, %v5443
    %v5582 = vmul.f32 %v5444, %v5444
    %v5583 = vmul.f32 %v5445, %v5445
    %v5584 = vmul.f32 %v5446, %v5446
    %v5585 = vmul.f32 %v5447, %v5447
    %v5586 = vmul.f32 %v5448, %v5448
    %v5587 = vmul.f32 %v5449, %v5449
    %v5588 = vmul.f32 %v5450, %v5450
    %v5589 = vmul.f32 %v5451, %v5451
    %v5590 = vmul.f32 %v5452, %v5452
    %v5591 = vmul.f32 %v5453, %v5453
    %v5592 = vmul.f32 %v5454, %v5454
    %v5593 = vmul.f32 %v5455, %v5455
    %v5594 = vmul.f32 %v5456, %v5456
    %v5595 = vmul.f32 %v5457, %v5457
    %v5596 = vmul.f32 %v5458, %v5458
    %v5597 = vmul.f32 %v5459, %v5459
    %v5598 = vmul.f32 %v5460, %v5460
    %v5599 = vmul.f32 %v5461, %v5461
    %v5600 = vmul.f32 %v5462, %v5462
    %v5601 = vmul.f32 %v5463, %v5463
    %v5602 = vmul.f32 %v5464, %v5464
    %v5603 = vmul.f32 %v5465, %v5465
    %v5604 = vmul.f32 %v5466, %v5466
    %v5605 = vmul.f32 %v5467, %v5467
    %v5606 = vmul.f32 %v5468, %v5468
    %v5607 = vmul.f32 %v5469, %v5469
    %v5608 = vmul.f32 %v5470, %v5470
    %v5609 = vmul.f32 %v5471, %v5471
    %v5610 = vmul.f32 %v5472, %v5472
    %v5611 = vmul.f32 %v5473, %v5473
    %v5612 = vmul.f32 %v5474, %v5474
    %v5613 = vmul.f32 %v5475, %v5475
    %v5614 = vmul.f32 %v5476, %v5476
    %v5615 = vmul.f32 %v5477, %v5477
    %v5616 = vmul.f32 %v5478, %v5478
    %v5617 = vmul.f32 %v5479, %v5479
    %v5618 = vmul.f32 %v5480, %v5480
    %v5619 = vmul.f32 %v5481, %v5481
    %v5620 = vmul.f32 %v5482, %v5482
    %v5621 = vmul.f32 %v5483, %v5483
    %v5622 = vmul.f32 %v5484, %v5484
    %v5623 = vmul.f32 %v5485, %v5485
    %v5624 = vmul.f32 %v5486, %v5486
    %v5625 = vmul.f32 %v5487, %v5487
    %v5626 = vmul.f32 %v5488, %v5488
    %v5627 = vmul.f32 %v5489, %v5489
    %v5628 = vmul.f32 %v5490, %v5490
    %v5629 = vmul.f32 %v5491, %v5491
    %v5630 = vmul.f32 %v5492, %v5492
    %v5631 = vmul.f32 %v5493, %v5493
    %v5632 = vmul.f32 %v5494, %v5494
    %v5633 = vmul.f32 %v5495, %v5495
    %v5634 = vmul.f32 %v5496, %v5496
    %v5635 = vmul.f32 %v5497, %v5497
    %v5636 = vmul.f32 %v5498, %v5498
    %v5637 = vmul.f32 %v5499, %v5499
    %v5638 = vadd.f32 %v5574, %v5576
    %v5639 = vadd.f32 %v5638, %v5578
    %v5640 = vadd.f32 %v5639, %v5580
    %v5641 = vadd.f32 %v5640, %v5582
    %v5642 = vadd.f32 %v5641, %v5584
    %v5643 = vadd.f32 %v5642, %v5586
    %v5644 = vadd.f32 %v5643, %v5588
    %v5645 = vadd.f32 %v5644, %v5590
    %v5646 = vadd.f32 %v5645, %v5592
    %v5647 = vadd.f32 %v5646, %v5594
    %v5648 = vadd.f32 %v5647, %v5596
    %v5649 = vadd.f32 %v5648, %v5598
    %v5650 = vadd.f32 %v5649, %v5600
    %v5651 = vadd.f32 %v5650, %v5602
    %v5652 = vadd.f32 %v5651, %v5604
    %v5653 = vadd.f32 %v5652, %v5606
    %v5654 = vadd.f32 %v5653, %v5608
    %v5655 = vadd.f32 %v5654, %v5610
    %v5656 = vadd.f32 %v5655, %v5612
    %v5657 = vadd.f32 %v5656, %v5614
    %v5658 = vadd.f32 %v5657, %v5616
    %v5659 = vadd.f32 %v5658, %v5618
    %v5660 = vadd.f32 %v5659, %v5620
    %v5661 = vadd.f32 %v5660, %v5622
    %v5662 = vadd.f32 %v5661, %v5624
    %v5663 = vadd.f32 %v5662, %v5626
    %v5664 = vadd.f32 %v5663, %v5628
    %v5665 = vadd.f32 %v5664, %v5630
    %v5666 = vadd.f32 %v5665, %v5632
    %v5667 = vadd.f32 %v5666, %v5634
    %v5668 = vadd.f32 %v5667, %v5636
    %v5669 = vrot.slane %v5668, 4
    %v5670 = vadd.f32 %v5668, %v5669
    %v5671 = vrot.slane %v5670, 2
    %v5672 = vadd.f32 %v5670, %v5671
    %v5673 = vrot.slane %v5672, 1
    %v5674 = vadd.f32 %v5672, %v5673
    %v5675 = vadd.f32 %v5575, %v5577
    %v5676 = vadd.f32 %v5675, %v5579
    %v5677 = vadd.f32 %v5676, %v5581
    %v5678 = vadd.f32 %v5677, %v5583
    %v5679 = vadd.f32 %v5678, %v5585
    %v5680 = vadd.f32 %v5679, %v5587
    %v5681 = vadd.f32 %v5680, %v5589
    %v5682 = vadd.f32 %v5681, %v5591
    %v5683 = vadd.f32 %v5682, %v5593
    %v5684 = vadd.f32 %v5683, %v5595
    %v5685 = vadd.f32 %v5684, %v5597
    %v5686 = vadd.f32 %v5685, %v5599
    %v5687 = vadd.f32 %v5686, %v5601
    %v5688 = vadd.f32 %v5687, %v5603
    %v5689 = vadd.f32 %v5688, %v5605
    %v5690 = vadd.f32 %v5689, %v5607
    %v5691 = vadd.f32 %v5690, %v5609
    %v5692 = vadd.f32 %v5691, %v5611
    %v5693 = vadd.f32 %v5692, %v5613
    %v5694 = vadd.f32 %v5693, %v5615
    %v5695 = vadd.f32 %v5694, %v5617
    %v5696 = vadd.f32 %v5695, %v5619
    %v5697 = vadd.f32 %v5696, %v5621
    %v5698 = vadd.f32 %v5697, %v5623
    %v5699 = vadd.f32 %v5698, %v5625
    %v5700 = vadd.f32 %v5699, %v5627
    %v5701 = vadd.f32 %v5700, %v5629
    %v5702 = vadd.f32 %v5701, %v5631
    %v5703 = vadd.f32 %v5702, %v5633
    %v5704 = vadd.f32 %v5703, %v5635
    %v5705 = vadd.f32 %v5704, %v5637
    %v5706 = vrot.slane %v5705, 4
    %v5707 = vadd.f32 %v5705, %v5706
    %v5708 = vrot.slane %v5707, 2
    %v5709 = vadd.f32 %v5707, %v5708
    %v5710 = vrot.slane %v5709, 1
    %v5711 = vadd.f32 %v5709, %v5710
    %v5712 = vmul.f32 %v5536, 0.00390625
    %v5713 = vmul.f32 %v5573, 0.00390625
    %v5714 = vmul.f32 %v5674, 0.00390625
    %v5715 = vmul.f32 %v5711, 0.00390625
    %v5716 = vmul.f32 %v5712, %v5712
    %v5717 = vmul.f32 %v5713, %v5713
    %v5718 = vsub.f32 %v5714, %v5716
    %v5719 = vsub.f32 %v5715, %v5717
    %v5720 = vmax.f32 %v5718, 0.0
    %v5721 = vmax.f32 %v5719, 0.0
    %v5722 = vsub.f32 %v5436, %v5712
    %v5723 = vsub.f32 %v5437, %v5713
    %v5724 = vsub.f32 %v5438, %v5712
    %v5725 = vsub.f32 %v5439, %v5713
    %v5726 = vsub.f32 %v5440, %v5712
    %v5727 = vsub.f32 %v5441, %v5713
    %v5728 = vsub.f32 %v5442, %v5712
    %v5729 = vsub.f32 %v5443, %v5713
    %v5730 = vsub.f32 %v5444, %v5712
    %v5731 = vsub.f32 %v5445, %v5713
    %v5732 = vsub.f32 %v5446, %v5712
    %v5733 = vsub.f32 %v5447, %v5713
    %v5734 = vsub.f32 %v5448, %v5712
    %v5735 = vsub.f32 %v5449, %v5713
    %v5736 = vsub.f32 %v5450, %v5712
    %v5737 = vsub.f32 %v5451, %v5713
    %v5738 = vsub.f32 %v5452, %v5712
    %v5739 = vsub.f32 %v5453, %v5713
    %v5740 = vsub.f32 %v5454, %v5712
    %v5741 = vsub.f32 %v5455, %v5713
    %v5742 = vsub.f32 %v5456, %v5712
    %v5743 = vsub.f32 %v5457, %v5713
    %v5744 = vsub.f32 %v5458, %v5712
    %v5745 = vsub.f32 %v5459, %v5713
    %v5746 = vsub.f32 %v5460, %v5712
    %v5747 = vsub.f32 %v5461, %v5713
    %v5748 = vsub.f32 %v5462, %v5712
    %v5749 = vsub.f32 %v5463, %v5713
    %v5750 = vsub.f32 %v5464, %v5712
    %v5751 = vsub.f32 %v5465, %v5713
    %v5752 = vsub.f32 %v5466, %v5712
    %v5753 = vsub.f32 %v5467, %v5713
    %v5754 = vsub.f32 %v5468, %v5712
    %v5755 = vsub.f32 %v5469, %v5713
    %v5756 = vsub.f32 %v5470, %v5712
    %v5757 = vsub.f32 %v5471, %v5713
    %v5758 = vsub.f32 %v5472, %v5712
    %v5759 = vsub.f32 %v5473, %v5713
    %v5760 = vsub.f32 %v5474, %v5712
    %v5761 = vsub.f32 %v5475, %v5713
    %v5762 = vsub.f32 %v5476, %v5712
    %v5763 = vsub.f32 %v5477, %v5713
    %v5764 = vsub.f32 %v5478, %v5712
    %v5765 = vsub.f32 %v5479, %v5713
    %v5766 = vsub.f32 %v5480, %v5712
    %v5767 = vsub.f32 %v5481, %v5713
    %v5768 = vsub.f32 %v5482, %v5712
    %v5769 = vsub.f32 %v5483, %v5713
    %v5770 = vsub.f32 %v5484, %v5712
    %v5771 = vsub.f32 %v5485, %v5713
    %v5772 = vsub.f32 %v5486, %v5712
    %v5773 = vsub.f32 %v5487, %v5713
    %v5774 = vsub.f32 %v5488, %v5712
    %v5775 = vsub.f32 %v5489, %v5713
    %v5776 = vsub.f32 %v5490, %v5712
    %v5777 = vsub.f32 %v5491, %v5713
    %v5778 = vsub.f32 %v5492, %v5712
    %v5779 = vsub.f32 %v5493, %v5713
    %v5780 = vsub.f32 %v5494, %v5712
    %v5781 = vsub.f32 %v5495, %v5713
    %v5782 = vsub.f32 %v5496, %v5712
    %v5783 = vsub.f32 %v5497, %v5713
    %v5784 = vsub.f32 %v5498, %v5712
    %v5785 = vsub.f32 %v5499, %v5713
    %v5786 = vadd.f32 %v5720, 1e-05
    %v5787 = vadd.f32 %v5721, 1e-05
    %v5788 = vrsqrt.pop %v5786
    %v5789 = vmul.f32 %v5788, %v5786
    %v5790 = vmul.f32 %v5789, %v5788
    %v5791 = vmul.f32 0.5, %v5790
    %v5792 = vsub.f32 1.5, %v5791
    %v5793 = vmul.f32 %v5788, %v5792
    %vm5794 = vweird.f32 %v5786
    %vm5795 = vweird.f32 %v5788
    %vm5796 = vmor %vm5794, %vm5795
    %v5797 = vsel %vm5796, %v5788, %v5793
    %v5798 = vrsqrt.pop %v5787
    %v5799 = vmul.f32 %v5798, %v5787
    %v5800 = vmul.f32 %v5799, %v5798
    %v5801 = vmul.f32 0.5, %v5800
    %v5802 = vsub.f32 1.5, %v5801
    %v5803 = vmul.f32 %v5798, %v5802
    %vm5804 = vweird.f32 %v5787
    %vm5805 = vweird.f32 %v5798
    %vm5806 = vmor %vm5804, %vm5805
    %v5807 = vsel %vm5806, %v5798, %v5803
    %v5808 = vmul.f32 %v5722, %v5797
    %v5809 = vmul.f32 %v5723, %v5807
    %v5810 = vmul.f32 %v5724, %v5797
    %v5811 = vmul.f32 %v5725, %v5807
    %v5812 = vmul.f32 %v5726, %v5797
    %v5813 = vmul.f32 %v5727, %v5807
    %v5814 = vmul.f32 %v5728, %v5797
    %v5815 = vmul.f32 %v5729, %v5807
    %v5816 = vmul.f32 %v5730, %v5797
    %v5817 = vmul.f32 %v5731, %v5807
    %v5818 = vmul.f32 %v5732, %v5797
    %v5819 = vmul.f32 %v5733, %v5807
    %v5820 = vmul.f32 %v5734, %v5797
    %v5821 = vmul.f32 %v5735, %v5807
    %v5822 = vmul.f32 %v5736, %v5797
    %v5823 = vmul.f32 %v5737, %v5807
    %v5824 = vmul.f32 %v5738, %v5797
    %v5825 = vmul.f32 %v5739, %v5807
    %v5826 = vmul.f32 %v5740, %v5797
    %v5827 = vmul.f32 %v5741, %v5807
    %v5828 = vmul.f32 %v5742, %v5797
    %v5829 = vmul.f32 %v5743, %v5807
    %v5830 = vmul.f32 %v5744, %v5797
    %v5831 = vmul.f32 %v5745, %v5807
    %v5832 = vmul.f32 %v5746, %v5797
    %v5833 = vmul.f32 %v5747, %v5807
    %v5834 = vmul.f32 %v5748, %v5797
    %v5835 = vmul.f32 %v5749, %v5807
    %v5836 = vmul.f32 %v5750, %v5797
    %v5837 = vmul.f32 %v5751, %v5807
    %v5838 = vmul.f32 %v5752, %v5797
    %v5839 = vmul.f32 %v5753, %v5807
    %v5840 = vmul.f32 %v5754, %v5797
    %v5841 = vmul.f32 %v5755, %v5807
    %v5842 = vmul.f32 %v5756, %v5797
    %v5843 = vmul.f32 %v5757, %v5807
    %v5844 = vmul.f32 %v5758, %v5797
    %v5845 = vmul.f32 %v5759, %v5807
    %v5846 = vmul.f32 %v5760, %v5797
    %v5847 = vmul.f32 %v5761, %v5807
    %v5848 = vmul.f32 %v5762, %v5797
    %v5849 = vmul.f32 %v5763, %v5807
    %v5850 = vmul.f32 %v5764, %v5797
    %v5851 = vmul.f32 %v5765, %v5807
    %v5852 = vmul.f32 %v5766, %v5797
    %v5853 = vmul.f32 %v5767, %v5807
    %v5854 = vmul.f32 %v5768, %v5797
    %v5855 = vmul.f32 %v5769, %v5807
    %v5856 = vmul.f32 %v5770, %v5797
    %v5857 = vmul.f32 %v5771, %v5807
    %v5858 = vmul.f32 %v5772, %v5797
    %v5859 = vmul.f32 %v5773, %v5807
    %v5860 = vmul.f32 %v5774, %v5797
    %v5861 = vmul.f32 %v5775, %v5807
    %v5862 = vmul.f32 %v5776, %v5797
    %v5863 = vmul.f32 %v5777, %v5807
    %v5864 = vmul.f32 %v5778, %v5797
    %v5865 = vmul.f32 %v5779, %v5807
    %v5866 = vmul.f32 %v5780, %v5797
    %v5867 = vmul.f32 %v5781, %v5807
    %v5868 = vmul.f32 %v5782, %v5797
    %v5869 = vmul.f32 %v5783, %v5807
    %v5870 = vmul.f32 %v5784, %v5797
    %v5871 = vmul.f32 %v5785, %v5807
    %5872 = vst [vmem:[#allocation16] sm:$0xff] %v5808
    %5873 = vst [vmem:[#allocation16 + $0x8] sm:$0xff] %v5809
    %5874 = vst [vmem:[#allocation16 + $0x10] sm:$0xff] %v5810
    %5875 = vst [vmem:[#allocation16 + $0x18] sm:$0xff] %v5811
    %5876 = vst [vmem:[#allocation16 + $0x20] sm:$0xff] %v5812
    %5877 = vst [vmem:[#allocation16 + $0x28] sm:$0xff] %v5813
    %5878 = vst [vmem:[#allocation16 + $0x30] sm:$0xff] %v5814
    %5879 = vst [vmem:[#allocation16 + $0x38] sm:$0xff] %v5815
    %5880 = vst [vmem:[#allocation16 + $0x40] sm:$0xff] %v5816
    %5881 = vst [vmem:[#allocation16 + $0x48] sm:$0xff] %v5817
    %5882 = vst [vmem:[#allocation16 + $0x50] sm:$0xff] %v5818
    %5883 = vst [vmem:[#allocation16 + $0x58] sm:$0xff] %v5819
    %5884 = vst [vmem:[#allocation16 + $0x60] sm:$0xff] %v5820
    %5885 = vst [vmem:[#allocation16 + $0x68] sm:$0xff] %v5821
    %5886 = vst [vmem:[#allocation16 + $0x70] sm:$0xff] %v5822
    %5887 = vst [vmem:[#allocation16 + $0x78] sm:$0xff] %v5823
    %5888 = vst [vmem:[#allocation16 + $0x80] sm:$0xff] %v5824
    %5889 = vst [vmem:[#allocation16 + $0x88] sm:$0xff] %v5825
    %5890 = vst [vmem:[#allocation16 + $0x90] sm:$0xff] %v5826
    %5891 = vst [vmem:[#allocation16 + $0x98] sm:$0xff] %v5827
    %5892 = vst [vmem:[#allocation16 + $0xa0] sm:$0xff] %v5828
    %5893 = vst [vmem:[#allocation16 + $0xa8] sm:$0xff] %v5829
    %5894 = vst [vmem:[#allocation16 + $0xb0] sm:$0xff] %v5830
    %5895 = vst [vmem:[#allocation16 + $0xb8] sm:$0xff] %v5831
    %5896 = vst [vmem:[#allocation16 + $0xc0] sm:$0xff] %v5832
    %5897 = vst [vmem:[#allocation16 + $0xc8] sm:$0xff] %v5833
    %5898 = vst [vmem:[#allocation16 + $0xd0] sm:$0xff] %v5834
    %5899 = vst [vmem:[#allocation16 + $0xd8] sm:$0xff] %v5835
    %5900 = vst [vmem:[#allocation16 + $0xe0] sm:$0xff] %v5836
    %5901 = vst [vmem:[#allocation16 + $0xe8] sm:$0xff] %v5837
    %5902 = vst [vmem:[#allocation16 + $0xf0] sm:$0xff] %v5838
    %5903 = vst [vmem:[#allocation16 + $0xf8] sm:$0xff] %v5839
    %5904 = vst [vmem:[#allocation16 + $0x100] sm:$0xff] %v5840
    %5905 = vst [vmem:[#allocation16 + $0x108] sm:$0xff] %v5841
    %5906 = vst [vmem:[#allocation16 + $0x110] sm:$0xff] %v5842
    %5907 = vst [vmem:[#allocation16 + $0x118] sm:$0xff] %v5843
    %5908 = vst [vmem:[#allocation16 + $0x120] sm:$0xff] %v5844
    %5909 = vst [vmem:[#allocation16 + $0x128] sm:$0xff] %v5845
    %5910 = vst [vmem:[#allocation16 + $0x130] sm:$0xff] %v5846
    %5911 = vst [vmem:[#allocation16 + $0x138] sm:$0xff] %v5847
    %5912 = vst [vmem:[#allocation16 + $0x140] sm:$0xff] %v5848
    %5913 = vst [vmem:[#allocation16 + $0x148] sm:$0xff] %v5849
    %5914 = vst [vmem:[#allocation16 + $0x150] sm:$0xff] %v5850
    %5915 = vst [vmem:[#allocation16 + $0x158] sm:$0xff] %v5851
    %5916 = vst [vmem:[#allocation16 + $0x160] sm:$0xff] %v5852
    %5917 = vst [vmem:[#allocation16 + $0x168] sm:$0xff] %v5853
    %5918 = vst [vmem:[#allocation16 + $0x170] sm:$0xff] %v5854
    %5919 = vst [vmem:[#allocation16 + $0x178] sm:$0xff] %v5855
    %5920 = vst [vmem:[#allocation16 + $0x180] sm:$0xff] %v5856
    %5921 = vst [vmem:[#allocation16 + $0x188] sm:$0xff] %v5857
    %5922 = vst [vmem:[#allocation16 + $0x190] sm:$0xff] %v5858
    %5923 = vst [vmem:[#allocation16 + $0x198] sm:$0xff] %v5859
    %5924 = vst [vmem:[#allocation16 + $0x1a0] sm:$0xff] %v5860
    %5925 = vst [vmem:[#allocation16 + $0x1a8] sm:$0xff] %v5861
    %5926 = vst [vmem:[#allocation16 + $0x1b0] sm:$0xff] %v5862
    %5927 = vst [vmem:[#allocation16 + $0x1b8] sm:$0xff] %v5863
    %5928 = vst [vmem:[#allocation16 + $0x1c0] sm:$0xff] %v5864
    %5929 = vst [vmem:[#allocation16 + $0x1c8] sm:$0xff] %v5865
    %5930 = vst [vmem:[#allocation16 + $0x1d0] sm:$0xff] %v5866
    %5931 = vst [vmem:[#allocation16 + $0x1d8] sm:$0xff] %v5867
    %5932 = vst [vmem:[#allocation16 + $0x1e0] sm:$0xff] %v5868
    %5933 = vst [vmem:[#allocation16 + $0x1e8] sm:$0xff] %v5869
    %5934 = vst [vmem:[#allocation16 + $0x1f0] sm:$0xff] %v5870
    %5935 = vst [vmem:[#allocation16 + $0x1f8] sm:$0xff] %v5871
    %v5936 = vld [vmem:[#allocation11] sm:$0xff]
    %v5937 = vld [vmem:[#allocation11 + $0x8] sm:$0xff]
    %v5938 = vld [vmem:[#allocation11 + $0x10] sm:$0xff]
    %v5939 = vld [vmem:[#allocation11 + $0x18] sm:$0xff]
    %v5940 = vld [vmem:[#allocation11 + $0x20] sm:$0xff]
    %v5941 = vld [vmem:[#allocation11 + $0x28] sm:$0xff]
    %v5942 = vld [vmem:[#allocation11 + $0x30] sm:$0xff]
    %v5943 = vld [vmem:[#allocation11 + $0x38] sm:$0xff]
    %v5944 = vld [vmem:[#allocation11 + $0x40] sm:$0xff]
    %v5945 = vld [vmem:[#allocation11 + $0x48] sm:$0xff]
    %v5946 = vld [vmem:[#allocation11 + $0x50] sm:$0xff]
    %v5947 = vld [vmem:[#allocation11 + $0x58] sm:$0xff]
    %v5948 = vld [vmem:[#allocation11 + $0x60] sm:$0xff]
    %v5949 = vld [vmem:[#allocation11 + $0x68] sm:$0xff]
    %v5950 = vld [vmem:[#allocation11 + $0x70] sm:$0xff]
    %v5951 = vld [vmem:[#allocation11 + $0x78] sm:$0xff]
    %v5952 = vld [vmem:[#allocation11 + $0x80] sm:$0xff]
    %v5953 = vld [vmem:[#allocation11 + $0x88] sm:$0xff]
    %v5954 = vld [vmem:[#allocation11 + $0x90] sm:$0xff]
    %v5955 = vld [vmem:[#allocation11 + $0x98] sm:$0xff]
    %v5956 = vld [vmem:[#allocation11 + $0xa0] sm:$0xff]
    %v5957 = vld [vmem:[#allocation11 + $0xa8] sm:$0xff]
    %v5958 = vld [vmem:[#allocation11 + $0xb0] sm:$0xff]
    %v5959 = vld [vmem:[#allocation11 + $0xb8] sm:$0xff]
    %v5960 = vld [vmem:[#allocation11 + $0xc0] sm:$0xff]
    %v5961 = vld [vmem:[#allocation11 + $0xc8] sm:$0xff]
    %v5962 = vld [vmem:[#allocation11 + $0xd0] sm:$0xff]
    %v5963 = vld [vmem:[#allocation11 + $0xd8] sm:$0xff]
    %v5964 = vld [vmem:[#allocation11 + $0xe0] sm:$0xff]
    %v5965 = vld [vmem:[#allocation11 + $0xe8] sm:$0xff]
    %v5966 = vld [vmem:[#allocation11 + $0xf0] sm:$0xff]
    %v5967 = vld [vmem:[#allocation11 + $0xf8] sm:$0xff]
    %v5968 = vld [vmem:[#allocation11 + $0x100] sm:$0xff]
    %v5969 = vld [vmem:[#allocation11 + $0x108] sm:$0xff]
    %v5970 = vld [vmem:[#allocation11 + $0x110] sm:$0xff]
    %v5971 = vld [vmem:[#allocation11 + $0x118] sm:$0xff]
    %v5972 = vld [vmem:[#allocation11 + $0x120] sm:$0xff]
    %v5973 = vld [vmem:[#allocation11 + $0x128] sm:$0xff]
    %v5974 = vld [vmem:[#allocation11 + $0x130] sm:$0xff]
    %v5975 = vld [vmem:[#allocation11 + $0x138] sm:$0xff]
    %v5976 = vld [vmem:[#allocation11 + $0x140] sm:$0xff]
    %v5977 = vld [vmem:[#allocation11 + $0x148] sm:$0xff]
    %v5978 = vld [vmem:[#allocation11 + $0x150] sm:$0xff]
    %v5979 = vld [vmem:[#allocation11 + $0x158] sm:$0xff]
    %v5980 = vld [vmem:[#allocation11 + $0x160] sm:$0xff]
    %v5981 = vld [vmem:[#allocation11 + $0x168] sm:$0xff]
    %v5982 = vld [vmem:[#allocation11 + $0x170] sm:$0xff]
    %v5983 = vld [vmem:[#allocation11 + $0x178] sm:$0xff]
    %v5984 = vld [vmem:[#allocation11 + $0x180] sm:$0xff]
    %v5985 = vld [vmem:[#allocation11 + $0x188] sm:$0xff]
    %v5986 = vld [vmem:[#allocation11 + $0x190] sm:$0xff]
    %v5987 = vld [vmem:[#allocation11 + $0x198] sm:$0xff]
    %v5988 = vld [vmem:[#allocation11 + $0x1a0] sm:$0xff]
    %v5989 = vld [vmem:[#allocation11 + $0x1a8] sm:$0xff]
    %v5990 = vld [vmem:[#allocation11 + $0x1b0] sm:$0xff]
    %v5991 = vld [vmem:[#allocation11 + $0x1b8] sm:$0xff]
    %v5992 = vld [vmem:[#allocation11 + $0x1c0] sm:$0xff]
    %v5993 = vld [vmem:[#allocation11 + $0x1c8] sm:$0xff]
    %v5994 = vld [vmem:[#allocation11 + $0x1d0] sm:$0xff]
    %v5995 = vld [vmem:[#allocation11 + $0x1d8] sm:$0xff]
    %v5996 = vld [vmem:[#allocation11 + $0x1e0] sm:$0xff]
    %v5997 = vld [vmem:[#allocation11 + $0x1e8] sm:$0xff]
    %v5998 = vld [vmem:[#allocation11 + $0x1f0] sm:$0xff]
    %v5999 = vld [vmem:[#allocation11 + $0x1f8] sm:$0xff]
    %6000 = vmatpush.msra.mxu0 %v5966
    %6001 = vmatpush.msra.mxu0 %v5964
    %6002 = vmatpush.msra.mxu0 %v5962
    %6003 = vmatpush.msra.mxu0 %v5960
    %6004 = vmatpush.msra.mxu0 %v5958
    %6005 = vmatpush.msra.mxu0 %v5956
    %6006 = vmatpush.msra.mxu0 %v5954
    %6007 = vmatpush.msra.mxu0 %v5952
    %6008 = vmatpush.msra.mxu0 %v5950
    %6009 = vmatpush.msra.mxu0 %v5948
    %6010 = vmatpush.msra.mxu0 %v5946
    %6011 = vmatpush.msra.mxu0 %v5944
    %6012 = vmatpush.msra.mxu0 %v5942
    %6013 = vmatpush.msra.mxu0 %v5940
    %6014 = vmatpush.msra.mxu0 %v5938
    %6015 = vmatpush.msra.mxu0 %v5936
    %6016 = vmatmul.f32.gmra.mxu0 %v5808
    %v6017 = vpop.f32.mrf.mxu0
    %v6018 = vadd.f32 0.0, %v6017
    %6019 = vmatmul.f32.gmra.mxu0 %v5810
    %v6020 = vpop.f32.mrf.mxu0
    %v6021 = vadd.f32 0.0, %v6020
    %6022 = vmatmul.f32.gmra.mxu0 %v5812
    %v6023 = vpop.f32.mrf.mxu0
    %v6024 = vadd.f32 0.0, %v6023
    %6025 = vmatmul.f32.gmra.mxu0 %v5814
    %v6026 = vpop.f32.mrf.mxu0
    %v6027 = vadd.f32 0.0, %v6026
    %6028 = vmatmul.f32.gmra.mxu0 %v5816
    %v6029 = vpop.f32.mrf.mxu0
    %v6030 = vadd.f32 0.0, %v6029
    %6031 = vmatmul.f32.gmra.mxu0 %v5818
    %v6032 = vpop.f32.mrf.mxu0
    %v6033 = vadd.f32 0.0, %v6032
    %6034 = vmatmul.f32.gmra.mxu0 %v5820
    %v6035 = vpop.f32.mrf.mxu0
    %v6036 = vadd.f32 0.0, %v6035
    %6037 = vmatmul.f32.gmra.mxu0 %v5822
    %v6038 = vpop.f32.mrf.mxu0
    %v6039 = vadd.f32 0.0, %v6038
    %6040 = vmatmul.f32.gmra.mxu0 %v5824
    %v6041 = vpop.f32.mrf.mxu0
    %v6042 = vadd.f32 0.0, %v6041
    %6043 = vmatmul.f32.gmra.mxu0 %v5826
    %v6044 = vpop.f32.mrf.mxu0
    %v6045 = vadd.f32 0.0, %v6044
    %6046 = vmatmul.f32.gmra.mxu0 %v5828
    %v6047 = vpop.f32.mrf.mxu0
    %v6048 = vadd.f32 0.0, %v6047
    %6049 = vmatmul.f32.gmra.mxu0 %v5830
    %v6050 = vpop.f32.mrf.mxu0
    %v6051 = vadd.f32 0.0, %v6050
    %6052 = vmatmul.f32.gmra.mxu0 %v5832
    %v6053 = vpop.f32.mrf.mxu0
    %v6054 = vadd.f32 0.0, %v6053
    %6055 = vmatmul.f32.gmra.mxu0 %v5834
    %v6056 = vpop.f32.mrf.mxu0
    %v6057 = vadd.f32 0.0, %v6056
    %6058 = vmatmul.f32.gmra.mxu0 %v5836
    %v6059 = vpop.f32.mrf.mxu0
    %v6060 = vadd.f32 0.0, %v6059
    %6061 = vmatmul.f32.gmra.mxu0 %v5838
    %v6062 = vpop.f32.mrf.mxu0
    %v6063 = vadd.f32 0.0, %v6062
    %6064 = vmatmul.f32.gmra.mxu0 %v5840
    %v6065 = vpop.f32.mrf.mxu0
    %v6066 = vadd.f32 0.0, %v6065
    %6067 = vmatmul.f32.gmra.mxu0 %v5842
    %v6068 = vpop.f32.mrf.mxu0
    %v6069 = vadd.f32 0.0, %v6068
    %6070 = vmatmul.f32.gmra.mxu0 %v5844
    %v6071 = vpop.f32.mrf.mxu0
    %v6072 = vadd.f32 0.0, %v6071
    %6073 = vmatmul.f32.gmra.mxu0 %v5846
    %v6074 = vpop.f32.mrf.mxu0
    %v6075 = vadd.f32 0.0, %v6074
    %6076 = vmatmul.f32.gmra.mxu0 %v5848
    %v6077 = vpop.f32.mrf.mxu0
    %v6078 = vadd.f32 0.0, %v6077
    %6079 = vmatmul.f32.gmra.mxu0 %v5850
    %v6080 = vpop.f32.mrf.mxu0
    %v6081 = vadd.f32 0.0, %v6080
    %6082 = vmatmul.f32.gmra.mxu0 %v5852
    %v6083 = vpop.f32.mrf.mxu0
    %v6084 = vadd.f32 0.0, %v6083
    %6085 = vmatmul.f32.gmra.mxu0 %v5854
    %v6086 = vpop.f32.mrf.mxu0
    %v6087 = vadd.f32 0.0, %v6086
    %6088 = vmatmul.f32.gmra.mxu0 %v5856
    %v6089 = vpop.f32.mrf.mxu0
    %v6090 = vadd.f32 0.0, %v6089
    %6091 = vmatmul.f32.gmra.mxu0 %v5858
    %v6092 = vpop.f32.mrf.mxu0
    %v6093 = vadd.f32 0.0, %v6092
    %6094 = vmatmul.f32.gmra.mxu0 %v5860
    %v6095 = vpop.f32.mrf.mxu0
    %v6096 = vadd.f32 0.0, %v6095
    %6097 = vmatmul.f32.gmra.mxu0 %v5862
    %v6098 = vpop.f32.mrf.mxu0
    %v6099 = vadd.f32 0.0, %v6098
    %6100 = vmatmul.f32.gmra.mxu0 %v5864
    %v6101 = vpop.f32.mrf.mxu0
    %v6102 = vadd.f32 0.0, %v6101
    %6103 = vmatmul.f32.gmra.mxu0 %v5866
    %v6104 = vpop.f32.mrf.mxu0
    %v6105 = vadd.f32 0.0, %v6104
    %6106 = vmatmul.f32.gmra.mxu0 %v5868
    %v6107 = vpop.f32.mrf.mxu0
    %v6108 = vadd.f32 0.0, %v6107
    %6109 = vmatmul.f32.gmra.mxu0 %v5870
    %v6110 = vpop.f32.mrf.mxu0
    %v6111 = vadd.f32 0.0, %v6110
    %6112 = vdwg.mxu0
    %6113 = vmatpush.msra.mxu0 %v5998
    %6114 = vmatpush.msra.mxu0 %v5996
    %6115 = vmatpush.msra.mxu0 %v5994
    %6116 = vmatpush.msra.mxu0 %v5992
    %6117 = vmatpush.msra.mxu0 %v5990
    %6118 = vmatpush.msra.mxu0 %v5988
    %6119 = vmatpush.msra.mxu0 %v5986
    %6120 = vmatpush.msra.mxu0 %v5984
    %6121 = vmatpush.msra.mxu0 %v5982
    %6122 = vmatpush.msra.mxu0 %v5980
    %6123 = vmatpush.msra.mxu0 %v5978
    %6124 = vmatpush.msra.mxu0 %v5976
    %6125 = vmatpush.msra.mxu0 %v5974
    %6126 = vmatpush.msra.mxu0 %v5972
    %6127 = vmatpush.msra.mxu0 %v5970
    %6128 = vmatpush.msra.mxu0 %v5968
    %6129 = vmatmul.f32.gmra.mxu0 %v5809
    %v6130 = vpop.f32.mrf.mxu0
    %v6131 = vadd.f32 %v6018, %v6130
    %6132 = vmatmul.f32.gmra.mxu0 %v5811
    %v6133 = vpop.f32.mrf.mxu0
    %v6134 = vadd.f32 %v6021, %v6133
    %6135 = vmatmul.f32.gmra.mxu0 %v5813
    %v6136 = vpop.f32.mrf.mxu0
    %v6137 = vadd.f32 %v6024, %v6136
    %6138 = vmatmul.f32.gmra.mxu0 %v5815
    %v6139 = vpop.f32.mrf.mxu0
    %v6140 = vadd.f32 %v6027, %v6139
    %6141 = vmatmul.f32.gmra.mxu0 %v5817
    %v6142 = vpop.f32.mrf.mxu0
    %v6143 = vadd.f32 %v6030, %v6142
    %6144 = vmatmul.f32.gmra.mxu0 %v5819
    %v6145 = vpop.f32.mrf.mxu0
    %v6146 = vadd.f32 %v6033, %v6145
    %6147 = vmatmul.f32.gmra.mxu0 %v5821
    %v6148 = vpop.f32.mrf.mxu0
    %v6149 = vadd.f32 %v6036, %v6148
    %6150 = vmatmul.f32.gmra.mxu0 %v5823
    %v6151 = vpop.f32.mrf.mxu0
    %v6152 = vadd.f32 %v6039, %v6151
    %6153 = vmatmul.f32.gmra.mxu0 %v5825
    %v6154 = vpop.f32.mrf.mxu0
    %v6155 = vadd.f32 %v6042, %v6154
    %6156 = vmatmul.f32.gmra.mxu0 %v5827
    %v6157 = vpop.f32.mrf.mxu0
    %v6158 = vadd.f32 %v6045, %v6157
    %6159 = vmatmul.f32.gmra.mxu0 %v5829
    %v6160 = vpop.f32.mrf.mxu0
    %v6161 = vadd.f32 %v6048, %v6160
    %6162 = vmatmul.f32.gmra.mxu0 %v5831
    %v6163 = vpop.f32.mrf.mxu0
    %v6164 = vadd.f32 %v6051, %v6163
    %6165 = vmatmul.f32.gmra.mxu0 %v5833
    %v6166 = vpop.f32.mrf.mxu0
    %v6167 = vadd.f32 %v6054, %v6166
    %6168 = vmatmul.f32.gmra.mxu0 %v5835
    %v6169 = vpop.f32.mrf.mxu0
    %v6170 = vadd.f32 %v6057, %v6169
    %6171 = vmatmul.f32.gmra.mxu0 %v5837
    %v6172 = vpop.f32.mrf.mxu0
    %v6173 = vadd.f32 %v6060, %v6172
    %6174 = vmatmul.f32.gmra.mxu0 %v5839
    %v6175 = vpop.f32.mrf.mxu0
    %v6176 = vadd.f32 %v6063, %v6175
    %6177 = vmatmul.f32.gmra.mxu0 %v5841
    %v6178 = vpop.f32.mrf.mxu0
    %v6179 = vadd.f32 %v6066, %v6178
    %6180 = vmatmul.f32.gmra.mxu0 %v5843
    %v6181 = vpop.f32.mrf.mxu0
    %v6182 = vadd.f32 %v6069, %v6181
    %6183 = vmatmul.f32.gmra.mxu0 %v5845
    %v6184 = vpop.f32.mrf.mxu0
    %v6185 = vadd.f32 %v6072, %v6184
    %6186 = vmatmul.f32.gmra.mxu0 %v5847
    %v6187 = vpop.f32.mrf.mxu0
    %v6188 = vadd.f32 %v6075, %v6187
    %6189 = vmatmul.f32.gmra.mxu0 %v5849
    %v6190 = vpop.f32.mrf.mxu0
    %v6191 = vadd.f32 %v6078, %v6190
    %6192 = vmatmul.f32.gmra.mxu0 %v5851
    %v6193 = vpop.f32.mrf.mxu0
    %v6194 = vadd.f32 %v6081, %v6193
    %6195 = vmatmul.f32.gmra.mxu0 %v5853
    %v6196 = vpop.f32.mrf.mxu0
    %v6197 = vadd.f32 %v6084, %v6196
    %6198 = vmatmul.f32.gmra.mxu0 %v5855
    %v6199 = vpop.f32.mrf.mxu0
    %v6200 = vadd.f32 %v6087, %v6199
    %6201 = vmatmul.f32.gmra.mxu0 %v5857
    %v6202 = vpop.f32.mrf.mxu0
    %v6203 = vadd.f32 %v6090, %v6202
    %6204 = vmatmul.f32.gmra.mxu0 %v5859
    %v6205 = vpop.f32.mrf.mxu0
    %v6206 = vadd.f32 %v6093, %v6205
    %6207 = vmatmul.f32.gmra.mxu0 %v5861
    %v6208 = vpop.f32.mrf.mxu0
    %v6209 = vadd.f32 %v6096, %v6208
    %6210 = vmatmul.f32.gmra.mxu0 %v5863
    %v6211 = vpop.f32.mrf.mxu0
    %v6212 = vadd.f32 %v6099, %v6211
    %6213 = vmatmul.f32.gmra.mxu0 %v5865
    %v6214 = vpop.f32.mrf.mxu0
    %v6215 = vadd.f32 %v6102, %v6214
    %6216 = vmatmul.f32.gmra.mxu0 %v5867
    %v6217 = vpop.f32.mrf.mxu0
    %v6218 = vadd.f32 %v6105, %v6217
    %6219 = vmatmul.f32.gmra.mxu0 %v5869
    %v6220 = vpop.f32.mrf.mxu0
    %v6221 = vadd.f32 %v6108, %v6220
    %6222 = vmatmul.f32.gmra.mxu0 %v5871
    %v6223 = vpop.f32.mrf.mxu0
    %v6224 = vadd.f32 %v6111, %v6223
    %6225 = vdwg.mxu0
    %6226 = vmatpush.msra.mxu0 %v5967
    %6227 = vmatpush.msra.mxu0 %v5965
    %6228 = vmatpush.msra.mxu0 %v5963
    %6229 = vmatpush.msra.mxu0 %v5961
    %6230 = vmatpush.msra.mxu0 %v5959
    %6231 = vmatpush.msra.mxu0 %v5957
    %6232 = vmatpush.msra.mxu0 %v5955
    %6233 = vmatpush.msra.mxu0 %v5953
    %6234 = vmatpush.msra.mxu0 %v5951
    %6235 = vmatpush.msra.mxu0 %v5949
    %6236 = vmatpush.msra.mxu0 %v5947
    %6237 = vmatpush.msra.mxu0 %v5945
    %6238 = vmatpush.msra.mxu0 %v5943
    %6239 = vmatpush.msra.mxu0 %v5941
    %6240 = vmatpush.msra.mxu0 %v5939
    %6241 = vmatpush.msra.mxu0 %v5937
    %6242 = vmatmul.f32.gmra.mxu0 %v5808
    %v6243 = vpop.f32.mrf.mxu0
    %v6244 = vadd.f32 0.0, %v6243
    %6245 = vmatmul.f32.gmra.mxu0 %v5810
    %v6246 = vpop.f32.mrf.mxu0
    %v6247 = vadd.f32 0.0, %v6246
    %6248 = vmatmul.f32.gmra.mxu0 %v5812
    %v6249 = vpop.f32.mrf.mxu0
    %v6250 = vadd.f32 0.0, %v6249
    %6251 = vmatmul.f32.gmra.mxu0 %v5814
    %v6252 = vpop.f32.mrf.mxu0
    %v6253 = vadd.f32 0.0, %v6252
    %6254 = vmatmul.f32.gmra.mxu0 %v5816
    %v6255 = vpop.f32.mrf.mxu0
    %v6256 = vadd.f32 0.0, %v6255
    %6257 = vmatmul.f32.gmra.mxu0 %v5818
    %v6258 = vpop.f32.mrf.mxu0
    %v6259 = vadd.f32 0.0, %v6258
    %6260 = vmatmul.f32.gmra.mxu0 %v5820
    %v6261 = vpop.f32.mrf.mxu0
    %v6262 = vadd.f32 0.0, %v6261
    %6263 = vmatmul.f32.gmra.mxu0 %v5822
    %v6264 = vpop.f32.mrf.mxu0
    %v6265 = vadd.f32 0.0, %v6264
    %6266 = vmatmul.f32.gmra.mxu0 %v5824
    %v6267 = vpop.f32.mrf.mxu0
    %v6268 = vadd.f32 0.0, %v6267
    %6269 = vmatmul.f32.gmra.mxu0 %v5826
    %v6270 = vpop.f32.mrf.mxu0
    %v6271 = vadd.f32 0.0, %v6270
    %6272 = vmatmul.f32.gmra.mxu0 %v5828
    %v6273 = vpop.f32.mrf.mxu0
    %v6274 = vadd.f32 0.0, %v6273
    %6275 = vmatmul.f32.gmra.mxu0 %v5830
    %v6276 = vpop.f32.mrf.mxu0
    %v6277 = vadd.f32 0.0, %v6276
    %6278 = vmatmul.f32.gmra.mxu0 %v5832
    %v6279 = vpop.f32.mrf.mxu0
    %v6280 = vadd.f32 0.0, %v6279
    %6281 = vmatmul.f32.gmra.mxu0 %v5834
    %v6282 = vpop.f32.mrf.mxu0
    %v6283 = vadd.f32 0.0, %v6282
    %6284 = vmatmul.f32.gmra.mxu0 %v5836
    %v6285 = vpop.f32.mrf.mxu0
    %v6286 = vadd.f32 0.0, %v6285
    %6287 = vmatmul.f32.gmra.mxu0 %v5838
    %v6288 = vpop.f32.mrf.mxu0
    %v6289 = vadd.f32 0.0, %v6288
    %6290 = vmatmul.f32.gmra.mxu0 %v5840
    %v6291 = vpop.f32.mrf.mxu0
    %v6292 = vadd.f32 0.0, %v6291
    %6293 = vmatmul.f32.gmra.mxu0 %v5842
    %v6294 = vpop.f32.mrf.mxu0
    %v6295 = vadd.f32 0.0, %v6294
    %6296 = vmatmul.f32.gmra.mxu0 %v5844
    %v6297 = vpop.f32.mrf.mxu0
    %v6298 = vadd.f32 0.0, %v6297
    %6299 = vmatmul.f32.gmra.mxu0 %v5846
    %v6300 = vpop.f32.mrf.mxu0
    %v6301 = vadd.f32 0.0, %v6300
    %6302 = vmatmul.f32.gmra.mxu0 %v5848
    %v6303 = vpop.f32.mrf.mxu0
    %v6304 = vadd.f32 0.0, %v6303
    %6305 = vmatmul.f32.gmra.mxu0 %v5850
    %v6306 = vpop.f32.mrf.mxu0
    %v6307 = vadd.f32 0.0, %v6306
    %6308 = vmatmul.f32.gmra.mxu0 %v5852
    %v6309 = vpop.f32.mrf.mxu0
    %v6310 = vadd.f32 0.0, %v6309
    %6311 = vmatmul.f32.gmra.mxu0 %v5854
    %v6312 = vpop.f32.mrf.mxu0
    %v6313 = vadd.f32 0.0, %v6312
    %6314 = vmatmul.f32.gmra.mxu0 %v5856
    %v6315 = vpop.f32.mrf.mxu0
    %v6316 = vadd.f32 0.0, %v6315
    %6317 = vmatmul.f32.gmra.mxu0 %v5858
    %v6318 = vpop.f32.mrf.mxu0
    %v6319 = vadd.f32 0.0, %v6318
    %6320 = vmatmul.f32.gmra.mxu0 %v5860
    %v6321 = vpop.f32.mrf.mxu0
    %v6322 = vadd.f32 0.0, %v6321
    %6323 = vmatmul.f32.gmra.mxu0 %v5862
    %v6324 = vpop.f32.mrf.mxu0
    %v6325 = vadd.f32 0.0, %v6324
    %6326 = vmatmul.f32.gmra.mxu0 %v5864
    %v6327 = vpop.f32.mrf.mxu0
    %v6328 = vadd.f32 0.0, %v6327
    %6329 = vmatmul.f32.gmra.mxu0 %v5866
    %v6330 = vpop.f32.mrf.mxu0
    %v6331 = vadd.f32 0.0, %v6330
    %6332 = vmatmul.f32.gmra.mxu0 %v5868
    %v6333 = vpop.f32.mrf.mxu0
    %v6334 = vadd.f32 0.0, %v6333
    %6335 = vmatmul.f32.gmra.mxu0 %v5870
    %v6336 = vpop.f32.mrf.mxu0
    %v6337 = vadd.f32 0.0, %v6336
    %6338 = vdwg.mxu0
    %6339 = vmatpush.msra.mxu0 %v5999
    %6340 = vmatpush.msra.mxu0 %v5997
    %6341 = vmatpush.msra.mxu0 %v5995
    %6342 = vmatpush.msra.mxu0 %v5993
    %6343 = vmatpush.msra.mxu0 %v5991
    %6344 = vmatpush.msra.mxu0 %v5989
    %6345 = vmatpush.msra.mxu0 %v5987
    %6346 = vmatpush.msra.mxu0 %v5985
    %6347 = vmatpush.msra.mxu0 %v5983
    %6348 = vmatpush.msra.mxu0 %v5981
    %6349 = vmatpush.msra.mxu0 %v5979
    %6350 = vmatpush.msra.mxu0 %v5977
    %6351 = vmatpush.msra.mxu0 %v5975
    %6352 = vmatpush.msra.mxu0 %v5973
    %6353 = vmatpush.msra.mxu0 %v5971
    %6354 = vmatpush.msra.mxu0 %v5969
    %6355 = vmatmul.f32.gmra.mxu0 %v5809
    %v6356 = vpop.f32.mrf.mxu0
    %v6357 = vadd.f32 %v6244, %v6356
    %6358 = vmatmul.f32.gmra.mxu0 %v5811
    %v6359 = vpop.f32.mrf.mxu0
    %v6360 = vadd.f32 %v6247, %v6359
    %6361 = vmatmul.f32.gmra.mxu0 %v5813
    %v6362 = vpop.f32.mrf.mxu0
    %v6363 = vadd.f32 %v6250, %v6362
    %6364 = vmatmul.f32.gmra.mxu0 %v5815
    %v6365 = vpop.f32.mrf.mxu0
    %v6366 = vadd.f32 %v6253, %v6365
    %6367 = vmatmul.f32.gmra.mxu0 %v5817
    %v6368 = vpop.f32.mrf.mxu0
    %v6369 = vadd.f32 %v6256, %v6368
    %6370 = vmatmul.f32.gmra.mxu0 %v5819
    %v6371 = vpop.f32.mrf.mxu0
    %v6372 = vadd.f32 %v6259, %v6371
    %6373 = vmatmul.f32.gmra.mxu0 %v5821
    %v6374 = vpop.f32.mrf.mxu0
    %v6375 = vadd.f32 %v6262, %v6374
    %6376 = vmatmul.f32.gmra.mxu0 %v5823
    %v6377 = vpop.f32.mrf.mxu0
    %v6378 = vadd.f32 %v6265, %v6377
    %6379 = vmatmul.f32.gmra.mxu0 %v5825
    %v6380 = vpop.f32.mrf.mxu0
    %v6381 = vadd.f32 %v6268, %v6380
    %6382 = vmatmul.f32.gmra.mxu0 %v5827
    %v6383 = vpop.f32.mrf.mxu0
    %v6384 = vadd.f32 %v6271, %v6383
    %6385 = vmatmul.f32.gmra.mxu0 %v5829
    %v6386 = vpop.f32.mrf.mxu0
    %v6387 = vadd.f32 %v6274, %v6386
    %6388 = vmatmul.f32.gmra.mxu0 %v5831
    %v6389 = vpop.f32.mrf.mxu0
    %v6390 = vadd.f32 %v6277, %v6389
    %6391 = vmatmul.f32.gmra.mxu0 %v5833
    %v6392 = vpop.f32.mrf.mxu0
    %v6393 = vadd.f32 %v6280, %v6392
    %6394 = vmatmul.f32.gmra.mxu0 %v5835
    %v6395 = vpop.f32.mrf.mxu0
    %v6396 = vadd.f32 %v6283, %v6395
    %6397 = vmatmul.f32.gmra.mxu0 %v5837
    %v6398 = vpop.f32.mrf.mxu0
    %v6399 = vadd.f32 %v6286, %v6398
    %6400 = vmatmul.f32.gmra.mxu0 %v5839
    %v6401 = vpop.f32.mrf.mxu0
    %v6402 = vadd.f32 %v6289, %v6401
    %6403 = vmatmul.f32.gmra.mxu0 %v5841
    %v6404 = vpop.f32.mrf.mxu0
    %v6405 = vadd.f32 %v6292, %v6404
    %6406 = vmatmul.f32.gmra.mxu0 %v5843
    %v6407 = vpop.f32.mrf.mxu0
    %v6408 = vadd.f32 %v6295, %v6407
    %6409 = vmatmul.f32.gmra.mxu0 %v5845
    %v6410 = vpop.f32.mrf.mxu0
    %v6411 = vadd.f32 %v6298, %v6410
    %6412 = vmatmul.f32.gmra.mxu0 %v5847
    %v6413 = vpop.f32.mrf.mxu0
    %v6414 = vadd.f32 %v6301, %v6413
    %6415 = vmatmul.f32.gmra.mxu0 %v5849
    %v6416 = vpop.f32.mrf.mxu0
    %v6417 = vadd.f32 %v6304, %v6416
    %6418 = vmatmul.f32.gmra.mxu0 %v5851
    %v6419 = vpop.f32.mrf.mxu0
    %v6420 = vadd.f32 %v6307, %v6419
    %6421 = vmatmul.f32.gmra.mxu0 %v5853
    %v6422 = vpop.f32.mrf.mxu0
    %v6423 = vadd.f32 %v6310, %v6422
    %6424 = vmatmul.f32.gmra.mxu0 %v5855
    %v6425 = vpop.f32.mrf.mxu0
    %v6426 = vadd.f32 %v6313, %v6425
    %6427 = vmatmul.f32.gmra.mxu0 %v5857
    %v6428 = vpop.f32.mrf.mxu0
    %v6429 = vadd.f32 %v6316, %v6428
    %6430 = vmatmul.f32.gmra.mxu0 %v5859
    %v6431 = vpop.f32.mrf.mxu0
    %v6432 = vadd.f32 %v6319, %v6431
    %6433 = vmatmul.f32.gmra.mxu0 %v5861
    %v6434 = vpop.f32.mrf.mxu0
    %v6435 = vadd.f32 %v6322, %v6434
    %6436 = vmatmul.f32.gmra.mxu0 %v5863
    %v6437 = vpop.f32.mrf.mxu0
    %v6438 = vadd.f32 %v6325, %v6437
    %6439 = vmatmul.f32.gmra.mxu0 %v5865
    %v6440 = vpop.f32.mrf.mxu0
    %v6441 = vadd.f32 %v6328, %v6440
    %6442 = vmatmul.f32.gmra.mxu0 %v5867
    %v6443 = vpop.f32.mrf.mxu0
    %v6444 = vadd.f32 %v6331, %v6443
    %6445 = vmatmul.f32.gmra.mxu0 %v5869
    %v6446 = vpop.f32.mrf.mxu0
    %v6447 = vadd.f32 %v6334, %v6446
    %6448 = vmatmul.f32.gmra.mxu0 %v5871
    %v6449 = vpop.f32.mrf.mxu0
    %v6450 = vadd.f32 %v6337, %v6449
    %6451 = vdwg.mxu0
    %v6452 = vld [vmem:[#allocation5] sm:$0xff]
    %v6453 = vld [vmem:[#allocation5 + $0x8] sm:$0xff]
    %v6454 = vld [vmem:[#allocation5 + $0x10] sm:$0xff]
    %v6455 = vld [vmem:[#allocation5 + $0x18] sm:$0xff]
    %v6456 = vld [vmem:[#allocation5 + $0x20] sm:$0xff]
    %v6457 = vld [vmem:[#allocation5 + $0x28] sm:$0xff]
    %v6458 = vld [vmem:[#allocation5 + $0x30] sm:$0xff]
    %v6459 = vld [vmem:[#allocation5 + $0x38] sm:$0xff]
    %v6460 = vld [vmem:[#allocation5 + $0x40] sm:$0xff]
    %v6461 = vld [vmem:[#allocation5 + $0x48] sm:$0xff]
    %v6462 = vld [vmem:[#allocation5 + $0x50] sm:$0xff]
    %v6463 = vld [vmem:[#allocation5 + $0x58] sm:$0xff]
    %v6464 = vld [vmem:[#allocation5 + $0x60] sm:$0xff]
    %v6465 = vld [vmem:[#allocation5 + $0x68] sm:$0xff]
    %v6466 = vld [vmem:[#allocation5 + $0x70] sm:$0xff]
    %v6467 = vld [vmem:[#allocation5 + $0x78] sm:$0xff]
    %v6468 = vld [vmem:[#allocation5 + $0x80] sm:$0xff]
    %v6469 = vld [vmem:[#allocation5 + $0x88] sm:$0xff]
    %v6470 = vld [vmem:[#allocation5 + $0x90] sm:$0xff]
    %v6471 = vld [vmem:[#allocation5 + $0x98] sm:$0xff]
    %v6472 = vld [vmem:[#allocation5 + $0xa0] sm:$0xff]
    %v6473 = vld [vmem:[#allocation5 + $0xa8] sm:$0xff]
    %v6474 = vld [vmem:[#allocation5 + $0xb0] sm:$0xff]
    %v6475 = vld [vmem:[#allocation5 + $0xb8] sm:$0xff]
    %v6476 = vld [vmem:[#allocation5 + $0xc0] sm:$0xff]
    %v6477 = vld [vmem:[#allocation5 + $0xc8] sm:$0xff]
    %v6478 = vld [vmem:[#allocation5 + $0xd0] sm:$0xff]
    %v6479 = vld [vmem:[#allocation5 + $0xd8] sm:$0xff]
    %v6480 = vld [vmem:[#allocation5 + $0xe0] sm:$0xff]
    %v6481 = vld [vmem:[#allocation5 + $0xe8] sm:$0xff]
    %v6482 = vld [vmem:[#allocation5 + $0xf0] sm:$0xff]
    %v6483 = vld [vmem:[#allocation5 + $0xf8] sm:$0xff]
    %v6484 = vld [vmem:[#allocation5 + $0x100] sm:$0xff]
    %v6485 = vld [vmem:[#allocation5 + $0x108] sm:$0xff]
    %v6486 = vld [vmem:[#allocation5 + $0x110] sm:$0xff]
    %v6487 = vld [vmem:[#allocation5 + $0x118] sm:$0xff]
    %v6488 = vld [vmem:[#allocation5 + $0x120] sm:$0xff]
    %v6489 = vld [vmem:[#allocation5 + $0x128] sm:$0xff]
    %v6490 = vld [vmem:[#allocation5 + $0x130] sm:$0xff]
    %v6491 = vld [vmem:[#allocation5 + $0x138] sm:$0xff]
    %v6492 = vld [vmem:[#allocation5 + $0x140] sm:$0xff]
    %v6493 = vld [vmem:[#allocation5 + $0x148] sm:$0xff]
    %v6494 = vld [vmem:[#allocation5 + $0x150] sm:$0xff]
    %v6495 = vld [vmem:[#allocation5 + $0x158] sm:$0xff]
    %v6496 = vld [vmem:[#allocation5 + $0x160] sm:$0xff]
    %v6497 = vld [vmem:[#allocation5 + $0x168] sm:$0xff]
    %v6498 = vld [vmem:[#allocation5 + $0x170] sm:$0xff]
    %v6499 = vld [vmem:[#allocation5 + $0x178] sm:$0xff]
    %v6500 = vld [vmem:[#allocation5 + $0x180] sm:$0xff]
    %v6501 = vld [vmem:[#allocation5 + $0x188] sm:$0xff]
    %v6502 = vld [vmem:[#allocation5 + $0x190] sm:$0xff]
    %v6503 = vld [vmem:[#allocation5 + $0x198] sm:$0xff]
    %v6504 = vld [vmem:[#allocation5 + $0x1a0] sm:$0xff]
    %v6505 = vld [vmem:[#allocation5 + $0x1a8] sm:$0xff]
    %v6506 = vld [vmem:[#allocation5 + $0x1b0] sm:$0xff]
    %v6507 = vld [vmem:[#allocation5 + $0x1b8] sm:$0xff]
    %v6508 = vld [vmem:[#allocation5 + $0x1c0] sm:$0xff]
    %v6509 = vld [vmem:[#allocation5 + $0x1c8] sm:$0xff]
    %v6510 = vld [vmem:[#allocation5 + $0x1d0] sm:$0xff]
    %v6511 = vld [vmem:[#allocation5 + $0x1d8] sm:$0xff]
    %v6512 = vld [vmem:[#allocation5 + $0x1e0] sm:$0xff]
    %v6513 = vld [vmem:[#allocation5 + $0x1e8] sm:$0xff]
    %v6514 = vld [vmem:[#allocation5 + $0x1f0] sm:$0xff]
    %v6515 = vld [vmem:[#allocation5 + $0x1f8] sm:$0xff]
    %6516 = vmatpush.msra.mxu0 %v6176
    %6517 = vmatpush.msra.mxu0 %v6173
    %6518 = vmatpush.msra.mxu0 %v6170
    %6519 = vmatpush.msra.mxu0 %v6167
    %6520 = vmatpush.msra.mxu0 %v6164
    %6521 = vmatpush.msra.mxu0 %v6161
    %6522 = vmatpush.msra.mxu0 %v6158
    %6523 = vmatpush.msra.mxu0 %v6155
    %6524 = vmatpush.msra.mxu0 %v6152
    %6525 = vmatpush.msra.mxu0 %v6149
    %6526 = vmatpush.msra.mxu0 %v6146
    %6527 = vmatpush.msra.mxu0 %v6143
    %6528 = vmatpush.msra.mxu0 %v6140
    %6529 = vmatpush.msra.mxu0 %v6137
    %6530 = vmatpush.msra.mxu0 %v6134
    %6531 = vmatpush.msra.mxu0 %v6131
    %6532 = vmatmul.f32.gmra.mxu0 %v6452
    %v6533 = vpop.f32.mrf.mxu0
    %v6534 = vadd.f32 0.0, %v6533
    %6535 = vmatmul.f32.gmra.mxu0 %v6454
    %v6536 = vpop.f32.mrf.mxu0
    %v6537 = vadd.f32 0.0, %v6536
    %6538 = vmatmul.f32.gmra.mxu0 %v6456
    %v6539 = vpop.f32.mrf.mxu0
    %v6540 = vadd.f32 0.0, %v6539
    %6541 = vmatmul.f32.gmra.mxu0 %v6458
    %v6542 = vpop.f32.mrf.mxu0
    %v6543 = vadd.f32 0.0, %v6542
    %6544 = vmatmul.f32.gmra.mxu0 %v6460
    %v6545 = vpop.f32.mrf.mxu0
    %v6546 = vadd.f32 0.0, %v6545
    %6547 = vmatmul.f32.gmra.mxu0 %v6462
    %v6548 = vpop.f32.mrf.mxu0
    %v6549 = vadd.f32 0.0, %v6548
    %6550 = vmatmul.f32.gmra.mxu0 %v6464
    %v6551 = vpop.f32.mrf.mxu0
    %v6552 = vadd.f32 0.0, %v6551
    %6553 = vmatmul.f32.gmra.mxu0 %v6466
    %v6554 = vpop.f32.mrf.mxu0
    %v6555 = vadd.f32 0.0, %v6554
    %6556 = vmatmul.f32.gmra.mxu0 %v6468
    %v6557 = vpop.f32.mrf.mxu0
    %v6558 = vadd.f32 0.0, %v6557
    %6559 = vmatmul.f32.gmra.mxu0 %v6470
    %v6560 = vpop.f32.mrf.mxu0
    %v6561 = vadd.f32 0.0, %v6560
    %6562 = vmatmul.f32.gmra.mxu0 %v6472
    %v6563 = vpop.f32.mrf.mxu0
    %v6564 = vadd.f32 0.0, %v6563
    %6565 = vmatmul.f32.gmra.mxu0 %v6474
    %v6566 = vpop.f32.mrf.mxu0
    %v6567 = vadd.f32 0.0, %v6566
    %6568 = vmatmul.f32.gmra.mxu0 %v6476
    %v6569 = vpop.f32.mrf.mxu0
    %v6570 = vadd.f32 0.0, %v6569
    %6571 = vmatmul.f32.gmra.mxu0 %v6478
    %v6572 = vpop.f32.mrf.mxu0
    %v6573 = vadd.f32 0.0, %v6572
    %6574 = vmatmul.f32.gmra.mxu0 %v6480
    %v6575 = vpop.f32.mrf.mxu0
    %v6576 = vadd.f32 0.0, %v6575
    %6577 = vmatmul.f32.gmra.mxu0 %v6482
    %v6578 = vpop.f32.mrf.mxu0
    %v6579 = vadd.f32 0.0, %v6578
    %6580 = vmatmul.f32.gmra.mxu0 %v6484
    %v6581 = vpop.f32.mrf.mxu0
    %v6582 = vadd.f32 0.0, %v6581
    %6583 = vmatmul.f32.gmra.mxu0 %v6486
    %v6584 = vpop.f32.mrf.mxu0
    %v6585 = vadd.f32 0.0, %v6584
    %6586 = vmatmul.f32.gmra.mxu0 %v6488
    %v6587 = vpop.f32.mrf.mxu0
    %v6588 = vadd.f32 0.0, %v6587
    %6589 = vmatmul.f32.gmra.mxu0 %v6490
    %v6590 = vpop.f32.mrf.mxu0
    %v6591 = vadd.f32 0.0, %v6590
    %6592 = vmatmul.f32.gmra.mxu0 %v6492
    %v6593 = vpop.f32.mrf.mxu0
    %v6594 = vadd.f32 0.0, %v6593
    %6595 = vmatmul.f32.gmra.mxu0 %v6494
    %v6596 = vpop.f32.mrf.mxu0
    %v6597 = vadd.f32 0.0, %v6596
    %6598 = vmatmul.f32.gmra.mxu0 %v6496
    %v6599 = vpop.f32.mrf.mxu0
    %v6600 = vadd.f32 0.0, %v6599
    %6601 = vmatmul.f32.gmra.mxu0 %v6498
    %v6602 = vpop.f32.mrf.mxu0
    %v6603 = vadd.f32 0.0, %v6602
    %6604 = vmatmul.f32.gmra.mxu0 %v6500
    %v6605 = vpop.f32.mrf.mxu0
    %v6606 = vadd.f32 0.0, %v6605
    %6607 = vmatmul.f32.gmra.mxu0 %v6502
    %v6608 = vpop.f32.mrf.mxu0
    %v6609 = vadd.f32 0.0, %v6608
    %6610 = vmatmul.f32.gmra.mxu0 %v6504
    %v6611 = vpop.f32.mrf.mxu0
    %v6612 = vadd.f32 0.0, %v6611
    %6613 = vmatmul.f32.gmra.mxu0 %v6506
    %v6614 = vpop.f32.mrf.mxu0
    %v6615 = vadd.f32 0.0, %v6614
    %6616 = vmatmul.f32.gmra.mxu0 %v6508
    %v6617 = vpop.f32.mrf.mxu0
    %v6618 = vadd.f32 0.0, %v6617
    %6619 = vmatmul.f32.gmra.mxu0 %v6510
    %v6620 = vpop.f32.mrf.mxu0
    %v6621 = vadd.f32 0.0, %v6620
    %6622 = vmatmul.f32.gmra.mxu0 %v6512
    %v6623 = vpop.f32.mrf.mxu0
    %v6624 = vadd.f32 0.0, %v6623
    %6625 = vmatmul.f32.gmra.mxu0 %v6514
    %v6626 = vpop.f32.mrf.mxu0
    %v6627 = vadd.f32 0.0, %v6626
    %6628 = vdwg.mxu0
    %6629 = vmatpush.msra.mxu0 %v6224
    %6630 = vmatpush.msra.mxu0 %v6221
    %6631 = vmatpush.msra.mxu0 %v6218
    %6632 = vmatpush.msra.mxu0 %v6215
    %6633 = vmatpush.msra.mxu0 %v6212
    %6634 = vmatpush.msra.mxu0 %v6209
    %6635 = vmatpush.msra.mxu0 %v6206
    %6636 = vmatpush.msra.mxu0 %v6203
    %6637 = vmatpush.msra.mxu0 %v6200
    %6638 = vmatpush.msra.mxu0 %v6197
    %6639 = vmatpush.msra.mxu0 %v6194
    %6640 = vmatpush.msra.mxu0 %v6191
    %6641 = vmatpush.msra.mxu0 %v6188
    %6642 = vmatpush.msra.mxu0 %v6185
    %6643 = vmatpush.msra.mxu0 %v6182
    %6644 = vmatpush.msra.mxu0 %v6179
    %6645 = vmatmul.f32.gmra.mxu0 %v6453
    %v6646 = vpop.f32.mrf.mxu0
    %v6647 = vadd.f32 %v6534, %v6646
    %6648 = vmatmul.f32.gmra.mxu0 %v6455
    %v6649 = vpop.f32.mrf.mxu0
    %v6650 = vadd.f32 %v6537, %v6649
    %6651 = vmatmul.f32.gmra.mxu0 %v6457
    %v6652 = vpop.f32.mrf.mxu0
    %v6653 = vadd.f32 %v6540, %v6652
    %6654 = vmatmul.f32.gmra.mxu0 %v6459
    %v6655 = vpop.f32.mrf.mxu0
    %v6656 = vadd.f32 %v6543, %v6655
    %6657 = vmatmul.f32.gmra.mxu0 %v6461
    %v6658 = vpop.f32.mrf.mxu0
    %v6659 = vadd.f32 %v6546, %v6658
    %6660 = vmatmul.f32.gmra.mxu0 %v6463
    %v6661 = vpop.f32.mrf.mxu0
    %v6662 = vadd.f32 %v6549, %v6661
    %6663 = vmatmul.f32.gmra.mxu0 %v6465
    %v6664 = vpop.f32.mrf.mxu0
    %v6665 = vadd.f32 %v6552, %v6664
    %6666 = vmatmul.f32.gmra.mxu0 %v6467
    %v6667 = vpop.f32.mrf.mxu0
    %v6668 = vadd.f32 %v6555, %v6667
    %6669 = vmatmul.f32.gmra.mxu0 %v6469
    %v6670 = vpop.f32.mrf.mxu0
    %v6671 = vadd.f32 %v6558, %v6670
    %6672 = vmatmul.f32.gmra.mxu0 %v6471
    %v6673 = vpop.f32.mrf.mxu0
    %v6674 = vadd.f32 %v6561, %v6673
    %6675 = vmatmul.f32.gmra.mxu0 %v6473
    %v6676 = vpop.f32.mrf.mxu0
    %v6677 = vadd.f32 %v6564, %v6676
    %6678 = vmatmul.f32.gmra.mxu0 %v6475
    %v6679 = vpop.f32.mrf.mxu0
    %v6680 = vadd.f32 %v6567, %v6679
    %6681 = vmatmul.f32.gmra.mxu0 %v6477
    %v6682 = vpop.f32.mrf.mxu0
    %v6683 = vadd.f32 %v6570, %v6682
    %6684 = vmatmul.f32.gmra.mxu0 %v6479
    %v6685 = vpop.f32.mrf.mxu0
    %v6686 = vadd.f32 %v6573, %v6685
    %6687 = vmatmul.f32.gmra.mxu0 %v6481
    %v6688 = vpop.f32.mrf.mxu0
    %v6689 = vadd.f32 %v6576, %v6688
    %6690 = vmatmul.f32.gmra.mxu0 %v6483
    %v6691 = vpop.f32.mrf.mxu0
    %v6692 = vadd.f32 %v6579, %v6691
    %6693 = vmatmul.f32.gmra.mxu0 %v6485
    %v6694 = vpop.f32.mrf.mxu0
    %v6695 = vadd.f32 %v6582, %v6694
    %6696 = vmatmul.f32.gmra.mxu0 %v6487
    %v6697 = vpop.f32.mrf.mxu0
    %v6698 = vadd.f32 %v6585, %v6697
    %6699 = vmatmul.f32.gmra.mxu0 %v6489
    %v6700 = vpop.f32.mrf.mxu0
    %v6701 = vadd.f32 %v6588, %v6700
    %6702 = vmatmul.f32.gmra.mxu0 %v6491
    %v6703 = vpop.f32.mrf.mxu0
    %v6704 = vadd.f32 %v6591, %v6703
    %6705 = vmatmul.f32.gmra.mxu0 %v6493
    %v6706 = vpop.f32.mrf.mxu0
    %v6707 = vadd.f32 %v6594, %v6706
    %6708 = vmatmul.f32.gmra.mxu0 %v6495
    %v6709 = vpop.f32.mrf.mxu0
    %v6710 = vadd.f32 %v6597, %v6709
    %6711 = vmatmul.f32.gmra.mxu0 %v6497
    %v6712 = vpop.f32.mrf.mxu0
    %v6713 = vadd.f32 %v6600, %v6712
    %6714 = vmatmul.f32.gmra.mxu0 %v6499
    %v6715 = vpop.f32.mrf.mxu0
    %v6716 = vadd.f32 %v6603, %v6715
    %6717 = vmatmul.f32.gmra.mxu0 %v6501
    %v6718 = vpop.f32.mrf.mxu0
    %v6719 = vadd.f32 %v6606, %v6718
    %6720 = vmatmul.f32.gmra.mxu0 %v6503
    %v6721 = vpop.f32.mrf.mxu0
    %v6722 = vadd.f32 %v6609, %v6721
    %6723 = vmatmul.f32.gmra.mxu0 %v6505
    %v6724 = vpop.f32.mrf.mxu0
    %v6725 = vadd.f32 %v6612, %v6724
    %6726 = vmatmul.f32.gmra.mxu0 %v6507
    %v6727 = vpop.f32.mrf.mxu0
    %v6728 = vadd.f32 %v6615, %v6727
    %6729 = vmatmul.f32.gmra.mxu0 %v6509
    %v6730 = vpop.f32.mrf.mxu0
    %v6731 = vadd.f32 %v6618, %v6730
    %6732 = vmatmul.f32.gmra.mxu0 %v6511
    %v6733 = vpop.f32.mrf.mxu0
    %v6734 = vadd.f32 %v6621, %v6733
    %6735 = vmatmul.f32.gmra.mxu0 %v6513
    %v6736 = vpop.f32.mrf.mxu0
    %v6737 = vadd.f32 %v6624, %v6736
    %6738 = vmatmul.f32.gmra.mxu0 %v6515
    %v6739 = vpop.f32.mrf.mxu0
    %v6740 = vadd.f32 %v6627, %v6739
    %6741 = vdwg.mxu0
    %6742 = vmatpush.msra.mxu0 %v6402
    %6743 = vmatpush.msra.mxu0 %v6399
    %6744 = vmatpush.msra.mxu0 %v6396
    %6745 = vmatpush.msra.mxu0 %v6393
    %6746 = vmatpush.msra.mxu0 %v6390
    %6747 = vmatpush.msra.mxu0 %v6387
    %6748 = vmatpush.msra.mxu0 %v6384
    %6749 = vmatpush.msra.mxu0 %v6381
    %6750 = vmatpush.msra.mxu0 %v6378
    %6751 = vmatpush.msra.mxu0 %v6375
    %6752 = vmatpush.msra.mxu0 %v6372
    %6753 = vmatpush.msra.mxu0 %v6369
    %6754 = vmatpush.msra.mxu0 %v6366
    %6755 = vmatpush.msra.mxu0 %v6363
    %6756 = vmatpush.msra.mxu0 %v6360
    %6757 = vmatpush.msra.mxu0 %v6357
    %6758 = vmatmul.f32.gmra.mxu0 %v6452
    %v6759 = vpop.f32.mrf.mxu0
    %v6760 = vadd.f32 0.0, %v6759
    %6761 = vmatmul.f32.gmra.mxu0 %v6454
    %v6762 = vpop.f32.mrf.mxu0
    %v6763 = vadd.f32 0.0, %v6762
    %6764 = vmatmul.f32.gmra.mxu0 %v6456
    %v6765 = vpop.f32.mrf.mxu0
    %v6766 = vadd.f32 0.0, %v6765
    %6767 = vmatmul.f32.gmra.mxu0 %v6458
    %v6768 = vpop.f32.mrf.mxu0
    %v6769 = vadd.f32 0.0, %v6768
    %6770 = vmatmul.f32.gmra.mxu0 %v6460
    %v6771 = vpop.f32.mrf.mxu0
    %v6772 = vadd.f32 0.0, %v6771
    %6773 = vmatmul.f32.gmra.mxu0 %v6462
    %v6774 = vpop.f32.mrf.mxu0
    %v6775 = vadd.f32 0.0, %v6774
    %6776 = vmatmul.f32.gmra.mxu0 %v6464
    %v6777 = vpop.f32.mrf.mxu0
    %v6778 = vadd.f32 0.0, %v6777
    %6779 = vmatmul.f32.gmra.mxu0 %v6466
    %v6780 = vpop.f32.mrf.mxu0
    %v6781 = vadd.f32 0.0, %v6780
    %6782 = vmatmul.f32.gmra.mxu0 %v6468
    %v6783 = vpop.f32.mrf.mxu0
    %v6784 = vadd.f32 0.0, %v6783
    %6785 = vmatmul.f32.gmra.mxu0 %v6470
    %v6786 = vpop.f32.mrf.mxu0
    %v6787 = vadd.f32 0.0, %v6786
    %6788 = vmatmul.f32.gmra.mxu0 %v6472
    %v6789 = vpop.f32.mrf.mxu0
    %v6790 = vadd.f32 0.0, %v6789
    %6791 = vmatmul.f32.gmra.mxu0 %v6474
    %v6792 = vpop.f32.mrf.mxu0
    %v6793 = vadd.f32 0.0, %v6792
    %6794 = vmatmul.f32.gmra.mxu0 %v6476
    %v6795 = vpop.f32.mrf.mxu0
    %v6796 = vadd.f32 0.0, %v6795
    %6797 = vmatmul.f32.gmra.mxu0 %v6478
    %v6798 = vpop.f32.mrf.mxu0
    %v6799 = vadd.f32 0.0, %v6798
    %6800 = vmatmul.f32.gmra.mxu0 %v6480
    %v6801 = vpop.f32.mrf.mxu0
    %v6802 = vadd.f32 0.0, %v6801
    %6803 = vmatmul.f32.gmra.mxu0 %v6482
    %v6804 = vpop.f32.mrf.mxu0
    %v6805 = vadd.f32 0.0, %v6804
    %6806 = vmatmul.f32.gmra.mxu0 %v6484
    %v6807 = vpop.f32.mrf.mxu0
    %v6808 = vadd.f32 0.0, %v6807
    %6809 = vmatmul.f32.gmra.mxu0 %v6486
    %v6810 = vpop.f32.mrf.mxu0
    %v6811 = vadd.f32 0.0, %v6810
    %6812 = vmatmul.f32.gmra.mxu0 %v6488
    %v6813 = vpop.f32.mrf.mxu0
    %v6814 = vadd.f32 0.0, %v6813
    %6815 = vmatmul.f32.gmra.mxu0 %v6490
    %v6816 = vpop.f32.mrf.mxu0
    %v6817 = vadd.f32 0.0, %v6816
    %6818 = vmatmul.f32.gmra.mxu0 %v6492
    %v6819 = vpop.f32.mrf.mxu0
    %v6820 = vadd.f32 0.0, %v6819
    %6821 = vmatmul.f32.gmra.mxu0 %v6494
    %v6822 = vpop.f32.mrf.mxu0
    %v6823 = vadd.f32 0.0, %v6822
    %6824 = vmatmul.f32.gmra.mxu0 %v6496
    %v6825 = vpop.f32.mrf.mxu0
    %v6826 = vadd.f32 0.0, %v6825
    %6827 = vmatmul.f32.gmra.mxu0 %v6498
    %v6828 = vpop.f32.mrf.mxu0
    %v6829 = vadd.f32 0.0, %v6828
    %6830 = vmatmul.f32.gmra.mxu0 %v6500
    %v6831 = vpop.f32.mrf.mxu0
    %v6832 = vadd.f32 0.0, %v6831
    %6833 = vmatmul.f32.gmra.mxu0 %v6502
    %v6834 = vpop.f32.mrf.mxu0
    %v6835 = vadd.f32 0.0, %v6834
    %6836 = vmatmul.f32.gmra.mxu0 %v6504
    %v6837 = vpop.f32.mrf.mxu0
    %v6838 = vadd.f32 0.0, %v6837
    %6839 = vmatmul.f32.gmra.mxu0 %v6506
    %v6840 = vpop.f32.mrf.mxu0
    %v6841 = vadd.f32 0.0, %v6840
    %6842 = vmatmul.f32.gmra.mxu0 %v6508
    %v6843 = vpop.f32.mrf.mxu0
    %v6844 = vadd.f32 0.0, %v6843
    %6845 = vmatmul.f32.gmra.mxu0 %v6510
    %v6846 = vpop.f32.mrf.mxu0
    %v6847 = vadd.f32 0.0, %v6846
    %6848 = vmatmul.f32.gmra.mxu0 %v6512
    %v6849 = vpop.f32.mrf.mxu0
    %v6850 = vadd.f32 0.0, %v6849
    %6851 = vmatmul.f32.gmra.mxu0 %v6514
    %v6852 = vpop.f32.mrf.mxu0
    %v6853 = vadd.f32 0.0, %v6852
    %6854 = vdwg.mxu0
    %6855 = vmatpush.msra.mxu0 %v6450
    %6856 = vmatpush.msra.mxu0 %v6447
    %6857 = vmatpush.msra.mxu0 %v6444
    %6858 = vmatpush.msra.mxu0 %v6441
    %6859 = vmatpush.msra.mxu0 %v6438
    %6860 = vmatpush.msra.mxu0 %v6435
    %6861 = vmatpush.msra.mxu0 %v6432
    %6862 = vmatpush.msra.mxu0 %v6429
    %6863 = vmatpush.msra.mxu0 %v6426
    %6864 = vmatpush.msra.mxu0 %v6423
    %6865 = vmatpush.msra.mxu0 %v6420
    %6866 = vmatpush.msra.mxu0 %v6417
    %6867 = vmatpush.msra.mxu0 %v6414
    %6868 = vmatpush.msra.mxu0 %v6411
    %6869 = vmatpush.msra.mxu0 %v6408
    %6870 = vmatpush.msra.mxu0 %v6405
    %6871 = vmatmul.f32.gmra.mxu0 %v6453
    %v6872 = vpop.f32.mrf.mxu0
    %v6873 = vadd.f32 %v6760, %v6872
    %6874 = vmatmul.f32.gmra.mxu0 %v6455
    %v6875 = vpop.f32.mrf.mxu0
    %v6876 = vadd.f32 %v6763, %v6875
    %6877 = vmatmul.f32.gmra.mxu0 %v6457
    %v6878 = vpop.f32.mrf.mxu0
    %v6879 = vadd.f32 %v6766, %v6878
    %6880 = vmatmul.f32.gmra.mxu0 %v6459
    %v6881 = vpop.f32.mrf.mxu0
    %v6882 = vadd.f32 %v6769, %v6881
    %6883 = vmatmul.f32.gmra.mxu0 %v6461
    %v6884 = vpop.f32.mrf.mxu0
    %v6885 = vadd.f32 %v6772, %v6884
    %6886 = vmatmul.f32.gmra.mxu0 %v6463
    %v6887 = vpop.f32.mrf.mxu0
    %v6888 = vadd.f32 %v6775, %v6887
    %6889 = vmatmul.f32.gmra.mxu0 %v6465
    %v6890 = vpop.f32.mrf.mxu0
    %v6891 = vadd.f32 %v6778, %v6890
    %6892 = vmatmul.f32.gmra.mxu0 %v6467
    %v6893 = vpop.f32.mrf.mxu0
    %v6894 = vadd.f32 %v6781, %v6893
    %6895 = vmatmul.f32.gmra.mxu0 %v6469
    %v6896 = vpop.f32.mrf.mxu0
    %v6897 = vadd.f32 %v6784, %v6896
    %6898 = vmatmul.f32.gmra.mxu0 %v6471
    %v6899 = vpop.f32.mrf.mxu0
    %v6900 = vadd.f32 %v6787, %v6899
    %6901 = vmatmul.f32.gmra.mxu0 %v6473
    %v6902 = vpop.f32.mrf.mxu0
    %v6903 = vadd.f32 %v6790, %v6902
    %6904 = vmatmul.f32.gmra.mxu0 %v6475
    %v6905 = vpop.f32.mrf.mxu0
    %v6906 = vadd.f32 %v6793, %v6905
    %6907 = vmatmul.f32.gmra.mxu0 %v6477
    %v6908 = vpop.f32.mrf.mxu0
    %v6909 = vadd.f32 %v6796, %v6908
    %6910 = vmatmul.f32.gmra.mxu0 %v6479
    %v6911 = vpop.f32.mrf.mxu0
    %v6912 = vadd.f32 %v6799, %v6911
    %6913 = vmatmul.f32.gmra.mxu0 %v6481
    %v6914 = vpop.f32.mrf.mxu0
    %v6915 = vadd.f32 %v6802, %v6914
    %6916 = vmatmul.f32.gmra.mxu0 %v6483
    %v6917 = vpop.f32.mrf.mxu0
    %v6918 = vadd.f32 %v6805, %v6917
    %6919 = vmatmul.f32.gmra.mxu0 %v6485
    %v6920 = vpop.f32.mrf.mxu0
    %v6921 = vadd.f32 %v6808, %v6920
    %6922 = vmatmul.f32.gmra.mxu0 %v6487
    %v6923 = vpop.f32.mrf.mxu0
    %v6924 = vadd.f32 %v6811, %v6923
    %6925 = vmatmul.f32.gmra.mxu0 %v6489
    %v6926 = vpop.f32.mrf.mxu0
    %v6927 = vadd.f32 %v6814, %v6926
    %6928 = vmatmul.f32.gmra.mxu0 %v6491
    %v6929 = vpop.f32.mrf.mxu0
    %v6930 = vadd.f32 %v6817, %v6929
    %6931 = vmatmul.f32.gmra.mxu0 %v6493
    %v6932 = vpop.f32.mrf.mxu0
    %v6933 = vadd.f32 %v6820, %v6932
    %6934 = vmatmul.f32.gmra.mxu0 %v6495
    %v6935 = vpop.f32.mrf.mxu0
    %v6936 = vadd.f32 %v6823, %v6935
    %6937 = vmatmul.f32.gmra.mxu0 %v6497
    %v6938 = vpop.f32.mrf.mxu0
    %v6939 = vadd.f32 %v6826, %v6938
    %6940 = vmatmul.f32.gmra.mxu0 %v6499
    %v6941 = vpop.f32.mrf.mxu0
    %v6942 = vadd.f32 %v6829, %v6941
    %6943 = vmatmul.f32.gmra.mxu0 %v6501
    %v6944 = vpop.f32.mrf.mxu0
    %v6945 = vadd.f32 %v6832, %v6944
    %6946 = vmatmul.f32.gmra.mxu0 %v6503
    %v6947 = vpop.f32.mrf.mxu0
    %v6948 = vadd.f32 %v6835, %v6947
    %6949 = vmatmul.f32.gmra.mxu0 %v6505
    %v6950 = vpop.f32.mrf.mxu0
    %v6951 = vadd.f32 %v6838, %v6950
    %6952 = vmatmul.f32.gmra.mxu0 %v6507
    %v6953 = vpop.f32.mrf.mxu0
    %v6954 = vadd.f32 %v6841, %v6953
    %6955 = vmatmul.f32.gmra.mxu0 %v6509
    %v6956 = vpop.f32.mrf.mxu0
    %v6957 = vadd.f32 %v6844, %v6956
    %6958 = vmatmul.f32.gmra.mxu0 %v6511
    %v6959 = vpop.f32.mrf.mxu0
    %v6960 = vadd.f32 %v6847, %v6959
    %6961 = vmatmul.f32.gmra.mxu0 %v6513
    %v6962 = vpop.f32.mrf.mxu0
    %v6963 = vadd.f32 %v6850, %v6962
    %6964 = vmatmul.f32.gmra.mxu0 %v6515
    %v6965 = vpop.f32.mrf.mxu0
    %v6966 = vadd.f32 %v6853, %v6965
    %6967 = vdwg.mxu0
    %v6968 = vmin.f32 %v6647, 0.0
    %v6969 = vmin.f32 %v6873, 0.0
    %v6970 = vmin.f32 %v6650, 0.0
    %v6971 = vmin.f32 %v6876, 0.0
    %v6972 = vmin.f32 %v6653, 0.0
    %v6973 = vmin.f32 %v6879, 0.0
    %v6974 = vmin.f32 %v6656, 0.0
    %v6975 = vmin.f32 %v6882, 0.0
    %v6976 = vmin.f32 %v6659, 0.0
    %v6977 = vmin.f32 %v6885, 0.0
    %v6978 = vmin.f32 %v6662, 0.0
    %v6979 = vmin.f32 %v6888, 0.0
    %v6980 = vmin.f32 %v6665, 0.0
    %v6981 = vmin.f32 %v6891, 0.0
    %v6982 = vmin.f32 %v6668, 0.0
    %v6983 = vmin.f32 %v6894, 0.0
    %v6984 = vmin.f32 %v6671, 0.0
    %v6985 = vmin.f32 %v6897, 0.0
    %v6986 = vmin.f32 %v6674, 0.0
    %v6987 = vmin.f32 %v6900, 0.0
    %v6988 = vmin.f32 %v6677, 0.0
    %v6989 = vmin.f32 %v6903, 0.0
    %v6990 = vmin.f32 %v6680, 0.0
    %v6991 = vmin.f32 %v6906, 0.0
    %v6992 = vmin.f32 %v6683, 0.0
    %v6993 = vmin.f32 %v6909, 0.0
    %v6994 = vmin.f32 %v6686, 0.0
    %v6995 = vmin.f32 %v6912, 0.0
    %v6996 = vmin.f32 %v6689, 0.0
    %v6997 = vmin.f32 %v6915, 0.0
    %v6998 = vmin.f32 %v6692, 0.0
    %v6999 = vmin.f32 %v6918, 0.0
    %v7000 = vmin.f32 %v6695, 0.0
    %v7001 = vmin.f32 %v6921, 0.0
    %v7002 = vmin.f32 %v6698, 0.0
    %v7003 = vmin.f32 %v6924, 0.0
    %v7004 = vmin.f32 %v6701, 0.0
    %v7005 = vmin.f32 %v6927, 0.0
    %v7006 = vmin.f32 %v6704, 0.0
    %v7007 = vmin.f32 %v6930, 0.0
    %v7008 = vmin.f32 %v6707, 0.0
    %v7009 = vmin.f32 %v6933, 0.0
    %v7010 = vmin.f32 %v6710, 0.0
    %v7011 = vmin.f32 %v6936, 0.0
    %v7012 = vmin.f32 %v6713, 0.0
    %v7013 = vmin.f32 %v6939, 0.0
    %v7014 = vmin.f32 %v6716, 0.0
    %v7015 = vmin.f32 %v6942, 0.0
    %v7016 = vmin.f32 %v6719, 0.0
    %v7017 = vmin.f32 %v6945, 0.0
    %v7018 = vmin.f32 %v6722, 0.0
    %v7019 = vmin.f32 %v6948, 0.0
    %v7020 = vmin.f32 %v6725, 0.0
    %v7021 = vmin.f32 %v6951, 0.0
    %v7022 = vmin.f32 %v6728, 0.0
    %v7023 = vmin.f32 %v6954, 0.0
    %v7024 = vmin.f32 %v6731, 0.0
    %v7025 = vmin.f32 %v6957, 0.0
    %v7026 = vmin.f32 %v6734, 0.0
    %v7027 = vmin.f32 %v6960, 0.0
    %v7028 = vmin.f32 %v6737, 0.0
    %v7029 = vmin.f32 %v6963, 0.0
    %v7030 = vmin.f32 %v6740, 0.0
    %v7031 = vmin.f32 %v6966, 0.0
    %v7032 = vmul.f32 %v6968, 0.2
    %v7033 = vmul.f32 %v6969, 0.2
    %v7034 = vmul.f32 %v6970, 0.2
    %v7035 = vmul.f32 %v6971, 0.2
    %v7036 = vmul.f32 %v6972, 0.2
    %v7037 = vmul.f32 %v6973, 0.2
    %v7038 = vmul.f32 %v6974, 0.2
    %v7039 = vmul.f32 %v6975, 0.2
    %v7040 = vmul.f32 %v6976, 0.2
    %v7041 = vmul.f32 %v6977, 0.2
    %v7042 = vmul.f32 %v6978, 0.2
    %v7043 = vmul.f32 %v6979, 0.2
    %v7044 = vmul.f32 %v6980, 0.2
    %v7045 = vmul.f32 %v6981, 0.2
    %v7046 = vmul.f32 %v6982, 0.2
    %v7047 = vmul.f32 %v6983, 0.2
    %v7048 = vmul.f32 %v6984, 0.2
    %v7049 = vmul.f32 %v6985, 0.2
    %v7050 = vmul.f32 %v6986, 0.2
    %v7051 = vmul.f32 %v6987, 0.2
    %v7052 = vmul.f32 %v6988, 0.2
    %v7053 = vmul.f32 %v6989, 0.2
    %v7054 = vmul.f32 %v6990, 0.2
    %v7055 = vmul.f32 %v6991, 0.2
    %v7056 = vmul.f32 %v6992, 0.2
    %v7057 = vmul.f32 %v6993, 0.2
    %v7058 = vmul.f32 %v6994, 0.2
    %v7059 = vmul.f32 %v6995, 0.2
    %v7060 = vmul.f32 %v6996, 0.2
    %v7061 = vmul.f32 %v6997, 0.2
    %v7062 = vmul.f32 %v6998, 0.2
    %v7063 = vmul.f32 %v6999, 0.2
    %v7064 = vmul.f32 %v7000, 0.2
    %v7065 = vmul.f32 %v7001, 0.2
    %v7066 = vmul.f32 %v7002, 0.2
    %v7067 = vmul.f32 %v7003, 0.2
    %v7068 = vmul.f32 %v7004, 0.2
    %v7069 = vmul.f32 %v7005, 0.2
    %v7070 = vmul.f32 %v7006, 0.2
    %v7071 = vmul.f32 %v7007, 0.2
    %v7072 = vmul.f32 %v7008, 0.2
    %v7073 = vmul.f32 %v7009, 0.2
    %v7074 = vmul.f32 %v7010, 0.2
    %v7075 = vmul.f32 %v7011, 0.2
    %v7076 = vmul.f32 %v7012, 0.2
    %v7077 = vmul.f32 %v7013, 0.2
    %v7078 = vmul.f32 %v7014, 0.2
    %v7079 = vmul.f32 %v7015, 0.2
    %v7080 = vmul.f32 %v7016, 0.2
    %v7081 = vmul.f32 %v7017, 0.2
    %v7082 = vmul.f32 %v7018, 0.2
    %v7083 = vmul.f32 %v7019, 0.2
    %v7084 = vmul.f32 %v7020, 0.2
    %v7085 = vmul.f32 %v7021, 0.2
    %v7086 = vmul.f32 %v7022, 0.2
    %v7087 = vmul.f32 %v7023, 0.2
    %v7088 = vmul.f32 %v7024, 0.2
    %v7089 = vmul.f32 %v7025, 0.2
    %v7090 = vmul.f32 %v7026, 0.2
    %v7091 = vmul.f32 %v7027, 0.2
    %v7092 = vmul.f32 %v7028, 0.2
    %v7093 = vmul.f32 %v7029, 0.2
    %v7094 = vmul.f32 %v7030, 0.2
    %v7095 = vmul.f32 %v7031, 0.2
    %v7096 = vmul.f32 %v7032, 1.442695
    %v7097 = vpow.pop %v7096
    %v7098 = vmul.f32 %v7033, 1.442695
    %v7099 = vpow.pop %v7098
    %v7100 = vmul.f32 %v7034, 1.442695
    %v7101 = vpow.pop %v7100
    %v7102 = vmul.f32 %v7035, 1.442695
    %v7103 = vpow.pop %v7102
    %v7104 = vmul.f32 %v7036, 1.442695
    %v7105 = vpow.pop %v7104
    %v7106 = vmul.f32 %v7037, 1.442695
    %v7107 = vpow.pop %v7106
    %v7108 = vmul.f32 %v7038, 1.442695
    %v7109 = vpow.pop %v7108
    %v7110 = vmul.f32 %v7039, 1.442695
    %v7111 = vpow.pop %v7110
    %v7112 = vmul.f32 %v7040, 1.442695
    %v7113 = vpow.pop %v7112
    %v7114 = vmul.f32 %v7041, 1.442695
    %v7115 = vpow.pop %v7114
    %v7116 = vmul.f32 %v7042, 1.442695
    %v7117 = vpow.pop %v7116
    %v7118 = vmul.f32 %v7043, 1.442695
    %v7119 = vpow.pop %v7118
    %v7120 = vmul.f32 %v7044, 1.442695
    %v7121 = vpow.pop %v7120
    %v7122 = vmul.f32 %v7045, 1.442695
    %v7123 = vpow.pop %v7122
    %v7124 = vmul.f32 %v7046, 1.442695
    %v7125 = vpow.pop %v7124
    %v7126 = vmul.f32 %v7047, 1.442695
    %v7127 = vpow.pop %v7126
    %v7128 = vmul.f32 %v7048, 1.442695
    %v7129 = vpow.pop %v7128
    %v7130 = vmul.f32 %v7049, 1.442695
    %v7131 = vpow.pop %v7130
    %v7132 = vmul.f32 %v7050, 1.442695
    %v7133 = vpow.pop %v7132
    %v7134 = vmul.f32 %v7051, 1.442695
    %v7135 = vpow.pop %v7134
    %v7136 = vmul.f32 %v7052, 1.442695
    %v7137 = vpow.pop %v7136
    %v7138 = vmul.f32 %v7053, 1.442695
    %v7139 = vpow.pop %v7138
    %v7140 = vmul.f32 %v7054, 1.442695
    %v7141 = vpow.pop %v7140
    %v7142 = vmul.f32 %v7055, 1.442695
    %v7143 = vpow.pop %v7142
    %v7144 = vmul.f32 %v7056, 1.442695
    %v7145 = vpow.pop %v7144
    %v7146 = vmul.f32 %v7057, 1.442695
    %v7147 = vpow.pop %v7146
    %v7148 = vmul.f32 %v7058, 1.442695
    %v7149 = vpow.pop %v7148
    %v7150 = vmul.f32 %v7059, 1.442695
    %v7151 = vpow.pop %v7150
    %v7152 = vmul.f32 %v7060, 1.442695
    %v7153 = vpow.pop %v7152
    %v7154 = vmul.f32 %v7061, 1.442695
    %v7155 = vpow.pop %v7154
    %v7156 = vmul.f32 %v7062, 1.442695
    %v7157 = vpow.pop %v7156
    %v7158 = vmul.f32 %v7063, 1.442695
    %v7159 = vpow.pop %v7158
    %v7160 = vmul.f32 %v7064, 1.442695
    %v7161 = vpow.pop %v7160
    %v7162 = vmul.f32 %v7065, 1.442695
    %v7163 = vpow.pop %v7162
    %v7164 = vmul.f32 %v7066, 1.442695
    %v7165 = vpow.pop %v7164
    %v7166 = vmul.f32 %v7067, 1.442695
    %v7167 = vpow.pop %v7166
    %v7168 = vmul.f32 %v7068, 1.442695
    %v7169 = vpow.pop %v7168
    %v7170 = vmul.f32 %v7069, 1.442695
    %v7171 = vpow.pop %v7170
    %v7172 = vmul.f32 %v7070, 1.442695
    %v7173 = vpow.pop %v7172
    %v7174 = vmul.f32 %v7071, 1.442695
    %v7175 = vpow.pop %v7174
    %v7176 = vmul.f32 %v7072, 1.442695
    %v7177 = vpow.pop %v7176
    %v7178 = vmul.f32 %v7073, 1.442695
    %v7179 = vpow.pop %v7178
    %v7180 = vmul.f32 %v7074, 1.442695
    %v7181 = vpow.pop %v7180
    %v7182 = vmul.f32 %v7075, 1.442695
    %v7183 = vpow.pop %v7182
    %v7184 = vmul.f32 %v7076, 1.442695
    %v7185 = vpow.pop %v7184
    %v7186 = vmul.f32 %v7077, 1.442695
    %v7187 = vpow.pop %v7186
    %v7188 = vmul.f32 %v7078, 1.442695
    %v7189 = vpow.pop %v7188
    %v7190 = vmul.f32 %v7079, 1.442695
    %v7191 = vpow.pop %v7190
    %v7192 = vmul.f32 %v7080, 1.442695
    %v7193 = vpow.pop %v7192
    %v7194 = vmul.f32 %v7081, 1.442695
    %v7195 = vpow.pop %v7194
    %v7196 = vmul.f32 %v7082, 1.442695
    %v7197 = vpow.pop %v7196
    %v7198 = vmul.f32 %v7083, 1.442695
    %v7199 = vpow.pop %v7198
    %v7200 = vmul.f32 %v7084, 1.442695
    %v7201 = vpow.pop %v7200
    %v7202 = vmul.f32 %v7085, 1.442695
    %v7203 = vpow.pop %v7202
    %v7204 = vmul.f32 %v7086, 1.442695
    %v7205 = vpow.pop %v7204
    %v7206 = vmul.f32 %v7087, 1.442695
    %v7207 = vpow.pop %v7206
    %v7208 = vmul.f32 %v7088, 1.442695
    %v7209 = vpow.pop %v7208
    %v7210 = vmul.f32 %v7089, 1.442695
    %v7211 = vpow.pop %v7210
    %v7212 = vmul.f32 %v7090, 1.442695
    %v7213 = vpow.pop %v7212
    %v7214 = vmul.f32 %v7091, 1.442695
    %v7215 = vpow.pop %v7214
    %v7216 = vmul.f32 %v7092, 1.442695
    %v7217 = vpow.pop %v7216
    %v7218 = vmul.f32 %v7093, 1.442695
    %v7219 = vpow.pop %v7218
    %v7220 = vmul.f32 %v7094, 1.442695
    %v7221 = vpow.pop %v7220
    %v7222 = vmul.f32 %v7095, 1.442695
    %v7223 = vpow.pop %v7222
    %v7224 = vsub.f32 %v7097, 1.0
    %v7225 = vsub.f32 %v7099, 1.0
    %v7226 = vsub.f32 %v7101, 1.0
    %v7227 = vsub.f32 %v7103, 1.0
    %v7228 = vsub.f32 %v7105, 1.0
    %v7229 = vsub.f32 %v7107, 1.0
    %v7230 = vsub.f32 %v7109, 1.0
    %v7231 = vsub.f32 %v7111, 1.0
    %v7232 = vsub.f32 %v7113, 1.0
    %v7233 = vsub.f32 %v7115, 1.0
    %v7234 = vsub.f32 %v7117, 1.0
    %v7235 = vsub.f32 %v7119, 1.0
    %v7236 = vsub.f32 %v7121, 1.0
    %v7237 = vsub.f32 %v7123, 1.0
    %v7238 = vsub.f32 %v7125, 1.0
    %v7239 = vsub.f32 %v7127, 1.0
    %v7240 = vsub.f32 %v7129, 1.0
    %v7241 = vsub.f32 %v7131, 1.0
    %v7242 = vsub.f32 %v7133, 1.0
    %v7243 = vsub.f32 %v7135, 1.0
    %v7244 = vsub.f32 %v7137, 1.0
    %v7245 = vsub.f32 %v7139, 1.0
    %v7246 = vsub.f32 %v7141, 1.0
    %v7247 = vsub.f32 %v7143, 1.0
    %v7248 = vsub.f32 %v7145, 1.0
    %v7249 = vsub.f32 %v7147, 1.0
    %v7250 = vsub.f32 %v7149, 1.0
    %v7251 = vsub.f32 %v7151, 1.0
    %v7252 = vsub.f32 %v7153, 1.0
    %v7253 = vsub.f32 %v7155, 1.0
    %v7254 = vsub.f32 %v7157, 1.0
    %v7255 = vsub.f32 %v7159, 1.0
    %v7256 = vsub.f32 %v7161, 1.0
    %v7257 = vsub.f32 %v7163, 1.0
    %v7258 = vsub.f32 %v7165, 1.0
    %v7259 = vsub.f32 %v7167, 1.0
    %v7260 = vsub.f32 %v7169, 1.0
    %v7261 = vsub.f32 %v7171, 1.0
    %v7262 = vsub.f32 %v7173, 1.0
    %v7263 = vsub.f32 %v7175, 1.0
    %v7264 = vsub.f32 %v7177, 1.0
    %v7265 = vsub.f32 %v7179, 1.0
    %v7266 = vsub.f32 %v7181, 1.0
    %v7267 = vsub.f32 %v7183, 1.0
    %v7268 = vsub.f32 %v7185, 1.0
    %v7269 = vsub.f32 %v7187, 1.0
    %v7270 = vsub.f32 %v7189, 1.0
    %v7271 = vsub.f32 %v7191, 1.0
    %v7272 = vsub.f32 %v7193, 1.0
    %v7273 = vsub.f32 %v7195, 1.0
    %v7274 = vsub.f32 %v7197, 1.0
    %v7275 = vsub.f32 %v7199, 1.0
    %v7276 = vsub.f32 %v7201, 1.0
    %v7277 = vsub.f32 %v7203, 1.0
    %v7278 = vsub.f32 %v7205, 1.0
    %v7279 = vsub.f32 %v7207, 1.0
    %v7280 = vsub.f32 %v7209, 1.0
    %v7281 = vsub.f32 %v7211, 1.0
    %v7282 = vsub.f32 %v7213, 1.0
    %v7283 = vsub.f32 %v7215, 1.0
    %v7284 = vsub.f32 %v7217, 1.0
    %v7285 = vsub.f32 %v7219, 1.0
    %v7286 = vsub.f32 %v7221, 1.0
    %v7287 = vsub.f32 %v7223, 1.0
    %vm7288 = vcmp.ge.f32.partialorder %v6647, 0.0
    %vm7289 = vcmp.ge.f32.partialorder %v6873, 0.0
    %vm7290 = vcmp.ge.f32.partialorder %v6650, 0.0
    %vm7291 = vcmp.ge.f32.partialorder %v6876, 0.0
    %vm7292 = vcmp.ge.f32.partialorder %v6653, 0.0
    %vm7293 = vcmp.ge.f32.partialorder %v6879, 0.0
    %vm7294 = vcmp.ge.f32.partialorder %v6656, 0.0
    %vm7295 = vcmp.ge.f32.partialorder %v6882, 0.0
    %vm7296 = vcmp.ge.f32.partialorder %v6659, 0.0
    %vm7297 = vcmp.ge.f32.partialorder %v6885, 0.0
    %vm7298 = vcmp.ge.f32.partialorder %v6662, 0.0
    %vm7299 = vcmp.ge.f32.partialorder %v6888, 0.0
    %vm7300 = vcmp.ge.f32.partialorder %v6665, 0.0
    %vm7301 = vcmp.ge.f32.partialorder %v6891, 0.0
    %vm7302 = vcmp.ge.f32.partialorder %v6668, 0.0
    %vm7303 = vcmp.ge.f32.partialorder %v6894, 0.0
    %vm7304 = vcmp.ge.f32.partialorder %v6671, 0.0
    %vm7305 = vcmp.ge.f32.partialorder %v6897, 0.0
    %vm7306 = vcmp.ge.f32.partialorder %v6674, 0.0
    %vm7307 = vcmp.ge.f32.partialorder %v6900, 0.0
    %vm7308 = vcmp.ge.f32.partialorder %v6677, 0.0
    %vm7309 = vcmp.ge.f32.partialorder %v6903, 0.0
    %vm7310 = vcmp.ge.f32.partialorder %v6680, 0.0
    %vm7311 = vcmp.ge.f32.partialorder %v6906, 0.0
    %vm7312 = vcmp.ge.f32.partialorder %v6683, 0.0
    %vm7313 = vcmp.ge.f32.partialorder %v6909, 0.0
    %vm7314 = vcmp.ge.f32.partialorder %v6686, 0.0
    %vm7315 = vcmp.ge.f32.partialorder %v6912, 0.0
    %vm7316 = vcmp.ge.f32.partialorder %v6689, 0.0
    %vm7317 = vcmp.ge.f32.partialorder %v6915, 0.0
    %vm7318 = vcmp.ge.f32.partialorder %v6692, 0.0
    %vm7319 = vcmp.ge.f32.partialorder %v6918, 0.0
    %vm7320 = vcmp.ge.f32.partialorder %v6695, 0.0
    %vm7321 = vcmp.ge.f32.partialorder %v6921, 0.0
    %vm7322 = vcmp.ge.f32.partialorder %v6698, 0.0
    %vm7323 = vcmp.ge.f32.partialorder %v6924, 0.0
    %vm7324 = vcmp.ge.f32.partialorder %v6701, 0.0
    %vm7325 = vcmp.ge.f32.partialorder %v6927, 0.0
    %vm7326 = vcmp.ge.f32.partialorder %v6704, 0.0
    %vm7327 = vcmp.ge.f32.partialorder %v6930, 0.0
    %vm7328 = vcmp.ge.f32.partialorder %v6707, 0.0
    %vm7329 = vcmp.ge.f32.partialorder %v6933, 0.0
    %vm7330 = vcmp.ge.f32.partialorder %v6710, 0.0
    %vm7331 = vcmp.ge.f32.partialorder %v6936, 0.0
    %vm7332 = vcmp.ge.f32.partialorder %v6713, 0.0
    %vm7333 = vcmp.ge.f32.partialorder %v6939, 0.0
    %vm7334 = vcmp.ge.f32.partialorder %v6716, 0.0
    %vm7335 = vcmp.ge.f32.partialorder %v6942, 0.0
    %vm7336 = vcmp.ge.f32.partialorder %v6719, 0.0
    %vm7337 = vcmp.ge.f32.partialorder %v6945, 0.0
    %vm7338 = vcmp.ge.f32.partialorder %v6722, 0.0
    %vm7339 = vcmp.ge.f32.partialorder %v6948, 0.0
    %vm7340 = vcmp.ge.f32.partialorder %v6725, 0.0
    %vm7341 = vcmp.ge.f32.partialorder %v6951, 0.0
    %vm7342 = vcmp.ge.f32.partialorder %v6728, 0.0
    %vm7343 = vcmp.ge.f32.partialorder %v6954, 0.0
    %vm7344 = vcmp.ge.f32.partialorder %v6731, 0.0
    %vm7345 = vcmp.ge.f32.partialorder %v6957, 0.0
    %vm7346 = vcmp.ge.f32.partialorder %v6734, 0.0
    %vm7347 = vcmp.ge.f32.partialorder %v6960, 0.0
    %vm7348 = vcmp.ge.f32.partialorder %v6737, 0.0
    %vm7349 = vcmp.ge.f32.partialorder %v6963, 0.0
    %vm7350 = vcmp.ge.f32.partialorder %v6740, 0.0
    %vm7351 = vcmp.ge.f32.partialorder %v6966, 0.0
    %v7352 = vsel %vm7288, %v6647, %v7224
    %v7353 = vsel %vm7289, %v6873, %v7225
    %v7354 = vsel %vm7290, %v6650, %v7226
    %v7355 = vsel %vm7291, %v6876, %v7227
    %v7356 = vsel %vm7292, %v6653, %v7228
    %v7357 = vsel %vm7293, %v6879, %v7229
    %v7358 = vsel %vm7294, %v6656, %v7230
    %v7359 = vsel %vm7295, %v6882, %v7231
    %v7360 = vsel %vm7296, %v6659, %v7232
    %v7361 = vsel %vm7297, %v6885, %v7233
    %v7362 = vsel %vm7298, %v6662, %v7234
    %v7363 = vsel %vm7299, %v6888, %v7235
    %v7364 = vsel %vm7300, %v6665, %v7236
    %v7365 = vsel %vm7301, %v6891, %v7237
    %v7366 = vsel %vm7302, %v6668, %v7238
    %v7367 = vsel %vm7303, %v6894, %v7239
    %v7368 = vsel %vm7304, %v6671, %v7240
    %v7369 = vsel %vm7305, %v6897, %v7241
    %v7370 = vsel %vm7306, %v6674, %v7242
    %v7371 = vsel %vm7307, %v6900, %v7243
    %v7372 = vsel %vm7308, %v6677, %v7244
    %v7373 = vsel %vm7309, %v6903, %v7245
    %v7374 = vsel %vm7310, %v6680, %v7246
    %v7375 = vsel %vm7311, %v6906, %v7247
    %v7376 = vsel %vm7312, %v6683, %v7248
    %v7377 = vsel %vm7313, %v6909, %v7249
    %v7378 = vsel %vm7314, %v6686, %v7250
    %v7379 = vsel %vm7315, %v6912, %v7251
    %v7380 = vsel %vm7316, %v6689, %v7252
    %v7381 = vsel %vm7317, %v6915, %v7253
    %v7382 = vsel %vm7318, %v6692, %v7254
    %v7383 = vsel %vm7319, %v6918, %v7255
    %v7384 = vsel %vm7320, %v6695, %v7256
    %v7385 = vsel %vm7321, %v6921, %v7257
    %v7386 = vsel %vm7322, %v6698, %v7258
    %v7387 = vsel %vm7323, %v6924, %v7259
    %v7388 = vsel %vm7324, %v6701, %v7260
    %v7389 = vsel %vm7325, %v6927, %v7261
    %v7390 = vsel %vm7326, %v6704, %v7262
    %v7391 = vsel %vm7327, %v6930, %v7263
    %v7392 = vsel %vm7328, %v6707, %v7264
    %v7393 = vsel %vm7329, %v6933, %v7265
    %v7394 = vsel %vm7330, %v6710, %v7266
    %v7395 = vsel %vm7331, %v6936, %v7267
    %v7396 = vsel %vm7332, %v6713, %v7268
    %v7397 = vsel %vm7333, %v6939, %v7269
    %v7398 = vsel %vm7334, %v6716, %v7270
    %v7399 = vsel %vm7335, %v6942, %v7271
    %v7400 = vsel %vm7336, %v6719, %v7272
    %v7401 = vsel %vm7337, %v6945, %v7273
    %v7402 = vsel %vm7338, %v6722, %v7274
    %v7403 = vsel %vm7339, %v6948, %v7275
    %v7404 = vsel %vm7340, %v6725, %v7276
    %v7405 = vsel %vm7341, %v6951, %v7277
    %v7406 = vsel %vm7342, %v6728, %v7278
    %v7407 = vsel %vm7343, %v6954, %v7279
    %v7408 = vsel %vm7344, %v6731, %v7280
    %v7409 = vsel %vm7345, %v6957, %v7281
    %v7410 = vsel %vm7346, %v6734, %v7282
    %v7411 = vsel %vm7347, %v6960, %v7283
    %v7412 = vsel %vm7348, %v6737, %v7284
    %v7413 = vsel %vm7349, %v6963, %v7285
    %v7414 = vsel %vm7350, %v6740, %v7286
    %v7415 = vsel %vm7351, %v6966, %v7287
    %v7416 = vadd.f32 %v7352, %v7354
    %v7417 = vadd.f32 %v7416, %v7356
    %v7418 = vadd.f32 %v7417, %v7358
    %v7419 = vadd.f32 %v7418, %v7360
    %v7420 = vadd.f32 %v7419, %v7362
    %v7421 = vadd.f32 %v7420, %v7364
    %v7422 = vadd.f32 %v7421, %v7366
    %v7423 = vadd.f32 %v7422, %v7368
    %v7424 = vadd.f32 %v7423, %v7370
    %v7425 = vadd.f32 %v7424, %v7372
    %v7426 = vadd.f32 %v7425, %v7374
    %v7427 = vadd.f32 %v7426, %v7376
    %v7428 = vadd.f32 %v7427, %v7378
    %v7429 = vadd.f32 %v7428, %v7380
    %v7430 = vadd.f32 %v7429, %v7382
    %v7431 = vadd.f32 %v7430, %v7384
    %v7432 = vadd.f32 %v7431, %v7386
    %v7433 = vadd.f32 %v7432, %v7388
    %v7434 = vadd.f32 %v7433, %v7390
    %v7435 = vadd.f32 %v7434, %v7392
    %v7436 = vadd.f32 %v7435, %v7394
    %v7437 = vadd.f32 %v7436, %v7396
    %v7438 = vadd.f32 %v7437, %v7398
    %v7439 = vadd.f32 %v7438, %v7400
    %v7440 = vadd.f32 %v7439, %v7402
    %v7441 = vadd.f32 %v7440, %v7404
    %v7442 = vadd.f32 %v7441, %v7406
    %v7443 = vadd.f32 %v7442, %v7408
    %v7444 = vadd.f32 %v7443, %v7410
    %v7445 = vadd.f32 %v7444, %v7412
    %v7446 = vadd.f32 %v7445, %v7414
    %v7447 = vrot.slane %v7446, 4
    %v7448 = vadd.f32 %v7446, %v7447
    %v7449 = vrot.slane %v7448, 2
    %v7450 = vadd.f32 %v7448, %v7449
    %v7451 = vrot.slane %v7450, 1
    %v7452 = vadd.f32 %v7450, %v7451
    %v7453 = vadd.f32 %v7353, %v7355
    %v7454 = vadd.f32 %v7453, %v7357
    %v7455 = vadd.f32 %v7454, %v7359
    %v7456 = vadd.f32 %v7455, %v7361
    %v7457 = vadd.f32 %v7456, %v7363
    %v7458 = vadd.f32 %v7457, %v7365
    %v7459 = vadd.f32 %v7458, %v7367
    %v7460 = vadd.f32 %v7459, %v7369
    %v7461 = vadd.f32 %v7460, %v7371
    %v7462 = vadd.f32 %v7461, %v7373
    %v7463 = vadd.f32 %v7462, %v7375
    %v7464 = vadd.f32 %v7463, %v7377
    %v7465 = vadd.f32 %v7464, %v7379
    %v7466 = vadd.f32 %v7465, %v7381
    %v7467 = vadd.f32 %v7466, %v7383
    %v7468 = vadd.f32 %v7467, %v7385
    %v7469 = vadd.f32 %v7468, %v7387
    %v7470 = vadd.f32 %v7469, %v7389
    %v7471 = vadd.f32 %v7470, %v7391
    %v7472 = vadd.f32 %v7471, %v7393
    %v7473 = vadd.f32 %v7472, %v7395
    %v7474 = vadd.f32 %v7473, %v7397
    %v7475 = vadd.f32 %v7474, %v7399
    %v7476 = vadd.f32 %v7475, %v7401
    %v7477 = vadd.f32 %v7476, %v7403
    %v7478 = vadd.f32 %v7477, %v7405
    %v7479 = vadd.f32 %v7478, %v7407
    %v7480 = vadd.f32 %v7479, %v7409
    %v7481 = vadd.f32 %v7480, %v7411
    %v7482 = vadd.f32 %v7481, %v7413
    %v7483 = vadd.f32 %v7482, %v7415
    %v7484 = vrot.slane %v7483, 4
    %v7485 = vadd.f32 %v7483, %v7484
    %v7486 = vrot.slane %v7485, 2
    %v7487 = vadd.f32 %v7485, %v7486
    %v7488 = vrot.slane %v7487, 1
    %v7489 = vadd.f32 %v7487, %v7488
    %v7490 = vmul.f32 %v7352, %v7352
    %v7491 = vmul.f32 %v7353, %v7353
    %v7492 = vmul.f32 %v7354, %v7354
    %v7493 = vmul.f32 %v7355, %v7355
    %v7494 = vmul.f32 %v7356, %v7356
    %v7495 = vmul.f32 %v7357, %v7357
    %v7496 = vmul.f32 %v7358, %v7358
    %v7497 = vmul.f32 %v7359, %v7359
    %v7498 = vmul.f32 %v7360, %v7360
    %v7499 = vmul.f32 %v7361, %v7361
    %v7500 = vmul.f32 %v7362, %v7362
    %v7501 = vmul.f32 %v7363, %v7363
    %v7502 = vmul.f32 %v7364, %v7364
    %v7503 = vmul.f32 %v7365, %v7365
    %v7504 = vmul.f32 %v7366, %v7366
    %v7505 = vmul.f32 %v7367, %v7367
    %v7506 = vmul.f32 %v7368, %v7368
    %v7507 = vmul.f32 %v7369, %v7369
    %v7508 = vmul.f32 %v7370, %v7370
    %v7509 = vmul.f32 %v7371, %v7371
    %v7510 = vmul.f32 %v7372, %v7372
    %v7511 = vmul.f32 %v7373, %v7373
    %v7512 = vmul.f32 %v7374, %v7374
    %v7513 = vmul.f32 %v7375, %v7375
    %v7514 = vmul.f32 %v7376, %v7376
    %v7515 = vmul.f32 %v7377, %v7377
    %v7516 = vmul.f32 %v7378, %v7378
    %v7517 = vmul.f32 %v7379, %v7379
    %v7518 = vmul.f32 %v7380, %v7380
    %v7519 = vmul.f32 %v7381, %v7381
    %v7520 = vmul.f32 %v7382, %v7382
    %v7521 = vmul.f32 %v7383, %v7383
    %v7522 = vmul.f32 %v7384, %v7384
    %v7523 = vmul.f32 %v7385, %v7385
    %v7524 = vmul.f32 %v7386, %v7386
    %v7525 = vmul.f32 %v7387, %v7387
    %v7526 = vmul.f32 %v7388, %v7388
    %v7527 = vmul.f32 %v7389, %v7389
    %v7528 = vmul.f32 %v7390, %v7390
    %v7529 = vmul.f32 %v7391, %v7391
    %v7530 = vmul.f32 %v7392, %v7392
    %v7531 = vmul.f32 %v7393, %v7393
    %v7532 = vmul.f32 %v7394, %v7394
    %v7533 = vmul.f32 %v7395, %v7395
    %v7534 = vmul.f32 %v7396, %v7396
    %v7535 = vmul.f32 %v7397, %v7397
    %v7536 = vmul.f32 %v7398, %v7398
    %v7537 = vmul.f32 %v7399, %v7399
    %v7538 = vmul.f32 %v7400, %v7400
    %v7539 = vmul.f32 %v7401, %v7401
    %v7540 = vmul.f32 %v7402, %v7402
    %v7541 = vmul.f32 %v7403, %v7403
    %v7542 = vmul.f32 %v7404, %v7404
    %v7543 = vmul.f32 %v7405, %v7405
    %v7544 = vmul.f32 %v7406, %v7406
    %v7545 = vmul.f32 %v7407, %v7407
    %v7546 = vmul.f32 %v7408, %v7408
    %v7547 = vmul.f32 %v7409, %v7409
    %v7548 = vmul.f32 %v7410, %v7410
    %v7549 = vmul.f32 %v7411, %v7411
    %v7550 = vmul.f32 %v7412, %v7412
    %v7551 = vmul.f32 %v7413, %v7413
    %v7552 = vmul.f32 %v7414, %v7414
    %v7553 = vmul.f32 %v7415, %v7415
    %v7554 = vadd.f32 %v7490, %v7492
    %v7555 = vadd.f32 %v7554, %v7494
    %v7556 = vadd.f32 %v7555, %v7496
    %v7557 = vadd.f32 %v7556, %v7498
    %v7558 = vadd.f32 %v7557, %v7500
    %v7559 = vadd.f32 %v7558, %v7502
    %v7560 = vadd.f32 %v7559, %v7504
    %v7561 = vadd.f32 %v7560, %v7506
    %v7562 = vadd.f32 %v7561, %v7508
    %v7563 = vadd.f32 %v7562, %v7510
    %v7564 = vadd.f32 %v7563, %v7512
    %v7565 = vadd.f32 %v7564, %v7514
    %v7566 = vadd.f32 %v7565, %v7516
    %v7567 = vadd.f32 %v7566, %v7518
    %v7568 = vadd.f32 %v7567, %v7520
    %v7569 = vadd.f32 %v7568, %v7522
    %v7570 = vadd.f32 %v7569, %v7524
    %v7571 = vadd.f32 %v7570, %v7526
    %v7572 = vadd.f32 %v7571, %v7528
    %v7573 = vadd.f32 %v7572, %v7530
    %v7574 = vadd.f32 %v7573, %v7532
    %v7575 = vadd.f32 %v7574, %v7534
    %v7576 = vadd.f32 %v7575, %v7536
    %v7577 = vadd.f32 %v7576, %v7538
    %v7578 = vadd.f32 %v7577, %v7540
    %v7579 = vadd.f32 %v7578, %v7542
    %v7580 = vadd.f32 %v7579, %v7544
    %v7581 = vadd.f32 %v7580, %v7546
    %v7582 = vadd.f32 %v7581, %v7548
    %v7583 = vadd.f32 %v7582, %v7550
    %v7584 = vadd.f32 %v7583, %v7552
    %v7585 = vrot.slane %v7584, 4
    %v7586 = vadd.f32 %v7584, %v7585
    %v7587 = vrot.slane %v7586, 2
    %v7588 = vadd.f32 %v7586, %v7587
    %v7589 = vrot.slane %v7588, 1
    %v7590 = vadd.f32 %v7588, %v7589
    %v7591 = vadd.f32 %v7491, %v7493
    %v7592 = vadd.f32 %v7591, %v7495
    %v7593 = vadd.f32 %v7592, %v7497
    %v7594 = vadd.f32 %v7593, %v7499
    %v7595 = vadd.f32 %v7594, %v7501
    %v7596 = vadd.f32 %v7595, %v7503
    %v7597 = vadd.f32 %v7596, %v7505
    %v7598 = vadd.f32 %v7597, %v7507
    %v7599 = vadd.f32 %v7598, %v7509
    %v7600 = vadd.f32 %v7599, %v7511
    %v7601 = vadd.f32 %v7600, %v7513
    %v7602 = vadd.f32 %v7601, %v7515
    %v7603 = vadd.f32 %v7602, %v7517
    %v7604 = vadd.f32 %v7603, %v7519
    %v7605 = vadd.f32 %v7604, %v7521
    %v7606 = vadd.f32 %v7605, %v7523
    %v7607 = vadd.f32 %v7606, %v7525
    %v7608 = vadd.f32 %v7607, %v7527
    %v7609 = vadd.f32 %v7608, %v7529
    %v7610 = vadd.f32 %v7609, %v7531
    %v7611 = vadd.f32 %v7610, %v7533
    %v7612 = vadd.f32 %v7611, %v7535
    %v7613 = vadd.f32 %v7612, %v7537
    %v7614 = vadd.f32 %v7613, %v7539
    %v7615 = vadd.f32 %v7614, %v7541
    %v7616 = vadd.f32 %v7615, %v7543
    %v7617 = vadd.f32 %v7616, %v7545
    %v7618 = vadd.f32 %v7617, %v7547
    %v7619 = vadd.f32 %v7618, %v7549
    %v7620 = vadd.f32 %v7619, %v7551
    %v7621 = vadd.f32 %v7620, %v7553
    %v7622 = vrot.slane %v7621, 4
    %v7623 = vadd.f32 %v7621, %v7622
    %v7624 = vrot.slane %v7623, 2
    %v7625 = vadd.f32 %v7623, %v7624
    %v7626 = vrot.slane %v7625, 1
    %v7627 = vadd.f32 %v7625, %v7626
    %v7628 = vmul.f32 %v7452, 0.00390625
    %v7629 = vmul.f32 %v7489, 0.00390625
    %v7630 = vmul.f32 %v7590, 0.00390625
    %v7631 = vmul.f32 %v7627, 0.00390625
    %v7632 = vmul.f32 %v7628, %v7628
    %v7633 = vmul.f32 %v7629, %v7629
    %v7634 = vsub.f32 %v7630, %v7632
    %v7635 = vsub.f32 %v7631, %v7633
    %v7636 = vmax.f32 %v7634, 0.0
    %v7637 = vmax.f32 %v7635, 0.0
    %v7638 = vsub.f32 %v7352, %v7628
    %v7639 = vsub.f32 %v7353, %v7629
    %v7640 = vsub.f32 %v7354, %v7628
    %v7641 = vsub.f32 %v7355, %v7629
    %v7642 = vsub.f32 %v7356, %v7628
    %v7643 = vsub.f32 %v7357, %v7629
    %v7644 = vsub.f32 %v7358, %v7628
    %v7645 = vsub.f32 %v7359, %v7629
    %v7646 = vsub.f32 %v7360, %v7628
    %v7647 = vsub.f32 %v7361, %v7629
    %v7648 = vsub.f32 %v7362, %v7628
    %v7649 = vsub.f32 %v7363, %v7629
    %v7650 = vsub.f32 %v7364, %v7628
    %v7651 = vsub.f32 %v7365, %v7629
    %v7652 = vsub.f32 %v7366, %v7628
    %v7653 = vsub.f32 %v7367, %v7629
    %v7654 = vsub.f32 %v7368, %v7628
    %v7655 = vsub.f32 %v7369, %v7629
    %v7656 = vsub.f32 %v7370, %v7628
    %v7657 = vsub.f32 %v7371, %v7629
    %v7658 = vsub.f32 %v7372, %v7628
    %v7659 = vsub.f32 %v7373, %v7629
    %v7660 = vsub.f32 %v7374, %v7628
    %v7661 = vsub.f32 %v7375, %v7629
    %v7662 = vsub.f32 %v7376, %v7628
    %v7663 = vsub.f32 %v7377, %v7629
    %v7664 = vsub.f32 %v7378, %v7628
    %v7665 = vsub.f32 %v7379, %v7629
    %v7666 = vsub.f32 %v7380, %v7628
    %v7667 = vsub.f32 %v7381, %v7629
    %v7668 = vsub.f32 %v7382, %v7628
    %v7669 = vsub.f32 %v7383, %v7629
    %v7670 = vsub.f32 %v7384, %v7628
    %v7671 = vsub.f32 %v7385, %v7629
    %v7672 = vsub.f32 %v7386, %v7628
    %v7673 = vsub.f32 %v7387, %v7629
    %v7674 = vsub.f32 %v7388, %v7628
    %v7675 = vsub.f32 %v7389, %v7629
    %v7676 = vsub.f32 %v7390, %v7628
    %v7677 = vsub.f32 %v7391, %v7629
    %v7678 = vsub.f32 %v7392, %v7628
    %v7679 = vsub.f32 %v7393, %v7629
    %v7680 = vsub.f32 %v7394, %v7628
    %v7681 = vsub.f32 %v7395, %v7629
    %v7682 = vsub.f32 %v7396, %v7628
    %v7683 = vsub.f32 %v7397, %v7629
    %v7684 = vsub.f32 %v7398, %v7628
    %v7685 = vsub.f32 %v7399, %v7629
    %v7686 = vsub.f32 %v7400, %v7628
    %v7687 = vsub.f32 %v7401, %v7629
    %v7688 = vsub.f32 %v7402, %v7628
    %v7689 = vsub.f32 %v7403, %v7629
    %v7690 = vsub.f32 %v7404, %v7628
    %v7691 = vsub.f32 %v7405, %v7629
    %v7692 = vsub.f32 %v7406, %v7628
    %v7693 = vsub.f32 %v7407, %v7629
    %v7694 = vsub.f32 %v7408, %v7628
    %v7695 = vsub.f32 %v7409, %v7629
    %v7696 = vsub.f32 %v7410, %v7628
    %v7697 = vsub.f32 %v7411, %v7629
    %v7698 = vsub.f32 %v7412, %v7628
    %v7699 = vsub.f32 %v7413, %v7629
    %v7700 = vsub.f32 %v7414, %v7628
    %v7701 = vsub.f32 %v7415, %v7629
    %v7702 = vadd.f32 %v7636, 1e-05
    %v7703 = vadd.f32 %v7637, 1e-05
    %v7704 = vrsqrt.pop %v7702
    %v7705 = vmul.f32 %v7704, %v7702
    %v7706 = vmul.f32 %v7705, %v7704
    %v7707 = vmul.f32 0.5, %v7706
    %v7708 = vsub.f32 1.5, %v7707
    %v7709 = vmul.f32 %v7704, %v7708
    %vm7710 = vweird.f32 %v7702
    %vm7711 = vweird.f32 %v7704
    %vm7712 = vmor %vm7710, %vm7711
    %v7713 = vsel %vm7712, %v7704, %v7709
    %v7714 = vrsqrt.pop %v7703
    %v7715 = vmul.f32 %v7714, %v7703
    %v7716 = vmul.f32 %v7715, %v7714
    %v7717 = vmul.f32 0.5, %v7716
    %v7718 = vsub.f32 1.5, %v7717
    %v7719 = vmul.f32 %v7714, %v7718
    %vm7720 = vweird.f32 %v7703
    %vm7721 = vweird.f32 %v7714
    %vm7722 = vmor %vm7720, %vm7721
    %v7723 = vsel %vm7722, %v7714, %v7719
    %v7724 = vmul.f32 %v7638, %v7713
    %v7725 = vmul.f32 %v7639, %v7723
    %v7726 = vmul.f32 %v7640, %v7713
    %v7727 = vmul.f32 %v7641, %v7723
    %v7728 = vmul.f32 %v7642, %v7713
    %v7729 = vmul.f32 %v7643, %v7723
    %v7730 = vmul.f32 %v7644, %v7713
    %v7731 = vmul.f32 %v7645, %v7723
    %v7732 = vmul.f32 %v7646, %v7713
    %v7733 = vmul.f32 %v7647, %v7723
    %v7734 = vmul.f32 %v7648, %v7713
    %v7735 = vmul.f32 %v7649, %v7723
    %v7736 = vmul.f32 %v7650, %v7713
    %v7737 = vmul.f32 %v7651, %v7723
    %v7738 = vmul.f32 %v7652, %v7713
    %v7739 = vmul.f32 %v7653, %v7723
    %v7740 = vmul.f32 %v7654, %v7713
    %v7741 = vmul.f32 %v7655, %v7723
    %v7742 = vmul.f32 %v7656, %v7713
    %v7743 = vmul.f32 %v7657, %v7723
    %v7744 = vmul.f32 %v7658, %v7713
    %v7745 = vmul.f32 %v7659, %v7723
    %v7746 = vmul.f32 %v7660, %v7713
    %v7747 = vmul.f32 %v7661, %v7723
    %v7748 = vmul.f32 %v7662, %v7713
    %v7749 = vmul.f32 %v7663, %v7723
    %v7750 = vmul.f32 %v7664, %v7713
    %v7751 = vmul.f32 %v7665, %v7723
    %v7752 = vmul.f32 %v7666, %v7713
    %v7753 = vmul.f32 %v7667, %v7723
    %v7754 = vmul.f32 %v7668, %v7713
    %v7755 = vmul.f32 %v7669, %v7723
    %v7756 = vmul.f32 %v7670, %v7713
    %v7757 = vmul.f32 %v7671, %v7723
    %v7758 = vmul.f32 %v7672, %v7713
    %v7759 = vmul.f32 %v7673, %v7723
    %v7760 = vmul.f32 %v7674, %v7713
    %v7761 = vmul.f32 %v7675, %v7723
    %v7762 = vmul.f32 %v7676, %v7713
    %v7763 = vmul.f32 %v7677, %v7723
    %v7764 = vmul.f32 %v7678, %v7713
    %v7765 = vmul.f32 %v7679, %v7723
    %v7766 = vmul.f32 %v7680, %v7713
    %v7767 = vmul.f32 %v7681, %v7723
    %v7768 = vmul.f32 %v7682, %v7713
    %v7769 = vmul.f32 %v7683, %v7723
    %v7770 = vmul.f32 %v7684, %v7713
    %v7771 = vmul.f32 %v7685, %v7723
    %v7772 = vmul.f32 %v7686, %v7713
    %v7773 = vmul.f32 %v7687, %v7723
    %v7774 = vmul.f32 %v7688, %v7713
    %v7775 = vmul.f32 %v7689, %v7723
    %v7776 = vmul.f32 %v7690, %v7713
    %v7777 = vmul.f32 %v7691, %v7723
    %v7778 = vmul.f32 %v7692, %v7713
    %v7779 = vmul.f32 %v7693, %v7723
    %v7780 = vmul.f32 %v7694, %v7713
    %v7781 = vmul.f32 %v7695, %v7723
    %v7782 = vmul.f32 %v7696, %v7713
    %v7783 = vmul.f32 %v7697, %v7723
    %v7784 = vmul.f32 %v7698, %v7713
    %v7785 = vmul.f32 %v7699, %v7723
    %v7786 = vmul.f32 %v7700, %v7713
    %v7787 = vmul.f32 %v7701, %v7723
    %7788 = vst [vmem:[#allocation17] sm:$0xff] %v7724
    %7789 = vst [vmem:[#allocation17 + $0x8] sm:$0xff] %v7725
    %7790 = vst [vmem:[#allocation17 + $0x10] sm:$0xff] %v7726
    %7791 = vst [vmem:[#allocation17 + $0x18] sm:$0xff] %v7727
    %7792 = vst [vmem:[#allocation17 + $0x20] sm:$0xff] %v7728
    %7793 = vst [vmem:[#allocation17 + $0x28] sm:$0xff] %v7729
    %7794 = vst [vmem:[#allocation17 + $0x30] sm:$0xff] %v7730
    %7795 = vst [vmem:[#allocation17 + $0x38] sm:$0xff] %v7731
    %7796 = vst [vmem:[#allocation17 + $0x40] sm:$0xff] %v7732
    %7797 = vst [vmem:[#allocation17 + $0x48] sm:$0xff] %v7733
    %7798 = vst [vmem:[#allocation17 + $0x50] sm:$0xff] %v7734
    %7799 = vst [vmem:[#allocation17 + $0x58] sm:$0xff] %v7735
    %7800 = vst [vmem:[#allocation17 + $0x60] sm:$0xff] %v7736
    %7801 = vst [vmem:[#allocation17 + $0x68] sm:$0xff] %v7737
    %7802 = vst [vmem:[#allocation17 + $0x70] sm:$0xff] %v7738
    %7803 = vst [vmem:[#allocation17 + $0x78] sm:$0xff] %v7739
    %7804 = vst [vmem:[#allocation17 + $0x80] sm:$0xff] %v7740
    %7805 = vst [vmem:[#allocation17 + $0x88] sm:$0xff] %v7741
    %7806 = vst [vmem:[#allocation17 + $0x90] sm:$0xff] %v7742
    %7807 = vst [vmem:[#allocation17 + $0x98] sm:$0xff] %v7743
    %7808 = vst [vmem:[#allocation17 + $0xa0] sm:$0xff] %v7744
    %7809 = vst [vmem:[#allocation17 + $0xa8] sm:$0xff] %v7745
    %7810 = vst [vmem:[#allocation17 + $0xb0] sm:$0xff] %v7746
    %7811 = vst [vmem:[#allocation17 + $0xb8] sm:$0xff] %v7747
    %7812 = vst [vmem:[#allocation17 + $0xc0] sm:$0xff] %v7748
    %7813 = vst [vmem:[#allocation17 + $0xc8] sm:$0xff] %v7749
    %7814 = vst [vmem:[#allocation17 + $0xd0] sm:$0xff] %v7750
    %7815 = vst [vmem:[#allocation17 + $0xd8] sm:$0xff] %v7751
    %7816 = vst [vmem:[#allocation17 + $0xe0] sm:$0xff] %v7752
    %7817 = vst [vmem:[#allocation17 + $0xe8] sm:$0xff] %v7753
    %7818 = vst [vmem:[#allocation17 + $0xf0] sm:$0xff] %v7754
    %7819 = vst [vmem:[#allocation17 + $0xf8] sm:$0xff] %v7755
    %7820 = vst [vmem:[#allocation17 + $0x100] sm:$0xff] %v7756
    %7821 = vst [vmem:[#allocation17 + $0x108] sm:$0xff] %v7757
    %7822 = vst [vmem:[#allocation17 + $0x110] sm:$0xff] %v7758
    %7823 = vst [vmem:[#allocation17 + $0x118] sm:$0xff] %v7759
    %7824 = vst [vmem:[#allocation17 + $0x120] sm:$0xff] %v7760
    %7825 = vst [vmem:[#allocation17 + $0x128] sm:$0xff] %v7761
    %7826 = vst [vmem:[#allocation17 + $0x130] sm:$0xff] %v7762
    %7827 = vst [vmem:[#allocation17 + $0x138] sm:$0xff] %v7763
    %7828 = vst [vmem:[#allocation17 + $0x140] sm:$0xff] %v7764
    %7829 = vst [vmem:[#allocation17 + $0x148] sm:$0xff] %v7765
    %7830 = vst [vmem:[#allocation17 + $0x150] sm:$0xff] %v7766
    %7831 = vst [vmem:[#allocation17 + $0x158] sm:$0xff] %v7767
    %7832 = vst [vmem:[#allocation17 + $0x160] sm:$0xff] %v7768
    %7833 = vst [vmem:[#allocation17 + $0x168] sm:$0xff] %v7769
    %7834 = vst [vmem:[#allocation17 + $0x170] sm:$0xff] %v7770
    %7835 = vst [vmem:[#allocation17 + $0x178] sm:$0xff] %v7771
    %7836 = vst [vmem:[#allocation17 + $0x180] sm:$0xff] %v7772
    %7837 = vst [vmem:[#allocation17 + $0x188] sm:$0xff] %v7773
    %7838 = vst [vmem:[#allocation17 + $0x190] sm:$0xff] %v7774
    %7839 = vst [vmem:[#allocation17 + $0x198] sm:$0xff] %v7775
    %7840 = vst [vmem:[#allocation17 + $0x1a0] sm:$0xff] %v7776
    %7841 = vst [vmem:[#allocation17 + $0x1a8] sm:$0xff] %v7777
    %7842 = vst [vmem:[#allocation17 + $0x1b0] sm:$0xff] %v7778
    %7843 = vst [vmem:[#allocation17 + $0x1b8] sm:$0xff] %v7779
    %7844 = vst [vmem:[#allocation17 + $0x1c0] sm:$0xff] %v7780
    %7845 = vst [vmem:[#allocation17 + $0x1c8] sm:$0xff] %v7781
    %7846 = vst [vmem:[#allocation17 + $0x1d0] sm:$0xff] %v7782
    %7847 = vst [vmem:[#allocation17 + $0x1d8] sm:$0xff] %v7783
    %7848 = vst [vmem:[#allocation17 + $0x1e0] sm:$0xff] %v7784
    %7849 = vst [vmem:[#allocation17 + $0x1e8] sm:$0xff] %v7785
    %7850 = vst [vmem:[#allocation17 + $0x1f0] sm:$0xff] %v7786
    %7851 = vst [vmem:[#allocation17 + $0x1f8] sm:$0xff] %v7787
    // Predicated region
    $region50: #{topo_forward.1} parent=1 // pred_check
      _
    $region51: #{topo_forward.1} parent=1 // pred_check_branch
      %7853 = sbr.rel (0) target = $region53
    $region52: #{topo_forward.1} parent=1 // pred_region
      %7855 = vsyncadd [#allocation4], 0
      %s7856 = sshll.u32 [#allocation13], 4
      %s7857 = int_to_ptr.vmem [resolvable:$true] %s7856
      %s7858 = sshll.u32 %s6, 4
      %s7859 = int_to_ptr.hbm [resolvable:$true] %s7858
      %7864 = dma.vmem_to_hbm [thread:$0]  %s7857, 8192, %s7859, [#allocation4], 256, 256, 16
    $region53: #{topo_forward.1} parent=1 // pred_fallthru
      _
    // Predicated region
    $region54: #{topo_forward.1} parent=1 // pred_check
      _
    $region55: #{topo_forward.1} parent=1 // pred_check_branch
      %7866 = sbr.rel (0) target = $region57
    $region56: #{topo_forward.1} parent=1 // pred_region
      %7868 = vsyncadd [#allocation15], 0
      %s7869 = sshll.u32 [#allocation14], 4
      %s7870 = int_to_ptr.vmem [resolvable:$true] %s7869
      %s7871 = sshll.u32 %s7, 4
      %s7872 = int_to_ptr.hbm [resolvable:$true] %s7871
      %7877 = dma.vmem_to_hbm [thread:$0]  %s7870, 8192, %s7872, [#allocation15], 256, 256, 16
    $region57: #{topo_forward.1} parent=1 // pred_fallthru
      _
    // Predicated region
    $region58: #{topo_forward.1} parent=1 // pred_check
      _
    $region59: #{topo_forward.1} parent=1 // pred_check_branch
      %7879 = sbr.rel (0) target = $region61
    $region60: #{topo_forward.1} parent=1 // pred_region
      %7881 = vsyncadd [#allocation15], 0
      %s7882 = sshll.u32 [#allocation16], 4
      %s7883 = int_to_ptr.vmem [resolvable:$true] %s7882
      %s7884 = sshll.u32 %s8, 4
      %s7885 = int_to_ptr.hbm [resolvable:$true] %s7884
      %7890 = dma.vmem_to_hbm [thread:$0]  %s7883, 8192, %s7885, [#allocation15], 256, 256, 16
    $region61: #{topo_forward.1} parent=1 // pred_fallthru
      _
    // Predicated region
    $region62: #{topo_forward.1} parent=1 // pred_check
      _
    $region63: #{topo_forward.1} parent=1 // pred_check_branch
      %7892 = sbr.rel (0) target = $region65
    $region64: #{topo_forward.1} parent=1 // pred_region
      %7894 = vsyncadd [#allocation18], 0
      %s7895 = sshll.u32 [#allocation17], 4
      %s7896 = int_to_ptr.vmem [resolvable:$true] %s7895
      %s7897 = sshll.u32 %s9, 4
      %s7898 = int_to_ptr.hbm [resolvable:$true] %s7897
      %7903 = dma.vmem_to_hbm [thread:$0]  %s7896, 8192, %s7898, [#allocation18], 256, 256, 16
    $region65: #{topo_forward.1} parent=1 // pred_fallthru
      _
    // Predicated region
    $region66: #{topo_forward.1} parent=1 // pred_check
      _
    $region67: #{topo_forward.1} parent=1 // pred_check_branch
      %7905 = sbr.rel (0) target = $region69
    $region68: #{topo_forward.1} parent=1 // pred_region
      %7907 = dma.done [#allocation4], 8192
    $region69: #{topo_forward.1} parent=1 // pred_fallthru
      _
    // Predicated region
    $region70: #{topo_forward.1} parent=1 // pred_check
      _
    $region71: #{topo_forward.1} parent=1 // pred_check_branch
      %7909 = sbr.rel (0) target = $region73
    $region72: #{topo_forward.1} parent=1 // pred_region
      %7911 = dma.done [#allocation15], 8192
    $region73: #{topo_forward.1} parent=1 // pred_fallthru
      _
    // Predicated region
    $region74: #{topo_forward.1} parent=1 // pred_check
      _
    $region75: #{topo_forward.1} parent=1 // pred_check_branch
      %7913 = sbr.rel (0) target = $region77
    $region76: #{topo_forward.1} parent=1 // pred_region
      %7915 = dma.done [#allocation15], 8192
    $region77: #{topo_forward.1} parent=1 // pred_fallthru
      _
    // Predicated region
    $region78: #{topo_forward.1} parent=1 // pred_check
      _
    $region79: #{topo_forward.1} parent=1 // pred_check_branch
      %7917 = sbr.rel (0) target = $region81
    $region80: #{topo_forward.1} parent=1 // pred_region
      %7919 = dma.done [#allocation18], 8192
    $region81: #{topo_forward.1} parent=1 // pred_fallthru
      _
    %7920 = vsyncpa [#allocation3], 1
    %7921 = vsyncpa [#allocation6], 1
    %7922 = vsyncpa [#allocation9], 1
    %7923 = vsyncpa [#allocation12], 1
    %7924 = vsyncpa [#allocation4], 1
    %7925 = vsyncpa [#allocation15], 1
    %7926 = vsyncpa [#allocation18], 1

</llo_original>
